<compile_context>
chip_gen: v7x
topology: tpu7x:2x2x1
jax: 0.10.0
libtpu: 0.0.40
codegen_flags: <defaults>
</compile_context>

<pallas_src>
import jax
import jax.numpy as jnp
from jax.experimental import pallas as pl
from jax.experimental.pallas import tpu as pltpu

# ---- small DINOv2-like config ----
PATCH = 14
IMAGE_SIZE = 28                      # image_size // 14 = 2  ->  4 patches
HIDDEN = 32
NUM_HEADS = 4
HEAD_DIM = HIDDEN // NUM_HEADS
NUM_LAYERS = 2
MLP_DIM = 4 * HIDDEN
BATCH = 2
NUM_PATCHES = (IMAGE_SIZE // PATCH) ** 2
SEQ = NUM_PATCHES + 1                # +1 for CLS (use_cls_token=True)
PATCH_DIM = 3 * PATCH * PATCH
EPS = 1e-6

DINO_MEAN = (0.485, 0.456, 0.406)
DINO_STD = (0.229, 0.224, 0.225)

# Per-layer stacked parameters, in kernel-argument order (scale / layer-scale
# already folded into the weights at init, so no ls1/ls2 tensors).
LAYER_PARAMS = ('ln1_g', 'ln1_b', 'wqkv', 'bqkv', 'wo', 'bo',
                'ln2_g', 'ln2_b', 'w1', 'b1', 'w2', 'b2')


# ---------------- in-kernel helpers (pure jnp, no captured arrays) ----------------

def _layernorm(x, g, b):
    mu = jnp.mean(x, axis=-1, keepdims=True)
    var = jnp.mean(jnp.square(x - mu), axis=-1, keepdims=True)
    return (x - mu) * jax.lax.rsqrt(var + EPS) * g + b


def _gelu(x):
    # TODO(synk): HF DINOv2 uses exact (erf) GELU; tanh approximation used here.
    return 0.5 * x * (1.0 + jnp.tanh(0.7978845608028654 * (x + 0.044715 * x * x * x)))


# ---------------- fused encoder kernel (no grid: one invocation) ----------------

def fused_encoder_kernel(
        # global params
        patches_ref, pw_ref, pb_ref, clsp_ref, posp_ref, lnf_g_ref, lnf_b_ref,
        # per-layer params, stacked along a leading layer axis
        ln1_g_ref, ln1_b_ref, wqkv_ref, bqkv_ref, wo_ref, bo_ref,
        ln2_g_ref, ln2_b_ref, w1_ref, b1_ref, w2_ref, b2_ref,
        # output
        out_ref):
    B, S, D = out_ref.shape
    P = S - 1
    H = NUM_HEADS
    hd = D // H
    bf16 = jnp.bfloat16
    f32 = jnp.float32

    # ---- patch embed (value-range + mean/std normalize folded into pw/pb) ----
    tok = (jnp.dot(patches_ref[...].astype(bf16), pw_ref[...],
                   preferred_element_type=f32) + pb_ref[...])                # (B*P, D)

    # CLS / positional assembly via slice stores into the resident output block
    # (out_ref doubles as a one-time assembly scratch; no sublane concat).
    out_ref[:, 0:1, :] = jnp.broadcast_to(clsp_ref[...], (B, 1, D))
    out_ref[:, 1:, :] = tok.reshape(B, P, D) + posp_ref[...]
    x = out_ref[...].reshape(B * S, D)                                       # (B*S, D) f32

    # ---- statically unrolled transformer layers (all weights VMEM-resident) ----
    for l in range(NUM_LAYERS):
        # pre-LN attention.  1/sqrt(hd) is pre-folded into the Q columns of wqkv;
        # layer_scale_1 is pre-folded into (wo, bo).
        h = _layernorm(x, ln1_g_ref[l], ln1_b_ref[l])
        qkv = (jnp.dot(h.astype(bf16), wqkv_ref[l],
                       preferred_element_type=f32) + bqkv_ref[l])            # (B*S, 3D)
        wo_l = wo_ref[l]                                                     # (D, D) bf16
        attn = jnp.zeros((B * S, D), f32)
        for hh in range(H):                                                  # static unroll
            lo = hh * hd
            qh = qkv[:, lo:lo + hd].reshape(B, S, hd)
            kh = qkv[:, D + lo:D + lo + hd].reshape(B, S, hd)
            vh = qkv[:, 2 * D + lo:2 * D + lo + hd].reshape(B, S, hd)
            s = jnp.einsum('bqd,bkd->bqk', qh.astype(bf16), kh.astype(bf16),
                           preferred_element_type=f32)                       # (B, S, S)
            s = s - jnp.max(s, axis=-1, keepdims=True)
            p = jnp.exp(s)
            p = p * pl.reciprocal(jnp.sum(p, axis=-1, keepdims=True), approx=True)
            ctx = jnp.einsum('bqk,bkd->bqd', p.astype(bf16), vh.astype(bf16),
                             preferred_element_type=f32)                     # (B, S, hd)
            # Head merge folded into the output projection: accumulate this
            # head's row-slice of W_o -> no (B,H,S,hd) transpose / lane concat.
            attn = attn + jnp.dot(ctx.reshape(B * S, hd).astype(bf16),
                                  wo_l[lo:lo + hd, :],
                                  preferred_element_type=f32)
        x = x + attn + bo_ref[l]

        # pre-LN MLP; layer_scale_2 is pre-folded into (w2, b2).
        m = _layernorm(x, ln2_g_ref[l], ln2_b_ref[l])
        m = jnp.dot(m.astype(bf16), w1_ref[l], preferred_element_type=f32) + b1_ref[l]
        m = _gelu(m)
        m = jnp.dot(m.astype(bf16), w2_ref[l], preferred_element_type=f32) + b2_ref[l]
        x = x + m

    # ---- final LayerNorm -> last_hidden_state ----
    y = _layernorm(x, lnf_g_ref[...], lnf_b_ref[...])
    out_ref[...] = y.reshape(B, S, D).astype(out_ref.dtype)


# ---------------- parameters (synthetic, deterministic, with exact folds) ----------------

def init_params(key):
    std = 0.02
    scale = float(HEAD_DIM) ** -0.5
    ks = jax.random.split(key, 3 + NUM_LAYERS)

    # Patch-embed weight, rows in (c, kh, kw) order == Conv2d(3, D, 14, stride=14).
    w = jax.random.normal(ks[0], (PATCH_DIM, HIDDEN), jnp.float32) * std
    b = jnp.zeros((HIDDEN,), jnp.float32)
    # Fold value_range rescale ((x+1)*0.5) + DINO mean/std normalize into (w, b):
    #   norm(x) = a_c * x + d_c,  a_c = 0.5/std_c,  d_c = (0.5 - mean_c)/std_c
    mean = jnp.array(DINO_MEAN, jnp.float32)
    stdv = jnp.array(DINO_STD, jnp.float32)
    a = jnp.repeat(0.5 / stdv, PATCH * PATCH)                  # (PATCH_DIM,)
    d = jnp.repeat((0.5 - mean) / stdv, PATCH * PATCH)         # (PATCH_DIM,)
    patch_w = (w * a[:, None]).astype(jnp.bfloat16)
    patch_b = (b + d @ w).reshape(1, HIDDEN)

    cls = jax.random.normal(ks[1], (1, 1, HIDDEN), jnp.float32) * std
    pos = jax.random.normal(ks[2], (1, SEQ, HIDDEN), jnp.float32) * std

    params = {
        'patch_w': patch_w,
        'patch_b': patch_b,
        'cls_pos0': cls + pos[:, 0:1, :],      # CLS token + its positional embedding
        'pos_patch': pos[:, 1:, :],            # positional embeddings of the patch tokens
        'ln_f_g': jnp.ones((1, HIDDEN), jnp.float32),
        'ln_f_b': jnp.zeros((1, HIDDEN), jnp.float32),
    }

    per_layer = []
    for l in range(NUM_LAYERS):
        lk = jax.random.split(ks[3 + l], 6)
        wq = jax.random.normal(lk[0], (HIDDEN, HIDDEN), jnp.float32) * std
        wk = jax.random.normal(lk[1], (HIDDEN, HIDDEN), jnp.float32) * std
        wv = jax.random.normal(lk[2], (HIDDEN, HIDDEN), jnp.float32) * std
        wo = jax.random.normal(lk[3], (HIDDEN, HIDDEN), jnp.float32) * std
        bo = jnp.zeros((1, HIDDEN), jnp.float32)
        w1 = jax.random.normal(lk[4], (HIDDEN, MLP_DIM), jnp.float32) * std
        b1 = jnp.zeros((1, MLP_DIM), jnp.float32)
        w2 = jax.random.normal(lk[5], (MLP_DIM, HIDDEN), jnp.float32) * std
        b2 = jnp.zeros((1, HIDDEN), jnp.float32)
        ls1 = jnp.full((1, HIDDEN), 1.0, jnp.float32)   # layer_scale (synthetic init)
        ls2 = jnp.full((1, HIDDEN), 1.0, jnp.float32)
        per_layer.append(dict(
            ln1_g=jnp.ones((1, HIDDEN), jnp.float32),
            ln1_b=jnp.zeros((1, HIDDEN), jnp.float32),
            # fused QKV with 1/sqrt(head_dim) folded into the Q columns
            wqkv=jnp.concatenate([wq * scale, wk, wv], axis=1).astype(jnp.bfloat16),
            bqkv=jnp.zeros((1, 3 * HIDDEN), jnp.float32),
            # layer_scale_1 folded into the output projection
            wo=(wo * ls1).astype(jnp.bfloat16),
            bo=bo * ls1,
            ln2_g=jnp.ones((1, HIDDEN), jnp.float32),
            ln2_b=jnp.zeros((1, HIDDEN), jnp.float32),
            w1=w1.astype(jnp.bfloat16),
            b1=b1,
            # layer_scale_2 folded into the second MLP matmul
            w2=(w2 * ls2).astype(jnp.bfloat16),
            b2=b2 * ls2,
        ))
    # Stack per-layer params along a leading layer axis; statically indexed in-kernel.
    for name in LAYER_PARAMS:
        params[name] = jnp.stack([layer[name] for layer in per_layer], axis=0)
    return params


# ---------------- forward (wrapper = layout glue only, compute = one Pallas call) ----------------

def dino_image_encoder_forward(params, image):
    B = image.shape[0]
    g = IMAGE_SIZE // PATCH

    # Layout-only glue: non-overlapping 14x14 patch extraction in (c, kh, kw) row
    # order (== the Conv2d patch embed expressed as a matmul).  Resize/CenterCrop
    # are identity at this input size; value-range rescale + normalization are
    # folded into patch_w/patch_b.
    patches = image.reshape(B, 3, g, PATCH, g, PATCH)
    patches = patches.transpose(0, 2, 4, 1, 3, 5).reshape(B * NUM_PATCHES, PATCH_DIM)

    inputs = (patches, params['patch_w'], params['patch_b'], params['cls_pos0'],
              params['pos_patch'], params['ln_f_g'], params['ln_f_b'],
              *[params[name] for name in LAYER_PARAMS])

    vmem = pl.BlockSpec(memory_space=pltpu.MemorySpace.VMEM)   # whole array, VMEM-resident
    out = pl.pallas_call(
        fused_encoder_kernel,
        out_shape=jax.ShapeDtypeStruct((B, SEQ, HIDDEN), jnp.float32),
        in_specs=[vmem] * len(inputs),
        out_specs=vmem,
    )(*inputs)
    # TODO(synk): at real DINOv2 sizes (S~1370, D=768), reintroduce a grid over
    # layers (pipelined bf16 weights, raised vmem_limit_bytes) plus a leading
    # "parallel" batch axis so v7x's second TensorCore gets work.
    return out


def single_image_encoder_forward(params, image, mask=None):
    # SingleImageEncoder.forward: {'main': main_image_encoder(image, mask=mask)}
    # (the reference ImageEncoder.forward accepts `mask` but never uses it)
    return {'main': dino_image_encoder_forward(params, image)}


def unconditional_embedding(batch_size):
    return {'main': jnp.zeros((batch_size, SEQ, HIDDEN), jnp.float32)}


if __name__ == "__main__":
    key = jax.random.PRNGKey(0)
    pkey, xkey = jax.random.split(key)
    params = init_params(pkey)

    # synthetic image in [-1, 1], NCHW like PyTorch
    image = jax.random.uniform(xkey, (BATCH, 3, IMAGE_SIZE, IMAGE_SIZE),
                               jnp.float32, minval=-1.0, maxval=1.0)

    out = single_image_encoder_forward(params, image)
    jax.block_until_ready(out['main'])
    assert out['main'].shape == (BATCH, SEQ, HIDDEN)
    assert out['main'].dtype == jnp.float32
    print("KERNEL_OK")
</pallas_src>

<mosaic_0001>
module attributes {stable_mosaic.version = 11 : i64} {
  func.func @fused_encoder_kernel(%arg0: memref<8x588xf32, #tpu.memory_space<vmem>>, %arg1: memref<588x32xbf16, #tpu.memory_space<vmem>>, %arg2: memref<1x32xf32, #tpu.memory_space<vmem>>, %arg3: memref<1x1x32xf32, #tpu.memory_space<vmem>>, %arg4: memref<1x4x32xf32, #tpu.memory_space<vmem>>, %arg5: memref<1x32xf32, #tpu.memory_space<vmem>>, %arg6: memref<1x32xf32, #tpu.memory_space<vmem>>, %arg7: memref<2x1x32xf32, #tpu.memory_space<vmem>>, %arg8: memref<2x1x32xf32, #tpu.memory_space<vmem>>, %arg9: memref<2x32x96xbf16, #tpu.memory_space<vmem>>, %arg10: memref<2x1x96xf32, #tpu.memory_space<vmem>>, %arg11: memref<2x32x32xbf16, #tpu.memory_space<vmem>>, %arg12: memref<2x1x32xf32, #tpu.memory_space<vmem>>, %arg13: memref<2x1x32xf32, #tpu.memory_space<vmem>>, %arg14: memref<2x1x32xf32, #tpu.memory_space<vmem>>, %arg15: memref<2x32x128xbf16, #tpu.memory_space<vmem>>, %arg16: memref<2x1x128xf32, #tpu.memory_space<vmem>>, %arg17: memref<2x128x32xbf16, #tpu.memory_space<vmem>>, %arg18: memref<2x1x32xf32, #tpu.memory_space<vmem>>, %arg19: memref<2x5x32xf32, #tpu.memory_space<vmem>>) attributes {dimension_semantics = [], scalar_prefetch = 0 : i64, scratch_operands = 0 : i64, tpu.core_type = #tpu.core_type<tc>} {
    %c0 = arith.constant 0 : index
    %c0_0 = arith.constant 0 : index
    %0 = vector.load %arg0[%c0, %c0_0] : memref<8x588xf32, #tpu.memory_space<vmem>>, vector<8x588xf32>
    %1 = arith.truncf %0 : vector<8x588xf32> to vector<8x588xbf16>
    %c0_1 = arith.constant 0 : index
    %c0_2 = arith.constant 0 : index
    %2 = vector.load %arg1[%c0_1, %c0_2] : memref<588x32xbf16, #tpu.memory_space<vmem>>, vector<588x32xbf16>
    %cst = arith.constant dense<0.000000e+00> : vector<8x32xf32>
    %3 = tpu.matmul %1, %2, %cst {dimension_numbers = #tpu.dot_dimension_numbers<[1], [0], [0], [1], [0, 0, 1, 1], [], []>} : vector<8x588xbf16>, vector<588x32xbf16>, vector<8x32xf32> -> vector<8x32xf32>
    %c0_3 = arith.constant 0 : index
    %c0_4 = arith.constant 0 : index
    %4 = vector.load %arg2[%c0_3, %c0_4] : memref<1x32xf32, #tpu.memory_space<vmem>>, vector<1x32xf32>
    %5 = vector.broadcast %4 : vector<1x32xf32> to vector<8x32xf32>
    %6 = arith.addf %3, %5 : vector<8x32xf32>
    %c0_5 = arith.constant 0 : index
    %c0_6 = arith.constant 0 : index
    %c0_7 = arith.constant 0 : index
    %7 = vector.load %arg3[%c0_5, %c0_6, %c0_7] : memref<1x1x32xf32, #tpu.memory_space<vmem>>, vector<1x1x32xf32>
    %8 = vector.shape_cast %7 : vector<1x1x32xf32> to vector<1x1x32xf32>
    %9 = vector.broadcast %8 : vector<1x1x32xf32> to vector<2x1x32xf32>
    %c0_8 = arith.constant 0 : index
    %c0_9 = arith.constant 0 : index
    %c0_10 = arith.constant 0 : index
    %10 = vector.load %arg19[%c0_8, %c0_9, %c0_10] : memref<2x5x32xf32, #tpu.memory_space<vmem>>, vector<2x1x32xf32>
    tpu.vector_store %arg19[%c0_8, %c0_9, %c0_10], %9 {strides = array<i32>} : memref<2x5x32xf32, #tpu.memory_space<vmem>>, vector<2x1x32xf32>,
    %11 = vector.shape_cast %6 : vector<8x32xf32> to vector<2x4x32xf32>
    %c0_11 = arith.constant 0 : index
    %c0_12 = arith.constant 0 : index
    %c0_13 = arith.constant 0 : index
    %12 = vector.load %arg4[%c0_11, %c0_12, %c0_13] : memref<1x4x32xf32, #tpu.memory_space<vmem>>, vector<1x4x32xf32>
    %13 = vector.broadcast %12 : vector<1x4x32xf32> to vector<2x4x32xf32>
    %14 = arith.addf %11, %13 : vector<2x4x32xf32>
    %c0_14 = arith.constant 0 : index
    %c1 = arith.constant 1 : index
    %c0_15 = arith.constant 0 : index
    %15 = vector.load %arg19[%c0_14, %c1, %c0_15] : memref<2x5x32xf32, #tpu.memory_space<vmem>>, vector<2x4x32xf32>
    tpu.vector_store %arg19[%c0_14, %c1, %c0_15], %14 {strides = array<i32>} : memref<2x5x32xf32, #tpu.memory_space<vmem>>, vector<2x4x32xf32>,
    %c0_16 = arith.constant 0 : index
    %c0_17 = arith.constant 0 : index
    %c0_18 = arith.constant 0 : index
    %16 = vector.load %arg19[%c0_16, %c0_17, %c0_18] : memref<2x5x32xf32, #tpu.memory_space<vmem>>, vector<2x5x32xf32>
    %17 = vector.shape_cast %16 : vector<2x5x32xf32> to vector<10x32xf32>
    %c0_19 = arith.constant 0 : index
    %c0_20 = arith.constant 0 : index
    %c0_21 = arith.constant 0 : index
    %18 = vector.load %arg7[%c0_19, %c0_20, %c0_21] : memref<2x1x32xf32, #tpu.memory_space<vmem>>, vector<1x1x32xf32>
    %19 = vector.shape_cast %18 : vector<1x1x32xf32> to vector<1x32xf32>
    %c0_22 = arith.constant 0 : index
    %c0_23 = arith.constant 0 : index
    %c0_24 = arith.constant 0 : index
    %20 = vector.load %arg8[%c0_22, %c0_23, %c0_24] : memref<2x1x32xf32, #tpu.memory_space<vmem>>, vector<1x1x32xf32>
    %21 = vector.shape_cast %20 : vector<1x1x32xf32> to vector<1x32xf32>
    %cst_25 = arith.constant dense<0.000000e+00> : vector<10xf32>
    %22 = vector.multi_reduction <add>, %17, %cst_25 [1] : vector<10x32xf32> to vector<10xf32>
    %23 = vector.shape_cast %22 : vector<10xf32> to vector<10x1xf32>
    %cst_26 = arith.constant 3.200000e+01 : f32
    %24 = vector.broadcast %cst_26 : f32 to vector<10x1xf32>
    %25 = arith.divf %23, %24 : vector<10x1xf32>
    %26 = vector.broadcast %25 : vector<10x1xf32> to vector<10x32xf32>
    %27 = arith.subf %17, %26 : vector<10x32xf32>
    %28 = arith.mulf %27, %27 : vector<10x32xf32>
    %cst_27 = arith.constant dense<0.000000e+00> : vector<10xf32>
    %29 = vector.multi_reduction <add>, %28, %cst_27 [1] : vector<10x32xf32> to vector<10xf32>
    %30 = vector.shape_cast %29 : vector<10xf32> to vector<10x1xf32>
    %cst_28 = arith.constant 3.200000e+01 : f32
    %31 = vector.broadcast %cst_28 : f32 to vector<10x1xf32>
    %32 = arith.divf %30, %31 : vector<10x1xf32>
    %33 = vector.broadcast %25 : vector<10x1xf32> to vector<10x32xf32>
    %34 = arith.subf %17, %33 : vector<10x32xf32>
    %cst_29 = arith.constant 9.99999997E-7 : f32
    %35 = vector.broadcast %cst_29 : f32 to vector<10x1xf32>
    %36 = arith.addf %32, %35 : vector<10x1xf32>
    %37 = math.rsqrt %36 : vector<10x1xf32>
    %38 = vector.broadcast %37 : vector<10x1xf32> to vector<10x32xf32>
    %39 = arith.mulf %34, %38 : vector<10x32xf32>
    %40 = vector.broadcast %19 : vector<1x32xf32> to vector<10x32xf32>
    %41 = arith.mulf %39, %40 : vector<10x32xf32>
    %42 = vector.broadcast %21 : vector<1x32xf32> to vector<10x32xf32>
    %43 = arith.addf %41, %42 : vector<10x32xf32>
    %44 = arith.truncf %43 : vector<10x32xf32> to vector<10x32xbf16>
    %c0_30 = arith.constant 0 : index
    %c0_31 = arith.constant 0 : index
    %c0_32 = arith.constant 0 : index
    %45 = vector.load %arg9[%c0_30, %c0_31, %c0_32] : memref<2x32x96xbf16, #tpu.memory_space<vmem>>, vector<1x32x96xbf16>
    %46 = vector.shape_cast %45 : vector<1x32x96xbf16> to vector<32x96xbf16>
    %cst_33 = arith.constant dense<0.000000e+00> : vector<10x96xf32>
    %47 = tpu.matmul %44, %46, %cst_33 {dimension_numbers = #tpu.dot_dimension_numbers<[1], [0], [0], [1], [0, 0, 1, 1], [], []>} : vector<10x32xbf16>, vector<32x96xbf16>, vector<10x96xf32> -> vector<10x96xf32>
    %c0_34 = arith.constant 0 : index
    %c0_35 = arith.constant 0 : index
    %c0_36 = arith.constant 0 : index
    %48 = vector.load %arg10[%c0_34, %c0_35, %c0_36] : memref<2x1x96xf32, #tpu.memory_space<vmem>>, vector<1x1x96xf32>
    %49 = vector.shape_cast %48 : vector<1x1x96xf32> to vector<1x96xf32>
    %50 = vector.broadcast %49 : vector<1x96xf32> to vector<10x96xf32>
    %51 = arith.addf %47, %50 : vector<10x96xf32>
    %c0_37 = arith.constant 0 : index
    %c0_38 = arith.constant 0 : index
    %c0_39 = arith.constant 0 : index
    %52 = vector.load %arg11[%c0_37, %c0_38, %c0_39] : memref<2x32x32xbf16, #tpu.memory_space<vmem>>, vector<1x32x32xbf16>
    %53 = vector.shape_cast %52 : vector<1x32x32xbf16> to vector<32x32xbf16>
    %cst_40 = arith.constant 0.000000e+00 : f32
    %54 = vector.broadcast %cst_40 : f32 to vector<10x32xf32>
    %55 = vector.extract_strided_slice %51 {offsets = [0, 0], sizes = [10, 8], strides = [1, 1]} : vector<10x96xf32> to vector<10x8xf32>
    %56 = vector.shape_cast %55 : vector<10x8xf32> to vector<2x5x8xf32>
    %57 = vector.extract_strided_slice %51 {offsets = [0, 32], sizes = [10, 8], strides = [1, 1]} : vector<10x96xf32> to vector<10x8xf32>
    %58 = vector.shape_cast %57 : vector<10x8xf32> to vector<2x5x8xf32>
    %59 = vector.extract_strided_slice %51 {offsets = [0, 64], sizes = [10, 8], strides = [1, 1]} : vector<10x96xf32> to vector<10x8xf32>
    %60 = vector.shape_cast %59 : vector<10x8xf32> to vector<2x5x8xf32>
    %61 = arith.truncf %56 : vector<2x5x8xf32> to vector<2x5x8xbf16>
    %62 = arith.truncf %58 : vector<2x5x8xf32> to vector<2x5x8xbf16>
    "tpu.trace_start"() <{level = 10 : i32, message = "bqd,bkd->bqk"}> : () -> ()
    %cst_41 = arith.constant dense<0.000000e+00> : vector<2x5x5xf32>
    %63 = tpu.matmul %61, %62, %cst_41 {dimension_numbers = #tpu.dot_dimension_numbers<[2], [2], [1], [1], [0, 0, 0, 1, 1, 1], [0], [0]>} : vector<2x5x8xbf16>, vector<2x5x8xbf16>, vector<2x5x5xf32> -> vector<2x5x5xf32>
    "tpu.trace_stop"() : () -> ()
    %cst_42 = arith.constant dense<0xFF800000> : vector<2x5xf32>
    %64 = vector.multi_reduction <maximumf>, %63, %cst_42 [2] : vector<2x5x5xf32> to vector<2x5xf32>
    %65 = vector.shape_cast %64 : vector<2x5xf32> to vector<2x5x1xf32>
    %66 = vector.broadcast %65 : vector<2x5x1xf32> to vector<2x5x5xf32>
    %67 = arith.subf %63, %66 : vector<2x5x5xf32>
    %68 = math.exp %67 : vector<2x5x5xf32>
    %cst_43 = arith.constant dense<0.000000e+00> : vector<2x5xf32>
    %69 = vector.multi_reduction <add>, %68, %cst_43 [2] : vector<2x5x5xf32> to vector<2x5xf32>
    %70 = vector.shape_cast %69 : vector<2x5xf32> to vector<2x5x1xf32>
    %71 = tpu.reciprocal %70 {approx = true} : vector<2x5x1xf32> -> vector<2x5x1xf32>
    %72 = vector.broadcast %71 : vector<2x5x1xf32> to vector<2x5x5xf32>
    %73 = arith.mulf %68, %72 : vector<2x5x5xf32>
    %74 = arith.truncf %73 : vector<2x5x5xf32> to vector<2x5x5xbf16>
    %75 = arith.truncf %60 : vector<2x5x8xf32> to vector<2x5x8xbf16>
    "tpu.trace_start"() <{level = 10 : i32, message = "bqk,bkd->bqd"}> : () -> ()
    %cst_44 = arith.constant dense<0.000000e+00> : vector<2x5x8xf32>
    %76 = tpu.matmul %74, %75, %cst_44 {dimension_numbers = #tpu.dot_dimension_numbers<[2], [1], [1], [2], [0, 0, 0, 1, 1, 2], [0], [0]>} : vector<2x5x5xbf16>, vector<2x5x8xbf16>, vector<2x5x8xf32> -> vector<2x5x8xf32>
    "tpu.trace_stop"() : () -> ()
    %77 = vector.shape_cast %76 : vector<2x5x8xf32> to vector<10x8xf32>
    %78 = arith.truncf %77 : vector<10x8xf32> to vector<10x8xbf16>
    %79 = vector.extract_strided_slice %53 {offsets = [0, 0], sizes = [8, 32], strides = [1, 1]} : vector<32x32xbf16> to vector<8x32xbf16>
    %cst_45 = arith.constant dense<0.000000e+00> : vector<10x32xf32>
    %80 = tpu.matmul %78, %79, %cst_45 {dimension_numbers = #tpu.dot_dimension_numbers<[1], [0], [0], [1], [0, 0, 1, 1], [], []>} : vector<10x8xbf16>, vector<8x32xbf16>, vector<10x32xf32> -> vector<10x32xf32>
    %81 = arith.addf %54, %80 : vector<10x32xf32>
    %82 = vector.extract_strided_slice %51 {offsets = [0, 8], sizes = [10, 8], strides = [1, 1]} : vector<10x96xf32> to vector<10x8xf32>
    %83 = vector.shape_cast %82 : vector<10x8xf32> to vector<2x5x8xf32>
    %84 = vector.extract_strided_slice %51 {offsets = [0, 40], sizes = [10, 8], strides = [1, 1]} : vector<10x96xf32> to vector<10x8xf32>
    %85 = vector.shape_cast %84 : vector<10x8xf32> to vector<2x5x8xf32>
    %86 = vector.extract_strided_slice %51 {offsets = [0, 72], sizes = [10, 8], strides = [1, 1]} : vector<10x96xf32> to vector<10x8xf32>
    %87 = vector.shape_cast %86 : vector<10x8xf32> to vector<2x5x8xf32>
    %88 = arith.truncf %83 : vector<2x5x8xf32> to vector<2x5x8xbf16>
    %89 = arith.truncf %85 : vector<2x5x8xf32> to vector<2x5x8xbf16>
    "tpu.trace_start"() <{level = 10 : i32, message = "bqd,bkd->bqk"}> : () -> ()
    %cst_46 = arith.constant dense<0.000000e+00> : vector<2x5x5xf32>
    %90 = tpu.matmul %88, %89, %cst_46 {dimension_numbers = #tpu.dot_dimension_numbers<[2], [2], [1], [1], [0, 0, 0, 1, 1, 1], [0], [0]>} : vector<2x5x8xbf16>, vector<2x5x8xbf16>, vector<2x5x5xf32> -> vector<2x5x5xf32>
    "tpu.trace_stop"() : () -> ()
    %cst_47 = arith.constant dense<0xFF800000> : vector<2x5xf32>
    %91 = vector.multi_reduction <maximumf>, %90, %cst_47 [2] : vector<2x5x5xf32> to vector<2x5xf32>
    %92 = vector.shape_cast %91 : vector<2x5xf32> to vector<2x5x1xf32>
    %93 = vector.broadcast %92 : vector<2x5x1xf32> to vector<2x5x5xf32>
    %94 = arith.subf %90, %93 : vector<2x5x5xf32>
    %95 = math.exp %94 : vector<2x5x5xf32>
    %cst_48 = arith.constant dense<0.000000e+00> : vector<2x5xf32>
    %96 = vector.multi_reduction <add>, %95, %cst_48 [2] : vector<2x5x5xf32> to vector<2x5xf32>
    %97 = vector.shape_cast %96 : vector<2x5xf32> to vector<2x5x1xf32>
    %98 = tpu.reciprocal %97 {approx = true} : vector<2x5x1xf32> -> vector<2x5x1xf32>
    %99 = vector.broadcast %98 : vector<2x5x1xf32> to vector<2x5x5xf32>
    %100 = arith.mulf %95, %99 : vector<2x5x5xf32>
    %101 = arith.truncf %100 : vector<2x5x5xf32> to vector<2x5x5xbf16>
    %102 = arith.truncf %87 : vector<2x5x8xf32> to vector<2x5x8xbf16>
    "tpu.trace_start"() <{level = 10 : i32, message = "bqk,bkd->bqd"}> : () -> ()
    %cst_49 = arith.constant dense<0.000000e+00> : vector<2x5x8xf32>
    %103 = tpu.matmul %101, %102, %cst_49 {dimension_numbers = #tpu.dot_dimension_numbers<[2], [1], [1], [2], [0, 0, 0, 1, 1, 2], [0], [0]>} : vector<2x5x5xbf16>, vector<2x5x8xbf16>, vector<2x5x8xf32> -> vector<2x5x8xf32>
    "tpu.trace_stop"() : () -> ()
    %104 = vector.shape_cast %103 : vector<2x5x8xf32> to vector<10x8xf32>
    %105 = arith.truncf %104 : vector<10x8xf32> to vector<10x8xbf16>
    %106 = vector.extract_strided_slice %53 {offsets = [8, 0], sizes = [8, 32], strides = [1, 1]} : vector<32x32xbf16> to vector<8x32xbf16>
    %cst_50 = arith.constant dense<0.000000e+00> : vector<10x32xf32>
    %107 = tpu.matmul %105, %106, %cst_50 {dimension_numbers = #tpu.dot_dimension_numbers<[1], [0], [0], [1], [0, 0, 1, 1], [], []>} : vector<10x8xbf16>, vector<8x32xbf16>, vector<10x32xf32> -> vector<10x32xf32>
    %108 = arith.addf %81, %107 : vector<10x32xf32>
    %109 = vector.extract_strided_slice %51 {offsets = [0, 16], sizes = [10, 8], strides = [1, 1]} : vector<10x96xf32> to vector<10x8xf32>
    %110 = vector.shape_cast %109 : vector<10x8xf32> to vector<2x5x8xf32>
    %111 = vector.extract_strided_slice %51 {offsets = [0, 48], sizes = [10, 8], strides = [1, 1]} : vector<10x96xf32> to vector<10x8xf32>
    %112 = vector.shape_cast %111 : vector<10x8xf32> to vector<2x5x8xf32>
    %113 = vector.extract_strided_slice %51 {offsets = [0, 80], sizes = [10, 8], strides = [1, 1]} : vector<10x96xf32> to vector<10x8xf32>
    %114 = vector.shape_cast %113 : vector<10x8xf32> to vector<2x5x8xf32>
    %115 = arith.truncf %110 : vector<2x5x8xf32> to vector<2x5x8xbf16>
    %116 = arith.truncf %112 : vector<2x5x8xf32> to vector<2x5x8xbf16>
    "tpu.trace_start"() <{level = 10 : i32, message = "bqd,bkd->bqk"}> : () -> ()
    %cst_51 = arith.constant dense<0.000000e+00> : vector<2x5x5xf32>
    %117 = tpu.matmul %115, %116, %cst_51 {dimension_numbers = #tpu.dot_dimension_numbers<[2], [2], [1], [1], [0, 0, 0, 1, 1, 1], [0], [0]>} : vector<2x5x8xbf16>, vector<2x5x8xbf16>, vector<2x5x5xf32> -> vector<2x5x5xf32>
    "tpu.trace_stop"() : () -> ()
    %cst_52 = arith.constant dense<0xFF800000> : vector<2x5xf32>
    %118 = vector.multi_reduction <maximumf>, %117, %cst_52 [2] : vector<2x5x5xf32> to vector<2x5xf32>
    %119 = vector.shape_cast %118 : vector<2x5xf32> to vector<2x5x1xf32>
    %120 = vector.broadcast %119 : vector<2x5x1xf32> to vector<2x5x5xf32>
    %121 = arith.subf %117, %120 : vector<2x5x5xf32>
    %122 = math.exp %121 : vector<2x5x5xf32>
    %cst_53 = arith.constant dense<0.000000e+00> : vector<2x5xf32>
    %123 = vector.multi_reduction <add>, %122, %cst_53 [2] : vector<2x5x5xf32> to vector<2x5xf32>
    %124 = vector.shape_cast %123 : vector<2x5xf32> to vector<2x5x1xf32>
    %125 = tpu.reciprocal %124 {approx = true} : vector<2x5x1xf32> -> vector<2x5x1xf32>
    %126 = vector.broadcast %125 : vector<2x5x1xf32> to vector<2x5x5xf32>
    %127 = arith.mulf %122, %126 : vector<2x5x5xf32>
    %128 = arith.truncf %127 : vector<2x5x5xf32> to vector<2x5x5xbf16>
    %129 = arith.truncf %114 : vector<2x5x8xf32> to vector<2x5x8xbf16>
    "tpu.trace_start"() <{level = 10 : i32, message = "bqk,bkd->bqd"}> : () -> ()
    %cst_54 = arith.constant dense<0.000000e+00> : vector<2x5x8xf32>
    %130 = tpu.matmul %128, %129, %cst_54 {dimension_numbers = #tpu.dot_dimension_numbers<[2], [1], [1], [2], [0, 0, 0, 1, 1, 2], [0], [0]>} : vector<2x5x5xbf16>, vector<2x5x8xbf16>, vector<2x5x8xf32> -> vector<2x5x8xf32>
    "tpu.trace_stop"() : () -> ()
    %131 = vector.shape_cast %130 : vector<2x5x8xf32> to vector<10x8xf32>
    %132 = arith.truncf %131 : vector<10x8xf32> to vector<10x8xbf16>
    %133 = vector.extract_strided_slice %53 {offsets = [16, 0], sizes = [8, 32], strides = [1, 1]} : vector<32x32xbf16> to vector<8x32xbf16>
    %cst_55 = arith.constant dense<0.000000e+00> : vector<10x32xf32>
    %134 = tpu.matmul %132, %133, %cst_55 {dimension_numbers = #tpu.dot_dimension_numbers<[1], [0], [0], [1], [0, 0, 1, 1], [], []>} : vector<10x8xbf16>, vector<8x32xbf16>, vector<10x32xf32> -> vector<10x32xf32>
    %135 = arith.addf %108, %134 : vector<10x32xf32>
    %136 = vector.extract_strided_slice %51 {offsets = [0, 24], sizes = [10, 8], strides = [1, 1]} : vector<10x96xf32> to vector<10x8xf32>
    %137 = vector.shape_cast %136 : vector<10x8xf32> to vector<2x5x8xf32>
    %138 = vector.extract_strided_slice %51 {offsets = [0, 56], sizes = [10, 8], strides = [1, 1]} : vector<10x96xf32> to vector<10x8xf32>
    %139 = vector.shape_cast %138 : vector<10x8xf32> to vector<2x5x8xf32>
    %140 = vector.extract_strided_slice %51 {offsets = [0, 88], sizes = [10, 8], strides = [1, 1]} : vector<10x96xf32> to vector<10x8xf32>
    %141 = vector.shape_cast %140 : vector<10x8xf32> to vector<2x5x8xf32>
    %142 = arith.truncf %137 : vector<2x5x8xf32> to vector<2x5x8xbf16>
    %143 = arith.truncf %139 : vector<2x5x8xf32> to vector<2x5x8xbf16>
    "tpu.trace_start"() <{level = 10 : i32, message = "bqd,bkd->bqk"}> : () -> ()
    %cst_56 = arith.constant dense<0.000000e+00> : vector<2x5x5xf32>
    %144 = tpu.matmul %142, %143, %cst_56 {dimension_numbers = #tpu.dot_dimension_numbers<[2], [2], [1], [1], [0, 0, 0, 1, 1, 1], [0], [0]>} : vector<2x5x8xbf16>, vector<2x5x8xbf16>, vector<2x5x5xf32> -> vector<2x5x5xf32>
    "tpu.trace_stop"() : () -> ()
    %cst_57 = arith.constant dense<0xFF800000> : vector<2x5xf32>
    %145 = vector.multi_reduction <maximumf>, %144, %cst_57 [2] : vector<2x5x5xf32> to vector<2x5xf32>
    %146 = vector.shape_cast %145 : vector<2x5xf32> to vector<2x5x1xf32>
    %147 = vector.broadcast %146 : vector<2x5x1xf32> to vector<2x5x5xf32>
    %148 = arith.subf %144, %147 : vector<2x5x5xf32>
    %149 = math.exp %148 : vector<2x5x5xf32>
    %cst_58 = arith.constant dense<0.000000e+00> : vector<2x5xf32>
    %150 = vector.multi_reduction <add>, %149, %cst_58 [2] : vector<2x5x5xf32> to vector<2x5xf32>
    %151 = vector.shape_cast %150 : vector<2x5xf32> to vector<2x5x1xf32>
    %152 = tpu.reciprocal %151 {approx = true} : vector<2x5x1xf32> -> vector<2x5x1xf32>
    %153 = vector.broadcast %152 : vector<2x5x1xf32> to vector<2x5x5xf32>
    %154 = arith.mulf %149, %153 : vector<2x5x5xf32>
    %155 = arith.truncf %154 : vector<2x5x5xf32> to vector<2x5x5xbf16>
    %156 = arith.truncf %141 : vector<2x5x8xf32> to vector<2x5x8xbf16>
    "tpu.trace_start"() <{level = 10 : i32, message = "bqk,bkd->bqd"}> : () -> ()
    %cst_59 = arith.constant dense<0.000000e+00> : vector<2x5x8xf32>
    %157 = tpu.matmul %155, %156, %cst_59 {dimension_numbers = #tpu.dot_dimension_numbers<[2], [1], [1], [2], [0, 0, 0, 1, 1, 2], [0], [0]>} : vector<2x5x5xbf16>, vector<2x5x8xbf16>, vector<2x5x8xf32> -> vector<2x5x8xf32>
    "tpu.trace_stop"() : () -> ()
    %158 = vector.shape_cast %157 : vector<2x5x8xf32> to vector<10x8xf32>
    %159 = arith.truncf %158 : vector<10x8xf32> to vector<10x8xbf16>
    %160 = vector.extract_strided_slice %53 {offsets = [24, 0], sizes = [8, 32], strides = [1, 1]} : vector<32x32xbf16> to vector<8x32xbf16>
    %cst_60 = arith.constant dense<0.000000e+00> : vector<10x32xf32>
    %161 = tpu.matmul %159, %160, %cst_60 {dimension_numbers = #tpu.dot_dimension_numbers<[1], [0], [0], [1], [0, 0, 1, 1], [], []>} : vector<10x8xbf16>, vector<8x32xbf16>, vector<10x32xf32> -> vector<10x32xf32>
    %162 = arith.addf %135, %161 : vector<10x32xf32>
    %163 = arith.addf %17, %162 : vector<10x32xf32>
    %c0_61 = arith.constant 0 : index
    %c0_62 = arith.constant 0 : index
    %c0_63 = arith.constant 0 : index
    %164 = vector.load %arg12[%c0_61, %c0_62, %c0_63] : memref<2x1x32xf32, #tpu.memory_space<vmem>>, vector<1x1x32xf32>
    %165 = vector.shape_cast %164 : vector<1x1x32xf32> to vector<1x32xf32>
    %166 = vector.broadcast %165 : vector<1x32xf32> to vector<10x32xf32>
    %167 = arith.addf %163, %166 : vector<10x32xf32>
    %c0_64 = arith.constant 0 : index
    %c0_65 = arith.constant 0 : index
    %c0_66 = arith.constant 0 : index
    %168 = vector.load %arg13[%c0_64, %c0_65, %c0_66] : memref<2x1x32xf32, #tpu.memory_space<vmem>>, vector<1x1x32xf32>
    %169 = vector.shape_cast %168 : vector<1x1x32xf32> to vector<1x32xf32>
    %c0_67 = arith.constant 0 : index
    %c0_68 = arith.constant 0 : index
    %c0_69 = arith.constant 0 : index
    %170 = vector.load %arg14[%c0_67, %c0_68, %c0_69] : memref<2x1x32xf32, #tpu.memory_space<vmem>>, vector<1x1x32xf32>
    %171 = vector.shape_cast %170 : vector<1x1x32xf32> to vector<1x32xf32>
    %cst_70 = arith.constant dense<0.000000e+00> : vector<10xf32>
    %172 = vector.multi_reduction <add>, %167, %cst_70 [1] : vector<10x32xf32> to vector<10xf32>
    %173 = vector.shape_cast %172 : vector<10xf32> to vector<10x1xf32>
    %cst_71 = arith.constant 3.200000e+01 : f32
    %174 = vector.broadcast %cst_71 : f32 to vector<10x1xf32>
    %175 = arith.divf %173, %174 : vector<10x1xf32>
    %176 = vector.broadcast %175 : vector<10x1xf32> to vector<10x32xf32>
    %177 = arith.subf %167, %176 : vector<10x32xf32>
    %178 = arith.mulf %177, %177 : vector<10x32xf32>
    %cst_72 = arith.constant dense<0.000000e+00> : vector<10xf32>
    %179 = vector.multi_reduction <add>, %178, %cst_72 [1] : vector<10x32xf32> to vector<10xf32>
    %180 = vector.shape_cast %179 : vector<10xf32> to vector<10x1xf32>
    %cst_73 = arith.constant 3.200000e+01 : f32
    %181 = vector.broadcast %cst_73 : f32 to vector<10x1xf32>
    %182 = arith.divf %180, %181 : vector<10x1xf32>
    %183 = vector.broadcast %175 : vector<10x1xf32> to vector<10x32xf32>
    %184 = arith.subf %167, %183 : vector<10x32xf32>
    %cst_74 = arith.constant 9.99999997E-7 : f32
    %185 = vector.broadcast %cst_74 : f32 to vector<10x1xf32>
    %186 = arith.addf %182, %185 : vector<10x1xf32>
    %187 = math.rsqrt %186 : vector<10x1xf32>
    %188 = vector.broadcast %187 : vector<10x1xf32> to vector<10x32xf32>
    %189 = arith.mulf %184, %188 : vector<10x32xf32>
    %190 = vector.broadcast %169 : vector<1x32xf32> to vector<10x32xf32>
    %191 = arith.mulf %189, %190 : vector<10x32xf32>
    %192 = vector.broadcast %171 : vector<1x32xf32> to vector<10x32xf32>
    %193 = arith.addf %191, %192 : vector<10x32xf32>
    %194 = arith.truncf %193 : vector<10x32xf32> to vector<10x32xbf16>
    %c0_75 = arith.constant 0 : index
    %c0_76 = arith.constant 0 : index
    %c0_77 = arith.constant 0 : index
    %195 = vector.load %arg15[%c0_75, %c0_76, %c0_77] : memref<2x32x128xbf16, #tpu.memory_space<vmem>>, vector<1x32x128xbf16>
    %196 = vector.shape_cast %195 : vector<1x32x128xbf16> to vector<32x128xbf16>
    %cst_78 = arith.constant dense<0.000000e+00> : vector<10x128xf32>
    %197 = tpu.matmul %194, %196, %cst_78 {dimension_numbers = #tpu.dot_dimension_numbers<[1], [0], [0], [1], [0, 0, 1, 1], [], []>} : vector<10x32xbf16>, vector<32x128xbf16>, vector<10x128xf32> -> vector<10x128xf32>
    %c0_79 = arith.constant 0 : index
    %c0_80 = arith.constant 0 : index
    %c0_81 = arith.constant 0 : index
    %198 = vector.load %arg16[%c0_79, %c0_80, %c0_81] : memref<2x1x128xf32, #tpu.memory_space<vmem>>, vector<1x1x128xf32>
    %199 = vector.shape_cast %198 : vector<1x1x128xf32> to vector<1x128xf32>
    %200 = vector.broadcast %199 : vector<1x128xf32> to vector<10x128xf32>
    %201 = arith.addf %197, %200 : vector<10x128xf32>
    %cst_82 = arith.constant 5.000000e-01 : f32
    %202 = vector.broadcast %cst_82 : f32 to vector<10x128xf32>
    %203 = arith.mulf %202, %201 : vector<10x128xf32>
    %cst_83 = arith.constant 4.471500e-02 : f32
    %204 = vector.broadcast %cst_83 : f32 to vector<10x128xf32>
    %205 = arith.mulf %204, %201 : vector<10x128xf32>
    %206 = arith.mulf %205, %201 : vector<10x128xf32>
    %207 = arith.mulf %206, %201 : vector<10x128xf32>
    %208 = arith.addf %201, %207 : vector<10x128xf32>
    %cst_84 = arith.constant 0.797884583 : f32
    %209 = vector.broadcast %cst_84 : f32 to vector<10x128xf32>
    %210 = arith.mulf %209, %208 : vector<10x128xf32>
    %211 = math.tanh %210 : vector<10x128xf32>
    %cst_85 = arith.constant 1.000000e+00 : f32
    %212 = vector.broadcast %cst_85 : f32 to vector<10x128xf32>
    %213 = arith.addf %212, %211 : vector<10x128xf32>
    %214 = arith.mulf %203, %213 : vector<10x128xf32>
    %215 = arith.truncf %214 : vector<10x128xf32> to vector<10x128xbf16>
    %c0_86 = arith.constant 0 : index
    %c0_87 = arith.constant 0 : index
    %c0_88 = arith.constant 0 : index
    %216 = vector.load %arg17[%c0_86, %c0_87, %c0_88] : memref<2x128x32xbf16, #tpu.memory_space<vmem>>, vector<1x128x32xbf16>
    %217 = vector.shape_cast %216 : vector<1x128x32xbf16> to vector<128x32xbf16>
    %cst_89 = arith.constant dense<0.000000e+00> : vector<10x32xf32>
    %218 = tpu.matmul %215, %217, %cst_89 {dimension_numbers = #tpu.dot_dimension_numbers<[1], [0], [0], [1], [0, 0, 1, 1], [], []>} : vector<10x128xbf16>, vector<128x32xbf16>, vector<10x32xf32> -> vector<10x32xf32>
    %c0_90 = arith.constant 0 : index
    %c0_91 = arith.constant 0 : index
    %c0_92 = arith.constant 0 : index
    %219 = vector.load %arg18[%c0_90, %c0_91, %c0_92] : memref<2x1x32xf32, #tpu.memory_space<vmem>>, vector<1x1x32xf32>
    %220 = vector.shape_cast %219 : vector<1x1x32xf32> to vector<1x32xf32>
    %221 = vector.broadcast %220 : vector<1x32xf32> to vector<10x32xf32>
    %222 = arith.addf %218, %221 : vector<10x32xf32>
    %223 = arith.addf %167, %222 : vector<10x32xf32>
    %c1_93 = arith.constant 1 : index
    %c0_94 = arith.constant 0 : index
    %c0_95 = arith.constant 0 : index
    %224 = vector.load %arg7[%c1_93, %c0_94, %c0_95] : memref<2x1x32xf32, #tpu.memory_space<vmem>>, vector<1x1x32xf32>
    %225 = vector.shape_cast %224 : vector<1x1x32xf32> to vector<1x32xf32>
    %c1_96 = arith.constant 1 : index
    %c0_97 = arith.constant 0 : index
    %c0_98 = arith.constant 0 : index
    %226 = vector.load %arg8[%c1_96, %c0_97, %c0_98] : memref<2x1x32xf32, #tpu.memory_space<vmem>>, vector<1x1x32xf32>
    %227 = vector.shape_cast %226 : vector<1x1x32xf32> to vector<1x32xf32>
    %cst_99 = arith.constant dense<0.000000e+00> : vector<10xf32>
    %228 = vector.multi_reduction <add>, %223, %cst_99 [1] : vector<10x32xf32> to vector<10xf32>
    %229 = vector.shape_cast %228 : vector<10xf32> to vector<10x1xf32>
    %cst_100 = arith.constant 3.200000e+01 : f32
    %230 = vector.broadcast %cst_100 : f32 to vector<10x1xf32>
    %231 = arith.divf %229, %230 : vector<10x1xf32>
    %232 = vector.broadcast %231 : vector<10x1xf32> to vector<10x32xf32>
    %233 = arith.subf %223, %232 : vector<10x32xf32>
    %234 = arith.mulf %233, %233 : vector<10x32xf32>
    %cst_101 = arith.constant dense<0.000000e+00> : vector<10xf32>
    %235 = vector.multi_reduction <add>, %234, %cst_101 [1] : vector<10x32xf32> to vector<10xf32>
    %236 = vector.shape_cast %235 : vector<10xf32> to vector<10x1xf32>
    %cst_102 = arith.constant 3.200000e+01 : f32
    %237 = vector.broadcast %cst_102 : f32 to vector<10x1xf32>
    %238 = arith.divf %236, %237 : vector<10x1xf32>
    %239 = vector.broadcast %231 : vector<10x1xf32> to vector<10x32xf32>
    %240 = arith.subf %223, %239 : vector<10x32xf32>
    %cst_103 = arith.constant 9.99999997E-7 : f32
    %241 = vector.broadcast %cst_103 : f32 to vector<10x1xf32>
    %242 = arith.addf %238, %241 : vector<10x1xf32>
    %243 = math.rsqrt %242 : vector<10x1xf32>
    %244 = vector.broadcast %243 : vector<10x1xf32> to vector<10x32xf32>
    %245 = arith.mulf %240, %244 : vector<10x32xf32>
    %246 = vector.broadcast %225 : vector<1x32xf32> to vector<10x32xf32>
    %247 = arith.mulf %245, %246 : vector<10x32xf32>
    %248 = vector.broadcast %227 : vector<1x32xf32> to vector<10x32xf32>
    %249 = arith.addf %247, %248 : vector<10x32xf32>
    %250 = arith.truncf %249 : vector<10x32xf32> to vector<10x32xbf16>
    %c1_104 = arith.constant 1 : index
    %c0_105 = arith.constant 0 : index
    %c0_106 = arith.constant 0 : index
    %251 = vector.load %arg9[%c1_104, %c0_105, %c0_106] : memref<2x32x96xbf16, #tpu.memory_space<vmem>>, vector<1x32x96xbf16>
    %252 = vector.shape_cast %251 : vector<1x32x96xbf16> to vector<32x96xbf16>
    %cst_107 = arith.constant dense<0.000000e+00> : vector<10x96xf32>
    %253 = tpu.matmul %250, %252, %cst_107 {dimension_numbers = #tpu.dot_dimension_numbers<[1], [0], [0], [1], [0, 0, 1, 1], [], []>} : vector<10x32xbf16>, vector<32x96xbf16>, vector<10x96xf32> -> vector<10x96xf32>
    %c1_108 = arith.constant 1 : index
    %c0_109 = arith.constant 0 : index
    %c0_110 = arith.constant 0 : index
    %254 = vector.load %arg10[%c1_108, %c0_109, %c0_110] : memref<2x1x96xf32, #tpu.memory_space<vmem>>, vector<1x1x96xf32>
    %255 = vector.shape_cast %254 : vector<1x1x96xf32> to vector<1x96xf32>
    %256 = vector.broadcast %255 : vector<1x96xf32> to vector<10x96xf32>
    %257 = arith.addf %253, %256 : vector<10x96xf32>
    %c1_111 = arith.constant 1 : index
    %c0_112 = arith.constant 0 : index
    %c0_113 = arith.constant 0 : index
    %258 = vector.load %arg11[%c1_111, %c0_112, %c0_113] : memref<2x32x32xbf16, #tpu.memory_space<vmem>>, vector<1x32x32xbf16>
    %259 = vector.shape_cast %258 : vector<1x32x32xbf16> to vector<32x32xbf16>
    %cst_114 = arith.constant 0.000000e+00 : f32
    %260 = vector.broadcast %cst_114 : f32 to vector<10x32xf32>
    %261 = vector.extract_strided_slice %257 {offsets = [0, 0], sizes = [10, 8], strides = [1, 1]} : vector<10x96xf32> to vector<10x8xf32>
    %262 = vector.shape_cast %261 : vector<10x8xf32> to vector<2x5x8xf32>
    %263 = vector.extract_strided_slice %257 {offsets = [0, 32], sizes = [10, 8], strides = [1, 1]} : vector<10x96xf32> to vector<10x8xf32>
    %264 = vector.shape_cast %263 : vector<10x8xf32> to vector<2x5x8xf32>
    %265 = vector.extract_strided_slice %257 {offsets = [0, 64], sizes = [10, 8], strides = [1, 1]} : vector<10x96xf32> to vector<10x8xf32>
    %266 = vector.shape_cast %265 : vector<10x8xf32> to vector<2x5x8xf32>
    %267 = arith.truncf %262 : vector<2x5x8xf32> to vector<2x5x8xbf16>
    %268 = arith.truncf %264 : vector<2x5x8xf32> to vector<2x5x8xbf16>
    "tpu.trace_start"() <{level = 10 : i32, message = "bqd,bkd->bqk"}> : () -> ()
    %cst_115 = arith.constant dense<0.000000e+00> : vector<2x5x5xf32>
    %269 = tpu.matmul %267, %268, %cst_115 {dimension_numbers = #tpu.dot_dimension_numbers<[2], [2], [1], [1], [0, 0, 0, 1, 1, 1], [0], [0]>} : vector<2x5x8xbf16>, vector<2x5x8xbf16>, vector<2x5x5xf32> -> vector<2x5x5xf32>
    "tpu.trace_stop"() : () -> ()
    %cst_116 = arith.constant dense<0xFF800000> : vector<2x5xf32>
    %270 = vector.multi_reduction <maximumf>, %269, %cst_116 [2] : vector<2x5x5xf32> to vector<2x5xf32>
    %271 = vector.shape_cast %270 : vector<2x5xf32> to vector<2x5x1xf32>
    %272 = vector.broadcast %271 : vector<2x5x1xf32> to vector<2x5x5xf32>
    %273 = arith.subf %269, %272 : vector<2x5x5xf32>
    %274 = math.exp %273 : vector<2x5x5xf32>
    %cst_117 = arith.constant dense<0.000000e+00> : vector<2x5xf32>
    %275 = vector.multi_reduction <add>, %274, %cst_117 [2] : vector<2x5x5xf32> to vector<2x5xf32>
    %276 = vector.shape_cast %275 : vector<2x5xf32> to vector<2x5x1xf32>
    %277 = tpu.reciprocal %276 {approx = true} : vector<2x5x1xf32> -> vector<2x5x1xf32>
    %278 = vector.broadcast %277 : vector<2x5x1xf32> to vector<2x5x5xf32>
    %279 = arith.mulf %274, %278 : vector<2x5x5xf32>
    %280 = arith.truncf %279 : vector<2x5x5xf32> to vector<2x5x5xbf16>
    %281 = arith.truncf %266 : vector<2x5x8xf32> to vector<2x5x8xbf16>
    "tpu.trace_start"() <{level = 10 : i32, message = "bqk,bkd->bqd"}> : () -> ()
    %cst_118 = arith.constant dense<0.000000e+00> : vector<2x5x8xf32>
    %282 = tpu.matmul %280, %281, %cst_118 {dimension_numbers = #tpu.dot_dimension_numbers<[2], [1], [1], [2], [0, 0, 0, 1, 1, 2], [0], [0]>} : vector<2x5x5xbf16>, vector<2x5x8xbf16>, vector<2x5x8xf32> -> vector<2x5x8xf32>
    "tpu.trace_stop"() : () -> ()
    %283 = vector.shape_cast %282 : vector<2x5x8xf32> to vector<10x8xf32>
    %284 = arith.truncf %283 : vector<10x8xf32> to vector<10x8xbf16>
    %285 = vector.extract_strided_slice %259 {offsets = [0, 0], sizes = [8, 32], strides = [1, 1]} : vector<32x32xbf16> to vector<8x32xbf16>
    %cst_119 = arith.constant dense<0.000000e+00> : vector<10x32xf32>
    %286 = tpu.matmul %284, %285, %cst_119 {dimension_numbers = #tpu.dot_dimension_numbers<[1], [0], [0], [1], [0, 0, 1, 1], [], []>} : vector<10x8xbf16>, vector<8x32xbf16>, vector<10x32xf32> -> vector<10x32xf32>
    %287 = arith.addf %260, %286 : vector<10x32xf32>
    %288 = vector.extract_strided_slice %257 {offsets = [0, 8], sizes = [10, 8], strides = [1, 1]} : vector<10x96xf32> to vector<10x8xf32>
    %289 = vector.shape_cast %288 : vector<10x8xf32> to vector<2x5x8xf32>
    %290 = vector.extract_strided_slice %257 {offsets = [0, 40], sizes = [10, 8], strides = [1, 1]} : vector<10x96xf32> to vector<10x8xf32>
    %291 = vector.shape_cast %290 : vector<10x8xf32> to vector<2x5x8xf32>
    %292 = vector.extract_strided_slice %257 {offsets = [0, 72], sizes = [10, 8], strides = [1, 1]} : vector<10x96xf32> to vector<10x8xf32>
    %293 = vector.shape_cast %292 : vector<10x8xf32> to vector<2x5x8xf32>
    %294 = arith.truncf %289 : vector<2x5x8xf32> to vector<2x5x8xbf16>
    %295 = arith.truncf %291 : vector<2x5x8xf32> to vector<2x5x8xbf16>
    "tpu.trace_start"() <{level = 10 : i32, message = "bqd,bkd->bqk"}> : () -> ()
    %cst_120 = arith.constant dense<0.000000e+00> : vector<2x5x5xf32>
    %296 = tpu.matmul %294, %295, %cst_120 {dimension_numbers = #tpu.dot_dimension_numbers<[2], [2], [1], [1], [0, 0, 0, 1, 1, 1], [0], [0]>} : vector<2x5x8xbf16>, vector<2x5x8xbf16>, vector<2x5x5xf32> -> vector<2x5x5xf32>
    "tpu.trace_stop"() : () -> ()
    %cst_121 = arith.constant dense<0xFF800000> : vector<2x5xf32>
    %297 = vector.multi_reduction <maximumf>, %296, %cst_121 [2] : vector<2x5x5xf32> to vector<2x5xf32>
    %298 = vector.shape_cast %297 : vector<2x5xf32> to vector<2x5x1xf32>
    %299 = vector.broadcast %298 : vector<2x5x1xf32> to vector<2x5x5xf32>
    %300 = arith.subf %296, %299 : vector<2x5x5xf32>
    %301 = math.exp %300 : vector<2x5x5xf32>
    %cst_122 = arith.constant dense<0.000000e+00> : vector<2x5xf32>
    %302 = vector.multi_reduction <add>, %301, %cst_122 [2] : vector<2x5x5xf32> to vector<2x5xf32>
    %303 = vector.shape_cast %302 : vector<2x5xf32> to vector<2x5x1xf32>
    %304 = tpu.reciprocal %303 {approx = true} : vector<2x5x1xf32> -> vector<2x5x1xf32>
    %305 = vector.broadcast %304 : vector<2x5x1xf32> to vector<2x5x5xf32>
    %306 = arith.mulf %301, %305 : vector<2x5x5xf32>
    %307 = arith.truncf %306 : vector<2x5x5xf32> to vector<2x5x5xbf16>
    %308 = arith.truncf %293 : vector<2x5x8xf32> to vector<2x5x8xbf16>
    "tpu.trace_start"() <{level = 10 : i32, message = "bqk,bkd->bqd"}> : () -> ()
    %cst_123 = arith.constant dense<0.000000e+00> : vector<2x5x8xf32>
    %309 = tpu.matmul %307, %308, %cst_123 {dimension_numbers = #tpu.dot_dimension_numbers<[2], [1], [1], [2], [0, 0, 0, 1, 1, 2], [0], [0]>} : vector<2x5x5xbf16>, vector<2x5x8xbf16>, vector<2x5x8xf32> -> vector<2x5x8xf32>
    "tpu.trace_stop"() : () -> ()
    %310 = vector.shape_cast %309 : vector<2x5x8xf32> to vector<10x8xf32>
    %311 = arith.truncf %310 : vector<10x8xf32> to vector<10x8xbf16>
    %312 = vector.extract_strided_slice %259 {offsets = [8, 0], sizes = [8, 32], strides = [1, 1]} : vector<32x32xbf16> to vector<8x32xbf16>
    %cst_124 = arith.constant dense<0.000000e+00> : vector<10x32xf32>
    %313 = tpu.matmul %311, %312, %cst_124 {dimension_numbers = #tpu.dot_dimension_numbers<[1], [0], [0], [1], [0, 0, 1, 1], [], []>} : vector<10x8xbf16>, vector<8x32xbf16>, vector<10x32xf32> -> vector<10x32xf32>
    %314 = arith.addf %287, %313 : vector<10x32xf32>
    %315 = vector.extract_strided_slice %257 {offsets = [0, 16], sizes = [10, 8], strides = [1, 1]} : vector<10x96xf32> to vector<10x8xf32>
    %316 = vector.shape_cast %315 : vector<10x8xf32> to vector<2x5x8xf32>
    %317 = vector.extract_strided_slice %257 {offsets = [0, 48], sizes = [10, 8], strides = [1, 1]} : vector<10x96xf32> to vector<10x8xf32>
    %318 = vector.shape_cast %317 : vector<10x8xf32> to vector<2x5x8xf32>
    %319 = vector.extract_strided_slice %257 {offsets = [0, 80], sizes = [10, 8], strides = [1, 1]} : vector<10x96xf32> to vector<10x8xf32>
    %320 = vector.shape_cast %319 : vector<10x8xf32> to vector<2x5x8xf32>
    %321 = arith.truncf %316 : vector<2x5x8xf32> to vector<2x5x8xbf16>
    %322 = arith.truncf %318 : vector<2x5x8xf32> to vector<2x5x8xbf16>
    "tpu.trace_start"() <{level = 10 : i32, message = "bqd,bkd->bqk"}> : () -> ()
    %cst_125 = arith.constant dense<0.000000e+00> : vector<2x5x5xf32>
    %323 = tpu.matmul %321, %322, %cst_125 {dimension_numbers = #tpu.dot_dimension_numbers<[2], [2], [1], [1], [0, 0, 0, 1, 1, 1], [0], [0]>} : vector<2x5x8xbf16>, vector<2x5x8xbf16>, vector<2x5x5xf32> -> vector<2x5x5xf32>
    "tpu.trace_stop"() : () -> ()
    %cst_126 = arith.constant dense<0xFF800000> : vector<2x5xf32>
    %324 = vector.multi_reduction <maximumf>, %323, %cst_126 [2] : vector<2x5x5xf32> to vector<2x5xf32>
    %325 = vector.shape_cast %324 : vector<2x5xf32> to vector<2x5x1xf32>
    %326 = vector.broadcast %325 : vector<2x5x1xf32> to vector<2x5x5xf32>
    %327 = arith.subf %323, %326 : vector<2x5x5xf32>
    %328 = math.exp %327 : vector<2x5x5xf32>
    %cst_127 = arith.constant dense<0.000000e+00> : vector<2x5xf32>
    %329 = vector.multi_reduction <add>, %328, %cst_127 [2] : vector<2x5x5xf32> to vector<2x5xf32>
    %330 = vector.shape_cast %329 : vector<2x5xf32> to vector<2x5x1xf32>
    %331 = tpu.reciprocal %330 {approx = true} : vector<2x5x1xf32> -> vector<2x5x1xf32>
    %332 = vector.broadcast %331 : vector<2x5x1xf32> to vector<2x5x5xf32>
    %333 = arith.mulf %328, %332 : vector<2x5x5xf32>
    %334 = arith.truncf %333 : vector<2x5x5xf32> to vector<2x5x5xbf16>
    %335 = arith.truncf %320 : vector<2x5x8xf32> to vector<2x5x8xbf16>
    "tpu.trace_start"() <{level = 10 : i32, message = "bqk,bkd->bqd"}> : () -> ()
    %cst_128 = arith.constant dense<0.000000e+00> : vector<2x5x8xf32>
    %336 = tpu.matmul %334, %335, %cst_128 {dimension_numbers = #tpu.dot_dimension_numbers<[2], [1], [1], [2], [0, 0, 0, 1, 1, 2], [0], [0]>} : vector<2x5x5xbf16>, vector<2x5x8xbf16>, vector<2x5x8xf32> -> vector<2x5x8xf32>
    "tpu.trace_stop"() : () -> ()
    %337 = vector.shape_cast %336 : vector<2x5x8xf32> to vector<10x8xf32>
    %338 = arith.truncf %337 : vector<10x8xf32> to vector<10x8xbf16>
    %339 = vector.extract_strided_slice %259 {offsets = [16, 0], sizes = [8, 32], strides = [1, 1]} : vector<32x32xbf16> to vector<8x32xbf16>
    %cst_129 = arith.constant dense<0.000000e+00> : vector<10x32xf32>
    %340 = tpu.matmul %338, %339, %cst_129 {dimension_numbers = #tpu.dot_dimension_numbers<[1], [0], [0], [1], [0, 0, 1, 1], [], []>} : vector<10x8xbf16>, vector<8x32xbf16>, vector<10x32xf32> -> vector<10x32xf32>
    %341 = arith.addf %314, %340 : vector<10x32xf32>
    %342 = vector.extract_strided_slice %257 {offsets = [0, 24], sizes = [10, 8], strides = [1, 1]} : vector<10x96xf32> to vector<10x8xf32>
    %343 = vector.shape_cast %342 : vector<10x8xf32> to vector<2x5x8xf32>
    %344 = vector.extract_strided_slice %257 {offsets = [0, 56], sizes = [10, 8], strides = [1, 1]} : vector<10x96xf32> to vector<10x8xf32>
    %345 = vector.shape_cast %344 : vector<10x8xf32> to vector<2x5x8xf32>
    %346 = vector.extract_strided_slice %257 {offsets = [0, 88], sizes = [10, 8], strides = [1, 1]} : vector<10x96xf32> to vector<10x8xf32>
    %347 = vector.shape_cast %346 : vector<10x8xf32> to vector<2x5x8xf32>
    %348 = arith.truncf %343 : vector<2x5x8xf32> to vector<2x5x8xbf16>
    %349 = arith.truncf %345 : vector<2x5x8xf32> to vector<2x5x8xbf16>
    "tpu.trace_start"() <{level = 10 : i32, message = "bqd,bkd->bqk"}> : () -> ()
    %cst_130 = arith.constant dense<0.000000e+00> : vector<2x5x5xf32>
    %350 = tpu.matmul %348, %349, %cst_130 {dimension_numbers = #tpu.dot_dimension_numbers<[2], [2], [1], [1], [0, 0, 0, 1, 1, 1], [0], [0]>} : vector<2x5x8xbf16>, vector<2x5x8xbf16>, vector<2x5x5xf32> -> vector<2x5x5xf32>
    "tpu.trace_stop"() : () -> ()
    %cst_131 = arith.constant dense<0xFF800000> : vector<2x5xf32>
    %351 = vector.multi_reduction <maximumf>, %350, %cst_131 [2] : vector<2x5x5xf32> to vector<2x5xf32>
    %352 = vector.shape_cast %351 : vector<2x5xf32> to vector<2x5x1xf32>
    %353 = vector.broadcast %352 : vector<2x5x1xf32> to vector<2x5x5xf32>
    %354 = arith.subf %350, %353 : vector<2x5x5xf32>
    %355 = math.exp %354 : vector<2x5x5xf32>
    %cst_132 = arith.constant dense<0.000000e+00> : vector<2x5xf32>
    %356 = vector.multi_reduction <add>, %355, %cst_132 [2] : vector<2x5x5xf32> to vector<2x5xf32>
    %357 = vector.shape_cast %356 : vector<2x5xf32> to vector<2x5x1xf32>
    %358 = tpu.reciprocal %357 {approx = true} : vector<2x5x1xf32> -> vector<2x5x1xf32>
    %359 = vector.broadcast %358 : vector<2x5x1xf32> to vector<2x5x5xf32>
    %360 = arith.mulf %355, %359 : vector<2x5x5xf32>
    %361 = arith.truncf %360 : vector<2x5x5xf32> to vector<2x5x5xbf16>
    %362 = arith.truncf %347 : vector<2x5x8xf32> to vector<2x5x8xbf16>
    "tpu.trace_start"() <{level = 10 : i32, message = "bqk,bkd->bqd"}> : () -> ()
    %cst_133 = arith.constant dense<0.000000e+00> : vector<2x5x8xf32>
    %363 = tpu.matmul %361, %362, %cst_133 {dimension_numbers = #tpu.dot_dimension_numbers<[2], [1], [1], [2], [0, 0, 0, 1, 1, 2], [0], [0]>} : vector<2x5x5xbf16>, vector<2x5x8xbf16>, vector<2x5x8xf32> -> vector<2x5x8xf32>
    "tpu.trace_stop"() : () -> ()
    %364 = vector.shape_cast %363 : vector<2x5x8xf32> to vector<10x8xf32>
    %365 = arith.truncf %364 : vector<10x8xf32> to vector<10x8xbf16>
    %366 = vector.extract_strided_slice %259 {offsets = [24, 0], sizes = [8, 32], strides = [1, 1]} : vector<32x32xbf16> to vector<8x32xbf16>
    %cst_134 = arith.constant dense<0.000000e+00> : vector<10x32xf32>
    %367 = tpu.matmul %365, %366, %cst_134 {dimension_numbers = #tpu.dot_dimension_numbers<[1], [0], [0], [1], [0, 0, 1, 1], [], []>} : vector<10x8xbf16>, vector<8x32xbf16>, vector<10x32xf32> -> vector<10x32xf32>
    %368 = arith.addf %341, %367 : vector<10x32xf32>
    %369 = arith.addf %223, %368 : vector<10x32xf32>
    %c1_135 = arith.constant 1 : index
    %c0_136 = arith.constant 0 : index
    %c0_137 = arith.constant 0 : index
    %370 = vector.load %arg12[%c1_135, %c0_136, %c0_137] : memref<2x1x32xf32, #tpu.memory_space<vmem>>, vector<1x1x32xf32>
    %371 = vector.shape_cast %370 : vector<1x1x32xf32> to vector<1x32xf32>
    %372 = vector.broadcast %371 : vector<1x32xf32> to vector<10x32xf32>
    %373 = arith.addf %369, %372 : vector<10x32xf32>
    %c1_138 = arith.constant 1 : index
    %c0_139 = arith.constant 0 : index
    %c0_140 = arith.constant 0 : index
    %374 = vector.load %arg13[%c1_138, %c0_139, %c0_140] : memref<2x1x32xf32, #tpu.memory_space<vmem>>, vector<1x1x32xf32>
    %375 = vector.shape_cast %374 : vector<1x1x32xf32> to vector<1x32xf32>
    %c1_141 = arith.constant 1 : index
    %c0_142 = arith.constant 0 : index
    %c0_143 = arith.constant 0 : index
    %376 = vector.load %arg14[%c1_141, %c0_142, %c0_143] : memref<2x1x32xf32, #tpu.memory_space<vmem>>, vector<1x1x32xf32>
    %377 = vector.shape_cast %376 : vector<1x1x32xf32> to vector<1x32xf32>
    %cst_144 = arith.constant dense<0.000000e+00> : vector<10xf32>
    %378 = vector.multi_reduction <add>, %373, %cst_144 [1] : vector<10x32xf32> to vector<10xf32>
    %379 = vector.shape_cast %378 : vector<10xf32> to vector<10x1xf32>
    %cst_145 = arith.constant 3.200000e+01 : f32
    %380 = vector.broadcast %cst_145 : f32 to vector<10x1xf32>
    %381 = arith.divf %379, %380 : vector<10x1xf32>
    %382 = vector.broadcast %381 : vector<10x1xf32> to vector<10x32xf32>
    %383 = arith.subf %373, %382 : vector<10x32xf32>
    %384 = arith.mulf %383, %383 : vector<10x32xf32>
    %cst_146 = arith.constant dense<0.000000e+00> : vector<10xf32>
    %385 = vector.multi_reduction <add>, %384, %cst_146 [1] : vector<10x32xf32> to vector<10xf32>
    %386 = vector.shape_cast %385 : vector<10xf32> to vector<10x1xf32>
    %cst_147 = arith.constant 3.200000e+01 : f32
    %387 = vector.broadcast %cst_147 : f32 to vector<10x1xf32>
    %388 = arith.divf %386, %387 : vector<10x1xf32>
    %389 = vector.broadcast %381 : vector<10x1xf32> to vector<10x32xf32>
    %390 = arith.subf %373, %389 : vector<10x32xf32>
    %cst_148 = arith.constant 9.99999997E-7 : f32
    %391 = vector.broadcast %cst_148 : f32 to vector<10x1xf32>
    %392 = arith.addf %388, %391 : vector<10x1xf32>
    %393 = math.rsqrt %392 : vector<10x1xf32>
    %394 = vector.broadcast %393 : vector<10x1xf32> to vector<10x32xf32>
    %395 = arith.mulf %390, %394 : vector<10x32xf32>
    %396 = vector.broadcast %375 : vector<1x32xf32> to vector<10x32xf32>
    %397 = arith.mulf %395, %396 : vector<10x32xf32>
    %398 = vector.broadcast %377 : vector<1x32xf32> to vector<10x32xf32>
    %399 = arith.addf %397, %398 : vector<10x32xf32>
    %400 = arith.truncf %399 : vector<10x32xf32> to vector<10x32xbf16>
    %c1_149 = arith.constant 1 : index
    %c0_150 = arith.constant 0 : index
    %c0_151 = arith.constant 0 : index
    %401 = vector.load %arg15[%c1_149, %c0_150, %c0_151] : memref<2x32x128xbf16, #tpu.memory_space<vmem>>, vector<1x32x128xbf16>
    %402 = vector.shape_cast %401 : vector<1x32x128xbf16> to vector<32x128xbf16>
    %cst_152 = arith.constant dense<0.000000e+00> : vector<10x128xf32>
    %403 = tpu.matmul %400, %402, %cst_152 {dimension_numbers = #tpu.dot_dimension_numbers<[1], [0], [0], [1], [0, 0, 1, 1], [], []>} : vector<10x32xbf16>, vector<32x128xbf16>, vector<10x128xf32> -> vector<10x128xf32>
    %c1_153 = arith.constant 1 : index
    %c0_154 = arith.constant 0 : index
    %c0_155 = arith.constant 0 : index
    %404 = vector.load %arg16[%c1_153, %c0_154, %c0_155] : memref<2x1x128xf32, #tpu.memory_space<vmem>>, vector<1x1x128xf32>
    %405 = vector.shape_cast %404 : vector<1x1x128xf32> to vector<1x128xf32>
    %406 = vector.broadcast %405 : vector<1x128xf32> to vector<10x128xf32>
    %407 = arith.addf %403, %406 : vector<10x128xf32>
    %cst_156 = arith.constant 5.000000e-01 : f32
    %408 = vector.broadcast %cst_156 : f32 to vector<10x128xf32>
    %409 = arith.mulf %408, %407 : vector<10x128xf32>
    %cst_157 = arith.constant 4.471500e-02 : f32
    %410 = vector.broadcast %cst_157 : f32 to vector<10x128xf32>
    %411 = arith.mulf %410, %407 : vector<10x128xf32>
    %412 = arith.mulf %411, %407 : vector<10x128xf32>
    %413 = arith.mulf %412, %407 : vector<10x128xf32>
    %414 = arith.addf %407, %413 : vector<10x128xf32>
    %cst_158 = arith.constant 0.797884583 : f32
    %415 = vector.broadcast %cst_158 : f32 to vector<10x128xf32>
    %416 = arith.mulf %415, %414 : vector<10x128xf32>
    %417 = math.tanh %416 : vector<10x128xf32>
    %cst_159 = arith.constant 1.000000e+00 : f32
    %418 = vector.broadcast %cst_159 : f32 to vector<10x128xf32>
    %419 = arith.addf %418, %417 : vector<10x128xf32>
    %420 = arith.mulf %409, %419 : vector<10x128xf32>
    %421 = arith.truncf %420 : vector<10x128xf32> to vector<10x128xbf16>
    %c1_160 = arith.constant 1 : index
    %c0_161 = arith.constant 0 : index
    %c0_162 = arith.constant 0 : index
    %422 = vector.load %arg17[%c1_160, %c0_161, %c0_162] : memref<2x128x32xbf16, #tpu.memory_space<vmem>>, vector<1x128x32xbf16>
    %423 = vector.shape_cast %422 : vector<1x128x32xbf16> to vector<128x32xbf16>
    %cst_163 = arith.constant dense<0.000000e+00> : vector<10x32xf32>
    %424 = tpu.matmul %421, %423, %cst_163 {dimension_numbers = #tpu.dot_dimension_numbers<[1], [0], [0], [1], [0, 0, 1, 1], [], []>} : vector<10x128xbf16>, vector<128x32xbf16>, vector<10x32xf32> -> vector<10x32xf32>
    %c1_164 = arith.constant 1 : index
    %c0_165 = arith.constant 0 : index
    %c0_166 = arith.constant 0 : index
    %425 = vector.load %arg18[%c1_164, %c0_165, %c0_166] : memref<2x1x32xf32, #tpu.memory_space<vmem>>, vector<1x1x32xf32>
    %426 = vector.shape_cast %425 : vector<1x1x32xf32> to vector<1x32xf32>
    %427 = vector.broadcast %426 : vector<1x32xf32> to vector<10x32xf32>
    %428 = arith.addf %424, %427 : vector<10x32xf32>
    %429 = arith.addf %373, %428 : vector<10x32xf32>
    %c0_167 = arith.constant 0 : index
    %c0_168 = arith.constant 0 : index
    %430 = vector.load %arg5[%c0_167, %c0_168] : memref<1x32xf32, #tpu.memory_space<vmem>>, vector<1x32xf32>
    %c0_169 = arith.constant 0 : index
    %c0_170 = arith.constant 0 : index
    %431 = vector.load %arg6[%c0_169, %c0_170] : memref<1x32xf32, #tpu.memory_space<vmem>>, vector<1x32xf32>
    %cst_171 = arith.constant dense<0.000000e+00> : vector<10xf32>
    %432 = vector.multi_reduction <add>, %429, %cst_171 [1] : vector<10x32xf32> to vector<10xf32>
    %433 = vector.shape_cast %432 : vector<10xf32> to vector<10x1xf32>
    %cst_172 = arith.constant 3.200000e+01 : f32
    %434 = vector.broadcast %cst_172 : f32 to vector<10x1xf32>
    %435 = arith.divf %433, %434 : vector<10x1xf32>
    %436 = vector.broadcast %435 : vector<10x1xf32> to vector<10x32xf32>
    %437 = arith.subf %429, %436 : vector<10x32xf32>
    %438 = arith.mulf %437, %437 : vector<10x32xf32>
    %cst_173 = arith.constant dense<0.000000e+00> : vector<10xf32>
    %439 = vector.multi_reduction <add>, %438, %cst_173 [1] : vector<10x32xf32> to vector<10xf32>
    %440 = vector.shape_cast %439 : vector<10xf32> to vector<10x1xf32>
    %cst_174 = arith.constant 3.200000e+01 : f32
    %441 = vector.broadcast %cst_174 : f32 to vector<10x1xf32>
    %442 = arith.divf %440, %441 : vector<10x1xf32>
    %443 = vector.broadcast %435 : vector<10x1xf32> to vector<10x32xf32>
    %444 = arith.subf %429, %443 : vector<10x32xf32>
    %cst_175 = arith.constant 9.99999997E-7 : f32
    %445 = vector.broadcast %cst_175 : f32 to vector<10x1xf32>
    %446 = arith.addf %442, %445 : vector<10x1xf32>
    %447 = math.rsqrt %446 : vector<10x1xf32>
    %448 = vector.broadcast %447 : vector<10x1xf32> to vector<10x32xf32>
    %449 = arith.mulf %444, %448 : vector<10x32xf32>
    %450 = vector.broadcast %430 : vector<1x32xf32> to vector<10x32xf32>
    %451 = arith.mulf %449, %450 : vector<10x32xf32>
    %452 = vector.broadcast %431 : vector<1x32xf32> to vector<10x32xf32>
    %453 = arith.addf %451, %452 : vector<10x32xf32>
    %454 = vector.shape_cast %453 : vector<10x32xf32> to vector<2x5x32xf32>
    %c0_176 = arith.constant 0 : index
    %c0_177 = arith.constant 0 : index
    %c0_178 = arith.constant 0 : index
    %455 = vector.load %arg19[%c0_176, %c0_177, %c0_178] : memref<2x5x32xf32, #tpu.memory_space<vmem>>, vector<2x5x32xf32>
    tpu.vector_store %arg19[%c0_176, %c0_177, %c0_178], %454 {strides = array<i32>} : memref<2x5x32xf32, #tpu.memory_space<vmem>>, vector<2x5x32xf32>,
    return
  }
}

</mosaic_0001>

<llo_original>
// kernel: tpu_custom_call.1
$region0: #{tpu_custom_call.1}
  #allocation0 [shape = 'u32[]', space=smem, size = 0x4, offset = 0x4, fixed_abs, tag = 'smem constant byte address 0x4 - core index']
  #allocation1 [shape = 'u32[144,128]{1,0:T(1,128)}', space=vmem, size = 0x12000, scoped, tag = 'internal scratch']
  %s0 = inlined_call_operand.vmem [shape: f32[8,588], index: 0, kind: input, shape index: {}]
  %s1 = inlined_call_operand.vmem [shape: bf16[588,32], index: 1, kind: input, shape index: {}]
  %s2 = inlined_call_operand.vmem [shape: f32[1,32], index: 2, kind: input, shape index: {}]
  %s3 = inlined_call_operand.vmem [shape: f32[1,1,32], index: 3, kind: input, shape index: {}]
  %s4 = inlined_call_operand.vmem [shape: f32[1,4,32], index: 4, kind: input, shape index: {}]
  %s5 = inlined_call_operand.vmem [shape: f32[1,32], index: 5, kind: input, shape index: {}]
  %s6 = inlined_call_operand.vmem [shape: f32[1,32], index: 6, kind: input, shape index: {}]
  %s7 = inlined_call_operand.vmem [shape: f32[2,1,32], index: 7, kind: input, shape index: {}]
  %s8 = inlined_call_operand.vmem [shape: f32[2,1,32], index: 8, kind: input, shape index: {}]
  %s9 = inlined_call_operand.vmem [shape: bf16[2,32,96], index: 9, kind: input, shape index: {}]
  %s10 = inlined_call_operand.vmem [shape: f32[2,1,96], index: 10, kind: input, shape index: {}]
  %s11 = inlined_call_operand.vmem [shape: bf16[2,32,32], index: 11, kind: input, shape index: {}]
  %s12 = inlined_call_operand.vmem [shape: f32[2,1,32], index: 12, kind: input, shape index: {}]
  %s13 = inlined_call_operand.vmem [shape: f32[2,1,32], index: 13, kind: input, shape index: {}]
  %s14 = inlined_call_operand.vmem [shape: f32[2,1,32], index: 14, kind: input, shape index: {}]
  %s15 = inlined_call_operand.vmem [shape: bf16[2,32,128], index: 15, kind: input, shape index: {}]
  %s16 = inlined_call_operand.vmem [shape: f32[2,1,128], index: 16, kind: input, shape index: {}]
  %s17 = inlined_call_operand.vmem [shape: bf16[2,128,32], index: 17, kind: input, shape index: {}]
  %s18 = inlined_call_operand.vmem [shape: f32[2,1,32], index: 18, kind: input, shape index: {}]
  %s19 = inlined_call_operand.vmem [shape: f32[2,5,32], index: 19, kind: output, shape index: {}]
  %s20 = sld [smem:[#allocation0]]
  $region86: #{tpu_custom_call.1} parent=0
    _
  %s22 = ssub.s32 1, %s20
  %s23 = scalar_select 0, %s22, %s20
  // Predicated region
  $region2: #{tpu_custom_call.1} parent=0 // pred_check
    _
  $region3: #{tpu_custom_call.1} parent=0 // pred_check_branch
    %25 = sbr.rel (0) target = $region5
  $region4: #{tpu_custom_call.1} parent=0 // pred_region
    _
  $region5: #{tpu_custom_call.1} parent=0 // pred_fallthru
    _
  // Predicated region
  $region6: #{tpu_custom_call.1} parent=0 // pred_check
    _
  $region7: #{tpu_custom_call.1} parent=0 // pred_check_branch
    %27 = sbr.rel (0) target = $region9
  $region8: #{tpu_custom_call.1} parent=0 // pred_region
    _
  $region9: #{tpu_custom_call.1} parent=0 // pred_fallthru
    _
  // Predicated region
  $region10: #{tpu_custom_call.1} parent=0 // pred_check
    _
  $region11: #{tpu_custom_call.1} parent=0 // pred_check_branch
    %29 = sbr.rel (0) target = $region13
  $region12: #{tpu_custom_call.1} parent=0 // pred_region
    _
  $region13: #{tpu_custom_call.1} parent=0 // pred_fallthru
    _
  // Predicated region
  $region14: #{tpu_custom_call.1} parent=0 // pred_check
    _
  $region15: #{tpu_custom_call.1} parent=0 // pred_check_branch
    %31 = sbr.rel (0) target = $region17
  $region16: #{tpu_custom_call.1} parent=0 // pred_region
    _
  $region17: #{tpu_custom_call.1} parent=0 // pred_fallthru
    _
  // Predicated region
  $region18: #{tpu_custom_call.1} parent=0 // pred_check
    _
  $region19: #{tpu_custom_call.1} parent=0 // pred_check_branch
    %33 = sbr.rel (0) target = $region21
  $region20: #{tpu_custom_call.1} parent=0 // pred_region
    _
  $region21: #{tpu_custom_call.1} parent=0 // pred_fallthru
    _
  // Predicated region
  $region22: #{tpu_custom_call.1} parent=0 // pred_check
    _
  $region23: #{tpu_custom_call.1} parent=0 // pred_check_branch
    %35 = sbr.rel (0) target = $region25
  $region24: #{tpu_custom_call.1} parent=0 // pred_region
    _
  $region25: #{tpu_custom_call.1} parent=0 // pred_fallthru
    _
  // Predicated region
  $region26: #{tpu_custom_call.1} parent=0 // pred_check
    _
  $region27: #{tpu_custom_call.1} parent=0 // pred_check_branch
    %37 = sbr.rel (0) target = $region29
  $region28: #{tpu_custom_call.1} parent=0 // pred_region
    _
  $region29: #{tpu_custom_call.1} parent=0 // pred_fallthru
    _
  // Predicated region
  $region30: #{tpu_custom_call.1} parent=0 // pred_check
    _
  $region31: #{tpu_custom_call.1} parent=0 // pred_check_branch
    %39 = sbr.rel (0) target = $region33
  $region32: #{tpu_custom_call.1} parent=0 // pred_region
    _
  $region33: #{tpu_custom_call.1} parent=0 // pred_fallthru
    _
  // Predicated region
  $region34: #{tpu_custom_call.1} parent=0 // pred_check
    _
  $region35: #{tpu_custom_call.1} parent=0 // pred_check_branch
    %41 = sbr.rel (0) target = $region37
  $region36: #{tpu_custom_call.1} parent=0 // pred_region
    _
  $region37: #{tpu_custom_call.1} parent=0 // pred_fallthru
    _
  // Predicated region
  $region38: #{tpu_custom_call.1} parent=0 // pred_check
    _
  $region39: #{tpu_custom_call.1} parent=0 // pred_check_branch
    %43 = sbr.rel (0) target = $region41
  $region40: #{tpu_custom_call.1} parent=0 // pred_region
    _
  $region41: #{tpu_custom_call.1} parent=0 // pred_fallthru
    _
  // Predicated region
  $region42: #{tpu_custom_call.1} parent=0 // pred_check
    _
  $region43: #{tpu_custom_call.1} parent=0 // pred_check_branch
    %45 = sbr.rel (0) target = $region45
  $region44: #{tpu_custom_call.1} parent=0 // pred_region
    _
  $region45: #{tpu_custom_call.1} parent=0 // pred_fallthru
    _
  // Predicated region
  $region46: #{tpu_custom_call.1} parent=0 // pred_check
    _
  $region47: #{tpu_custom_call.1} parent=0 // pred_check_branch
    %47 = sbr.rel (0) target = $region49
  $region48: #{tpu_custom_call.1} parent=0 // pred_region
    _
  $region49: #{tpu_custom_call.1} parent=0 // pred_fallthru
    _
  // Predicated region
  $region50: #{tpu_custom_call.1} parent=0 // pred_check
    _
  $region51: #{tpu_custom_call.1} parent=0 // pred_check_branch
    %49 = sbr.rel (0) target = $region53
  $region52: #{tpu_custom_call.1} parent=0 // pred_region
    _
  $region53: #{tpu_custom_call.1} parent=0 // pred_fallthru
    _
  // Predicated region
  $region54: #{tpu_custom_call.1} parent=0 // pred_check
    _
  $region55: #{tpu_custom_call.1} parent=0 // pred_check_branch
    %51 = sbr.rel (0) target = $region57
  $region56: #{tpu_custom_call.1} parent=0 // pred_region
    _
  $region57: #{tpu_custom_call.1} parent=0 // pred_fallthru
    _
  // Predicated region
  $region58: #{tpu_custom_call.1} parent=0 // pred_check
    _
  $region59: #{tpu_custom_call.1} parent=0 // pred_check_branch
    %53 = sbr.rel (0) target = $region61
  $region60: #{tpu_custom_call.1} parent=0 // pred_region
    _
  $region61: #{tpu_custom_call.1} parent=0 // pred_fallthru
    _
  // Predicated region
  $region62: #{tpu_custom_call.1} parent=0 // pred_check
    _
  $region63: #{tpu_custom_call.1} parent=0 // pred_check_branch
    %55 = sbr.rel (0) target = $region65
  $region64: #{tpu_custom_call.1} parent=0 // pred_region
    _
  $region65: #{tpu_custom_call.1} parent=0 // pred_fallthru
    _
  // Predicated region
  $region66: #{tpu_custom_call.1} parent=0 // pred_check
    _
  $region67: #{tpu_custom_call.1} parent=0 // pred_check_branch
    %57 = sbr.rel (0) target = $region69
  $region68: #{tpu_custom_call.1} parent=0 // pred_region
    _
  $region69: #{tpu_custom_call.1} parent=0 // pred_fallthru
    _
  // Predicated region
  $region70: #{tpu_custom_call.1} parent=0 // pred_check
    _
  $region71: #{tpu_custom_call.1} parent=0 // pred_check_branch
    %59 = sbr.rel (0) target = $region73
  $region72: #{tpu_custom_call.1} parent=0 // pred_region
    _
  $region73: #{tpu_custom_call.1} parent=0 // pred_fallthru
    _
  // Predicated region
  $region74: #{tpu_custom_call.1} parent=0 // pred_check
    _
  $region75: #{tpu_custom_call.1} parent=0 // pred_check_branch
    %61 = sbr.rel (0) target = $region77
  $region76: #{tpu_custom_call.1} parent=0 // pred_region
    _
  $region77: #{tpu_custom_call.1} parent=0 // pred_fallthru
    _
  %v63 = vld [vmem:[%s0] sm:$0xff]
  %v64 = vld [vmem:[%s0 + $0x8] sm:$0xff]
  %v65 = vld [vmem:[%s0 + $0x10] sm:$0xff]
  %v66 = vld [vmem:[%s0 + $0x18] sm:$0xff]
  %v67 = vld [vmem:[%s0 + $0x20] sm:$0xff]
  %v68 = vpack.c.bf16 %v63, %v63
  %v69 = vpack.c.bf16 %v64, %v64
  %v70 = vpack.c.bf16 %v65, %v65
  %v71 = vpack.c.bf16 %v66, %v66
  %v72 = vpack.c.bf16 %v67, %v67
  %v73 = vld [vmem:[%s1] sm:$0xf]
  %v74 = vld [vmem:[%s1 + $0x4] sm:$0xf]
  %v75 = vld [vmem:[%s1 + $0x8] sm:$0xf]
  %v76 = vld [vmem:[%s1 + $0xc] sm:$0xf]
  %v77 = vld [vmem:[%s1 + $0x10] sm:$0xf]
  %v78 = vld [vmem:[%s1 + $0x14] sm:$0xf]
  %v79 = vld [vmem:[%s1 + $0x18] sm:$0xf]
  %v80 = vld [vmem:[%s1 + $0x1c] sm:$0xf]
  %v81 = vld [vmem:[%s1 + $0x20] sm:$0xf]
  %v82 = vld [vmem:[%s1 + $0x24] sm:$0xf]
  %v83 = vld [vmem:[%s1 + $0x28] sm:$0xf]
  %v84 = vld [vmem:[%s1 + $0x2c] sm:$0xf]
  %v85 = vld [vmem:[%s1 + $0x30] sm:$0xf]
  %v86 = vld [vmem:[%s1 + $0x34] sm:$0xf]
  %v87 = vld [vmem:[%s1 + $0x38] sm:$0xf]
  %v88 = vld [vmem:[%s1 + $0x3c] sm:$0xf]
  %v89 = vld [vmem:[%s1 + $0x40] sm:$0xf]
  %v90 = vld [vmem:[%s1 + $0x44] sm:$0xf]
  %v91 = vld [vmem:[%s1 + $0x48] sm:$0xf]
  %v92 = vld [vmem:[%s1 + $0x4c] sm:$0xf]
  %v93 = vld [vmem:[%s1 + $0x50] sm:$0xf]
  %v94 = vld [vmem:[%s1 + $0x54] sm:$0xf]
  %v95 = vld [vmem:[%s1 + $0x58] sm:$0xf]
  %v96 = vld [vmem:[%s1 + $0x5c] sm:$0xf]
  %v97 = vld [vmem:[%s1 + $0x60] sm:$0xf]
  %v98 = vld [vmem:[%s1 + $0x64] sm:$0xf]
  %v99 = vld [vmem:[%s1 + $0x68] sm:$0xf]
  %v100 = vld [vmem:[%s1 + $0x6c] sm:$0xf]
  %v101 = vld [vmem:[%s1 + $0x70] sm:$0xf]
  %v102 = vld [vmem:[%s1 + $0x74] sm:$0xf]
  %v103 = vld [vmem:[%s1 + $0x78] sm:$0xf]
  %v104 = vld [vmem:[%s1 + $0x7c] sm:$0xf]
  %v105 = vld [vmem:[%s1 + $0x80] sm:$0xf]
  %v106 = vld [vmem:[%s1 + $0x84] sm:$0xf]
  %v107 = vld [vmem:[%s1 + $0x88] sm:$0xf]
  %v108 = vld [vmem:[%s1 + $0x8c] sm:$0xf]
  %v109 = vld [vmem:[%s1 + $0x90] sm:$0xf]
  %v110 = vld [vmem:[%s1 + $0x94] sm:$0xf]
  %v111 = vld [vmem:[%s1 + $0x98] sm:$0xf]
  %v112 = vld [vmem:[%s1 + $0x9c] sm:$0xf]
  %v113 = vld [vmem:[%s1 + $0xa0] sm:$0xf]
  %v114 = vld [vmem:[%s1 + $0xa4] sm:$0xf]
  %v115 = vld [vmem:[%s1 + $0xa8] sm:$0xf]
  %v116 = vld [vmem:[%s1 + $0xac] sm:$0xf]
  %v117 = vld [vmem:[%s1 + $0xb0] sm:$0xf]
  %v118 = vld [vmem:[%s1 + $0xb4] sm:$0xf]
  %v119 = vld [vmem:[%s1 + $0xb8] sm:$0xf]
  %v120 = vld [vmem:[%s1 + $0xbc] sm:$0xf]
  %v121 = vld [vmem:[%s1 + $0xc0] sm:$0xf]
  %v122 = vld [vmem:[%s1 + $0xc4] sm:$0xf]
  %v123 = vld [vmem:[%s1 + $0xc8] sm:$0xf]
  %v124 = vld [vmem:[%s1 + $0xcc] sm:$0xf]
  %v125 = vld [vmem:[%s1 + $0xd0] sm:$0xf]
  %v126 = vld [vmem:[%s1 + $0xd4] sm:$0xf]
  %v127 = vld [vmem:[%s1 + $0xd8] sm:$0xf]
  %v128 = vld [vmem:[%s1 + $0xdc] sm:$0xf]
  %v129 = vld [vmem:[%s1 + $0xe0] sm:$0xf]
  %v130 = vld [vmem:[%s1 + $0xe4] sm:$0xf]
  %v131 = vld [vmem:[%s1 + $0xe8] sm:$0xf]
  %v132 = vld [vmem:[%s1 + $0xec] sm:$0xf]
  %v133 = vld [vmem:[%s1 + $0xf0] sm:$0xf]
  %v134 = vld [vmem:[%s1 + $0xf4] sm:$0xf]
  %v135 = vld [vmem:[%s1 + $0xf8] sm:$0xf]
  %v136 = vld [vmem:[%s1 + $0xfc] sm:$0xf]
  %v137 = vld [vmem:[%s1 + $0x100] sm:$0xf]
  %v138 = vld [vmem:[%s1 + $0x104] sm:$0xf]
  %v139 = vld [vmem:[%s1 + $0x108] sm:$0xf]
  %v140 = vld [vmem:[%s1 + $0x10c] sm:$0xf]
  %v141 = vld [vmem:[%s1 + $0x110] sm:$0xf]
  %v142 = vld [vmem:[%s1 + $0x114] sm:$0xf]
  %v143 = vld [vmem:[%s1 + $0x118] sm:$0xf]
  %v144 = vld [vmem:[%s1 + $0x11c] sm:$0xf]
  %v145 = vld [vmem:[%s1 + $0x120] sm:$0xf]
  %v146 = vld [vmem:[%s1 + $0x124] sm:$0x3]
  %v147 = vld [vmem:[%s2] sm:$0x1]
  %v149 = vlaneseq
  %v150 = vshrl.u32 %v149, 7
  %v151 = vsub.s32 0, %v150
  %v152 = vrot.slane %v147, %v151
  %v228 = vunpack.c.l.b16 %v73
  %v229 = vunpack.c.l.b16 %v74
  %v230 = vunpack.c.l.b16 %v75
  %v231 = vunpack.c.l.b16 %v76
  %v232 = vunpack.c.l.b16 %v77
  %v233 = vunpack.c.l.b16 %v78
  %v234 = vunpack.c.l.b16 %v79
  %v235 = vunpack.c.l.b16 %v80
  %v236 = vunpack.c.l.b16 %v81
  %v237 = vunpack.c.l.b16 %v82
  %v238 = vunpack.c.l.b16 %v83
  %v239 = vunpack.c.l.b16 %v84
  %v240 = vunpack.c.l.b16 %v85
  %v241 = vunpack.c.l.b16 %v86
  %v242 = vunpack.c.l.b16 %v87
  %v243 = vunpack.c.l.b16 %v88
  %v244 = vunpack.c.l.b16 %v89
  %v245 = vunpack.c.l.b16 %v90
  %v246 = vunpack.c.l.b16 %v91
  %v247 = vunpack.c.l.b16 %v92
  %v248 = vunpack.c.l.b16 %v93
  %v249 = vunpack.c.l.b16 %v94
  %v250 = vunpack.c.l.b16 %v95
  %v251 = vunpack.c.l.b16 %v96
  %v252 = vunpack.c.l.b16 %v97
  %v253 = vunpack.c.l.b16 %v98
  %v254 = vunpack.c.l.b16 %v99
  %v255 = vunpack.c.l.b16 %v100
  %v256 = vunpack.c.l.b16 %v101
  %v257 = vunpack.c.l.b16 %v102
  %v258 = vunpack.c.l.b16 %v103
  %v259 = vunpack.c.l.b16 %v104
  %v260 = vunpack.c.l.b16 %v105
  %v261 = vunpack.c.l.b16 %v106
  %v262 = vunpack.c.l.b16 %v107
  %v263 = vunpack.c.l.b16 %v108
  %v264 = vunpack.c.l.b16 %v109
  %v265 = vunpack.c.l.b16 %v110
  %v266 = vunpack.c.l.b16 %v111
  %v267 = vunpack.c.l.b16 %v112
  %v268 = vunpack.c.l.b16 %v113
  %v269 = vunpack.c.l.b16 %v114
  %v270 = vunpack.c.l.b16 %v115
  %v271 = vunpack.c.l.b16 %v116
  %v272 = vunpack.c.l.b16 %v117
  %v273 = vunpack.c.l.b16 %v118
  %v274 = vunpack.c.l.b16 %v119
  %v275 = vunpack.c.l.b16 %v120
  %v276 = vunpack.c.l.b16 %v121
  %v277 = vunpack.c.l.b16 %v122
  %v278 = vunpack.c.l.b16 %v123
  %v279 = vunpack.c.l.b16 %v124
  %v280 = vunpack.c.l.b16 %v125
  %v281 = vunpack.c.l.b16 %v126
  %v282 = vunpack.c.l.b16 %v127
  %v283 = vunpack.c.l.b16 %v128
  %v284 = vunpack.c.l.b16 %v129
  %v285 = vunpack.c.l.b16 %v130
  %v286 = vunpack.c.l.b16 %v131
  %v287 = vunpack.c.l.b16 %v132
  %v288 = vunpack.c.l.b16 %v133
  %v289 = vunpack.c.l.b16 %v134
  %v290 = vunpack.c.l.b16 %v135
  %v291 = vunpack.c.l.b16 %v136
  %v292 = vunpack.c.l.b16 %v137
  %v293 = vunpack.c.l.b16 %v138
  %v294 = vunpack.c.l.b16 %v139
  %v295 = vunpack.c.l.b16 %v140
  %v296 = vunpack.c.l.b16 %v141
  %v297 = vunpack.c.l.b16 %v142
  %v298 = vunpack.c.l.b16 %v143
  %v299 = vunpack.c.l.b16 %v144
  %v300 = vunpack.c.l.b16 %v145
  %v301 = vunpack.c.l.b16 %v146
  %v302 = vpack.c.b16 %v229, %v228
  %v303 = vpack.c.b16 %v231, %v230
  %v304 = vpack.c.b16 %v233, %v232
  %v305 = vpack.c.b16 %v235, %v234
  %v306 = vpack.c.b16 %v237, %v236
  %v307 = vpack.c.b16 %v239, %v238
  %v308 = vpack.c.b16 %v241, %v240
  %v309 = vpack.c.b16 %v243, %v242
  %v310 = vpack.c.b16 %v245, %v244
  %v311 = vpack.c.b16 %v247, %v246
  %v312 = vpack.c.b16 %v249, %v248
  %v313 = vpack.c.b16 %v251, %v250
  %v314 = vpack.c.b16 %v253, %v252
  %v315 = vpack.c.b16 %v255, %v254
  %v316 = vpack.c.b16 %v257, %v256
  %v317 = vpack.c.b16 %v259, %v258
  %v318 = vpack.c.b16 %v261, %v260
  %v319 = vpack.c.b16 %v263, %v262
  %v320 = vpack.c.b16 %v265, %v264
  %v321 = vpack.c.b16 %v267, %v266
  %v322 = vpack.c.b16 %v269, %v268
  %v323 = vpack.c.b16 %v271, %v270
  %v324 = vpack.c.b16 %v273, %v272
  %v325 = vpack.c.b16 %v275, %v274
  %v326 = vpack.c.b16 %v277, %v276
  %v327 = vpack.c.b16 %v279, %v278
  %v328 = vpack.c.b16 %v281, %v280
  %v329 = vpack.c.b16 %v283, %v282
  %v330 = vpack.c.b16 %v285, %v284
  %v331 = vpack.c.b16 %v287, %v286
  %v332 = vpack.c.b16 %v289, %v288
  %v333 = vpack.c.b16 %v291, %v290
  %v334 = vpack.c.b16 %v293, %v292
  %v335 = vpack.c.b16 %v295, %v294
  %v336 = vpack.c.b16 %v297, %v296
  %v337 = vpack.c.b16 %v299, %v298
  %v338 = vpack.c.b16 %v301, %v300
  %vm375 = vcmask 621568
  %v377 = vsel %vm375, %v72, 0
  %vm379 = vcmask 1045504
  %v381 = vsel %vm379, %v338, 0
  %383 = vmatprep.subr.bf16.mxu0 0
  %384 = vmatpush1.bf16.msra.mxu0 %v302
  %385 = vmatprep.subr.bf16.mxu0 0
  %386 = vmatpush1.bf16.msra.mxu0 %v303
  %387 = vmatprep.subr.bf16.mxu0 0
  %388 = vmatpush1.bf16.msra.mxu0 %v304
  %389 = vmatprep.subr.bf16.mxu0 0
  %390 = vmatpush1.bf16.msra.mxu0 %v305
  %391 = vmatprep.subr.bf16.mxu0 0
  %392 = vmatpush1.bf16.msra.mxu0 %v306
  %393 = vmatprep.subr.bf16.mxu0 0
  %394 = vmatpush1.bf16.msra.mxu0 %v307
  %395 = vmatprep.subr.bf16.mxu0 0
  %396 = vmatpush1.bf16.msra.mxu0 %v308
  %397 = vmatprep.subr.bf16.mxu0 0
  %398 = vmatpush1.bf16.msra.mxu0 %v309
  %399 = vmatprep.subr.bf16.mxu0 0
  %400 = vmatpush1.bf16.msra.mxu0 %v310
  %401 = vmatprep.subr.bf16.mxu0 0
  %402 = vmatpush1.bf16.msra.mxu0 %v311
  %403 = vmatprep.subr.bf16.mxu0 0
  %404 = vmatpush1.bf16.msra.mxu0 %v312
  %405 = vmatprep.subr.bf16.mxu0 0
  %406 = vmatpush1.bf16.msra.mxu0 %v313
  %407 = vmatprep.subr.bf16.mxu0 0
  %408 = vmatpush1.bf16.msra.mxu0 %v314
  %409 = vmatprep.subr.bf16.mxu0 0
  %410 = vmatpush1.bf16.msra.mxu0 %v315
  %411 = vmatprep.subr.bf16.mxu0 0
  %412 = vmatpush1.bf16.msra.mxu0 %v316
  %413 = vmatprep.subr.bf16.mxu0 0
  %414 = vmatpush1.bf16.msra.mxu0 %v317
  %415 = vmatprep.mubr.bf16.mxu0 %v69
  %416 = vmatmul.mubr.bf16.gmra.mrb[0].mxu0 %v68
  %v417 = vpop.f32.mrb[0].mxu0
  %v418 = vadd.f32 %v152, %v417
  %v419 = vpop.f32.mrb[0].mxu0
  %v420 = vpop.f32.mrb[0].mxu0
  %v421 = vpop.f32.mrb[0].mxu0
  %422 = vdwg.mxu0
  %423 = vmatprep.subr.bf16.mxu0 0
  %424 = vmatpush1.bf16.msra.mxu0 %v318
  %425 = vmatprep.subr.bf16.mxu0 0
  %426 = vmatpush1.bf16.msra.mxu0 %v319
  %427 = vmatprep.subr.bf16.mxu0 0
  %428 = vmatpush1.bf16.msra.mxu0 %v320
  %429 = vmatprep.subr.bf16.mxu0 0
  %430 = vmatpush1.bf16.msra.mxu0 %v321
  %431 = vmatprep.subr.bf16.mxu0 0
  %432 = vmatpush1.bf16.msra.mxu0 %v322
  %433 = vmatprep.subr.bf16.mxu0 0
  %434 = vmatpush1.bf16.msra.mxu0 %v323
  %435 = vmatprep.subr.bf16.mxu0 0
  %436 = vmatpush1.bf16.msra.mxu0 %v324
  %437 = vmatprep.subr.bf16.mxu0 0
  %438 = vmatpush1.bf16.msra.mxu0 %v325
  %439 = vmatprep.subr.bf16.mxu0 0
  %440 = vmatpush1.bf16.msra.mxu0 %v326
  %441 = vmatprep.subr.bf16.mxu0 0
  %442 = vmatpush1.bf16.msra.mxu0 %v327
  %443 = vmatprep.subr.bf16.mxu0 0
  %444 = vmatpush1.bf16.msra.mxu0 %v328
  %445 = vmatprep.subr.bf16.mxu0 0
  %446 = vmatpush1.bf16.msra.mxu0 %v329
  %447 = vmatprep.subr.bf16.mxu0 0
  %448 = vmatpush1.bf16.msra.mxu0 %v330
  %449 = vmatprep.subr.bf16.mxu0 0
  %450 = vmatpush1.bf16.msra.mxu0 %v331
  %451 = vmatprep.subr.bf16.mxu0 0
  %452 = vmatpush1.bf16.msra.mxu0 %v332
  %453 = vmatprep.subr.bf16.mxu0 0
  %454 = vmatpush1.bf16.msra.mxu0 %v333
  %455 = vmatprep.mubr.bf16.mxu0 %v71
  %456 = vmatmul.mubr.bf16.gmra.mrb[0].mxu0 %v70
  %v457 = vpop.f32.mrb[0].mxu0
  %v458 = vadd.f32 %v418, %v457
  %v459 = vpop.f32.mrb[0].mxu0
  %v460 = vpop.f32.mrb[0].mxu0
  %v461 = vpop.f32.mrb[0].mxu0
  %462 = vdwg.mxu0
  %463 = vmatprep.subr.bf16.mxu0 0
  %464 = vmatpush1.bf16.msra.mxu0 %v334
  %465 = vmatprep.subr.bf16.mxu0 0
  %466 = vmatpush1.bf16.msra.mxu0 %v335
  %467 = vmatprep.subr.bf16.mxu0 0
  %468 = vmatpush1.bf16.msra.mxu0 %v336
  %469 = vmatprep.subr.bf16.mxu0 0
  %470 = vmatpush1.bf16.msra.mxu0 %v337
  %471 = vmatprep.subr.bf16.mxu0 0
  %472 = vmatpush1.bf16.msra.mxu0 %v381
  %473 = vmatprep.subr.bf16.mxu0 0
  %474 = vmatpush1.bf16.msra.mxu0 0
  %475 = vmatprep.subr.bf16.mxu0 0
  %476 = vmatpush1.bf16.msra.mxu0 0
  %477 = vmatprep.subr.bf16.mxu0 0
  %478 = vmatpush1.bf16.msra.mxu0 0
  %479 = vmatprep.subr.bf16.mxu0 0
  %480 = vmatpush1.bf16.msra.mxu0 0
  %481 = vmatprep.subr.bf16.mxu0 0
  %482 = vmatpush1.bf16.msra.mxu0 0
  %483 = vmatprep.subr.bf16.mxu0 0
  %484 = vmatpush1.bf16.msra.mxu0 0
  %485 = vmatprep.subr.bf16.mxu0 0
  %486 = vmatpush1.bf16.msra.mxu0 0
  %487 = vmatprep.subr.bf16.mxu0 0
  %488 = vmatpush1.bf16.msra.mxu0 0
  %489 = vmatprep.subr.bf16.mxu0 0
  %490 = vmatpush1.bf16.msra.mxu0 0
  %491 = vmatprep.subr.bf16.mxu0 0
  %492 = vmatpush1.bf16.msra.mxu0 0
  %493 = vmatprep.subr.bf16.mxu0 0
  %494 = vmatpush1.bf16.msra.mxu0 0
  %495 = vmatprep.mubr.bf16.mxu0 0
  %496 = vmatmul.mubr.bf16.gmra.mrb[0].mxu0 %v377
  %v497 = vpop.f32.mrb[0].mxu0
  %v498 = vadd.f32 %v458, %v497
  %v499 = vpop.f32.mrb[0].mxu0
  %v500 = vpop.f32.mrb[0].mxu0
  %v501 = vpop.f32.mrb[0].mxu0
  %502 = vdwg.mxu0
  %v503 = vld [vmem:[%s3] sm:$0x1]
  %vm504 = vcmask 253952
  %505 = vst.msk [vmem:[%s19] sm:$0x1] %vm504, %v503
  %506 = vst.msk [vmem:[%s19 + $0x8] sm:$0x1] %vm504, %v503
  %v508 = vcombine.high %v498, %v498
  %v510 = vld [vmem:[%s4] sm:$0xf]
  %v511 = vadd.f32 %v498, %v510
  %v512 = vadd.f32 %v508, %v510
  %vm513 = vcmask 257024
  %514 = vst.msk [vmem:[%s19 + $0x1] sm:$0xf] %vm513, %v511
  %515 = vst.msk [vmem:[%s19 + $0x9] sm:$0xf] %vm513, %v512
  %v516 = vld [vmem:[%s19] sm:$0x1f]
  %v517 = vld [vmem:[%s19 + $0x8] sm:$0x1f]
  %v520 = vcombine.high %v516, %v516
  %v522 = vunpack.c.l.s4 1966171168
  %v523 = vunpack.c.0.s8 %v522
  %v524 = vlaneseq
  %v525 = vshrl.u32 %v524, 7
  %v526 = vsub.s32 %v523, %v525
  %v527 = vrot.slane %v516, %v526
  %v529 = vunpack.c.l.s4 1966171168
  %v530 = vunpack.c.0.s8 %v529
  %v531 = vlaneseq
  %v532 = vshrl.u32 %v531, 7
  %v533 = vsub.s32 %v530, %v532
  %v534 = vrot.slane %v520, %v533
  %v535 = vcombine.high %v527, %v527
  %v537 = vunpack.c.l.s4 1966171168
  %v538 = vunpack.c.0.s8 %v537
  %v539 = vlaneseq
  %v540 = vshrl.u32 %v539, 7
  %v541 = vsub.s32 %v538, %v540
  %v542 = vrot.slane %v527, %v541
  %v544 = vunpack.c.l.s4 1966171168
  %v545 = vunpack.c.0.s8 %v544
  %v546 = vlaneseq
  %v547 = vshrl.u32 %v546, 7
  %v548 = vsub.s32 %v545, %v547
  %v549 = vrot.slane %v534, %v548
  %v551 = vunpack.c.l.s4 1966171168
  %v552 = vunpack.c.0.s8 %v551
  %v553 = vlaneseq
  %v554 = vshrl.u32 %v553, 7
  %v555 = vsub.s32 %v552, %v554
  %v556 = vrot.slane %v535, %v555
  %v557 = vcombine.high %v542, %v542
  %v558 = vcombine.high %v556, %v556
  %v559 = vcombine.high %v517, %v517
  %v561 = vunpack.c.l.s4 1966171168
  %v562 = vunpack.c.0.s8 %v561
  %v563 = vlaneseq
  %v564 = vshrl.u32 %v563, 7
  %v565 = vsub.s32 %v562, %v564
  %v566 = vrot.slane %v517, %v565
  %v568 = vunpack.c.l.s4 1966171168
  %v569 = vunpack.c.0.s8 %v568
  %v570 = vlaneseq
  %v571 = vshrl.u32 %v570, 7
  %v572 = vsub.s32 %v569, %v571
  %v573 = vrot.slane %v559, %v572
  %v574 = vcombine.high %v566, %v566
  %v576 = vunpack.c.l.s4 1966171168
  %v577 = vunpack.c.0.s8 %v576
  %v578 = vlaneseq
  %v579 = vshrl.u32 %v578, 7
  %v580 = vsub.s32 %v577, %v579
  %v581 = vrot.slane %v566, %v580
  %v583 = vunpack.c.l.s4 1966171168
  %v584 = vunpack.c.0.s8 %v583
  %v585 = vlaneseq
  %v586 = vshrl.u32 %v585, 7
  %v587 = vsub.s32 %v584, %v586
  %v588 = vrot.slane %v573, %v587
  %v590 = vunpack.c.l.s4 1966171168
  %v591 = vunpack.c.0.s8 %v590
  %v592 = vlaneseq
  %v593 = vshrl.u32 %v592, 7
  %v594 = vsub.s32 %v591, %v593
  %v595 = vrot.slane %v574, %v594
  %v596 = vcombine.high %v581, %v581
  %v597 = vcombine.high %v595, %v595
  %v608 = vld [vmem:[%s7] sm:$0x1]
  %v609 = vld [vmem:[%s8] sm:$0x1]
  %v610 = vcombine.low %v542, %v556
  %v611 = vcombine.low %v557, %v558
  %v612 = vcombine.low %v549, %v581
  %v613 = vcombine.low %v595, %v596
  %v615 = vunpack.c.l.s4 1966171168
  %v616 = vunpack.c.0.s8 %v615
  %v617 = vlaneseq
  %v618 = vshrl.u32 %v617, 7
  %v619 = vsub.s32 %v616, %v618
  %v620 = vrot.slane %v610, %v619
  %v622 = vunpack.c.l.s4 1966171168
  %v623 = vunpack.c.0.s8 %v622
  %v624 = vlaneseq
  %v625 = vshrl.u32 %v624, 7
  %v626 = vsub.s32 %v623, %v625
  %v627 = vrot.slane %v611, %v626
  %v629 = vunpack.c.l.s4 1966171168
  %v630 = vunpack.c.0.s8 %v629
  %v631 = vlaneseq
  %v632 = vshrl.u32 %v631, 7
  %v633 = vsub.s32 %v630, %v632
  %v634 = vrot.slane %v612, %v633
  %v636 = vunpack.c.l.s4 1966171168
  %v637 = vunpack.c.0.s8 %v636
  %v638 = vlaneseq
  %v639 = vshrl.u32 %v638, 7
  %v640 = vsub.s32 %v637, %v639
  %v641 = vrot.slane %v613, %v640
  %v642 = vcombine.low %v620, %v627
  %v643 = vcombine.low %v634, %v641
  %v645 = vunpack.c.l.s4 1966171168
  %v646 = vunpack.c.0.s8 %v645
  %v647 = vlaneseq
  %v648 = vshrl.u32 %v647, 7
  %v649 = vsub.s32 %v646, %v648
  %v650 = vrot.slane %v642, %v649
  %v652 = vunpack.c.l.s4 1966171168
  %v653 = vunpack.c.0.s8 %v652
  %v654 = vlaneseq
  %v655 = vshrl.u32 %v654, 7
  %v656 = vsub.s32 %v653, %v655
  %v657 = vrot.slane %v643, %v656
  %v658 = vcombine.low %v650, %v657
  %v659 = vcombine.low %v597, %v588
  %v661 = vunpack.c.l.s4 1966171168
  %v662 = vunpack.c.0.s8 %v661
  %v663 = vlaneseq
  %v664 = vshrl.u32 %v663, 7
  %v665 = vsub.s32 %v662, %v664
  %v666 = vrot.slane %v659, %v665
  %v668 = vunpack.c.l.s4 1966171168
  %v669 = vunpack.c.0.s8 %v668
  %v670 = vlaneseq
  %v671 = vshrl.u32 %v670, 7
  %v672 = vsub.s32 %v669, %v671
  %v673 = vrot.slane %v666, %v672
  %vm676 = vcmask 261120
  %v677 = vsel %vm676, %v658, 0.0
  %678 = vadd.xlane.f32.xlu0 %v677
  %v679 = vpop.xlane.xlu0 %678
  %vm680 = vcmask 254976
  %v681 = vsel %vm680, %v673, 0.0
  %682 = vadd.xlane.f32.xlu0 %v681
  %v683 = vpop.xlane.xlu0 %682
  %v684 = vrcp.pop 32.0
  %v685 = vmul.f32 %v679, %v684
  %v686 = vmul.f32 %v683, %v684
  %v689 = vlaneseq
  %v690 = vshrl.u32 %v689, 7
  %v691 = vsub.s32 0, %v690
  %v692 = vrot.slane %v685, %v691
  %v693 = vlaneseq
  %v694 = vshrl.u32 %v693, 7
  %v695 = vsub.s32 1, %v694
  %v696 = vrot.slane %v685, %v695
  %v697 = vlaneseq
  %v698 = vshrl.u32 %v697, 7
  %v699 = vsub.s32 2, %v698
  %v700 = vrot.slane %v685, %v699
  %v701 = vlaneseq
  %v702 = vshrl.u32 %v701, 7
  %v703 = vsub.s32 3, %v702
  %v704 = vrot.slane %v685, %v703
  %v705 = vlaneseq
  %v706 = vshrl.u32 %v705, 7
  %v707 = vsub.s32 4, %v706
  %v708 = vrot.slane %v685, %v707
  %v709 = vlaneseq
  %v710 = vshrl.u32 %v709, 7
  %v711 = vsub.s32 5, %v710
  %v712 = vrot.slane %v685, %v711
  %v713 = vlaneseq
  %v714 = vshrl.u32 %v713, 7
  %v715 = vsub.s32 6, %v714
  %v716 = vrot.slane %v685, %v715
  %v717 = vlaneseq
  %v718 = vshrl.u32 %v717, 7
  %v719 = vsub.s32 7, %v718
  %v720 = vrot.slane %v685, %v719
  %v721 = vlaneseq
  %v722 = vshrl.u32 %v721, 7
  %v723 = vsub.s32 0, %v722
  %v724 = vrot.slane %v686, %v723
  %v725 = vlaneseq
  %v726 = vshrl.u32 %v725, 7
  %v727 = vsub.s32 1, %v726
  %v728 = vrot.slane %v686, %v727
  %v739 = vsub.f32 %v542, %v692
  %v740 = vsub.f32 %v556, %v696
  %v741 = vsub.f32 %v557, %v700
  %v742 = vsub.f32 %v558, %v704
  %v743 = vsub.f32 %v549, %v708
  %v744 = vsub.f32 %v581, %v712
  %v745 = vsub.f32 %v595, %v716
  %v746 = vsub.f32 %v596, %v720
  %v747 = vsub.f32 %v597, %v724
  %v748 = vsub.f32 %v588, %v728
  %v749 = vmul.f32 %v739, %v739
  %v750 = vmul.f32 %v740, %v740
  %v751 = vmul.f32 %v741, %v741
  %v752 = vmul.f32 %v742, %v742
  %v753 = vmul.f32 %v743, %v743
  %v754 = vmul.f32 %v744, %v744
  %v755 = vmul.f32 %v745, %v745
  %v756 = vmul.f32 %v746, %v746
  %v757 = vmul.f32 %v747, %v747
  %v758 = vmul.f32 %v748, %v748
  %v769 = vcombine.low %v749, %v750
  %v770 = vcombine.low %v751, %v752
  %v771 = vcombine.low %v753, %v754
  %v772 = vcombine.low %v755, %v756
  %v774 = vunpack.c.l.s4 1966171168
  %v775 = vunpack.c.0.s8 %v774
  %v776 = vlaneseq
  %v777 = vshrl.u32 %v776, 7
  %v778 = vsub.s32 %v775, %v777
  %v779 = vrot.slane %v769, %v778
  %v781 = vunpack.c.l.s4 1966171168
  %v782 = vunpack.c.0.s8 %v781
  %v783 = vlaneseq
  %v784 = vshrl.u32 %v783, 7
  %v785 = vsub.s32 %v782, %v784
  %v786 = vrot.slane %v770, %v785
  %v788 = vunpack.c.l.s4 1966171168
  %v789 = vunpack.c.0.s8 %v788
  %v790 = vlaneseq
  %v791 = vshrl.u32 %v790, 7
  %v792 = vsub.s32 %v789, %v791
  %v793 = vrot.slane %v771, %v792
  %v795 = vunpack.c.l.s4 1966171168
  %v796 = vunpack.c.0.s8 %v795
  %v797 = vlaneseq
  %v798 = vshrl.u32 %v797, 7
  %v799 = vsub.s32 %v796, %v798
  %v800 = vrot.slane %v772, %v799
  %v801 = vcombine.low %v779, %v786
  %v802 = vcombine.low %v793, %v800
  %v804 = vunpack.c.l.s4 1966171168
  %v805 = vunpack.c.0.s8 %v804
  %v806 = vlaneseq
  %v807 = vshrl.u32 %v806, 7
  %v808 = vsub.s32 %v805, %v807
  %v809 = vrot.slane %v801, %v808
  %v811 = vunpack.c.l.s4 1966171168
  %v812 = vunpack.c.0.s8 %v811
  %v813 = vlaneseq
  %v814 = vshrl.u32 %v813, 7
  %v815 = vsub.s32 %v812, %v814
  %v816 = vrot.slane %v802, %v815
  %v817 = vcombine.low %v809, %v816
  %v818 = vcombine.low %v757, %v758
  %v820 = vunpack.c.l.s4 1966171168
  %v821 = vunpack.c.0.s8 %v820
  %v822 = vlaneseq
  %v823 = vshrl.u32 %v822, 7
  %v824 = vsub.s32 %v821, %v823
  %v825 = vrot.slane %v818, %v824
  %v827 = vunpack.c.l.s4 1966171168
  %v828 = vunpack.c.0.s8 %v827
  %v829 = vlaneseq
  %v830 = vshrl.u32 %v829, 7
  %v831 = vsub.s32 %v828, %v830
  %v832 = vrot.slane %v825, %v831
  %v835 = vsel %vm676, %v817, 0.0
  %836 = vadd.xlane.f32.xlu0 %v835
  %v837 = vpop.xlane.xlu0 %836
  %v838 = vsel %vm680, %v832, 0.0
  %839 = vadd.xlane.f32.xlu0 %v838
  %v840 = vpop.xlane.xlu0 %839
  %v841 = vmul.f32 %v837, %v684
  %v842 = vmul.f32 %v840, %v684
  %v843 = vadd.f32 %v841, 1e-06
  %v844 = vadd.f32 %v842, 1e-06
  %v845 = vrsqrt.pop %v843
  %v846 = vrsqrt.pop %v844
  %v849 = vlaneseq
  %v850 = vshrl.u32 %v849, 7
  %v851 = vsub.s32 0, %v850
  %v852 = vrot.slane %v845, %v851
  %v853 = vlaneseq
  %v854 = vshrl.u32 %v853, 7
  %v855 = vsub.s32 1, %v854
  %v856 = vrot.slane %v845, %v855
  %v857 = vlaneseq
  %v858 = vshrl.u32 %v857, 7
  %v859 = vsub.s32 2, %v858
  %v860 = vrot.slane %v845, %v859
  %v861 = vlaneseq
  %v862 = vshrl.u32 %v861, 7
  %v863 = vsub.s32 3, %v862
  %v864 = vrot.slane %v845, %v863
  %v865 = vlaneseq
  %v866 = vshrl.u32 %v865, 7
  %v867 = vsub.s32 4, %v866
  %v868 = vrot.slane %v845, %v867
  %v869 = vlaneseq
  %v870 = vshrl.u32 %v869, 7
  %v871 = vsub.s32 5, %v870
  %v872 = vrot.slane %v845, %v871
  %v873 = vlaneseq
  %v874 = vshrl.u32 %v873, 7
  %v875 = vsub.s32 6, %v874
  %v876 = vrot.slane %v845, %v875
  %v877 = vlaneseq
  %v878 = vshrl.u32 %v877, 7
  %v879 = vsub.s32 7, %v878
  %v880 = vrot.slane %v845, %v879
  %v881 = vlaneseq
  %v882 = vshrl.u32 %v881, 7
  %v883 = vsub.s32 0, %v882
  %v884 = vrot.slane %v846, %v883
  %v885 = vlaneseq
  %v886 = vshrl.u32 %v885, 7
  %v887 = vsub.s32 1, %v886
  %v888 = vrot.slane %v846, %v887
  %v899 = vmul.f32 %v739, %v852
  %v900 = vmul.f32 %v740, %v856
  %v901 = vmul.f32 %v741, %v860
  %v902 = vmul.f32 %v742, %v864
  %v903 = vmul.f32 %v743, %v868
  %v904 = vmul.f32 %v744, %v872
  %v905 = vmul.f32 %v745, %v876
  %v906 = vmul.f32 %v746, %v880
  %v907 = vmul.f32 %v747, %v884
  %v908 = vmul.f32 %v748, %v888
  %v910 = vlaneseq
  %v911 = vshrl.u32 %v910, 7
  %v912 = vsub.s32 0, %v911
  %v913 = vrot.slane %v608, %v912
  %v914 = vcombine.high %v913, %v913
  %v916 = vunpack.c.l.s4 1966171168
  %v917 = vunpack.c.0.s8 %v916
  %v918 = vlaneseq
  %v919 = vshrl.u32 %v918, 7
  %v920 = vsub.s32 %v917, %v919
  %v921 = vrot.slane %v913, %v920
  %v923 = vunpack.c.l.s4 1966171168
  %v924 = vunpack.c.0.s8 %v923
  %v925 = vlaneseq
  %v926 = vshrl.u32 %v925, 7
  %v927 = vsub.s32 %v924, %v926
  %v928 = vrot.slane %v914, %v927
  %v929 = vcombine.high %v921, %v921
  %v930 = vcombine.high %v928, %v928
  %v932 = vunpack.c.l.s4 1966171168
  %v933 = vunpack.c.0.s8 %v932
  %v934 = vlaneseq
  %v935 = vshrl.u32 %v934, 7
  %v936 = vsub.s32 %v933, %v935
  %v937 = vrot.slane %v921, %v936
  %v939 = vunpack.c.l.s4 1966171168
  %v940 = vunpack.c.0.s8 %v939
  %v941 = vlaneseq
  %v942 = vshrl.u32 %v941, 7
  %v943 = vsub.s32 %v940, %v942
  %v944 = vrot.slane %v928, %v943
  %v946 = vunpack.c.l.s4 1966171168
  %v947 = vunpack.c.0.s8 %v946
  %v948 = vlaneseq
  %v949 = vshrl.u32 %v948, 7
  %v950 = vsub.s32 %v947, %v949
  %v951 = vrot.slane %v929, %v950
  %v953 = vunpack.c.l.s4 1966171168
  %v954 = vunpack.c.0.s8 %v953
  %v955 = vlaneseq
  %v956 = vshrl.u32 %v955, 7
  %v957 = vsub.s32 %v954, %v956
  %v958 = vrot.slane %v930, %v957
  %v959 = vcombine.high %v937, %v937
  %v960 = vcombine.high %v944, %v944
  %v961 = vcombine.high %v951, %v951
  %v962 = vcombine.high %v958, %v958
  %v971 = vmul.f32 %v899, %v937
  %v972 = vmul.f32 %v900, %v951
  %v973 = vmul.f32 %v901, %v959
  %v974 = vmul.f32 %v902, %v961
  %v975 = vmul.f32 %v903, %v944
  %v976 = vmul.f32 %v904, %v958
  %v977 = vmul.f32 %v905, %v960
  %v978 = vmul.f32 %v906, %v962
  %v979 = vmul.f32 %v907, %v937
  %v980 = vmul.f32 %v908, %v951
  %v982 = vlaneseq
  %v983 = vshrl.u32 %v982, 7
  %v984 = vsub.s32 0, %v983
  %v985 = vrot.slane %v609, %v984
  %v986 = vcombine.high %v985, %v985
  %v988 = vunpack.c.l.s4 1966171168
  %v989 = vunpack.c.0.s8 %v988
  %v990 = vlaneseq
  %v991 = vshrl.u32 %v990, 7
  %v992 = vsub.s32 %v989, %v991
  %v993 = vrot.slane %v985, %v992
  %v995 = vunpack.c.l.s4 1966171168
  %v996 = vunpack.c.0.s8 %v995
  %v997 = vlaneseq
  %v998 = vshrl.u32 %v997, 7
  %v999 = vsub.s32 %v996, %v998
  %v1000 = vrot.slane %v986, %v999
  %v1001 = vcombine.high %v993, %v993
  %v1002 = vcombine.high %v1000, %v1000
  %v1004 = vunpack.c.l.s4 1966171168
  %v1005 = vunpack.c.0.s8 %v1004
  %v1006 = vlaneseq
  %v1007 = vshrl.u32 %v1006, 7
  %v1008 = vsub.s32 %v1005, %v1007
  %v1009 = vrot.slane %v993, %v1008
  %v1011 = vunpack.c.l.s4 1966171168
  %v1012 = vunpack.c.0.s8 %v1011
  %v1013 = vlaneseq
  %v1014 = vshrl.u32 %v1013, 7
  %v1015 = vsub.s32 %v1012, %v1014
  %v1016 = vrot.slane %v1000, %v1015
  %v1018 = vunpack.c.l.s4 1966171168
  %v1019 = vunpack.c.0.s8 %v1018
  %v1020 = vlaneseq
  %v1021 = vshrl.u32 %v1020, 7
  %v1022 = vsub.s32 %v1019, %v1021
  %v1023 = vrot.slane %v1001, %v1022
  %v1025 = vunpack.c.l.s4 1966171168
  %v1026 = vunpack.c.0.s8 %v1025
  %v1027 = vlaneseq
  %v1028 = vshrl.u32 %v1027, 7
  %v1029 = vsub.s32 %v1026, %v1028
  %v1030 = vrot.slane %v1002, %v1029
  %v1031 = vcombine.high %v1009, %v1009
  %v1032 = vcombine.high %v1016, %v1016
  %v1033 = vcombine.high %v1023, %v1023
  %v1034 = vcombine.high %v1030, %v1030
  %v1043 = vadd.f32 %v971, %v1009
  %v1044 = vadd.f32 %v972, %v1023
  %v1045 = vadd.f32 %v973, %v1031
  %v1046 = vadd.f32 %v974, %v1033
  %v1047 = vadd.f32 %v975, %v1016
  %v1048 = vadd.f32 %v976, %v1030
  %v1049 = vadd.f32 %v977, %v1032
  %v1050 = vadd.f32 %v978, %v1034
  %v1051 = vadd.f32 %v979, %v1009
  %v1052 = vadd.f32 %v980, %v1023
  %v1063 = vcombine.low %v1043, %v1044
  %v1064 = vcombine.low %v1045, %v1046
  %v1065 = vcombine.low %v1047, %v1048
  %v1066 = vcombine.low %v1049, %v1050
  %v1068 = vunpack.c.l.s4 1966171168
  %v1069 = vunpack.c.0.s8 %v1068
  %v1070 = vlaneseq
  %v1071 = vshrl.u32 %v1070, 7
  %v1072 = vsub.s32 %v1069, %v1071
  %v1073 = vrot.slane %v1063, %v1072
  %v1075 = vunpack.c.l.s4 1966171168
  %v1076 = vunpack.c.0.s8 %v1075
  %v1077 = vlaneseq
  %v1078 = vshrl.u32 %v1077, 7
  %v1079 = vsub.s32 %v1076, %v1078
  %v1080 = vrot.slane %v1064, %v1079
  %v1082 = vunpack.c.l.s4 1966171168
  %v1083 = vunpack.c.0.s8 %v1082
  %v1084 = vlaneseq
  %v1085 = vshrl.u32 %v1084, 7
  %v1086 = vsub.s32 %v1083, %v1085
  %v1087 = vrot.slane %v1065, %v1086
  %v1089 = vunpack.c.l.s4 1966171168
  %v1090 = vunpack.c.0.s8 %v1089
  %v1091 = vlaneseq
  %v1092 = vshrl.u32 %v1091, 7
  %v1093 = vsub.s32 %v1090, %v1092
  %v1094 = vrot.slane %v1066, %v1093
  %v1095 = vcombine.low %v1073, %v1080
  %v1096 = vcombine.low %v1087, %v1094
  %v1098 = vunpack.c.l.s4 1966171168
  %v1099 = vunpack.c.0.s8 %v1098
  %v1100 = vlaneseq
  %v1101 = vshrl.u32 %v1100, 7
  %v1102 = vsub.s32 %v1099, %v1101
  %v1103 = vrot.slane %v1095, %v1102
  %v1105 = vunpack.c.l.s4 1966171168
  %v1106 = vunpack.c.0.s8 %v1105
  %v1107 = vlaneseq
  %v1108 = vshrl.u32 %v1107, 7
  %v1109 = vsub.s32 %v1106, %v1108
  %v1110 = vrot.slane %v1096, %v1109
  %v1111 = vcombine.low %v1103, %v1110
  %v1112 = vcombine.low %v1051, %v1052
  %v1114 = vunpack.c.l.s4 1966171168
  %v1115 = vunpack.c.0.s8 %v1114
  %v1116 = vlaneseq
  %v1117 = vshrl.u32 %v1116, 7
  %v1118 = vsub.s32 %v1115, %v1117
  %v1119 = vrot.slane %v1112, %v1118
  %v1121 = vunpack.c.l.s4 1966171168
  %v1122 = vunpack.c.0.s8 %v1121
  %v1123 = vlaneseq
  %v1124 = vshrl.u32 %v1123, 7
  %v1125 = vsub.s32 %v1122, %v1124
  %v1126 = vrot.slane %v1119, %v1125
  %v1129 = vpack.c.bf16 %v1126, %v1111
  %v1130 = vld [vmem:[%s9] sm:$0xf]
  %v1131 = vld [vmem:[%s9 + $0x4] sm:$0xf]
  %v1132 = vld [vmem:[%s9 + $0x8] sm:$0xf]
  %v1133 = vld [vmem:[%s9 + $0xc] sm:$0xf]
  %v1134 = vld [vmem:[%s10] sm:$0x1]
  %v1136 = vlaneseq
  %v1137 = vshrl.u32 %v1136, 7
  %v1138 = vsub.s32 0, %v1137
  %v1139 = vrot.slane %v1134, %v1138
  %v1145 = vunpack.c.l.b16 %v1130
  %v1146 = vunpack.c.l.b16 %v1131
  %v1147 = vunpack.c.l.b16 %v1132
  %v1148 = vunpack.c.l.b16 %v1133
  %v1149 = vpack.c.b16 %v1146, %v1145
  %v1150 = vpack.c.b16 %v1148, %v1147
  %v1154 = vsel %vm676, %v1129, 0
  %1156 = vmatprep.subr.bf16.mxu0 0
  %1157 = vmatpush1.bf16.msra.mxu0 %v1149
  %1158 = vmatprep.subr.bf16.mxu0 0
  %1159 = vmatpush1.bf16.msra.mxu0 %v1150
  %1160 = vmatprep.subr.bf16.mxu0 0
  %1161 = vmatpush1.bf16.msra.mxu0 0
  %1162 = vmatprep.subr.bf16.mxu0 0
  %1163 = vmatpush1.bf16.msra.mxu0 0
  %1164 = vmatprep.subr.bf16.mxu0 0
  %1165 = vmatpush1.bf16.msra.mxu0 0
  %1166 = vmatprep.subr.bf16.mxu0 0
  %1167 = vmatpush1.bf16.msra.mxu0 0
  %1168 = vmatprep.subr.bf16.mxu0 0
  %1169 = vmatpush1.bf16.msra.mxu0 0
  %1170 = vmatprep.subr.bf16.mxu0 0
  %1171 = vmatpush1.bf16.msra.mxu0 0
  %1172 = vmatprep.subr.bf16.mxu0 0
  %1173 = vmatpush1.bf16.msra.mxu0 0
  %1174 = vmatprep.subr.bf16.mxu0 0
  %1175 = vmatpush1.bf16.msra.mxu0 0
  %1176 = vmatprep.subr.bf16.mxu0 0
  %1177 = vmatpush1.bf16.msra.mxu0 0
  %1178 = vmatprep.subr.bf16.mxu0 0
  %1179 = vmatpush1.bf16.msra.mxu0 0
  %1180 = vmatprep.subr.bf16.mxu0 0
  %1181 = vmatpush1.bf16.msra.mxu0 0
  %1182 = vmatprep.subr.bf16.mxu0 0
  %1183 = vmatpush1.bf16.msra.mxu0 0
  %1184 = vmatprep.subr.bf16.mxu0 0
  %1185 = vmatpush1.bf16.msra.mxu0 0
  %1186 = vmatprep.subr.bf16.mxu0 0
  %1187 = vmatpush1.bf16.msra.mxu0 0
  %1188 = vmatprep.mubr.bf16.mxu0 0
  %1189 = vmatmul.mubr.bf16.gmra.mrb[0].mxu0 %v1154
  %v1190 = vpop.f32.mrb[0].mxu0
  %v1191 = vadd.f32 %v1139, %v1190
  %v1192 = vpop.f32.mrb[0].mxu0
  %v1193 = vpop.f32.mrb[0].mxu0
  %v1194 = vadd.f32 %v1139, %v1193
  %v1195 = vpop.f32.mrb[0].mxu0
  %1196 = vdwg.mxu0
  %v1197 = vld [vmem:[%s11] sm:$0xf]
  %v1198 = vld [vmem:[%s11 + $0x4] sm:$0xf]
  %v1199 = vld [vmem:[%s11 + $0x8] sm:$0xf]
  %v1200 = vld [vmem:[%s11 + $0xc] sm:$0xf]
  %v1203 = vcombine.high %v1191, %v1191
  %v1205 = vunpack.c.l.s4 1966171168
  %v1206 = vunpack.c.0.s8 %v1205
  %v1207 = vlaneseq
  %v1208 = vshrl.u32 %v1207, 7
  %v1209 = vsub.s32 %v1206, %v1208
  %v1210 = vrot.slane %v1191, %v1209
  %v1212 = vunpack.c.l.s4 1966171168
  %v1213 = vunpack.c.0.s8 %v1212
  %v1214 = vlaneseq
  %v1215 = vshrl.u32 %v1214, 7
  %v1216 = vsub.s32 %v1213, %v1215
  %v1217 = vrot.slane %v1203, %v1216
  %v1218 = vcombine.high %v1210, %v1210
  %v1219 = vcombine.high %v1217, %v1217
  %v1221 = vunpack.c.l.s4 1966171168
  %v1222 = vunpack.c.0.s8 %v1221
  %v1223 = vlaneseq
  %v1224 = vshrl.u32 %v1223, 7
  %v1225 = vsub.s32 %v1222, %v1224
  %v1226 = vrot.slane %v1210, %v1225
  %v1228 = vunpack.c.l.s4 1966171168
  %v1229 = vunpack.c.0.s8 %v1228
  %v1230 = vlaneseq
  %v1231 = vshrl.u32 %v1230, 7
  %v1232 = vsub.s32 %v1229, %v1231
  %v1233 = vrot.slane %v1217, %v1232
  %v1235 = vunpack.c.l.s4 1966171168
  %v1236 = vunpack.c.0.s8 %v1235
  %v1237 = vlaneseq
  %v1238 = vshrl.u32 %v1237, 7
  %v1239 = vsub.s32 %v1236, %v1238
  %v1240 = vrot.slane %v1218, %v1239
  %v1242 = vunpack.c.l.s4 1966171168
  %v1243 = vunpack.c.0.s8 %v1242
  %v1244 = vlaneseq
  %v1245 = vshrl.u32 %v1244, 7
  %v1246 = vsub.s32 %v1243, %v1245
  %v1247 = vrot.slane %v1219, %v1246
  %v1248 = vcombine.high %v1226, %v1226
  %v1249 = vcombine.high %v1233, %v1233
  %v1250 = vcombine.high %v1240, %v1240
  %v1251 = vcombine.high %v1247, %v1247
  %v1253 = vunpack.c.l.s4 1966171168
  %v1254 = vunpack.c.0.s8 %v1253
  %v1255 = vlaneseq
  %v1256 = vshrl.u32 %v1255, 7
  %v1257 = vsub.s32 %v1254, %v1256
  %v1258 = vrot.slane %v1194, %v1257
  %v1259 = vcombine.high %v1258, %v1258
  %v1261 = vunpack.c.l.s4 1966171168
  %v1262 = vunpack.c.0.s8 %v1261
  %v1263 = vlaneseq
  %v1264 = vshrl.u32 %v1263, 7
  %v1265 = vsub.s32 %v1262, %v1264
  %v1266 = vrot.slane %v1258, %v1265
  %v1268 = vunpack.c.l.s4 1966171168
  %v1269 = vunpack.c.0.s8 %v1268
  %v1270 = vlaneseq
  %v1271 = vshrl.u32 %v1270, 7
  %v1272 = vsub.s32 %v1269, %v1271
  %v1273 = vrot.slane %v1259, %v1272
  %v1274 = vcombine.low %v1226, %v1240
  %v1275 = vcombine.low %v1248, %v1250
  %v1277 = vunpack.c.l.s4 1966171168
  %v1278 = vunpack.c.0.s8 %v1277
  %v1279 = vlaneseq
  %v1280 = vshrl.u32 %v1279, 7
  %v1281 = vsub.s32 %v1278, %v1280
  %v1282 = vrot.slane %v1274, %v1281
  %v1284 = vunpack.c.l.s4 1966171168
  %v1285 = vunpack.c.0.s8 %v1284
  %v1286 = vlaneseq
  %v1287 = vshrl.u32 %v1286, 7
  %v1288 = vsub.s32 %v1285, %v1287
  %v1289 = vrot.slane %v1275, %v1288
  %v1291 = vunpack.c.l.s4 1966171168
  %v1292 = vunpack.c.0.s8 %v1291
  %v1293 = vlaneseq
  %v1294 = vshrl.u32 %v1293, 7
  %v1295 = vsub.s32 %v1292, %v1294
  %v1296 = vrot.slane %v1233, %v1295
  %v1297 = vcombine.low %v1282, %v1289
  %v1299 = vunpack.c.l.s4 1966171168
  %v1300 = vunpack.c.0.s8 %v1299
  %v1301 = vlaneseq
  %v1302 = vshrl.u32 %v1301, 7
  %v1303 = vsub.s32 %v1300, %v1302
  %v1304 = vrot.slane %v1297, %v1303
  %v1306 = vunpack.c.l.s4 1966171168
  %v1307 = vunpack.c.0.s8 %v1306
  %v1308 = vlaneseq
  %v1309 = vshrl.u32 %v1308, 7
  %v1310 = vsub.s32 %v1307, %v1309
  %v1311 = vrot.slane %v1296, %v1310
  %v1312 = vcombine.low %v1304, %v1311
  %v1313 = vcombine.low %v1247, %v1249
  %v1314 = vcombine.low %v1251, %v1266
  %v1316 = vunpack.c.l.s4 1966171168
  %v1317 = vunpack.c.0.s8 %v1316
  %v1318 = vlaneseq
  %v1319 = vshrl.u32 %v1318, 7
  %v1320 = vsub.s32 %v1317, %v1319
  %v1321 = vrot.slane %v1313, %v1320
  %v1323 = vunpack.c.l.s4 1966171168
  %v1324 = vunpack.c.0.s8 %v1323
  %v1325 = vlaneseq
  %v1326 = vshrl.u32 %v1325, 7
  %v1327 = vsub.s32 %v1324, %v1326
  %v1328 = vrot.slane %v1314, %v1327
  %v1330 = vunpack.c.l.s4 1966171168
  %v1331 = vunpack.c.0.s8 %v1330
  %v1332 = vlaneseq
  %v1333 = vshrl.u32 %v1332, 7
  %v1334 = vsub.s32 %v1331, %v1333
  %v1335 = vrot.slane %v1273, %v1334
  %v1336 = vcombine.low %v1321, %v1328
  %v1338 = vunpack.c.l.s4 1966171168
  %v1339 = vunpack.c.0.s8 %v1338
  %v1340 = vlaneseq
  %v1341 = vshrl.u32 %v1340, 7
  %v1342 = vsub.s32 %v1339, %v1341
  %v1343 = vrot.slane %v1336, %v1342
  %v1345 = vunpack.c.l.s4 1966171168
  %v1346 = vunpack.c.0.s8 %v1345
  %v1347 = vlaneseq
  %v1348 = vshrl.u32 %v1347, 7
  %v1349 = vsub.s32 %v1346, %v1348
  %v1350 = vrot.slane %v1335, %v1349
  %v1351 = vcombine.low %v1343, %v1350
  %v1354 = vpack.c.bf16 %v1312, %v1312
  %v1355 = vpack.c.bf16 %v1351, %v1351
  %1357 = vrot.lane.b32.xlu0 %v1354, 96
  %v1358 = vpop.permute.xlu0 %1357
  %vm1359 = vcmask 64512
  %v1361 = vsel %vm1359, %v1354, 0
  %v1364 = vsel %vm1359, %v1358, 0
  %1366 = vmatprep.subr.bf16.mxu0 0
  %1367 = vmatpush1.bf16.xpose.msra.mxu0 %v1364
  %1368 = vmatprep.subr.bf16.mxu0 0
  %1369 = vmatpush1.bf16.xpose.msra.mxu0 0
  %1370 = vmatprep.subr.bf16.mxu0 0
  %1371 = vmatpush1.bf16.xpose.msra.mxu0 0
  %1372 = vmatprep.subr.bf16.mxu0 0
  %1373 = vmatpush1.bf16.xpose.msra.mxu0 0
  %1374 = vmatprep.subr.bf16.mxu0 0
  %1375 = vmatpush1.bf16.xpose.msra.mxu0 0
  %1376 = vmatprep.subr.bf16.mxu0 0
  %1377 = vmatpush1.bf16.xpose.msra.mxu0 0
  %1378 = vmatprep.subr.bf16.mxu0 0
  %1379 = vmatpush1.bf16.xpose.msra.mxu0 0
  %1380 = vmatprep.subr.bf16.mxu0 0
  %1381 = vmatpush1.bf16.xpose.msra.mxu0 0
  %1382 = vmatprep.subr.bf16.mxu0 0
  %1383 = vmatpush1.bf16.xpose.msra.mxu0 0
  %1384 = vmatprep.subr.bf16.mxu0 0
  %1385 = vmatpush1.bf16.xpose.msra.mxu0 0
  %1386 = vmatprep.subr.bf16.mxu0 0
  %1387 = vmatpush1.bf16.xpose.msra.mxu0 0
  %1388 = vmatprep.subr.bf16.mxu0 0
  %1389 = vmatpush1.bf16.xpose.msra.mxu0 0
  %1390 = vmatprep.subr.bf16.mxu0 0
  %1391 = vmatpush1.bf16.xpose.msra.mxu0 0
  %1392 = vmatprep.subr.bf16.mxu0 0
  %1393 = vmatpush1.bf16.xpose.msra.mxu0 0
  %1394 = vmatprep.subr.bf16.mxu0 0
  %1395 = vmatpush1.bf16.xpose.msra.mxu0 0
  %1396 = vmatprep.subr.bf16.mxu0 0
  %1397 = vmatpush1.bf16.xpose.msra.mxu0 0
  %1398 = vmatprep.mubr.bf16.mxu0 0
  %1399 = vmatmul.mubr.bf16.gmra.mrb[0].mxu0 %v1361
  %v1400 = vpop.f32.mrb[0].mxu0
  %v1401 = vadd.f32 0.0, %v1400
  %v1402 = vpop.f32.mrb[0].mxu0
  %v1403 = vpop.f32.mrb[0].mxu0
  %v1404 = vpop.f32.mrb[0].mxu0
  %1405 = vdwg.mxu0
  %1407 = vrot.lane.b32.xlu0 %v1355, 96
  %v1408 = vpop.permute.xlu0 %1407
  %v1410 = vsel %vm1359, %v1355, 0
  %v1413 = vsel %vm1359, %v1408, 0
  %1415 = vmatprep.subr.bf16.mxu0 0
  %1416 = vmatpush1.bf16.xpose.msra.mxu0 %v1413
  %1417 = vmatprep.subr.bf16.mxu0 0
  %1418 = vmatpush1.bf16.xpose.msra.mxu0 0
  %1419 = vmatprep.subr.bf16.mxu0 0
  %1420 = vmatpush1.bf16.xpose.msra.mxu0 0
  %1421 = vmatprep.subr.bf16.mxu0 0
  %1422 = vmatpush1.bf16.xpose.msra.mxu0 0
  %1423 = vmatprep.subr.bf16.mxu0 0
  %1424 = vmatpush1.bf16.xpose.msra.mxu0 0
  %1425 = vmatprep.subr.bf16.mxu0 0
  %1426 = vmatpush1.bf16.xpose.msra.mxu0 0
  %1427 = vmatprep.subr.bf16.mxu0 0
  %1428 = vmatpush1.bf16.xpose.msra.mxu0 0
  %1429 = vmatprep.subr.bf16.mxu0 0
  %1430 = vmatpush1.bf16.xpose.msra.mxu0 0
  %1431 = vmatprep.subr.bf16.mxu0 0
  %1432 = vmatpush1.bf16.xpose.msra.mxu0 0
  %1433 = vmatprep.subr.bf16.mxu0 0
  %1434 = vmatpush1.bf16.xpose.msra.mxu0 0
  %1435 = vmatprep.subr.bf16.mxu0 0
  %1436 = vmatpush1.bf16.xpose.msra.mxu0 0
  %1437 = vmatprep.subr.bf16.mxu0 0
  %1438 = vmatpush1.bf16.xpose.msra.mxu0 0
  %1439 = vmatprep.subr.bf16.mxu0 0
  %1440 = vmatpush1.bf16.xpose.msra.mxu0 0
  %1441 = vmatprep.subr.bf16.mxu0 0
  %1442 = vmatpush1.bf16.xpose.msra.mxu0 0
  %1443 = vmatprep.subr.bf16.mxu0 0
  %1444 = vmatpush1.bf16.xpose.msra.mxu0 0
  %1445 = vmatprep.subr.bf16.mxu0 0
  %1446 = vmatpush1.bf16.xpose.msra.mxu0 0
  %1447 = vmatprep.mubr.bf16.mxu0 0
  %1448 = vmatmul.mubr.bf16.gmra.mrb[0].mxu0 %v1410
  %v1449 = vpop.f32.mrb[0].mxu0
  %v1450 = vadd.f32 0.0, %v1449
  %v1451 = vpop.f32.mrb[0].mxu0
  %v1452 = vpop.f32.mrb[0].mxu0
  %v1453 = vpop.f32.mrb[0].mxu0
  %1454 = vdwg.mxu0
  %vm1455 = vcmask 36864
  %v1456 = vsel %vm1455, %v1401, -inf
  %1457 = vmax.xlane.f32.xlu0 %v1456
  %v1458 = vpop.xlane.xlu0 %1457
  %v1459 = vsel %vm1455, %v1450, -inf
  %1460 = vmax.xlane.f32.xlu0 %v1459
  %v1461 = vpop.xlane.xlu0 %1460
  %v1462 = vsub.f32 %v1401, %v1458
  %v1463 = vsub.f32 %v1450, %v1461
  %v1464 = vmul.f32 %v1462, 1.442695
  %v1465 = vpow.pop %v1464
  %v1466 = vmul.f32 %v1463, 1.442695
  %v1467 = vpow.pop %v1466
  %v1468 = vsel %vm1455, %v1465, 0.0
  %1469 = vadd.xlane.f32.xlu0 %v1468
  %v1470 = vpop.xlane.xlu0 %1469
  %v1471 = vsel %vm1455, %v1467, 0.0
  %1472 = vadd.xlane.f32.xlu0 %v1471
  %v1473 = vpop.xlane.xlu0 %1472
  %v1474 = vrcp.pop %v1470
  %v1475 = vrcp.pop %v1473
  %v1476 = vmul.f32 %v1465, %v1474
  %v1477 = vmul.f32 %v1467, %v1475
  %v1478 = vpack.c.bf16 %v1476, %v1476
  %v1479 = vpack.c.bf16 %v1477, %v1477
  %1480 = vrot.lane.b32.xlu0 %v1354, 64
  %v1481 = vpop.permute.xlu0 %1480
  %vm1482 = vcmask 39936
  %v1484 = vsel %vm1482, %v1478, 0
  %vm1486 = vcmask 1041408
  %vm1487 = vcmask 1042432
  %v1488 = vsel %vm1486, 4294967295, 65535
  %v1489 = vsel %vm1487, %v1488, 0
  %v1491 = vand.u32 %v1481, %v1489
  %1493 = vmatprep.subr.bf16.mxu0 0
  %1494 = vmatpush1.bf16.msra.mxu0 %v1491
  %1495 = vmatprep.subr.bf16.mxu0 0
  %1496 = vmatpush1.bf16.msra.mxu0 0
  %1497 = vmatprep.subr.bf16.mxu0 0
  %1498 = vmatpush1.bf16.msra.mxu0 0
  %1499 = vmatprep.subr.bf16.mxu0 0
  %1500 = vmatpush1.bf16.msra.mxu0 0
  %1501 = vmatprep.subr.bf16.mxu0 0
  %1502 = vmatpush1.bf16.msra.mxu0 0
  %1503 = vmatprep.subr.bf16.mxu0 0
  %1504 = vmatpush1.bf16.msra.mxu0 0
  %1505 = vmatprep.subr.bf16.mxu0 0
  %1506 = vmatpush1.bf16.msra.mxu0 0
  %1507 = vmatprep.subr.bf16.mxu0 0
  %1508 = vmatpush1.bf16.msra.mxu0 0
  %1509 = vmatprep.subr.bf16.mxu0 0
  %1510 = vmatpush1.bf16.msra.mxu0 0
  %1511 = vmatprep.subr.bf16.mxu0 0
  %1512 = vmatpush1.bf16.msra.mxu0 0
  %1513 = vmatprep.subr.bf16.mxu0 0
  %1514 = vmatpush1.bf16.msra.mxu0 0
  %1515 = vmatprep.subr.bf16.mxu0 0
  %1516 = vmatpush1.bf16.msra.mxu0 0
  %1517 = vmatprep.subr.bf16.mxu0 0
  %1518 = vmatpush1.bf16.msra.mxu0 0
  %1519 = vmatprep.subr.bf16.mxu0 0
  %1520 = vmatpush1.bf16.msra.mxu0 0
  %1521 = vmatprep.subr.bf16.mxu0 0
  %1522 = vmatpush1.bf16.msra.mxu0 0
  %1523 = vmatprep.subr.bf16.mxu0 0
  %1524 = vmatpush1.bf16.msra.mxu0 0
  %1525 = vmatprep.mubr.bf16.mxu0 0
  %1526 = vmatmul.mubr.bf16.gmra.mrb[0].mxu0 %v1484
  %v1527 = vpop.f32.mrb[0].mxu0
  %v1528 = vadd.f32 0.0, %v1527
  %v1529 = vpop.f32.mrb[0].mxu0
  %v1530 = vpop.f32.mrb[0].mxu0
  %v1531 = vpop.f32.mrb[0].mxu0
  %1532 = vdwg.mxu0
  %1533 = vrot.lane.b32.xlu0 %v1355, 64
  %v1534 = vpop.permute.xlu0 %1533
  %v1536 = vsel %vm1482, %v1479, 0
  %v1539 = vand.u32 %v1534, %v1489
  %1541 = vmatprep.subr.bf16.mxu0 0
  %1542 = vmatpush1.bf16.msra.mxu0 %v1539
  %1543 = vmatprep.subr.bf16.mxu0 0
  %1544 = vmatpush1.bf16.msra.mxu0 0
  %1545 = vmatprep.subr.bf16.mxu0 0
  %1546 = vmatpush1.bf16.msra.mxu0 0
  %1547 = vmatprep.subr.bf16.mxu0 0
  %1548 = vmatpush1.bf16.msra.mxu0 0
  %1549 = vmatprep.subr.bf16.mxu0 0
  %1550 = vmatpush1.bf16.msra.mxu0 0
  %1551 = vmatprep.subr.bf16.mxu0 0
  %1552 = vmatpush1.bf16.msra.mxu0 0
  %1553 = vmatprep.subr.bf16.mxu0 0
  %1554 = vmatpush1.bf16.msra.mxu0 0
  %1555 = vmatprep.subr.bf16.mxu0 0
  %1556 = vmatpush1.bf16.msra.mxu0 0
  %1557 = vmatprep.subr.bf16.mxu0 0
  %1558 = vmatpush1.bf16.msra.mxu0 0
  %1559 = vmatprep.subr.bf16.mxu0 0
  %1560 = vmatpush1.bf16.msra.mxu0 0
  %1561 = vmatprep.subr.bf16.mxu0 0
  %1562 = vmatpush1.bf16.msra.mxu0 0
  %1563 = vmatprep.subr.bf16.mxu0 0
  %1564 = vmatpush1.bf16.msra.mxu0 0
  %1565 = vmatprep.subr.bf16.mxu0 0
  %1566 = vmatpush1.bf16.msra.mxu0 0
  %1567 = vmatprep.subr.bf16.mxu0 0
  %1568 = vmatpush1.bf16.msra.mxu0 0
  %1569 = vmatprep.subr.bf16.mxu0 0
  %1570 = vmatpush1.bf16.msra.mxu0 0
  %1571 = vmatprep.subr.bf16.mxu0 0
  %1572 = vmatpush1.bf16.msra.mxu0 0
  %1573 = vmatprep.mubr.bf16.mxu0 0
  %1574 = vmatmul.mubr.bf16.gmra.mrb[0].mxu0 %v1536
  %v1575 = vpop.f32.mrb[0].mxu0
  %v1576 = vadd.f32 0.0, %v1575
  %v1577 = vpop.f32.mrb[0].mxu0
  %v1578 = vpop.f32.mrb[0].mxu0
  %v1579 = vpop.f32.mrb[0].mxu0
  %1580 = vdwg.mxu0
  %v1583 = vcombine.high %v1528, %v1528
  %v1585 = vunpack.c.l.s4 1966171168
  %v1586 = vunpack.c.0.s8 %v1585
  %v1587 = vlaneseq
  %v1588 = vshrl.u32 %v1587, 7
  %v1589 = vsub.s32 %v1586, %v1588
  %v1590 = vrot.slane %v1528, %v1589
  %v1592 = vunpack.c.l.s4 1966171168
  %v1593 = vunpack.c.0.s8 %v1592
  %v1594 = vlaneseq
  %v1595 = vshrl.u32 %v1594, 7
  %v1596 = vsub.s32 %v1593, %v1595
  %v1597 = vrot.slane %v1583, %v1596
  %v1598 = vcombine.high %v1590, %v1590
  %v1600 = vunpack.c.l.s4 1966171168
  %v1601 = vunpack.c.0.s8 %v1600
  %v1602 = vlaneseq
  %v1603 = vshrl.u32 %v1602, 7
  %v1604 = vsub.s32 %v1601, %v1603
  %v1605 = vrot.slane %v1590, %v1604
  %v1607 = vunpack.c.l.s4 1966171168
  %v1608 = vunpack.c.0.s8 %v1607
  %v1609 = vlaneseq
  %v1610 = vshrl.u32 %v1609, 7
  %v1611 = vsub.s32 %v1608, %v1610
  %v1612 = vrot.slane %v1597, %v1611
  %v1614 = vunpack.c.l.s4 1966171168
  %v1615 = vunpack.c.0.s8 %v1614
  %v1616 = vlaneseq
  %v1617 = vshrl.u32 %v1616, 7
  %v1618 = vsub.s32 %v1615, %v1617
  %v1619 = vrot.slane %v1598, %v1618
  %v1620 = vcombine.high %v1605, %v1605
  %v1621 = vcombine.high %v1619, %v1619
  %v1622 = vcombine.high %v1576, %v1576
  %v1624 = vunpack.c.l.s4 1966171168
  %v1625 = vunpack.c.0.s8 %v1624
  %v1626 = vlaneseq
  %v1627 = vshrl.u32 %v1626, 7
  %v1628 = vsub.s32 %v1625, %v1627
  %v1629 = vrot.slane %v1576, %v1628
  %v1631 = vunpack.c.l.s4 1966171168
  %v1632 = vunpack.c.0.s8 %v1631
  %v1633 = vlaneseq
  %v1634 = vshrl.u32 %v1633, 7
  %v1635 = vsub.s32 %v1632, %v1634
  %v1636 = vrot.slane %v1622, %v1635
  %v1637 = vcombine.high %v1629, %v1629
  %v1639 = vunpack.c.l.s4 1966171168
  %v1640 = vunpack.c.0.s8 %v1639
  %v1641 = vlaneseq
  %v1642 = vshrl.u32 %v1641, 7
  %v1643 = vsub.s32 %v1640, %v1642
  %v1644 = vrot.slane %v1629, %v1643
  %v1646 = vunpack.c.l.s4 1966171168
  %v1647 = vunpack.c.0.s8 %v1646
  %v1648 = vlaneseq
  %v1649 = vshrl.u32 %v1648, 7
  %v1650 = vsub.s32 %v1647, %v1649
  %v1651 = vrot.slane %v1636, %v1650
  %v1653 = vunpack.c.l.s4 1966171168
  %v1654 = vunpack.c.0.s8 %v1653
  %v1655 = vlaneseq
  %v1656 = vshrl.u32 %v1655, 7
  %v1657 = vsub.s32 %v1654, %v1656
  %v1658 = vrot.slane %v1637, %v1657
  %v1659 = vcombine.high %v1644, %v1644
  %v1660 = vcombine.high %v1658, %v1658
  %v1661 = vcombine.low %v1605, %v1619
  %v1662 = vcombine.low %v1620, %v1621
  %v1663 = vcombine.low %v1612, %v1644
  %v1664 = vcombine.low %v1658, %v1659
  %v1666 = vunpack.c.l.s4 1966171168
  %v1667 = vunpack.c.0.s8 %v1666
  %v1668 = vlaneseq
  %v1669 = vshrl.u32 %v1668, 7
  %v1670 = vsub.s32 %v1667, %v1669
  %v1671 = vrot.slane %v1661, %v1670
  %v1673 = vunpack.c.l.s4 1966171168
  %v1674 = vunpack.c.0.s8 %v1673
  %v1675 = vlaneseq
  %v1676 = vshrl.u32 %v1675, 7
  %v1677 = vsub.s32 %v1674, %v1676
  %v1678 = vrot.slane %v1662, %v1677
  %v1680 = vunpack.c.l.s4 1966171168
  %v1681 = vunpack.c.0.s8 %v1680
  %v1682 = vlaneseq
  %v1683 = vshrl.u32 %v1682, 7
  %v1684 = vsub.s32 %v1681, %v1683
  %v1685 = vrot.slane %v1663, %v1684
  %v1687 = vunpack.c.l.s4 1966171168
  %v1688 = vunpack.c.0.s8 %v1687
  %v1689 = vlaneseq
  %v1690 = vshrl.u32 %v1689, 7
  %v1691 = vsub.s32 %v1688, %v1690
  %v1692 = vrot.slane %v1664, %v1691
  %v1693 = vcombine.low %v1671, %v1678
  %v1694 = vcombine.low %v1685, %v1692
  %v1696 = vunpack.c.l.s4 1966171168
  %v1697 = vunpack.c.0.s8 %v1696
  %v1698 = vlaneseq
  %v1699 = vshrl.u32 %v1698, 7
  %v1700 = vsub.s32 %v1697, %v1699
  %v1701 = vrot.slane %v1693, %v1700
  %v1703 = vunpack.c.l.s4 1966171168
  %v1704 = vunpack.c.0.s8 %v1703
  %v1705 = vlaneseq
  %v1706 = vshrl.u32 %v1705, 7
  %v1707 = vsub.s32 %v1704, %v1706
  %v1708 = vrot.slane %v1694, %v1707
  %v1709 = vcombine.low %v1701, %v1708
  %v1710 = vcombine.low %v1660, %v1651
  %v1712 = vunpack.c.l.s4 1966171168
  %v1713 = vunpack.c.0.s8 %v1712
  %v1714 = vlaneseq
  %v1715 = vshrl.u32 %v1714, 7
  %v1716 = vsub.s32 %v1713, %v1715
  %v1717 = vrot.slane %v1710, %v1716
  %v1719 = vunpack.c.l.s4 1966171168
  %v1720 = vunpack.c.0.s8 %v1719
  %v1721 = vlaneseq
  %v1722 = vshrl.u32 %v1721, 7
  %v1723 = vsub.s32 %v1720, %v1722
  %v1724 = vrot.slane %v1717, %v1723
  %v1727 = vpack.c.bf16 %v1724, %v1709
  %1728 = vrot.lane.b32.xlu0 %v1354, 120
  %v1729 = vpop.permute.xlu0 %1728
  %1730 = vrot.lane.b32.xlu0 %v1354, 88
  %v1731 = vpop.permute.xlu0 %1730
  %v1733 = vsel %vm1359, %v1729, 0
  %v1736 = vsel %vm1359, %v1731, 0
  %1738 = vmatprep.subr.bf16.mxu0 0
  %1739 = vmatpush1.bf16.xpose.msra.mxu0 %v1736
  %1740 = vmatprep.subr.bf16.mxu0 0
  %1741 = vmatpush1.bf16.xpose.msra.mxu0 0
  %1742 = vmatprep.subr.bf16.mxu0 0
  %1743 = vmatpush1.bf16.xpose.msra.mxu0 0
  %1744 = vmatprep.subr.bf16.mxu0 0
  %1745 = vmatpush1.bf16.xpose.msra.mxu0 0
  %1746 = vmatprep.subr.bf16.mxu0 0
  %1747 = vmatpush1.bf16.xpose.msra.mxu0 0
  %1748 = vmatprep.subr.bf16.mxu0 0
  %1749 = vmatpush1.bf16.xpose.msra.mxu0 0
  %1750 = vmatprep.subr.bf16.mxu0 0
  %1751 = vmatpush1.bf16.xpose.msra.mxu0 0
  %1752 = vmatprep.subr.bf16.mxu0 0
  %1753 = vmatpush1.bf16.xpose.msra.mxu0 0
  %1754 = vmatprep.subr.bf16.mxu0 0
  %1755 = vmatpush1.bf16.xpose.msra.mxu0 0
  %1756 = vmatprep.subr.bf16.mxu0 0
  %1757 = vmatpush1.bf16.xpose.msra.mxu0 0
  %1758 = vmatprep.subr.bf16.mxu0 0
  %1759 = vmatpush1.bf16.xpose.msra.mxu0 0
  %1760 = vmatprep.subr.bf16.mxu0 0
  %1761 = vmatpush1.bf16.xpose.msra.mxu0 0
  %1762 = vmatprep.subr.bf16.mxu0 0
  %1763 = vmatpush1.bf16.xpose.msra.mxu0 0
  %1764 = vmatprep.subr.bf16.mxu0 0
  %1765 = vmatpush1.bf16.xpose.msra.mxu0 0
  %1766 = vmatprep.subr.bf16.mxu0 0
  %1767 = vmatpush1.bf16.xpose.msra.mxu0 0
  %1768 = vmatprep.subr.bf16.mxu0 0
  %1769 = vmatpush1.bf16.xpose.msra.mxu0 0
  %1770 = vmatprep.mubr.bf16.mxu0 0
  %1771 = vmatmul.mubr.bf16.gmra.mrb[0].mxu0 %v1733
  %v1772 = vpop.f32.mrb[0].mxu0
  %v1773 = vadd.f32 0.0, %v1772
  %v1774 = vpop.f32.mrb[0].mxu0
  %v1775 = vpop.f32.mrb[0].mxu0
  %v1776 = vpop.f32.mrb[0].mxu0
  %1777 = vdwg.mxu0
  %1778 = vrot.lane.b32.xlu0 %v1355, 120
  %v1779 = vpop.permute.xlu0 %1778
  %1780 = vrot.lane.b32.xlu0 %v1355, 88
  %v1781 = vpop.permute.xlu0 %1780
  %v1783 = vsel %vm1359, %v1779, 0
  %v1786 = vsel %vm1359, %v1781, 0
  %1788 = vmatprep.subr.bf16.mxu0 0
  %1789 = vmatpush1.bf16.xpose.msra.mxu0 %v1786
  %1790 = vmatprep.subr.bf16.mxu0 0
  %1791 = vmatpush1.bf16.xpose.msra.mxu0 0
  %1792 = vmatprep.subr.bf16.mxu0 0
  %1793 = vmatpush1.bf16.xpose.msra.mxu0 0
  %1794 = vmatprep.subr.bf16.mxu0 0
  %1795 = vmatpush1.bf16.xpose.msra.mxu0 0
  %1796 = vmatprep.subr.bf16.mxu0 0
  %1797 = vmatpush1.bf16.xpose.msra.mxu0 0
  %1798 = vmatprep.subr.bf16.mxu0 0
  %1799 = vmatpush1.bf16.xpose.msra.mxu0 0
  %1800 = vmatprep.subr.bf16.mxu0 0
  %1801 = vmatpush1.bf16.xpose.msra.mxu0 0
  %1802 = vmatprep.subr.bf16.mxu0 0
  %1803 = vmatpush1.bf16.xpose.msra.mxu0 0
  %1804 = vmatprep.subr.bf16.mxu0 0
  %1805 = vmatpush1.bf16.xpose.msra.mxu0 0
  %1806 = vmatprep.subr.bf16.mxu0 0
  %1807 = vmatpush1.bf16.xpose.msra.mxu0 0
  %1808 = vmatprep.subr.bf16.mxu0 0
  %1809 = vmatpush1.bf16.xpose.msra.mxu0 0
  %1810 = vmatprep.subr.bf16.mxu0 0
  %1811 = vmatpush1.bf16.xpose.msra.mxu0 0
  %1812 = vmatprep.subr.bf16.mxu0 0
  %1813 = vmatpush1.bf16.xpose.msra.mxu0 0
  %1814 = vmatprep.subr.bf16.mxu0 0
  %1815 = vmatpush1.bf16.xpose.msra.mxu0 0
  %1816 = vmatprep.subr.bf16.mxu0 0
  %1817 = vmatpush1.bf16.xpose.msra.mxu0 0
  %1818 = vmatprep.subr.bf16.mxu0 0
  %1819 = vmatpush1.bf16.xpose.msra.mxu0 0
  %1820 = vmatprep.mubr.bf16.mxu0 0
  %1821 = vmatmul.mubr.bf16.gmra.mrb[0].mxu0 %v1783
  %v1822 = vpop.f32.mrb[0].mxu0
  %v1823 = vadd.f32 0.0, %v1822
  %v1824 = vpop.f32.mrb[0].mxu0
  %v1825 = vpop.f32.mrb[0].mxu0
  %v1826 = vpop.f32.mrb[0].mxu0
  %1827 = vdwg.mxu0
  %v1828 = vsel %vm1455, %v1773, -inf
  %1829 = vmax.xlane.f32.xlu0 %v1828
  %v1830 = vpop.xlane.xlu0 %1829
  %v1831 = vsel %vm1455, %v1823, -inf
  %1832 = vmax.xlane.f32.xlu0 %v1831
  %v1833 = vpop.xlane.xlu0 %1832
  %v1834 = vsub.f32 %v1773, %v1830
  %v1835 = vsub.f32 %v1823, %v1833
  %v1836 = vmul.f32 %v1834, 1.442695
  %v1837 = vpow.pop %v1836
  %v1838 = vmul.f32 %v1835, 1.442695
  %v1839 = vpow.pop %v1838
  %v1840 = vsel %vm1455, %v1837, 0.0
  %1841 = vadd.xlane.f32.xlu0 %v1840
  %v1842 = vpop.xlane.xlu0 %1841
  %v1843 = vsel %vm1455, %v1839, 0.0
  %1844 = vadd.xlane.f32.xlu0 %v1843
  %v1845 = vpop.xlane.xlu0 %1844
  %v1846 = vrcp.pop %v1842
  %v1847 = vrcp.pop %v1845
  %v1848 = vmul.f32 %v1837, %v1846
  %v1849 = vmul.f32 %v1839, %v1847
  %v1850 = vpack.c.bf16 %v1848, %v1848
  %v1851 = vpack.c.bf16 %v1849, %v1849
  %1852 = vrot.lane.b32.xlu0 %v1354, 56
  %v1853 = vpop.permute.xlu0 %1852
  %v1855 = vsel %vm1482, %v1850, 0
  %v1858 = vand.u32 %v1853, %v1489
  %1860 = vmatprep.subr.bf16.mxu0 0
  %1861 = vmatpush1.bf16.msra.mxu0 %v1858
  %1862 = vmatprep.subr.bf16.mxu0 0
  %1863 = vmatpush1.bf16.msra.mxu0 0
  %1864 = vmatprep.subr.bf16.mxu0 0
  %1865 = vmatpush1.bf16.msra.mxu0 0
  %1866 = vmatprep.subr.bf16.mxu0 0
  %1867 = vmatpush1.bf16.msra.mxu0 0
  %1868 = vmatprep.subr.bf16.mxu0 0
  %1869 = vmatpush1.bf16.msra.mxu0 0
  %1870 = vmatprep.subr.bf16.mxu0 0
  %1871 = vmatpush1.bf16.msra.mxu0 0
  %1872 = vmatprep.subr.bf16.mxu0 0
  %1873 = vmatpush1.bf16.msra.mxu0 0
  %1874 = vmatprep.subr.bf16.mxu0 0
  %1875 = vmatpush1.bf16.msra.mxu0 0
  %1876 = vmatprep.subr.bf16.mxu0 0
  %1877 = vmatpush1.bf16.msra.mxu0 0
  %1878 = vmatprep.subr.bf16.mxu0 0
  %1879 = vmatpush1.bf16.msra.mxu0 0
  %1880 = vmatprep.subr.bf16.mxu0 0
  %1881 = vmatpush1.bf16.msra.mxu0 0
  %1882 = vmatprep.subr.bf16.mxu0 0
  %1883 = vmatpush1.bf16.msra.mxu0 0
  %1884 = vmatprep.subr.bf16.mxu0 0
  %1885 = vmatpush1.bf16.msra.mxu0 0
  %1886 = vmatprep.subr.bf16.mxu0 0
  %1887 = vmatpush1.bf16.msra.mxu0 0
  %1888 = vmatprep.subr.bf16.mxu0 0
  %1889 = vmatpush1.bf16.msra.mxu0 0
  %1890 = vmatprep.subr.bf16.mxu0 0
  %1891 = vmatpush1.bf16.msra.mxu0 0
  %1892 = vmatprep.mubr.bf16.mxu0 0
  %1893 = vmatmul.mubr.bf16.gmra.mrb[0].mxu0 %v1855
  %v1894 = vpop.f32.mrb[0].mxu0
  %v1895 = vadd.f32 0.0, %v1894
  %v1896 = vpop.f32.mrb[0].mxu0
  %v1897 = vpop.f32.mrb[0].mxu0
  %v1898 = vpop.f32.mrb[0].mxu0
  %1899 = vdwg.mxu0
  %1900 = vrot.lane.b32.xlu0 %v1355, 56
  %v1901 = vpop.permute.xlu0 %1900
  %v1903 = vsel %vm1482, %v1851, 0
  %v1906 = vand.u32 %v1901, %v1489
  %1908 = vmatprep.subr.bf16.mxu0 0
  %1909 = vmatpush1.bf16.msra.mxu0 %v1906
  %1910 = vmatprep.subr.bf16.mxu0 0
  %1911 = vmatpush1.bf16.msra.mxu0 0
  %1912 = vmatprep.subr.bf16.mxu0 0
  %1913 = vmatpush1.bf16.msra.mxu0 0
  %1914 = vmatprep.subr.bf16.mxu0 0
  %1915 = vmatpush1.bf16.msra.mxu0 0
  %1916 = vmatprep.subr.bf16.mxu0 0
  %1917 = vmatpush1.bf16.msra.mxu0 0
  %1918 = vmatprep.subr.bf16.mxu0 0
  %1919 = vmatpush1.bf16.msra.mxu0 0
  %1920 = vmatprep.subr.bf16.mxu0 0
  %1921 = vmatpush1.bf16.msra.mxu0 0
  %1922 = vmatprep.subr.bf16.mxu0 0
  %1923 = vmatpush1.bf16.msra.mxu0 0
  %1924 = vmatprep.subr.bf16.mxu0 0
  %1925 = vmatpush1.bf16.msra.mxu0 0
  %1926 = vmatprep.subr.bf16.mxu0 0
  %1927 = vmatpush1.bf16.msra.mxu0 0
  %1928 = vmatprep.subr.bf16.mxu0 0
  %1929 = vmatpush1.bf16.msra.mxu0 0
  %1930 = vmatprep.subr.bf16.mxu0 0
  %1931 = vmatpush1.bf16.msra.mxu0 0
  %1932 = vmatprep.subr.bf16.mxu0 0
  %1933 = vmatpush1.bf16.msra.mxu0 0
  %1934 = vmatprep.subr.bf16.mxu0 0
  %1935 = vmatpush1.bf16.msra.mxu0 0
  %1936 = vmatprep.subr.bf16.mxu0 0
  %1937 = vmatpush1.bf16.msra.mxu0 0
  %1938 = vmatprep.subr.bf16.mxu0 0
  %1939 = vmatpush1.bf16.msra.mxu0 0
  %1940 = vmatprep.mubr.bf16.mxu0 0
  %1941 = vmatmul.mubr.bf16.gmra.mrb[0].mxu0 %v1903
  %v1942 = vpop.f32.mrb[0].mxu0
  %v1943 = vadd.f32 0.0, %v1942
  %v1944 = vpop.f32.mrb[0].mxu0
  %v1945 = vpop.f32.mrb[0].mxu0
  %v1946 = vpop.f32.mrb[0].mxu0
  %1947 = vdwg.mxu0
  %v1950 = vcombine.high %v1895, %v1895
  %v1952 = vunpack.c.l.s4 1966171168
  %v1953 = vunpack.c.0.s8 %v1952
  %v1954 = vlaneseq
  %v1955 = vshrl.u32 %v1954, 7
  %v1956 = vsub.s32 %v1953, %v1955
  %v1957 = vrot.slane %v1895, %v1956
  %v1959 = vunpack.c.l.s4 1966171168
  %v1960 = vunpack.c.0.s8 %v1959
  %v1961 = vlaneseq
  %v1962 = vshrl.u32 %v1961, 7
  %v1963 = vsub.s32 %v1960, %v1962
  %v1964 = vrot.slane %v1950, %v1963
  %v1965 = vcombine.high %v1957, %v1957
  %v1967 = vunpack.c.l.s4 1966171168
  %v1968 = vunpack.c.0.s8 %v1967
  %v1969 = vlaneseq
  %v1970 = vshrl.u32 %v1969, 7
  %v1971 = vsub.s32 %v1968, %v1970
  %v1972 = vrot.slane %v1957, %v1971
  %v1974 = vunpack.c.l.s4 1966171168
  %v1975 = vunpack.c.0.s8 %v1974
  %v1976 = vlaneseq
  %v1977 = vshrl.u32 %v1976, 7
  %v1978 = vsub.s32 %v1975, %v1977
  %v1979 = vrot.slane %v1964, %v1978
  %v1981 = vunpack.c.l.s4 1966171168
  %v1982 = vunpack.c.0.s8 %v1981
  %v1983 = vlaneseq
  %v1984 = vshrl.u32 %v1983, 7
  %v1985 = vsub.s32 %v1982, %v1984
  %v1986 = vrot.slane %v1965, %v1985
  %v1987 = vcombine.high %v1972, %v1972
  %v1988 = vcombine.high %v1986, %v1986
  %v1989 = vcombine.high %v1943, %v1943
  %v1991 = vunpack.c.l.s4 1966171168
  %v1992 = vunpack.c.0.s8 %v1991
  %v1993 = vlaneseq
  %v1994 = vshrl.u32 %v1993, 7
  %v1995 = vsub.s32 %v1992, %v1994
  %v1996 = vrot.slane %v1943, %v1995
  %v1998 = vunpack.c.l.s4 1966171168
  %v1999 = vunpack.c.0.s8 %v1998
  %v2000 = vlaneseq
  %v2001 = vshrl.u32 %v2000, 7
  %v2002 = vsub.s32 %v1999, %v2001
  %v2003 = vrot.slane %v1989, %v2002
  %v2004 = vcombine.high %v1996, %v1996
  %v2006 = vunpack.c.l.s4 1966171168
  %v2007 = vunpack.c.0.s8 %v2006
  %v2008 = vlaneseq
  %v2009 = vshrl.u32 %v2008, 7
  %v2010 = vsub.s32 %v2007, %v2009
  %v2011 = vrot.slane %v1996, %v2010
  %v2013 = vunpack.c.l.s4 1966171168
  %v2014 = vunpack.c.0.s8 %v2013
  %v2015 = vlaneseq
  %v2016 = vshrl.u32 %v2015, 7
  %v2017 = vsub.s32 %v2014, %v2016
  %v2018 = vrot.slane %v2003, %v2017
  %v2020 = vunpack.c.l.s4 1966171168
  %v2021 = vunpack.c.0.s8 %v2020
  %v2022 = vlaneseq
  %v2023 = vshrl.u32 %v2022, 7
  %v2024 = vsub.s32 %v2021, %v2023
  %v2025 = vrot.slane %v2004, %v2024
  %v2026 = vcombine.high %v2011, %v2011
  %v2027 = vcombine.high %v2025, %v2025
  %v2028 = vcombine.low %v1972, %v1986
  %v2029 = vcombine.low %v1987, %v1988
  %v2030 = vcombine.low %v1979, %v2011
  %v2031 = vcombine.low %v2025, %v2026
  %v2033 = vunpack.c.l.s4 1966171168
  %v2034 = vunpack.c.0.s8 %v2033
  %v2035 = vlaneseq
  %v2036 = vshrl.u32 %v2035, 7
  %v2037 = vsub.s32 %v2034, %v2036
  %v2038 = vrot.slane %v2028, %v2037
  %v2040 = vunpack.c.l.s4 1966171168
  %v2041 = vunpack.c.0.s8 %v2040
  %v2042 = vlaneseq
  %v2043 = vshrl.u32 %v2042, 7
  %v2044 = vsub.s32 %v2041, %v2043
  %v2045 = vrot.slane %v2029, %v2044
  %v2047 = vunpack.c.l.s4 1966171168
  %v2048 = vunpack.c.0.s8 %v2047
  %v2049 = vlaneseq
  %v2050 = vshrl.u32 %v2049, 7
  %v2051 = vsub.s32 %v2048, %v2050
  %v2052 = vrot.slane %v2030, %v2051
  %v2054 = vunpack.c.l.s4 1966171168
  %v2055 = vunpack.c.0.s8 %v2054
  %v2056 = vlaneseq
  %v2057 = vshrl.u32 %v2056, 7
  %v2058 = vsub.s32 %v2055, %v2057
  %v2059 = vrot.slane %v2031, %v2058
  %v2060 = vcombine.low %v2038, %v2045
  %v2061 = vcombine.low %v2052, %v2059
  %v2063 = vunpack.c.l.s4 1966171168
  %v2064 = vunpack.c.0.s8 %v2063
  %v2065 = vlaneseq
  %v2066 = vshrl.u32 %v2065, 7
  %v2067 = vsub.s32 %v2064, %v2066
  %v2068 = vrot.slane %v2060, %v2067
  %v2070 = vunpack.c.l.s4 1966171168
  %v2071 = vunpack.c.0.s8 %v2070
  %v2072 = vlaneseq
  %v2073 = vshrl.u32 %v2072, 7
  %v2074 = vsub.s32 %v2071, %v2073
  %v2075 = vrot.slane %v2061, %v2074
  %v2076 = vcombine.low %v2068, %v2075
  %v2077 = vcombine.low %v2027, %v2018
  %v2079 = vunpack.c.l.s4 1966171168
  %v2080 = vunpack.c.0.s8 %v2079
  %v2081 = vlaneseq
  %v2082 = vshrl.u32 %v2081, 7
  %v2083 = vsub.s32 %v2080, %v2082
  %v2084 = vrot.slane %v2077, %v2083
  %v2086 = vunpack.c.l.s4 1966171168
  %v2087 = vunpack.c.0.s8 %v2086
  %v2088 = vlaneseq
  %v2089 = vshrl.u32 %v2088, 7
  %v2090 = vsub.s32 %v2087, %v2089
  %v2091 = vrot.slane %v2084, %v2090
  %v2094 = vpack.c.bf16 %v2091, %v2076
  %v2096 = vsel %vm1359, %v2094, 0
  %vm2098 = vcmask 1043456
  %v2100 = vsel %vm2098, %v1198, 0
  %2102 = vmatprep.subr.bf16.mxu0 0
  %2103 = vmatpush1.bf16.msra.mxu0 %v2100
  %2104 = vmatprep.subr.bf16.mxu0 0
  %2105 = vmatpush1.bf16.msra.mxu0 0
  %2106 = vmatprep.subr.bf16.mxu0 0
  %2107 = vmatpush1.bf16.msra.mxu0 0
  %2108 = vmatprep.subr.bf16.mxu0 0
  %2109 = vmatpush1.bf16.msra.mxu0 0
  %2110 = vmatprep.subr.bf16.mxu0 0
  %2111 = vmatpush1.bf16.msra.mxu0 0
  %2112 = vmatprep.subr.bf16.mxu0 0
  %2113 = vmatpush1.bf16.msra.mxu0 0
  %2114 = vmatprep.subr.bf16.mxu0 0
  %2115 = vmatpush1.bf16.msra.mxu0 0
  %2116 = vmatprep.subr.bf16.mxu0 0
  %2117 = vmatpush1.bf16.msra.mxu0 0
  %2118 = vmatprep.subr.bf16.mxu0 0
  %2119 = vmatpush1.bf16.msra.mxu0 0
  %2120 = vmatprep.subr.bf16.mxu0 0
  %2121 = vmatpush1.bf16.msra.mxu0 0
  %2122 = vmatprep.subr.bf16.mxu0 0
  %2123 = vmatpush1.bf16.msra.mxu0 0
  %2124 = vmatprep.subr.bf16.mxu0 0
  %2125 = vmatpush1.bf16.msra.mxu0 0
  %2126 = vmatprep.subr.bf16.mxu0 0
  %2127 = vmatpush1.bf16.msra.mxu0 0
  %2128 = vmatprep.subr.bf16.mxu0 0
  %2129 = vmatpush1.bf16.msra.mxu0 0
  %2130 = vmatprep.subr.bf16.mxu0 0
  %2131 = vmatpush1.bf16.msra.mxu0 0
  %2132 = vmatprep.subr.bf16.mxu0 0
  %2133 = vmatpush1.bf16.msra.mxu0 0
  %2134 = vmatprep.mubr.bf16.mxu0 0
  %2135 = vmatmul.mubr.bf16.gmra.mrb[0].mxu0 %v2096
  %v2136 = vpop.f32.mrb[0].mxu0
  %v2137 = vadd.f32 0.0, %v2136
  %v2138 = vpop.f32.mrb[0].mxu0
  %v2139 = vpop.f32.mrb[0].mxu0
  %v2140 = vadd.f32 0.0, %v2139
  %v2141 = vpop.f32.mrb[0].mxu0
  %2142 = vdwg.mxu0
  %v2144 = vsel %vm1359, %v1727, 0
  %v2147 = vsel %vm2098, %v1197, 0
  %2149 = vmatprep.subr.bf16.mxu0 0
  %2150 = vmatpush1.bf16.msra.mxu0 %v2147
  %2151 = vmatprep.subr.bf16.mxu0 0
  %2152 = vmatpush1.bf16.msra.mxu0 0
  %2153 = vmatprep.subr.bf16.mxu0 0
  %2154 = vmatpush1.bf16.msra.mxu0 0
  %2155 = vmatprep.subr.bf16.mxu0 0
  %2156 = vmatpush1.bf16.msra.mxu0 0
  %2157 = vmatprep.subr.bf16.mxu0 0
  %2158 = vmatpush1.bf16.msra.mxu0 0
  %2159 = vmatprep.subr.bf16.mxu0 0
  %2160 = vmatpush1.bf16.msra.mxu0 0
  %2161 = vmatprep.subr.bf16.mxu0 0
  %2162 = vmatpush1.bf16.msra.mxu0 0
  %2163 = vmatprep.subr.bf16.mxu0 0
  %2164 = vmatpush1.bf16.msra.mxu0 0
  %2165 = vmatprep.subr.bf16.mxu0 0
  %2166 = vmatpush1.bf16.msra.mxu0 0
  %2167 = vmatprep.subr.bf16.mxu0 0
  %2168 = vmatpush1.bf16.msra.mxu0 0
  %2169 = vmatprep.subr.bf16.mxu0 0
  %2170 = vmatpush1.bf16.msra.mxu0 0
  %2171 = vmatprep.subr.bf16.mxu0 0
  %2172 = vmatpush1.bf16.msra.mxu0 0
  %2173 = vmatprep.subr.bf16.mxu0 0
  %2174 = vmatpush1.bf16.msra.mxu0 0
  %2175 = vmatprep.subr.bf16.mxu0 0
  %2176 = vmatpush1.bf16.msra.mxu0 0
  %2177 = vmatprep.subr.bf16.mxu0 0
  %2178 = vmatpush1.bf16.msra.mxu0 0
  %2179 = vmatprep.subr.bf16.mxu0 0
  %2180 = vmatpush1.bf16.msra.mxu0 0
  %2181 = vmatprep.mubr.bf16.mxu0 0
  %2182 = vmatmul.mubr.bf16.gmra.mrb[0].mxu0 %v2144
  %v2183 = vpop.f32.mrb[0].mxu0
  %v2184 = vadd.f32 %v2137, %v2183
  %v2185 = vpop.f32.mrb[0].mxu0
  %v2186 = vpop.f32.mrb[0].mxu0
  %v2187 = vadd.f32 %v2140, %v2186
  %v2188 = vpop.f32.mrb[0].mxu0
  %2189 = vdwg.mxu0
  %2190 = vrot.lane.b32.xlu0 %v1354, 112
  %v2191 = vpop.permute.xlu0 %2190
  %2192 = vrot.lane.b32.xlu0 %v1354, 80
  %v2193 = vpop.permute.xlu0 %2192
  %v2195 = vsel %vm1359, %v2191, 0
  %v2198 = vsel %vm1359, %v2193, 0
  %2200 = vmatprep.subr.bf16.mxu0 0
  %2201 = vmatpush1.bf16.xpose.msra.mxu0 %v2198
  %2202 = vmatprep.subr.bf16.mxu0 0
  %2203 = vmatpush1.bf16.xpose.msra.mxu0 0
  %2204 = vmatprep.subr.bf16.mxu0 0
  %2205 = vmatpush1.bf16.xpose.msra.mxu0 0
  %2206 = vmatprep.subr.bf16.mxu0 0
  %2207 = vmatpush1.bf16.xpose.msra.mxu0 0
  %2208 = vmatprep.subr.bf16.mxu0 0
  %2209 = vmatpush1.bf16.xpose.msra.mxu0 0
  %2210 = vmatprep.subr.bf16.mxu0 0
  %2211 = vmatpush1.bf16.xpose.msra.mxu0 0
  %2212 = vmatprep.subr.bf16.mxu0 0
  %2213 = vmatpush1.bf16.xpose.msra.mxu0 0
  %2214 = vmatprep.subr.bf16.mxu0 0
  %2215 = vmatpush1.bf16.xpose.msra.mxu0 0
  %2216 = vmatprep.subr.bf16.mxu0 0
  %2217 = vmatpush1.bf16.xpose.msra.mxu0 0
  %2218 = vmatprep.subr.bf16.mxu0 0
  %2219 = vmatpush1.bf16.xpose.msra.mxu0 0
  %2220 = vmatprep.subr.bf16.mxu0 0
  %2221 = vmatpush1.bf16.xpose.msra.mxu0 0
  %2222 = vmatprep.subr.bf16.mxu0 0
  %2223 = vmatpush1.bf16.xpose.msra.mxu0 0
  %2224 = vmatprep.subr.bf16.mxu0 0
  %2225 = vmatpush1.bf16.xpose.msra.mxu0 0
  %2226 = vmatprep.subr.bf16.mxu0 0
  %2227 = vmatpush1.bf16.xpose.msra.mxu0 0
  %2228 = vmatprep.subr.bf16.mxu0 0
  %2229 = vmatpush1.bf16.xpose.msra.mxu0 0
  %2230 = vmatprep.subr.bf16.mxu0 0
  %2231 = vmatpush1.bf16.xpose.msra.mxu0 0
  %2232 = vmatprep.mubr.bf16.mxu0 0
  %2233 = vmatmul.mubr.bf16.gmra.mrb[0].mxu0 %v2195
  %v2234 = vpop.f32.mrb[0].mxu0
  %v2235 = vadd.f32 0.0, %v2234
  %v2236 = vpop.f32.mrb[0].mxu0
  %v2237 = vpop.f32.mrb[0].mxu0
  %v2238 = vpop.f32.mrb[0].mxu0
  %2239 = vdwg.mxu0
  %2240 = vrot.lane.b32.xlu0 %v1355, 112
  %v2241 = vpop.permute.xlu0 %2240
  %2242 = vrot.lane.b32.xlu0 %v1355, 80
  %v2243 = vpop.permute.xlu0 %2242
  %v2245 = vsel %vm1359, %v2241, 0
  %v2248 = vsel %vm1359, %v2243, 0
  %2250 = vmatprep.subr.bf16.mxu0 0
  %2251 = vmatpush1.bf16.xpose.msra.mxu0 %v2248
  %2252 = vmatprep.subr.bf16.mxu0 0
  %2253 = vmatpush1.bf16.xpose.msra.mxu0 0
  %2254 = vmatprep.subr.bf16.mxu0 0
  %2255 = vmatpush1.bf16.xpose.msra.mxu0 0
  %2256 = vmatprep.subr.bf16.mxu0 0
  %2257 = vmatpush1.bf16.xpose.msra.mxu0 0
  %2258 = vmatprep.subr.bf16.mxu0 0
  %2259 = vmatpush1.bf16.xpose.msra.mxu0 0
  %2260 = vmatprep.subr.bf16.mxu0 0
  %2261 = vmatpush1.bf16.xpose.msra.mxu0 0
  %2262 = vmatprep.subr.bf16.mxu0 0
  %2263 = vmatpush1.bf16.xpose.msra.mxu0 0
  %2264 = vmatprep.subr.bf16.mxu0 0
  %2265 = vmatpush1.bf16.xpose.msra.mxu0 0
  %2266 = vmatprep.subr.bf16.mxu0 0
  %2267 = vmatpush1.bf16.xpose.msra.mxu0 0
  %2268 = vmatprep.subr.bf16.mxu0 0
  %2269 = vmatpush1.bf16.xpose.msra.mxu0 0
  %2270 = vmatprep.subr.bf16.mxu0 0
  %2271 = vmatpush1.bf16.xpose.msra.mxu0 0
  %2272 = vmatprep.subr.bf16.mxu0 0
  %2273 = vmatpush1.bf16.xpose.msra.mxu0 0
  %2274 = vmatprep.subr.bf16.mxu0 0
  %2275 = vmatpush1.bf16.xpose.msra.mxu0 0
  %2276 = vmatprep.subr.bf16.mxu0 0
  %2277 = vmatpush1.bf16.xpose.msra.mxu0 0
  %2278 = vmatprep.subr.bf16.mxu0 0
  %2279 = vmatpush1.bf16.xpose.msra.mxu0 0
  %2280 = vmatprep.subr.bf16.mxu0 0
  %2281 = vmatpush1.bf16.xpose.msra.mxu0 0
  %2282 = vmatprep.mubr.bf16.mxu0 0
  %2283 = vmatmul.mubr.bf16.gmra.mrb[0].mxu0 %v2245
  %v2284 = vpop.f32.mrb[0].mxu0
  %v2285 = vadd.f32 0.0, %v2284
  %v2286 = vpop.f32.mrb[0].mxu0
  %v2287 = vpop.f32.mrb[0].mxu0
  %v2288 = vpop.f32.mrb[0].mxu0
  %2289 = vdwg.mxu0
  %v2290 = vsel %vm1455, %v2235, -inf
  %2291 = vmax.xlane.f32.xlu0 %v2290
  %v2292 = vpop.xlane.xlu0 %2291
  %v2293 = vsel %vm1455, %v2285, -inf
  %2294 = vmax.xlane.f32.xlu0 %v2293
  %v2295 = vpop.xlane.xlu0 %2294
  %v2296 = vsub.f32 %v2235, %v2292
  %v2297 = vsub.f32 %v2285, %v2295
  %v2298 = vmul.f32 %v2296, 1.442695
  %v2299 = vpow.pop %v2298
  %v2300 = vmul.f32 %v2297, 1.442695
  %v2301 = vpow.pop %v2300
  %v2302 = vsel %vm1455, %v2299, 0.0
  %2303 = vadd.xlane.f32.xlu0 %v2302
  %v2304 = vpop.xlane.xlu0 %2303
  %v2305 = vsel %vm1455, %v2301, 0.0
  %2306 = vadd.xlane.f32.xlu0 %v2305
  %v2307 = vpop.xlane.xlu0 %2306
  %v2308 = vrcp.pop %v2304
  %v2309 = vrcp.pop %v2307
  %v2310 = vmul.f32 %v2299, %v2308
  %v2311 = vmul.f32 %v2301, %v2309
  %v2312 = vpack.c.bf16 %v2310, %v2310
  %v2313 = vpack.c.bf16 %v2311, %v2311
  %2314 = vrot.lane.b32.xlu0 %v1354, 48
  %v2315 = vpop.permute.xlu0 %2314
  %v2317 = vsel %vm1482, %v2312, 0
  %v2320 = vand.u32 %v2315, %v1489
  %2322 = vmatprep.subr.bf16.mxu0 0
  %2323 = vmatpush1.bf16.msra.mxu0 %v2320
  %2324 = vmatprep.subr.bf16.mxu0 0
  %2325 = vmatpush1.bf16.msra.mxu0 0
  %2326 = vmatprep.subr.bf16.mxu0 0
  %2327 = vmatpush1.bf16.msra.mxu0 0
  %2328 = vmatprep.subr.bf16.mxu0 0
  %2329 = vmatpush1.bf16.msra.mxu0 0
  %2330 = vmatprep.subr.bf16.mxu0 0
  %2331 = vmatpush1.bf16.msra.mxu0 0
  %2332 = vmatprep.subr.bf16.mxu0 0
  %2333 = vmatpush1.bf16.msra.mxu0 0
  %2334 = vmatprep.subr.bf16.mxu0 0
  %2335 = vmatpush1.bf16.msra.mxu0 0
  %2336 = vmatprep.subr.bf16.mxu0 0
  %2337 = vmatpush1.bf16.msra.mxu0 0
  %2338 = vmatprep.subr.bf16.mxu0 0
  %2339 = vmatpush1.bf16.msra.mxu0 0
  %2340 = vmatprep.subr.bf16.mxu0 0
  %2341 = vmatpush1.bf16.msra.mxu0 0
  %2342 = vmatprep.subr.bf16.mxu0 0
  %2343 = vmatpush1.bf16.msra.mxu0 0
  %2344 = vmatprep.subr.bf16.mxu0 0
  %2345 = vmatpush1.bf16.msra.mxu0 0
  %2346 = vmatprep.subr.bf16.mxu0 0
  %2347 = vmatpush1.bf16.msra.mxu0 0
  %2348 = vmatprep.subr.bf16.mxu0 0
  %2349 = vmatpush1.bf16.msra.mxu0 0
  %2350 = vmatprep.subr.bf16.mxu0 0
  %2351 = vmatpush1.bf16.msra.mxu0 0
  %2352 = vmatprep.subr.bf16.mxu0 0
  %2353 = vmatpush1.bf16.msra.mxu0 0
  %2354 = vmatprep.mubr.bf16.mxu0 0
  %2355 = vmatmul.mubr.bf16.gmra.mrb[0].mxu0 %v2317
  %v2356 = vpop.f32.mrb[0].mxu0
  %v2357 = vadd.f32 0.0, %v2356
  %v2358 = vpop.f32.mrb[0].mxu0
  %v2359 = vpop.f32.mrb[0].mxu0
  %v2360 = vpop.f32.mrb[0].mxu0
  %2361 = vdwg.mxu0
  %2362 = vrot.lane.b32.xlu0 %v1355, 48
  %v2363 = vpop.permute.xlu0 %2362
  %v2365 = vsel %vm1482, %v2313, 0
  %v2368 = vand.u32 %v2363, %v1489
  %2370 = vmatprep.subr.bf16.mxu0 0
  %2371 = vmatpush1.bf16.msra.mxu0 %v2368
  %2372 = vmatprep.subr.bf16.mxu0 0
  %2373 = vmatpush1.bf16.msra.mxu0 0
  %2374 = vmatprep.subr.bf16.mxu0 0
  %2375 = vmatpush1.bf16.msra.mxu0 0
  %2376 = vmatprep.subr.bf16.mxu0 0
  %2377 = vmatpush1.bf16.msra.mxu0 0
  %2378 = vmatprep.subr.bf16.mxu0 0
  %2379 = vmatpush1.bf16.msra.mxu0 0
  %2380 = vmatprep.subr.bf16.mxu0 0
  %2381 = vmatpush1.bf16.msra.mxu0 0
  %2382 = vmatprep.subr.bf16.mxu0 0
  %2383 = vmatpush1.bf16.msra.mxu0 0
  %2384 = vmatprep.subr.bf16.mxu0 0
  %2385 = vmatpush1.bf16.msra.mxu0 0
  %2386 = vmatprep.subr.bf16.mxu0 0
  %2387 = vmatpush1.bf16.msra.mxu0 0
  %2388 = vmatprep.subr.bf16.mxu0 0
  %2389 = vmatpush1.bf16.msra.mxu0 0
  %2390 = vmatprep.subr.bf16.mxu0 0
  %2391 = vmatpush1.bf16.msra.mxu0 0
  %2392 = vmatprep.subr.bf16.mxu0 0
  %2393 = vmatpush1.bf16.msra.mxu0 0
  %2394 = vmatprep.subr.bf16.mxu0 0
  %2395 = vmatpush1.bf16.msra.mxu0 0
  %2396 = vmatprep.subr.bf16.mxu0 0
  %2397 = vmatpush1.bf16.msra.mxu0 0
  %2398 = vmatprep.subr.bf16.mxu0 0
  %2399 = vmatpush1.bf16.msra.mxu0 0
  %2400 = vmatprep.subr.bf16.mxu0 0
  %2401 = vmatpush1.bf16.msra.mxu0 0
  %2402 = vmatprep.mubr.bf16.mxu0 0
  %2403 = vmatmul.mubr.bf16.gmra.mrb[0].mxu0 %v2365
  %v2404 = vpop.f32.mrb[0].mxu0
  %v2405 = vadd.f32 0.0, %v2404
  %v2406 = vpop.f32.mrb[0].mxu0
  %v2407 = vpop.f32.mrb[0].mxu0
  %v2408 = vpop.f32.mrb[0].mxu0
  %2409 = vdwg.mxu0
  %v2412 = vcombine.high %v2357, %v2357
  %v2414 = vunpack.c.l.s4 1966171168
  %v2415 = vunpack.c.0.s8 %v2414
  %v2416 = vlaneseq
  %v2417 = vshrl.u32 %v2416, 7
  %v2418 = vsub.s32 %v2415, %v2417
  %v2419 = vrot.slane %v2357, %v2418
  %v2421 = vunpack.c.l.s4 1966171168
  %v2422 = vunpack.c.0.s8 %v2421
  %v2423 = vlaneseq
  %v2424 = vshrl.u32 %v2423, 7
  %v2425 = vsub.s32 %v2422, %v2424
  %v2426 = vrot.slane %v2412, %v2425
  %v2427 = vcombine.high %v2419, %v2419
  %v2429 = vunpack.c.l.s4 1966171168
  %v2430 = vunpack.c.0.s8 %v2429
  %v2431 = vlaneseq
  %v2432 = vshrl.u32 %v2431, 7
  %v2433 = vsub.s32 %v2430, %v2432
  %v2434 = vrot.slane %v2419, %v2433
  %v2436 = vunpack.c.l.s4 1966171168
  %v2437 = vunpack.c.0.s8 %v2436
  %v2438 = vlaneseq
  %v2439 = vshrl.u32 %v2438, 7
  %v2440 = vsub.s32 %v2437, %v2439
  %v2441 = vrot.slane %v2426, %v2440
  %v2443 = vunpack.c.l.s4 1966171168
  %v2444 = vunpack.c.0.s8 %v2443
  %v2445 = vlaneseq
  %v2446 = vshrl.u32 %v2445, 7
  %v2447 = vsub.s32 %v2444, %v2446
  %v2448 = vrot.slane %v2427, %v2447
  %v2449 = vcombine.high %v2434, %v2434
  %v2450 = vcombine.high %v2448, %v2448
  %v2451 = vcombine.high %v2405, %v2405
  %v2453 = vunpack.c.l.s4 1966171168
  %v2454 = vunpack.c.0.s8 %v2453
  %v2455 = vlaneseq
  %v2456 = vshrl.u32 %v2455, 7
  %v2457 = vsub.s32 %v2454, %v2456
  %v2458 = vrot.slane %v2405, %v2457
  %v2460 = vunpack.c.l.s4 1966171168
  %v2461 = vunpack.c.0.s8 %v2460
  %v2462 = vlaneseq
  %v2463 = vshrl.u32 %v2462, 7
  %v2464 = vsub.s32 %v2461, %v2463
  %v2465 = vrot.slane %v2451, %v2464
  %v2466 = vcombine.high %v2458, %v2458
  %v2468 = vunpack.c.l.s4 1966171168
  %v2469 = vunpack.c.0.s8 %v2468
  %v2470 = vlaneseq
  %v2471 = vshrl.u32 %v2470, 7
  %v2472 = vsub.s32 %v2469, %v2471
  %v2473 = vrot.slane %v2458, %v2472
  %v2475 = vunpack.c.l.s4 1966171168
  %v2476 = vunpack.c.0.s8 %v2475
  %v2477 = vlaneseq
  %v2478 = vshrl.u32 %v2477, 7
  %v2479 = vsub.s32 %v2476, %v2478
  %v2480 = vrot.slane %v2465, %v2479
  %v2482 = vunpack.c.l.s4 1966171168
  %v2483 = vunpack.c.0.s8 %v2482
  %v2484 = vlaneseq
  %v2485 = vshrl.u32 %v2484, 7
  %v2486 = vsub.s32 %v2483, %v2485
  %v2487 = vrot.slane %v2466, %v2486
  %v2488 = vcombine.high %v2473, %v2473
  %v2489 = vcombine.high %v2487, %v2487
  %v2490 = vcombine.low %v2434, %v2448
  %v2491 = vcombine.low %v2449, %v2450
  %v2492 = vcombine.low %v2441, %v2473
  %v2493 = vcombine.low %v2487, %v2488
  %v2495 = vunpack.c.l.s4 1966171168
  %v2496 = vunpack.c.0.s8 %v2495
  %v2497 = vlaneseq
  %v2498 = vshrl.u32 %v2497, 7
  %v2499 = vsub.s32 %v2496, %v2498
  %v2500 = vrot.slane %v2490, %v2499
  %v2502 = vunpack.c.l.s4 1966171168
  %v2503 = vunpack.c.0.s8 %v2502
  %v2504 = vlaneseq
  %v2505 = vshrl.u32 %v2504, 7
  %v2506 = vsub.s32 %v2503, %v2505
  %v2507 = vrot.slane %v2491, %v2506
  %v2509 = vunpack.c.l.s4 1966171168
  %v2510 = vunpack.c.0.s8 %v2509
  %v2511 = vlaneseq
  %v2512 = vshrl.u32 %v2511, 7
  %v2513 = vsub.s32 %v2510, %v2512
  %v2514 = vrot.slane %v2492, %v2513
  %v2516 = vunpack.c.l.s4 1966171168
  %v2517 = vunpack.c.0.s8 %v2516
  %v2518 = vlaneseq
  %v2519 = vshrl.u32 %v2518, 7
  %v2520 = vsub.s32 %v2517, %v2519
  %v2521 = vrot.slane %v2493, %v2520
  %v2522 = vcombine.low %v2500, %v2507
  %v2523 = vcombine.low %v2514, %v2521
  %v2525 = vunpack.c.l.s4 1966171168
  %v2526 = vunpack.c.0.s8 %v2525
  %v2527 = vlaneseq
  %v2528 = vshrl.u32 %v2527, 7
  %v2529 = vsub.s32 %v2526, %v2528
  %v2530 = vrot.slane %v2522, %v2529
  %v2532 = vunpack.c.l.s4 1966171168
  %v2533 = vunpack.c.0.s8 %v2532
  %v2534 = vlaneseq
  %v2535 = vshrl.u32 %v2534, 7
  %v2536 = vsub.s32 %v2533, %v2535
  %v2537 = vrot.slane %v2523, %v2536
  %v2538 = vcombine.low %v2530, %v2537
  %v2539 = vcombine.low %v2489, %v2480
  %v2541 = vunpack.c.l.s4 1966171168
  %v2542 = vunpack.c.0.s8 %v2541
  %v2543 = vlaneseq
  %v2544 = vshrl.u32 %v2543, 7
  %v2545 = vsub.s32 %v2542, %v2544
  %v2546 = vrot.slane %v2539, %v2545
  %v2548 = vunpack.c.l.s4 1966171168
  %v2549 = vunpack.c.0.s8 %v2548
  %v2550 = vlaneseq
  %v2551 = vshrl.u32 %v2550, 7
  %v2552 = vsub.s32 %v2549, %v2551
  %v2553 = vrot.slane %v2546, %v2552
  %v2556 = vpack.c.bf16 %v2553, %v2538
  %v2558 = vsel %vm1359, %v2556, 0
  %v2561 = vsel %vm2098, %v1199, 0
  %2563 = vmatprep.subr.bf16.mxu0 0
  %2564 = vmatpush1.bf16.msra.mxu0 %v2561
  %2565 = vmatprep.subr.bf16.mxu0 0
  %2566 = vmatpush1.bf16.msra.mxu0 0
  %2567 = vmatprep.subr.bf16.mxu0 0
  %2568 = vmatpush1.bf16.msra.mxu0 0
  %2569 = vmatprep.subr.bf16.mxu0 0
  %2570 = vmatpush1.bf16.msra.mxu0 0
  %2571 = vmatprep.subr.bf16.mxu0 0
  %2572 = vmatpush1.bf16.msra.mxu0 0
  %2573 = vmatprep.subr.bf16.mxu0 0
  %2574 = vmatpush1.bf16.msra.mxu0 0
  %2575 = vmatprep.subr.bf16.mxu0 0
  %2576 = vmatpush1.bf16.msra.mxu0 0
  %2577 = vmatprep.subr.bf16.mxu0 0
  %2578 = vmatpush1.bf16.msra.mxu0 0
  %2579 = vmatprep.subr.bf16.mxu0 0
  %2580 = vmatpush1.bf16.msra.mxu0 0
  %2581 = vmatprep.subr.bf16.mxu0 0
  %2582 = vmatpush1.bf16.msra.mxu0 0
  %2583 = vmatprep.subr.bf16.mxu0 0
  %2584 = vmatpush1.bf16.msra.mxu0 0
  %2585 = vmatprep.subr.bf16.mxu0 0
  %2586 = vmatpush1.bf16.msra.mxu0 0
  %2587 = vmatprep.subr.bf16.mxu0 0
  %2588 = vmatpush1.bf16.msra.mxu0 0
  %2589 = vmatprep.subr.bf16.mxu0 0
  %2590 = vmatpush1.bf16.msra.mxu0 0
  %2591 = vmatprep.subr.bf16.mxu0 0
  %2592 = vmatpush1.bf16.msra.mxu0 0
  %2593 = vmatprep.subr.bf16.mxu0 0
  %2594 = vmatpush1.bf16.msra.mxu0 0
  %2595 = vmatprep.mubr.bf16.mxu0 0
  %2596 = vmatmul.mubr.bf16.gmra.mrb[0].mxu0 %v2558
  %v2597 = vpop.f32.mrb[0].mxu0
  %v2598 = vadd.f32 0.0, %v2597
  %v2599 = vpop.f32.mrb[0].mxu0
  %v2600 = vpop.f32.mrb[0].mxu0
  %v2601 = vadd.f32 0.0, %v2600
  %v2602 = vpop.f32.mrb[0].mxu0
  %2603 = vdwg.mxu0
  %v2604 = vadd.f32 %v2184, %v2598
  %v2605 = vadd.f32 %v2187, %v2601
  %2606 = vrot.lane.b32.xlu0 %v1354, 104
  %v2607 = vpop.permute.xlu0 %2606
  %2608 = vrot.lane.b32.xlu0 %v1354, 72
  %v2609 = vpop.permute.xlu0 %2608
  %v2611 = vsel %vm1359, %v2607, 0
  %v2614 = vsel %vm1359, %v2609, 0
  %2616 = vmatprep.subr.bf16.mxu0 0
  %2617 = vmatpush1.bf16.xpose.msra.mxu0 %v2614
  %2618 = vmatprep.subr.bf16.mxu0 0
  %2619 = vmatpush1.bf16.xpose.msra.mxu0 0
  %2620 = vmatprep.subr.bf16.mxu0 0
  %2621 = vmatpush1.bf16.xpose.msra.mxu0 0
  %2622 = vmatprep.subr.bf16.mxu0 0
  %2623 = vmatpush1.bf16.xpose.msra.mxu0 0
  %2624 = vmatprep.subr.bf16.mxu0 0
  %2625 = vmatpush1.bf16.xpose.msra.mxu0 0
  %2626 = vmatprep.subr.bf16.mxu0 0
  %2627 = vmatpush1.bf16.xpose.msra.mxu0 0
  %2628 = vmatprep.subr.bf16.mxu0 0
  %2629 = vmatpush1.bf16.xpose.msra.mxu0 0
  %2630 = vmatprep.subr.bf16.mxu0 0
  %2631 = vmatpush1.bf16.xpose.msra.mxu0 0
  %2632 = vmatprep.subr.bf16.mxu0 0
  %2633 = vmatpush1.bf16.xpose.msra.mxu0 0
  %2634 = vmatprep.subr.bf16.mxu0 0
  %2635 = vmatpush1.bf16.xpose.msra.mxu0 0
  %2636 = vmatprep.subr.bf16.mxu0 0
  %2637 = vmatpush1.bf16.xpose.msra.mxu0 0
  %2638 = vmatprep.subr.bf16.mxu0 0
  %2639 = vmatpush1.bf16.xpose.msra.mxu0 0
  %2640 = vmatprep.subr.bf16.mxu0 0
  %2641 = vmatpush1.bf16.xpose.msra.mxu0 0
  %2642 = vmatprep.subr.bf16.mxu0 0
  %2643 = vmatpush1.bf16.xpose.msra.mxu0 0
  %2644 = vmatprep.subr.bf16.mxu0 0
  %2645 = vmatpush1.bf16.xpose.msra.mxu0 0
  %2646 = vmatprep.subr.bf16.mxu0 0
  %2647 = vmatpush1.bf16.xpose.msra.mxu0 0
  %2648 = vmatprep.mubr.bf16.mxu0 0
  %2649 = vmatmul.mubr.bf16.gmra.mrb[0].mxu0 %v2611
  %v2650 = vpop.f32.mrb[0].mxu0
  %v2651 = vadd.f32 0.0, %v2650
  %v2652 = vpop.f32.mrb[0].mxu0
  %v2653 = vpop.f32.mrb[0].mxu0
  %v2654 = vpop.f32.mrb[0].mxu0
  %2655 = vdwg.mxu0
  %2656 = vrot.lane.b32.xlu0 %v1355, 104
  %v2657 = vpop.permute.xlu0 %2656
  %2658 = vrot.lane.b32.xlu0 %v1355, 72
  %v2659 = vpop.permute.xlu0 %2658
  %v2661 = vsel %vm1359, %v2657, 0
  %v2664 = vsel %vm1359, %v2659, 0
  %2666 = vmatprep.subr.bf16.mxu0 0
  %2667 = vmatpush1.bf16.xpose.msra.mxu0 %v2664
  %2668 = vmatprep.subr.bf16.mxu0 0
  %2669 = vmatpush1.bf16.xpose.msra.mxu0 0
  %2670 = vmatprep.subr.bf16.mxu0 0
  %2671 = vmatpush1.bf16.xpose.msra.mxu0 0
  %2672 = vmatprep.subr.bf16.mxu0 0
  %2673 = vmatpush1.bf16.xpose.msra.mxu0 0
  %2674 = vmatprep.subr.bf16.mxu0 0
  %2675 = vmatpush1.bf16.xpose.msra.mxu0 0
  %2676 = vmatprep.subr.bf16.mxu0 0
  %2677 = vmatpush1.bf16.xpose.msra.mxu0 0
  %2678 = vmatprep.subr.bf16.mxu0 0
  %2679 = vmatpush1.bf16.xpose.msra.mxu0 0
  %2680 = vmatprep.subr.bf16.mxu0 0
  %2681 = vmatpush1.bf16.xpose.msra.mxu0 0
  %2682 = vmatprep.subr.bf16.mxu0 0
  %2683 = vmatpush1.bf16.xpose.msra.mxu0 0
  %2684 = vmatprep.subr.bf16.mxu0 0
  %2685 = vmatpush1.bf16.xpose.msra.mxu0 0
  %2686 = vmatprep.subr.bf16.mxu0 0
  %2687 = vmatpush1.bf16.xpose.msra.mxu0 0
  %2688 = vmatprep.subr.bf16.mxu0 0
  %2689 = vmatpush1.bf16.xpose.msra.mxu0 0
  %2690 = vmatprep.subr.bf16.mxu0 0
  %2691 = vmatpush1.bf16.xpose.msra.mxu0 0
  %2692 = vmatprep.subr.bf16.mxu0 0
  %2693 = vmatpush1.bf16.xpose.msra.mxu0 0
  %2694 = vmatprep.subr.bf16.mxu0 0
  %2695 = vmatpush1.bf16.xpose.msra.mxu0 0
  %2696 = vmatprep.subr.bf16.mxu0 0
  %2697 = vmatpush1.bf16.xpose.msra.mxu0 0
  %2698 = vmatprep.mubr.bf16.mxu0 0
  %2699 = vmatmul.mubr.bf16.gmra.mrb[0].mxu0 %v2661
  %v2700 = vpop.f32.mrb[0].mxu0
  %v2701 = vadd.f32 0.0, %v2700
  %v2702 = vpop.f32.mrb[0].mxu0
  %v2703 = vpop.f32.mrb[0].mxu0
  %v2704 = vpop.f32.mrb[0].mxu0
  %2705 = vdwg.mxu0
  %v2706 = vsel %vm1455, %v2651, -inf
  %2707 = vmax.xlane.f32.xlu0 %v2706
  %v2708 = vpop.xlane.xlu0 %2707
  %v2709 = vsel %vm1455, %v2701, -inf
  %2710 = vmax.xlane.f32.xlu0 %v2709
  %v2711 = vpop.xlane.xlu0 %2710
  %v2712 = vsub.f32 %v2651, %v2708
  %v2713 = vsub.f32 %v2701, %v2711
  %v2714 = vmul.f32 %v2712, 1.442695
  %v2715 = vpow.pop %v2714
  %v2716 = vmul.f32 %v2713, 1.442695
  %v2717 = vpow.pop %v2716
  %v2718 = vsel %vm1455, %v2715, 0.0
  %2719 = vadd.xlane.f32.xlu0 %v2718
  %v2720 = vpop.xlane.xlu0 %2719
  %v2721 = vsel %vm1455, %v2717, 0.0
  %2722 = vadd.xlane.f32.xlu0 %v2721
  %v2723 = vpop.xlane.xlu0 %2722
  %v2724 = vrcp.pop %v2720
  %v2725 = vrcp.pop %v2723
  %v2726 = vmul.f32 %v2715, %v2724
  %v2727 = vmul.f32 %v2717, %v2725
  %v2728 = vpack.c.bf16 %v2726, %v2726
  %v2729 = vpack.c.bf16 %v2727, %v2727
  %2730 = vrot.lane.b32.xlu0 %v1354, 40
  %v2731 = vpop.permute.xlu0 %2730
  %v2733 = vsel %vm1482, %v2728, 0
  %v2736 = vand.u32 %v2731, %v1489
  %2738 = vmatprep.subr.bf16.mxu0 0
  %2739 = vmatpush1.bf16.msra.mxu0 %v2736
  %2740 = vmatprep.subr.bf16.mxu0 0
  %2741 = vmatpush1.bf16.msra.mxu0 0
  %2742 = vmatprep.subr.bf16.mxu0 0
  %2743 = vmatpush1.bf16.msra.mxu0 0
  %2744 = vmatprep.subr.bf16.mxu0 0
  %2745 = vmatpush1.bf16.msra.mxu0 0
  %2746 = vmatprep.subr.bf16.mxu0 0
  %2747 = vmatpush1.bf16.msra.mxu0 0
  %2748 = vmatprep.subr.bf16.mxu0 0
  %2749 = vmatpush1.bf16.msra.mxu0 0
  %2750 = vmatprep.subr.bf16.mxu0 0
  %2751 = vmatpush1.bf16.msra.mxu0 0
  %2752 = vmatprep.subr.bf16.mxu0 0
  %2753 = vmatpush1.bf16.msra.mxu0 0
  %2754 = vmatprep.subr.bf16.mxu0 0
  %2755 = vmatpush1.bf16.msra.mxu0 0
  %2756 = vmatprep.subr.bf16.mxu0 0
  %2757 = vmatpush1.bf16.msra.mxu0 0
  %2758 = vmatprep.subr.bf16.mxu0 0
  %2759 = vmatpush1.bf16.msra.mxu0 0
  %2760 = vmatprep.subr.bf16.mxu0 0
  %2761 = vmatpush1.bf16.msra.mxu0 0
  %2762 = vmatprep.subr.bf16.mxu0 0
  %2763 = vmatpush1.bf16.msra.mxu0 0
  %2764 = vmatprep.subr.bf16.mxu0 0
  %2765 = vmatpush1.bf16.msra.mxu0 0
  %2766 = vmatprep.subr.bf16.mxu0 0
  %2767 = vmatpush1.bf16.msra.mxu0 0
  %2768 = vmatprep.subr.bf16.mxu0 0
  %2769 = vmatpush1.bf16.msra.mxu0 0
  %2770 = vmatprep.mubr.bf16.mxu0 0
  %2771 = vmatmul.mubr.bf16.gmra.mrb[0].mxu0 %v2733
  %v2772 = vpop.f32.mrb[0].mxu0
  %v2773 = vadd.f32 0.0, %v2772
  %v2774 = vpop.f32.mrb[0].mxu0
  %v2775 = vpop.f32.mrb[0].mxu0
  %v2776 = vpop.f32.mrb[0].mxu0
  %2777 = vdwg.mxu0
  %2778 = vrot.lane.b32.xlu0 %v1355, 40
  %v2779 = vpop.permute.xlu0 %2778
  %v2781 = vsel %vm1482, %v2729, 0
  %v2784 = vand.u32 %v2779, %v1489
  %2786 = vmatprep.subr.bf16.mxu0 0
  %2787 = vmatpush1.bf16.msra.mxu0 %v2784
  %2788 = vmatprep.subr.bf16.mxu0 0
  %2789 = vmatpush1.bf16.msra.mxu0 0
  %2790 = vmatprep.subr.bf16.mxu0 0
  %2791 = vmatpush1.bf16.msra.mxu0 0
  %2792 = vmatprep.subr.bf16.mxu0 0
  %2793 = vmatpush1.bf16.msra.mxu0 0
  %2794 = vmatprep.subr.bf16.mxu0 0
  %2795 = vmatpush1.bf16.msra.mxu0 0
  %2796 = vmatprep.subr.bf16.mxu0 0
  %2797 = vmatpush1.bf16.msra.mxu0 0
  %2798 = vmatprep.subr.bf16.mxu0 0
  %2799 = vmatpush1.bf16.msra.mxu0 0
  %2800 = vmatprep.subr.bf16.mxu0 0
  %2801 = vmatpush1.bf16.msra.mxu0 0
  %2802 = vmatprep.subr.bf16.mxu0 0
  %2803 = vmatpush1.bf16.msra.mxu0 0
  %2804 = vmatprep.subr.bf16.mxu0 0
  %2805 = vmatpush1.bf16.msra.mxu0 0
  %2806 = vmatprep.subr.bf16.mxu0 0
  %2807 = vmatpush1.bf16.msra.mxu0 0
  %2808 = vmatprep.subr.bf16.mxu0 0
  %2809 = vmatpush1.bf16.msra.mxu0 0
  %2810 = vmatprep.subr.bf16.mxu0 0
  %2811 = vmatpush1.bf16.msra.mxu0 0
  %2812 = vmatprep.subr.bf16.mxu0 0
  %2813 = vmatpush1.bf16.msra.mxu0 0
  %2814 = vmatprep.subr.bf16.mxu0 0
  %2815 = vmatpush1.bf16.msra.mxu0 0
  %2816 = vmatprep.subr.bf16.mxu0 0
  %2817 = vmatpush1.bf16.msra.mxu0 0
  %2818 = vmatprep.mubr.bf16.mxu0 0
  %2819 = vmatmul.mubr.bf16.gmra.mrb[0].mxu0 %v2781
  %v2820 = vpop.f32.mrb[0].mxu0
  %v2821 = vadd.f32 0.0, %v2820
  %v2822 = vpop.f32.mrb[0].mxu0
  %v2823 = vpop.f32.mrb[0].mxu0
  %v2824 = vpop.f32.mrb[0].mxu0
  %2825 = vdwg.mxu0
  %v2828 = vcombine.high %v2773, %v2773
  %v2830 = vunpack.c.l.s4 1966171168
  %v2831 = vunpack.c.0.s8 %v2830
  %v2832 = vlaneseq
  %v2833 = vshrl.u32 %v2832, 7
  %v2834 = vsub.s32 %v2831, %v2833
  %v2835 = vrot.slane %v2773, %v2834
  %v2837 = vunpack.c.l.s4 1966171168
  %v2838 = vunpack.c.0.s8 %v2837
  %v2839 = vlaneseq
  %v2840 = vshrl.u32 %v2839, 7
  %v2841 = vsub.s32 %v2838, %v2840
  %v2842 = vrot.slane %v2828, %v2841
  %v2843 = vcombine.high %v2835, %v2835
  %v2845 = vunpack.c.l.s4 1966171168
  %v2846 = vunpack.c.0.s8 %v2845
  %v2847 = vlaneseq
  %v2848 = vshrl.u32 %v2847, 7
  %v2849 = vsub.s32 %v2846, %v2848
  %v2850 = vrot.slane %v2835, %v2849
  %v2852 = vunpack.c.l.s4 1966171168
  %v2853 = vunpack.c.0.s8 %v2852
  %v2854 = vlaneseq
  %v2855 = vshrl.u32 %v2854, 7
  %v2856 = vsub.s32 %v2853, %v2855
  %v2857 = vrot.slane %v2842, %v2856
  %v2859 = vunpack.c.l.s4 1966171168
  %v2860 = vunpack.c.0.s8 %v2859
  %v2861 = vlaneseq
  %v2862 = vshrl.u32 %v2861, 7
  %v2863 = vsub.s32 %v2860, %v2862
  %v2864 = vrot.slane %v2843, %v2863
  %v2865 = vcombine.high %v2850, %v2850
  %v2866 = vcombine.high %v2864, %v2864
  %v2867 = vcombine.high %v2821, %v2821
  %v2869 = vunpack.c.l.s4 1966171168
  %v2870 = vunpack.c.0.s8 %v2869
  %v2871 = vlaneseq
  %v2872 = vshrl.u32 %v2871, 7
  %v2873 = vsub.s32 %v2870, %v2872
  %v2874 = vrot.slane %v2821, %v2873
  %v2876 = vunpack.c.l.s4 1966171168
  %v2877 = vunpack.c.0.s8 %v2876
  %v2878 = vlaneseq
  %v2879 = vshrl.u32 %v2878, 7
  %v2880 = vsub.s32 %v2877, %v2879
  %v2881 = vrot.slane %v2867, %v2880
  %v2882 = vcombine.high %v2874, %v2874
  %v2884 = vunpack.c.l.s4 1966171168
  %v2885 = vunpack.c.0.s8 %v2884
  %v2886 = vlaneseq
  %v2887 = vshrl.u32 %v2886, 7
  %v2888 = vsub.s32 %v2885, %v2887
  %v2889 = vrot.slane %v2874, %v2888
  %v2891 = vunpack.c.l.s4 1966171168
  %v2892 = vunpack.c.0.s8 %v2891
  %v2893 = vlaneseq
  %v2894 = vshrl.u32 %v2893, 7
  %v2895 = vsub.s32 %v2892, %v2894
  %v2896 = vrot.slane %v2881, %v2895
  %v2898 = vunpack.c.l.s4 1966171168
  %v2899 = vunpack.c.0.s8 %v2898
  %v2900 = vlaneseq
  %v2901 = vshrl.u32 %v2900, 7
  %v2902 = vsub.s32 %v2899, %v2901
  %v2903 = vrot.slane %v2882, %v2902
  %v2904 = vcombine.high %v2889, %v2889
  %v2905 = vcombine.high %v2903, %v2903
  %v2906 = vcombine.low %v2850, %v2864
  %v2907 = vcombine.low %v2865, %v2866
  %v2908 = vcombine.low %v2857, %v2889
  %v2909 = vcombine.low %v2903, %v2904
  %v2911 = vunpack.c.l.s4 1966171168
  %v2912 = vunpack.c.0.s8 %v2911
  %v2913 = vlaneseq
  %v2914 = vshrl.u32 %v2913, 7
  %v2915 = vsub.s32 %v2912, %v2914
  %v2916 = vrot.slane %v2906, %v2915
  %v2918 = vunpack.c.l.s4 1966171168
  %v2919 = vunpack.c.0.s8 %v2918
  %v2920 = vlaneseq
  %v2921 = vshrl.u32 %v2920, 7
  %v2922 = vsub.s32 %v2919, %v2921
  %v2923 = vrot.slane %v2907, %v2922
  %v2925 = vunpack.c.l.s4 1966171168
  %v2926 = vunpack.c.0.s8 %v2925
  %v2927 = vlaneseq
  %v2928 = vshrl.u32 %v2927, 7
  %v2929 = vsub.s32 %v2926, %v2928
  %v2930 = vrot.slane %v2908, %v2929
  %v2932 = vunpack.c.l.s4 1966171168
  %v2933 = vunpack.c.0.s8 %v2932
  %v2934 = vlaneseq
  %v2935 = vshrl.u32 %v2934, 7
  %v2936 = vsub.s32 %v2933, %v2935
  %v2937 = vrot.slane %v2909, %v2936
  %v2938 = vcombine.low %v2916, %v2923
  %v2939 = vcombine.low %v2930, %v2937
  %v2941 = vunpack.c.l.s4 1966171168
  %v2942 = vunpack.c.0.s8 %v2941
  %v2943 = vlaneseq
  %v2944 = vshrl.u32 %v2943, 7
  %v2945 = vsub.s32 %v2942, %v2944
  %v2946 = vrot.slane %v2938, %v2945
  %v2948 = vunpack.c.l.s4 1966171168
  %v2949 = vunpack.c.0.s8 %v2948
  %v2950 = vlaneseq
  %v2951 = vshrl.u32 %v2950, 7
  %v2952 = vsub.s32 %v2949, %v2951
  %v2953 = vrot.slane %v2939, %v2952
  %v2954 = vcombine.low %v2946, %v2953
  %v2955 = vcombine.low %v2905, %v2896
  %v2957 = vunpack.c.l.s4 1966171168
  %v2958 = vunpack.c.0.s8 %v2957
  %v2959 = vlaneseq
  %v2960 = vshrl.u32 %v2959, 7
  %v2961 = vsub.s32 %v2958, %v2960
  %v2962 = vrot.slane %v2955, %v2961
  %v2964 = vunpack.c.l.s4 1966171168
  %v2965 = vunpack.c.0.s8 %v2964
  %v2966 = vlaneseq
  %v2967 = vshrl.u32 %v2966, 7
  %v2968 = vsub.s32 %v2965, %v2967
  %v2969 = vrot.slane %v2962, %v2968
  %v2972 = vpack.c.bf16 %v2969, %v2954
  %v2974 = vsel %vm1359, %v2972, 0
  %v2977 = vsel %vm2098, %v1200, 0
  %2979 = vmatprep.subr.bf16.mxu0 0
  %2980 = vmatpush1.bf16.msra.mxu0 %v2977
  %2981 = vmatprep.subr.bf16.mxu0 0
  %2982 = vmatpush1.bf16.msra.mxu0 0
  %2983 = vmatprep.subr.bf16.mxu0 0
  %2984 = vmatpush1.bf16.msra.mxu0 0
  %2985 = vmatprep.subr.bf16.mxu0 0
  %2986 = vmatpush1.bf16.msra.mxu0 0
  %2987 = vmatprep.subr.bf16.mxu0 0
  %2988 = vmatpush1.bf16.msra.mxu0 0
  %2989 = vmatprep.subr.bf16.mxu0 0
  %2990 = vmatpush1.bf16.msra.mxu0 0
  %2991 = vmatprep.subr.bf16.mxu0 0
  %2992 = vmatpush1.bf16.msra.mxu0 0
  %2993 = vmatprep.subr.bf16.mxu0 0
  %2994 = vmatpush1.bf16.msra.mxu0 0
  %2995 = vmatprep.subr.bf16.mxu0 0
  %2996 = vmatpush1.bf16.msra.mxu0 0
  %2997 = vmatprep.subr.bf16.mxu0 0
  %2998 = vmatpush1.bf16.msra.mxu0 0
  %2999 = vmatprep.subr.bf16.mxu0 0
  %3000 = vmatpush1.bf16.msra.mxu0 0
  %3001 = vmatprep.subr.bf16.mxu0 0
  %3002 = vmatpush1.bf16.msra.mxu0 0
  %3003 = vmatprep.subr.bf16.mxu0 0
  %3004 = vmatpush1.bf16.msra.mxu0 0
  %3005 = vmatprep.subr.bf16.mxu0 0
  %3006 = vmatpush1.bf16.msra.mxu0 0
  %3007 = vmatprep.subr.bf16.mxu0 0
  %3008 = vmatpush1.bf16.msra.mxu0 0
  %3009 = vmatprep.subr.bf16.mxu0 0
  %3010 = vmatpush1.bf16.msra.mxu0 0
  %3011 = vmatprep.mubr.bf16.mxu0 0
  %3012 = vmatmul.mubr.bf16.gmra.mrb[0].mxu0 %v2974
  %v3013 = vpop.f32.mrb[0].mxu0
  %v3014 = vadd.f32 0.0, %v3013
  %v3015 = vpop.f32.mrb[0].mxu0
  %v3016 = vpop.f32.mrb[0].mxu0
  %v3017 = vadd.f32 0.0, %v3016
  %v3018 = vpop.f32.mrb[0].mxu0
  %3019 = vdwg.mxu0
  %v3020 = vadd.f32 %v2604, %v3014
  %v3021 = vadd.f32 %v2605, %v3017
  %v3024 = vcombine.high %v3020, %v3020
  %v3026 = vunpack.c.l.s4 1966171168
  %v3027 = vunpack.c.0.s8 %v3026
  %v3028 = vlaneseq
  %v3029 = vshrl.u32 %v3028, 7
  %v3030 = vsub.s32 %v3027, %v3029
  %v3031 = vrot.slane %v3020, %v3030
  %v3033 = vunpack.c.l.s4 1966171168
  %v3034 = vunpack.c.0.s8 %v3033
  %v3035 = vlaneseq
  %v3036 = vshrl.u32 %v3035, 7
  %v3037 = vsub.s32 %v3034, %v3036
  %v3038 = vrot.slane %v3024, %v3037
  %v3039 = vcombine.high %v3031, %v3031
  %v3040 = vcombine.high %v3038, %v3038
  %v3042 = vunpack.c.l.s4 1966171168
  %v3043 = vunpack.c.0.s8 %v3042
  %v3044 = vlaneseq
  %v3045 = vshrl.u32 %v3044, 7
  %v3046 = vsub.s32 %v3043, %v3045
  %v3047 = vrot.slane %v3031, %v3046
  %v3049 = vunpack.c.l.s4 1966171168
  %v3050 = vunpack.c.0.s8 %v3049
  %v3051 = vlaneseq
  %v3052 = vshrl.u32 %v3051, 7
  %v3053 = vsub.s32 %v3050, %v3052
  %v3054 = vrot.slane %v3038, %v3053
  %v3056 = vunpack.c.l.s4 1966171168
  %v3057 = vunpack.c.0.s8 %v3056
  %v3058 = vlaneseq
  %v3059 = vshrl.u32 %v3058, 7
  %v3060 = vsub.s32 %v3057, %v3059
  %v3061 = vrot.slane %v3039, %v3060
  %v3063 = vunpack.c.l.s4 1966171168
  %v3064 = vunpack.c.0.s8 %v3063
  %v3065 = vlaneseq
  %v3066 = vshrl.u32 %v3065, 7
  %v3067 = vsub.s32 %v3064, %v3066
  %v3068 = vrot.slane %v3040, %v3067
  %v3069 = vcombine.high %v3047, %v3047
  %v3070 = vcombine.high %v3054, %v3054
  %v3071 = vcombine.high %v3061, %v3061
  %v3072 = vcombine.high %v3068, %v3068
  %v3074 = vunpack.c.l.s4 1966171168
  %v3075 = vunpack.c.0.s8 %v3074
  %v3076 = vlaneseq
  %v3077 = vshrl.u32 %v3076, 7
  %v3078 = vsub.s32 %v3075, %v3077
  %v3079 = vrot.slane %v3021, %v3078
  %v3080 = vcombine.high %v3079, %v3079
  %v3082 = vunpack.c.l.s4 1966171168
  %v3083 = vunpack.c.0.s8 %v3082
  %v3084 = vlaneseq
  %v3085 = vshrl.u32 %v3084, 7
  %v3086 = vsub.s32 %v3083, %v3085
  %v3087 = vrot.slane %v3079, %v3086
  %v3089 = vunpack.c.l.s4 1966171168
  %v3090 = vunpack.c.0.s8 %v3089
  %v3091 = vlaneseq
  %v3092 = vshrl.u32 %v3091, 7
  %v3093 = vsub.s32 %v3090, %v3092
  %v3094 = vrot.slane %v3080, %v3093
  %v3105 = vadd.f32 %v542, %v3047
  %v3106 = vadd.f32 %v556, %v3061
  %v3107 = vadd.f32 %v557, %v3069
  %v3108 = vadd.f32 %v558, %v3071
  %v3109 = vadd.f32 %v549, %v3054
  %v3110 = vadd.f32 %v581, %v3068
  %v3111 = vadd.f32 %v595, %v3070
  %v3112 = vadd.f32 %v596, %v3072
  %v3113 = vadd.f32 %v597, %v3087
  %v3114 = vadd.f32 %v588, %v3094
  %v3115 = vld [vmem:[%s12] sm:$0x1]
  %v3117 = vlaneseq
  %v3118 = vshrl.u32 %v3117, 7
  %v3119 = vsub.s32 0, %v3118
  %v3120 = vrot.slane %v3115, %v3119
  %v3121 = vcombine.high %v3120, %v3120
  %v3123 = vunpack.c.l.s4 1966171168
  %v3124 = vunpack.c.0.s8 %v3123
  %v3125 = vlaneseq
  %v3126 = vshrl.u32 %v3125, 7
  %v3127 = vsub.s32 %v3124, %v3126
  %v3128 = vrot.slane %v3120, %v3127
  %v3130 = vunpack.c.l.s4 1966171168
  %v3131 = vunpack.c.0.s8 %v3130
  %v3132 = vlaneseq
  %v3133 = vshrl.u32 %v3132, 7
  %v3134 = vsub.s32 %v3131, %v3133
  %v3135 = vrot.slane %v3121, %v3134
  %v3136 = vcombine.high %v3128, %v3128
  %v3137 = vcombine.high %v3135, %v3135
  %v3139 = vunpack.c.l.s4 1966171168
  %v3140 = vunpack.c.0.s8 %v3139
  %v3141 = vlaneseq
  %v3142 = vshrl.u32 %v3141, 7
  %v3143 = vsub.s32 %v3140, %v3142
  %v3144 = vrot.slane %v3128, %v3143
  %v3146 = vunpack.c.l.s4 1966171168
  %v3147 = vunpack.c.0.s8 %v3146
  %v3148 = vlaneseq
  %v3149 = vshrl.u32 %v3148, 7
  %v3150 = vsub.s32 %v3147, %v3149
  %v3151 = vrot.slane %v3135, %v3150
  %v3153 = vunpack.c.l.s4 1966171168
  %v3154 = vunpack.c.0.s8 %v3153
  %v3155 = vlaneseq
  %v3156 = vshrl.u32 %v3155, 7
  %v3157 = vsub.s32 %v3154, %v3156
  %v3158 = vrot.slane %v3136, %v3157
  %v3160 = vunpack.c.l.s4 1966171168
  %v3161 = vunpack.c.0.s8 %v3160
  %v3162 = vlaneseq
  %v3163 = vshrl.u32 %v3162, 7
  %v3164 = vsub.s32 %v3161, %v3163
  %v3165 = vrot.slane %v3137, %v3164
  %v3166 = vcombine.high %v3144, %v3144
  %v3167 = vcombine.high %v3151, %v3151
  %v3168 = vcombine.high %v3158, %v3158
  %v3169 = vcombine.high %v3165, %v3165
  %v3178 = vadd.f32 %v3105, %v3144
  %v3179 = vadd.f32 %v3106, %v3158
  %v3180 = vadd.f32 %v3107, %v3166
  %v3181 = vadd.f32 %v3108, %v3168
  %v3182 = vadd.f32 %v3109, %v3151
  %v3183 = vadd.f32 %v3110, %v3165
  %v3184 = vadd.f32 %v3111, %v3167
  %v3185 = vadd.f32 %v3112, %v3169
  %v3186 = vadd.f32 %v3113, %v3144
  %v3187 = vadd.f32 %v3114, %v3158
  %v3188 = vld [vmem:[%s13] sm:$0x1]
  %v3189 = vld [vmem:[%s14] sm:$0x1]
  %v3200 = vcombine.low %v3178, %v3179
  %v3201 = vcombine.low %v3180, %v3181
  %v3202 = vcombine.low %v3182, %v3183
  %v3203 = vcombine.low %v3184, %v3185
  %v3205 = vunpack.c.l.s4 1966171168
  %v3206 = vunpack.c.0.s8 %v3205
  %v3207 = vlaneseq
  %v3208 = vshrl.u32 %v3207, 7
  %v3209 = vsub.s32 %v3206, %v3208
  %v3210 = vrot.slane %v3200, %v3209
  %v3212 = vunpack.c.l.s4 1966171168
  %v3213 = vunpack.c.0.s8 %v3212
  %v3214 = vlaneseq
  %v3215 = vshrl.u32 %v3214, 7
  %v3216 = vsub.s32 %v3213, %v3215
  %v3217 = vrot.slane %v3201, %v3216
  %v3219 = vunpack.c.l.s4 1966171168
  %v3220 = vunpack.c.0.s8 %v3219
  %v3221 = vlaneseq
  %v3222 = vshrl.u32 %v3221, 7
  %v3223 = vsub.s32 %v3220, %v3222
  %v3224 = vrot.slane %v3202, %v3223
  %v3226 = vunpack.c.l.s4 1966171168
  %v3227 = vunpack.c.0.s8 %v3226
  %v3228 = vlaneseq
  %v3229 = vshrl.u32 %v3228, 7
  %v3230 = vsub.s32 %v3227, %v3229
  %v3231 = vrot.slane %v3203, %v3230
  %v3232 = vcombine.low %v3210, %v3217
  %v3233 = vcombine.low %v3224, %v3231
  %v3235 = vunpack.c.l.s4 1966171168
  %v3236 = vunpack.c.0.s8 %v3235
  %v3237 = vlaneseq
  %v3238 = vshrl.u32 %v3237, 7
  %v3239 = vsub.s32 %v3236, %v3238
  %v3240 = vrot.slane %v3232, %v3239
  %v3242 = vunpack.c.l.s4 1966171168
  %v3243 = vunpack.c.0.s8 %v3242
  %v3244 = vlaneseq
  %v3245 = vshrl.u32 %v3244, 7
  %v3246 = vsub.s32 %v3243, %v3245
  %v3247 = vrot.slane %v3233, %v3246
  %v3248 = vcombine.low %v3240, %v3247
  %v3249 = vcombine.low %v3186, %v3187
  %v3251 = vunpack.c.l.s4 1966171168
  %v3252 = vunpack.c.0.s8 %v3251
  %v3253 = vlaneseq
  %v3254 = vshrl.u32 %v3253, 7
  %v3255 = vsub.s32 %v3252, %v3254
  %v3256 = vrot.slane %v3249, %v3255
  %v3258 = vunpack.c.l.s4 1966171168
  %v3259 = vunpack.c.0.s8 %v3258
  %v3260 = vlaneseq
  %v3261 = vshrl.u32 %v3260, 7
  %v3262 = vsub.s32 %v3259, %v3261
  %v3263 = vrot.slane %v3256, %v3262
  %v3266 = vsel %vm676, %v3248, 0.0
  %3267 = vadd.xlane.f32.xlu0 %v3266
  %v3268 = vpop.xlane.xlu0 %3267
  %v3269 = vsel %vm680, %v3263, 0.0
  %3270 = vadd.xlane.f32.xlu0 %v3269
  %v3271 = vpop.xlane.xlu0 %3270
  %v3272 = vmul.f32 %v3268, %v684
  %v3273 = vmul.f32 %v3271, %v684
  %v3276 = vlaneseq
  %v3277 = vshrl.u32 %v3276, 7
  %v3278 = vsub.s32 0, %v3277
  %v3279 = vrot.slane %v3272, %v3278
  %v3280 = vlaneseq
  %v3281 = vshrl.u32 %v3280, 7
  %v3282 = vsub.s32 1, %v3281
  %v3283 = vrot.slane %v3272, %v3282
  %v3284 = vlaneseq
  %v3285 = vshrl.u32 %v3284, 7
  %v3286 = vsub.s32 2, %v3285
  %v3287 = vrot.slane %v3272, %v3286
  %v3288 = vlaneseq
  %v3289 = vshrl.u32 %v3288, 7
  %v3290 = vsub.s32 3, %v3289
  %v3291 = vrot.slane %v3272, %v3290
  %v3292 = vlaneseq
  %v3293 = vshrl.u32 %v3292, 7
  %v3294 = vsub.s32 4, %v3293
  %v3295 = vrot.slane %v3272, %v3294
  %v3296 = vlaneseq
  %v3297 = vshrl.u32 %v3296, 7
  %v3298 = vsub.s32 5, %v3297
  %v3299 = vrot.slane %v3272, %v3298
  %v3300 = vlaneseq
  %v3301 = vshrl.u32 %v3300, 7
  %v3302 = vsub.s32 6, %v3301
  %v3303 = vrot.slane %v3272, %v3302
  %v3304 = vlaneseq
  %v3305 = vshrl.u32 %v3304, 7
  %v3306 = vsub.s32 7, %v3305
  %v3307 = vrot.slane %v3272, %v3306
  %v3308 = vlaneseq
  %v3309 = vshrl.u32 %v3308, 7
  %v3310 = vsub.s32 0, %v3309
  %v3311 = vrot.slane %v3273, %v3310
  %v3312 = vlaneseq
  %v3313 = vshrl.u32 %v3312, 7
  %v3314 = vsub.s32 1, %v3313
  %v3315 = vrot.slane %v3273, %v3314
  %v3326 = vsub.f32 %v3178, %v3279
  %v3327 = vsub.f32 %v3179, %v3283
  %v3328 = vsub.f32 %v3180, %v3287
  %v3329 = vsub.f32 %v3181, %v3291
  %v3330 = vsub.f32 %v3182, %v3295
  %v3331 = vsub.f32 %v3183, %v3299
  %v3332 = vsub.f32 %v3184, %v3303
  %v3333 = vsub.f32 %v3185, %v3307
  %v3334 = vsub.f32 %v3186, %v3311
  %v3335 = vsub.f32 %v3187, %v3315
  %v3336 = vmul.f32 %v3326, %v3326
  %v3337 = vmul.f32 %v3327, %v3327
  %v3338 = vmul.f32 %v3328, %v3328
  %v3339 = vmul.f32 %v3329, %v3329
  %v3340 = vmul.f32 %v3330, %v3330
  %v3341 = vmul.f32 %v3331, %v3331
  %v3342 = vmul.f32 %v3332, %v3332
  %v3343 = vmul.f32 %v3333, %v3333
  %v3344 = vmul.f32 %v3334, %v3334
  %v3345 = vmul.f32 %v3335, %v3335
  %v3356 = vcombine.low %v3336, %v3337
  %v3357 = vcombine.low %v3338, %v3339
  %v3358 = vcombine.low %v3340, %v3341
  %v3359 = vcombine.low %v3342, %v3343
  %v3361 = vunpack.c.l.s4 1966171168
  %v3362 = vunpack.c.0.s8 %v3361
  %v3363 = vlaneseq
  %v3364 = vshrl.u32 %v3363, 7
  %v3365 = vsub.s32 %v3362, %v3364
  %v3366 = vrot.slane %v3356, %v3365
  %v3368 = vunpack.c.l.s4 1966171168
  %v3369 = vunpack.c.0.s8 %v3368
  %v3370 = vlaneseq
  %v3371 = vshrl.u32 %v3370, 7
  %v3372 = vsub.s32 %v3369, %v3371
  %v3373 = vrot.slane %v3357, %v3372
  %v3375 = vunpack.c.l.s4 1966171168
  %v3376 = vunpack.c.0.s8 %v3375
  %v3377 = vlaneseq
  %v3378 = vshrl.u32 %v3377, 7
  %v3379 = vsub.s32 %v3376, %v3378
  %v3380 = vrot.slane %v3358, %v3379
  %v3382 = vunpack.c.l.s4 1966171168
  %v3383 = vunpack.c.0.s8 %v3382
  %v3384 = vlaneseq
  %v3385 = vshrl.u32 %v3384, 7
  %v3386 = vsub.s32 %v3383, %v3385
  %v3387 = vrot.slane %v3359, %v3386
  %v3388 = vcombine.low %v3366, %v3373
  %v3389 = vcombine.low %v3380, %v3387
  %v3391 = vunpack.c.l.s4 1966171168
  %v3392 = vunpack.c.0.s8 %v3391
  %v3393 = vlaneseq
  %v3394 = vshrl.u32 %v3393, 7
  %v3395 = vsub.s32 %v3392, %v3394
  %v3396 = vrot.slane %v3388, %v3395
  %v3398 = vunpack.c.l.s4 1966171168
  %v3399 = vunpack.c.0.s8 %v3398
  %v3400 = vlaneseq
  %v3401 = vshrl.u32 %v3400, 7
  %v3402 = vsub.s32 %v3399, %v3401
  %v3403 = vrot.slane %v3389, %v3402
  %v3404 = vcombine.low %v3396, %v3403
  %v3405 = vcombine.low %v3344, %v3345
  %v3407 = vunpack.c.l.s4 1966171168
  %v3408 = vunpack.c.0.s8 %v3407
  %v3409 = vlaneseq
  %v3410 = vshrl.u32 %v3409, 7
  %v3411 = vsub.s32 %v3408, %v3410
  %v3412 = vrot.slane %v3405, %v3411
  %v3414 = vunpack.c.l.s4 1966171168
  %v3415 = vunpack.c.0.s8 %v3414
  %v3416 = vlaneseq
  %v3417 = vshrl.u32 %v3416, 7
  %v3418 = vsub.s32 %v3415, %v3417
  %v3419 = vrot.slane %v3412, %v3418
  %v3422 = vsel %vm676, %v3404, 0.0
  %3423 = vadd.xlane.f32.xlu0 %v3422
  %v3424 = vpop.xlane.xlu0 %3423
  %v3425 = vsel %vm680, %v3419, 0.0
  %3426 = vadd.xlane.f32.xlu0 %v3425
  %v3427 = vpop.xlane.xlu0 %3426
  %v3428 = vmul.f32 %v3424, %v684
  %v3429 = vmul.f32 %v3427, %v684
  %v3430 = vadd.f32 %v3428, 1e-06
  %v3431 = vadd.f32 %v3429, 1e-06
  %v3432 = vrsqrt.pop %v3430
  %v3433 = vrsqrt.pop %v3431
  %v3436 = vlaneseq
  %v3437 = vshrl.u32 %v3436, 7
  %v3438 = vsub.s32 0, %v3437
  %v3439 = vrot.slane %v3432, %v3438
  %v3440 = vlaneseq
  %v3441 = vshrl.u32 %v3440, 7
  %v3442 = vsub.s32 1, %v3441
  %v3443 = vrot.slane %v3432, %v3442
  %v3444 = vlaneseq
  %v3445 = vshrl.u32 %v3444, 7
  %v3446 = vsub.s32 2, %v3445
  %v3447 = vrot.slane %v3432, %v3446
  %v3448 = vlaneseq
  %v3449 = vshrl.u32 %v3448, 7
  %v3450 = vsub.s32 3, %v3449
  %v3451 = vrot.slane %v3432, %v3450
  %v3452 = vlaneseq
  %v3453 = vshrl.u32 %v3452, 7
  %v3454 = vsub.s32 4, %v3453
  %v3455 = vrot.slane %v3432, %v3454
  %v3456 = vlaneseq
  %v3457 = vshrl.u32 %v3456, 7
  %v3458 = vsub.s32 5, %v3457
  %v3459 = vrot.slane %v3432, %v3458
  %v3460 = vlaneseq
  %v3461 = vshrl.u32 %v3460, 7
  %v3462 = vsub.s32 6, %v3461
  %v3463 = vrot.slane %v3432, %v3462
  %v3464 = vlaneseq
  %v3465 = vshrl.u32 %v3464, 7
  %v3466 = vsub.s32 7, %v3465
  %v3467 = vrot.slane %v3432, %v3466
  %v3468 = vlaneseq
  %v3469 = vshrl.u32 %v3468, 7
  %v3470 = vsub.s32 0, %v3469
  %v3471 = vrot.slane %v3433, %v3470
  %v3472 = vlaneseq
  %v3473 = vshrl.u32 %v3472, 7
  %v3474 = vsub.s32 1, %v3473
  %v3475 = vrot.slane %v3433, %v3474
  %v3486 = vmul.f32 %v3326, %v3439
  %v3487 = vmul.f32 %v3327, %v3443
  %v3488 = vmul.f32 %v3328, %v3447
  %v3489 = vmul.f32 %v3329, %v3451
  %v3490 = vmul.f32 %v3330, %v3455
  %v3491 = vmul.f32 %v3331, %v3459
  %v3492 = vmul.f32 %v3332, %v3463
  %v3493 = vmul.f32 %v3333, %v3467
  %v3494 = vmul.f32 %v3334, %v3471
  %v3495 = vmul.f32 %v3335, %v3475
  %v3497 = vlaneseq
  %v3498 = vshrl.u32 %v3497, 7
  %v3499 = vsub.s32 0, %v3498
  %v3500 = vrot.slane %v3188, %v3499
  %v3501 = vcombine.high %v3500, %v3500
  %v3503 = vunpack.c.l.s4 1966171168
  %v3504 = vunpack.c.0.s8 %v3503
  %v3505 = vlaneseq
  %v3506 = vshrl.u32 %v3505, 7
  %v3507 = vsub.s32 %v3504, %v3506
  %v3508 = vrot.slane %v3500, %v3507
  %v3510 = vunpack.c.l.s4 1966171168
  %v3511 = vunpack.c.0.s8 %v3510
  %v3512 = vlaneseq
  %v3513 = vshrl.u32 %v3512, 7
  %v3514 = vsub.s32 %v3511, %v3513
  %v3515 = vrot.slane %v3501, %v3514
  %v3516 = vcombine.high %v3508, %v3508
  %v3517 = vcombine.high %v3515, %v3515
  %v3519 = vunpack.c.l.s4 1966171168
  %v3520 = vunpack.c.0.s8 %v3519
  %v3521 = vlaneseq
  %v3522 = vshrl.u32 %v3521, 7
  %v3523 = vsub.s32 %v3520, %v3522
  %v3524 = vrot.slane %v3508, %v3523
  %v3526 = vunpack.c.l.s4 1966171168
  %v3527 = vunpack.c.0.s8 %v3526
  %v3528 = vlaneseq
  %v3529 = vshrl.u32 %v3528, 7
  %v3530 = vsub.s32 %v3527, %v3529
  %v3531 = vrot.slane %v3515, %v3530
  %v3533 = vunpack.c.l.s4 1966171168
  %v3534 = vunpack.c.0.s8 %v3533
  %v3535 = vlaneseq
  %v3536 = vshrl.u32 %v3535, 7
  %v3537 = vsub.s32 %v3534, %v3536
  %v3538 = vrot.slane %v3516, %v3537
  %v3540 = vunpack.c.l.s4 1966171168
  %v3541 = vunpack.c.0.s8 %v3540
  %v3542 = vlaneseq
  %v3543 = vshrl.u32 %v3542, 7
  %v3544 = vsub.s32 %v3541, %v3543
  %v3545 = vrot.slane %v3517, %v3544
  %v3546 = vcombine.high %v3524, %v3524
  %v3547 = vcombine.high %v3531, %v3531
  %v3548 = vcombine.high %v3538, %v3538
  %v3549 = vcombine.high %v3545, %v3545
  %v3558 = vmul.f32 %v3486, %v3524
  %v3559 = vmul.f32 %v3487, %v3538
  %v3560 = vmul.f32 %v3488, %v3546
  %v3561 = vmul.f32 %v3489, %v3548
  %v3562 = vmul.f32 %v3490, %v3531
  %v3563 = vmul.f32 %v3491, %v3545
  %v3564 = vmul.f32 %v3492, %v3547
  %v3565 = vmul.f32 %v3493, %v3549
  %v3566 = vmul.f32 %v3494, %v3524
  %v3567 = vmul.f32 %v3495, %v3538
  %v3569 = vlaneseq
  %v3570 = vshrl.u32 %v3569, 7
  %v3571 = vsub.s32 0, %v3570
  %v3572 = vrot.slane %v3189, %v3571
  %v3573 = vcombine.high %v3572, %v3572
  %v3575 = vunpack.c.l.s4 1966171168
  %v3576 = vunpack.c.0.s8 %v3575
  %v3577 = vlaneseq
  %v3578 = vshrl.u32 %v3577, 7
  %v3579 = vsub.s32 %v3576, %v3578
  %v3580 = vrot.slane %v3572, %v3579
  %v3582 = vunpack.c.l.s4 1966171168
  %v3583 = vunpack.c.0.s8 %v3582
  %v3584 = vlaneseq
  %v3585 = vshrl.u32 %v3584, 7
  %v3586 = vsub.s32 %v3583, %v3585
  %v3587 = vrot.slane %v3573, %v3586
  %v3588 = vcombine.high %v3580, %v3580
  %v3589 = vcombine.high %v3587, %v3587
  %v3591 = vunpack.c.l.s4 1966171168
  %v3592 = vunpack.c.0.s8 %v3591
  %v3593 = vlaneseq
  %v3594 = vshrl.u32 %v3593, 7
  %v3595 = vsub.s32 %v3592, %v3594
  %v3596 = vrot.slane %v3580, %v3595
  %v3598 = vunpack.c.l.s4 1966171168
  %v3599 = vunpack.c.0.s8 %v3598
  %v3600 = vlaneseq
  %v3601 = vshrl.u32 %v3600, 7
  %v3602 = vsub.s32 %v3599, %v3601
  %v3603 = vrot.slane %v3587, %v3602
  %v3605 = vunpack.c.l.s4 1966171168
  %v3606 = vunpack.c.0.s8 %v3605
  %v3607 = vlaneseq
  %v3608 = vshrl.u32 %v3607, 7
  %v3609 = vsub.s32 %v3606, %v3608
  %v3610 = vrot.slane %v3588, %v3609
  %v3612 = vunpack.c.l.s4 1966171168
  %v3613 = vunpack.c.0.s8 %v3612
  %v3614 = vlaneseq
  %v3615 = vshrl.u32 %v3614, 7
  %v3616 = vsub.s32 %v3613, %v3615
  %v3617 = vrot.slane %v3589, %v3616
  %v3618 = vcombine.high %v3596, %v3596
  %v3619 = vcombine.high %v3603, %v3603
  %v3620 = vcombine.high %v3610, %v3610
  %v3621 = vcombine.high %v3617, %v3617
  %v3630 = vadd.f32 %v3558, %v3596
  %v3631 = vadd.f32 %v3559, %v3610
  %v3632 = vadd.f32 %v3560, %v3618
  %v3633 = vadd.f32 %v3561, %v3620
  %v3634 = vadd.f32 %v3562, %v3603
  %v3635 = vadd.f32 %v3563, %v3617
  %v3636 = vadd.f32 %v3564, %v3619
  %v3637 = vadd.f32 %v3565, %v3621
  %v3638 = vadd.f32 %v3566, %v3596
  %v3639 = vadd.f32 %v3567, %v3610
  %v3650 = vcombine.low %v3630, %v3631
  %v3651 = vcombine.low %v3632, %v3633
  %v3652 = vcombine.low %v3634, %v3635
  %v3653 = vcombine.low %v3636, %v3637
  %v3655 = vunpack.c.l.s4 1966171168
  %v3656 = vunpack.c.0.s8 %v3655
  %v3657 = vlaneseq
  %v3658 = vshrl.u32 %v3657, 7
  %v3659 = vsub.s32 %v3656, %v3658
  %v3660 = vrot.slane %v3650, %v3659
  %v3662 = vunpack.c.l.s4 1966171168
  %v3663 = vunpack.c.0.s8 %v3662
  %v3664 = vlaneseq
  %v3665 = vshrl.u32 %v3664, 7
  %v3666 = vsub.s32 %v3663, %v3665
  %v3667 = vrot.slane %v3651, %v3666
  %v3669 = vunpack.c.l.s4 1966171168
  %v3670 = vunpack.c.0.s8 %v3669
  %v3671 = vlaneseq
  %v3672 = vshrl.u32 %v3671, 7
  %v3673 = vsub.s32 %v3670, %v3672
  %v3674 = vrot.slane %v3652, %v3673
  %v3676 = vunpack.c.l.s4 1966171168
  %v3677 = vunpack.c.0.s8 %v3676
  %v3678 = vlaneseq
  %v3679 = vshrl.u32 %v3678, 7
  %v3680 = vsub.s32 %v3677, %v3679
  %v3681 = vrot.slane %v3653, %v3680
  %v3682 = vcombine.low %v3660, %v3667
  %v3683 = vcombine.low %v3674, %v3681
  %v3685 = vunpack.c.l.s4 1966171168
  %v3686 = vunpack.c.0.s8 %v3685
  %v3687 = vlaneseq
  %v3688 = vshrl.u32 %v3687, 7
  %v3689 = vsub.s32 %v3686, %v3688
  %v3690 = vrot.slane %v3682, %v3689
  %v3692 = vunpack.c.l.s4 1966171168
  %v3693 = vunpack.c.0.s8 %v3692
  %v3694 = vlaneseq
  %v3695 = vshrl.u32 %v3694, 7
  %v3696 = vsub.s32 %v3693, %v3695
  %v3697 = vrot.slane %v3683, %v3696
  %v3698 = vcombine.low %v3690, %v3697
  %v3699 = vcombine.low %v3638, %v3639
  %v3701 = vunpack.c.l.s4 1966171168
  %v3702 = vunpack.c.0.s8 %v3701
  %v3703 = vlaneseq
  %v3704 = vshrl.u32 %v3703, 7
  %v3705 = vsub.s32 %v3702, %v3704
  %v3706 = vrot.slane %v3699, %v3705
  %v3708 = vunpack.c.l.s4 1966171168
  %v3709 = vunpack.c.0.s8 %v3708
  %v3710 = vlaneseq
  %v3711 = vshrl.u32 %v3710, 7
  %v3712 = vsub.s32 %v3709, %v3711
  %v3713 = vrot.slane %v3706, %v3712
  %v3716 = vpack.c.bf16 %v3713, %v3698
  %v3717 = vld [vmem:[%s15] sm:$0xf]
  %v3718 = vld [vmem:[%s15 + $0x4] sm:$0xf]
  %v3719 = vld [vmem:[%s15 + $0x8] sm:$0xf]
  %v3720 = vld [vmem:[%s15 + $0xc] sm:$0xf]
  %v3721 = vld [vmem:[%s16] sm:$0x1]
  %v3723 = vlaneseq
  %v3724 = vshrl.u32 %v3723, 7
  %v3725 = vsub.s32 0, %v3724
  %v3726 = vrot.slane %v3721, %v3725
  %v3732 = vunpack.c.l.b16 %v3717
  %v3733 = vunpack.c.l.b16 %v3718
  %v3734 = vunpack.c.l.b16 %v3719
  %v3735 = vunpack.c.l.b16 %v3720
  %v3736 = vpack.c.b16 %v3733, %v3732
  %v3737 = vpack.c.b16 %v3735, %v3734
  %v3741 = vsel %vm676, %v3716, 0
  %3743 = vmatprep.subr.bf16.mxu0 0
  %3744 = vmatpush1.bf16.msra.mxu0 %v3736
  %3745 = vmatprep.subr.bf16.mxu0 0
  %3746 = vmatpush1.bf16.msra.mxu0 %v3737
  %3747 = vmatprep.subr.bf16.mxu0 0
  %3748 = vmatpush1.bf16.msra.mxu0 0
  %3749 = vmatprep.subr.bf16.mxu0 0
  %3750 = vmatpush1.bf16.msra.mxu0 0
  %3751 = vmatprep.subr.bf16.mxu0 0
  %3752 = vmatpush1.bf16.msra.mxu0 0
  %3753 = vmatprep.subr.bf16.mxu0 0
  %3754 = vmatpush1.bf16.msra.mxu0 0
  %3755 = vmatprep.subr.bf16.mxu0 0
  %3756 = vmatpush1.bf16.msra.mxu0 0
  %3757 = vmatprep.subr.bf16.mxu0 0
  %3758 = vmatpush1.bf16.msra.mxu0 0
  %3759 = vmatprep.subr.bf16.mxu0 0
  %3760 = vmatpush1.bf16.msra.mxu0 0
  %3761 = vmatprep.subr.bf16.mxu0 0
  %3762 = vmatpush1.bf16.msra.mxu0 0
  %3763 = vmatprep.subr.bf16.mxu0 0
  %3764 = vmatpush1.bf16.msra.mxu0 0
  %3765 = vmatprep.subr.bf16.mxu0 0
  %3766 = vmatpush1.bf16.msra.mxu0 0
  %3767 = vmatprep.subr.bf16.mxu0 0
  %3768 = vmatpush1.bf16.msra.mxu0 0
  %3769 = vmatprep.subr.bf16.mxu0 0
  %3770 = vmatpush1.bf16.msra.mxu0 0
  %3771 = vmatprep.subr.bf16.mxu0 0
  %3772 = vmatpush1.bf16.msra.mxu0 0
  %3773 = vmatprep.subr.bf16.mxu0 0
  %3774 = vmatpush1.bf16.msra.mxu0 0
  %3775 = vmatprep.mubr.bf16.mxu0 0
  %3776 = vmatmul.mubr.bf16.gmra.mrb[0].mxu0 %v3741
  %v3777 = vpop.f32.mrb[0].mxu0
  %v3778 = vadd.f32 %v3726, %v3777
  %v3779 = vpop.f32.mrb[0].mxu0
  %v3780 = vpop.f32.mrb[0].mxu0
  %v3781 = vadd.f32 %v3726, %v3780
  %v3782 = vpop.f32.mrb[0].mxu0
  %3783 = vdwg.mxu0
  %v3784 = vmul.f32 %v3778, 0.5
  %v3785 = vmul.f32 %v3781, 0.5
  %v3786 = vmul.f32 %v3778, 0.044715
  %v3787 = vmul.f32 %v3781, 0.044715
  %v3788 = vmul.f32 %v3786, %v3778
  %v3789 = vmul.f32 %v3787, %v3781
  %v3790 = vmul.f32 %v3788, %v3778
  %v3791 = vmul.f32 %v3789, %v3781
  %v3792 = vadd.f32 %v3778, %v3790
  %v3793 = vadd.f32 %v3781, %v3791
  %v3794 = vmul.f32 %v3792, 0.7978846
  %v3795 = vmul.f32 %v3793, 0.7978846
  %v3796 = vtanh.pop %v3794
  %v3797 = vtanh.pop %v3795
  %v3798 = vadd.f32 %v3796, 1.0
  %v3799 = vadd.f32 %v3797, 1.0
  %v3800 = vmul.f32 %v3784, %v3798
  %v3801 = vmul.f32 %v3785, %v3799
  %v3802 = vpack.c.bf16 %v3801, %v3800
  %v3803 = vld [vmem:[%s17] sm:$0xf]
  %v3804 = vld [vmem:[%s17 + $0x4] sm:$0xf]
  %v3805 = vld [vmem:[%s17 + $0x8] sm:$0xf]
  %v3806 = vld [vmem:[%s17 + $0xc] sm:$0xf]
  %v3807 = vld [vmem:[%s17 + $0x10] sm:$0xf]
  %v3808 = vld [vmem:[%s17 + $0x14] sm:$0xf]
  %v3809 = vld [vmem:[%s17 + $0x18] sm:$0xf]
  %v3810 = vld [vmem:[%s17 + $0x1c] sm:$0xf]
  %v3811 = vld [vmem:[%s17 + $0x20] sm:$0xf]
  %v3812 = vld [vmem:[%s17 + $0x24] sm:$0xf]
  %v3813 = vld [vmem:[%s17 + $0x28] sm:$0xf]
  %v3814 = vld [vmem:[%s17 + $0x2c] sm:$0xf]
  %v3815 = vld [vmem:[%s17 + $0x30] sm:$0xf]
  %v3816 = vld [vmem:[%s17 + $0x34] sm:$0xf]
  %v3817 = vld [vmem:[%s17 + $0x38] sm:$0xf]
  %v3818 = vld [vmem:[%s17 + $0x3c] sm:$0xf]
  %v3819 = vld [vmem:[%s18] sm:$0x1]
  %v3821 = vlaneseq
  %v3822 = vshrl.u32 %v3821, 7
  %v3823 = vsub.s32 0, %v3822
  %v3824 = vrot.slane %v3819, %v3823
  %v3842 = vunpack.c.l.b16 %v3803
  %v3843 = vunpack.c.l.b16 %v3804
  %v3844 = vunpack.c.l.b16 %v3805
  %v3845 = vunpack.c.l.b16 %v3806
  %v3846 = vunpack.c.l.b16 %v3807
  %v3847 = vunpack.c.l.b16 %v3808
  %v3848 = vunpack.c.l.b16 %v3809
  %v3849 = vunpack.c.l.b16 %v3810
  %v3850 = vunpack.c.l.b16 %v3811
  %v3851 = vunpack.c.l.b16 %v3812
  %v3852 = vunpack.c.l.b16 %v3813
  %v3853 = vunpack.c.l.b16 %v3814
  %v3854 = vunpack.c.l.b16 %v3815
  %v3855 = vunpack.c.l.b16 %v3816
  %v3856 = vunpack.c.l.b16 %v3817
  %v3857 = vunpack.c.l.b16 %v3818
  %v3858 = vpack.c.b16 %v3843, %v3842
  %v3859 = vpack.c.b16 %v3845, %v3844
  %v3860 = vpack.c.b16 %v3847, %v3846
  %v3861 = vpack.c.b16 %v3849, %v3848
  %v3862 = vpack.c.b16 %v3851, %v3850
  %v3863 = vpack.c.b16 %v3853, %v3852
  %v3864 = vpack.c.b16 %v3855, %v3854
  %v3865 = vpack.c.b16 %v3857, %v3856
  %3874 = vmatprep.subr.bf16.mxu0 0
  %3875 = vmatpush1.bf16.msra.mxu0 %v3858
  %3876 = vmatprep.subr.bf16.mxu0 0
  %3877 = vmatpush1.bf16.msra.mxu0 %v3859
  %3878 = vmatprep.subr.bf16.mxu0 0
  %3879 = vmatpush1.bf16.msra.mxu0 %v3860
  %3880 = vmatprep.subr.bf16.mxu0 0
  %3881 = vmatpush1.bf16.msra.mxu0 %v3861
  %3882 = vmatprep.subr.bf16.mxu0 0
  %3883 = vmatpush1.bf16.msra.mxu0 %v3862
  %3884 = vmatprep.subr.bf16.mxu0 0
  %3885 = vmatpush1.bf16.msra.mxu0 %v3863
  %3886 = vmatprep.subr.bf16.mxu0 0
  %3887 = vmatpush1.bf16.msra.mxu0 %v3864
  %3888 = vmatprep.subr.bf16.mxu0 0
  %3889 = vmatpush1.bf16.msra.mxu0 %v3865
  %3890 = vmatprep.subr.bf16.mxu0 0
  %3891 = vmatpush1.bf16.msra.mxu0 0
  %3892 = vmatprep.subr.bf16.mxu0 0
  %3893 = vmatpush1.bf16.msra.mxu0 0
  %3894 = vmatprep.subr.bf16.mxu0 0
  %3895 = vmatpush1.bf16.msra.mxu0 0
  %3896 = vmatprep.subr.bf16.mxu0 0
  %3897 = vmatpush1.bf16.msra.mxu0 0
  %3898 = vmatprep.subr.bf16.mxu0 0
  %3899 = vmatpush1.bf16.msra.mxu0 0
  %3900 = vmatprep.subr.bf16.mxu0 0
  %3901 = vmatpush1.bf16.msra.mxu0 0
  %3902 = vmatprep.subr.bf16.mxu0 0
  %3903 = vmatpush1.bf16.msra.mxu0 0
  %3904 = vmatprep.subr.bf16.mxu0 0
  %3905 = vmatpush1.bf16.msra.mxu0 0
  %3906 = vmatprep.mubr.bf16.mxu0 0
  %3907 = vmatmul.mubr.bf16.gmra.mrb[0].mxu0 %v3802
  %v3908 = vpop.f32.mrb[0].mxu0
  %v3909 = vadd.f32 %v3824, %v3908
  %v3910 = vpop.f32.mrb[0].mxu0
  %v3911 = vpop.f32.mrb[0].mxu0
  %v3912 = vadd.f32 %v3824, %v3911
  %v3913 = vpop.f32.mrb[0].mxu0
  %3914 = vdwg.mxu0
  %v3917 = vcombine.high %v3909, %v3909
  %v3919 = vunpack.c.l.s4 1966171168
  %v3920 = vunpack.c.0.s8 %v3919
  %v3921 = vlaneseq
  %v3922 = vshrl.u32 %v3921, 7
  %v3923 = vsub.s32 %v3920, %v3922
  %v3924 = vrot.slane %v3909, %v3923
  %v3926 = vunpack.c.l.s4 1966171168
  %v3927 = vunpack.c.0.s8 %v3926
  %v3928 = vlaneseq
  %v3929 = vshrl.u32 %v3928, 7
  %v3930 = vsub.s32 %v3927, %v3929
  %v3931 = vrot.slane %v3917, %v3930
  %v3932 = vcombine.high %v3924, %v3924
  %v3933 = vcombine.high %v3931, %v3931
  %v3935 = vunpack.c.l.s4 1966171168
  %v3936 = vunpack.c.0.s8 %v3935
  %v3937 = vlaneseq
  %v3938 = vshrl.u32 %v3937, 7
  %v3939 = vsub.s32 %v3936, %v3938
  %v3940 = vrot.slane %v3924, %v3939
  %v3942 = vunpack.c.l.s4 1966171168
  %v3943 = vunpack.c.0.s8 %v3942
  %v3944 = vlaneseq
  %v3945 = vshrl.u32 %v3944, 7
  %v3946 = vsub.s32 %v3943, %v3945
  %v3947 = vrot.slane %v3931, %v3946
  %v3949 = vunpack.c.l.s4 1966171168
  %v3950 = vunpack.c.0.s8 %v3949
  %v3951 = vlaneseq
  %v3952 = vshrl.u32 %v3951, 7
  %v3953 = vsub.s32 %v3950, %v3952
  %v3954 = vrot.slane %v3932, %v3953
  %v3956 = vunpack.c.l.s4 1966171168
  %v3957 = vunpack.c.0.s8 %v3956
  %v3958 = vlaneseq
  %v3959 = vshrl.u32 %v3958, 7
  %v3960 = vsub.s32 %v3957, %v3959
  %v3961 = vrot.slane %v3933, %v3960
  %v3962 = vcombine.high %v3940, %v3940
  %v3963 = vcombine.high %v3947, %v3947
  %v3964 = vcombine.high %v3954, %v3954
  %v3965 = vcombine.high %v3961, %v3961
  %v3967 = vunpack.c.l.s4 1966171168
  %v3968 = vunpack.c.0.s8 %v3967
  %v3969 = vlaneseq
  %v3970 = vshrl.u32 %v3969, 7
  %v3971 = vsub.s32 %v3968, %v3970
  %v3972 = vrot.slane %v3912, %v3971
  %v3973 = vcombine.high %v3972, %v3972
  %v3975 = vunpack.c.l.s4 1966171168
  %v3976 = vunpack.c.0.s8 %v3975
  %v3977 = vlaneseq
  %v3978 = vshrl.u32 %v3977, 7
  %v3979 = vsub.s32 %v3976, %v3978
  %v3980 = vrot.slane %v3972, %v3979
  %v3982 = vunpack.c.l.s4 1966171168
  %v3983 = vunpack.c.0.s8 %v3982
  %v3984 = vlaneseq
  %v3985 = vshrl.u32 %v3984, 7
  %v3986 = vsub.s32 %v3983, %v3985
  %v3987 = vrot.slane %v3973, %v3986
  %v3998 = vadd.f32 %v3178, %v3940
  %v3999 = vadd.f32 %v3179, %v3954
  %v4000 = vadd.f32 %v3180, %v3962
  %v4001 = vadd.f32 %v3181, %v3964
  %v4002 = vadd.f32 %v3182, %v3947
  %v4003 = vadd.f32 %v3183, %v3961
  %v4004 = vadd.f32 %v3184, %v3963
  %v4005 = vadd.f32 %v3185, %v3965
  %v4006 = vadd.f32 %v3186, %v3980
  %v4007 = vadd.f32 %v3187, %v3987
  %s4008 = scalar_lea.vmem %s7, 1
  %v4009 = vld [vmem:[%s4008] sm:$0x1]
  %s4010 = scalar_lea.vmem %s8, 1
  %v4011 = vld [vmem:[%s4010] sm:$0x1]
  %v4022 = vcombine.low %v3998, %v3999
  %v4023 = vcombine.low %v4000, %v4001
  %v4024 = vcombine.low %v4002, %v4003
  %v4025 = vcombine.low %v4004, %v4005
  %v4027 = vunpack.c.l.s4 1966171168
  %v4028 = vunpack.c.0.s8 %v4027
  %v4029 = vlaneseq
  %v4030 = vshrl.u32 %v4029, 7
  %v4031 = vsub.s32 %v4028, %v4030
  %v4032 = vrot.slane %v4022, %v4031
  %v4034 = vunpack.c.l.s4 1966171168
  %v4035 = vunpack.c.0.s8 %v4034
  %v4036 = vlaneseq
  %v4037 = vshrl.u32 %v4036, 7
  %v4038 = vsub.s32 %v4035, %v4037
  %v4039 = vrot.slane %v4023, %v4038
  %v4041 = vunpack.c.l.s4 1966171168
  %v4042 = vunpack.c.0.s8 %v4041
  %v4043 = vlaneseq
  %v4044 = vshrl.u32 %v4043, 7
  %v4045 = vsub.s32 %v4042, %v4044
  %v4046 = vrot.slane %v4024, %v4045
  %v4048 = vunpack.c.l.s4 1966171168
  %v4049 = vunpack.c.0.s8 %v4048
  %v4050 = vlaneseq
  %v4051 = vshrl.u32 %v4050, 7
  %v4052 = vsub.s32 %v4049, %v4051
  %v4053 = vrot.slane %v4025, %v4052
  %v4054 = vcombine.low %v4032, %v4039
  %v4055 = vcombine.low %v4046, %v4053
  %v4057 = vunpack.c.l.s4 1966171168
  %v4058 = vunpack.c.0.s8 %v4057
  %v4059 = vlaneseq
  %v4060 = vshrl.u32 %v4059, 7
  %v4061 = vsub.s32 %v4058, %v4060
  %v4062 = vrot.slane %v4054, %v4061
  %v4064 = vunpack.c.l.s4 1966171168
  %v4065 = vunpack.c.0.s8 %v4064
  %v4066 = vlaneseq
  %v4067 = vshrl.u32 %v4066, 7
  %v4068 = vsub.s32 %v4065, %v4067
  %v4069 = vrot.slane %v4055, %v4068
  %v4070 = vcombine.low %v4062, %v4069
  %v4071 = vcombine.low %v4006, %v4007
  %v4073 = vunpack.c.l.s4 1966171168
  %v4074 = vunpack.c.0.s8 %v4073
  %v4075 = vlaneseq
  %v4076 = vshrl.u32 %v4075, 7
  %v4077 = vsub.s32 %v4074, %v4076
  %v4078 = vrot.slane %v4071, %v4077
  %v4080 = vunpack.c.l.s4 1966171168
  %v4081 = vunpack.c.0.s8 %v4080
  %v4082 = vlaneseq
  %v4083 = vshrl.u32 %v4082, 7
  %v4084 = vsub.s32 %v4081, %v4083
  %v4085 = vrot.slane %v4078, %v4084
  %v4088 = vsel %vm676, %v4070, 0.0
  %4089 = vadd.xlane.f32.xlu0 %v4088
  %v4090 = vpop.xlane.xlu0 %4089
  %v4091 = vsel %vm680, %v4085, 0.0
  %4092 = vadd.xlane.f32.xlu0 %v4091
  %v4093 = vpop.xlane.xlu0 %4092
  %v4094 = vmul.f32 %v4090, %v684
  %v4095 = vmul.f32 %v4093, %v684
  %v4098 = vlaneseq
  %v4099 = vshrl.u32 %v4098, 7
  %v4100 = vsub.s32 0, %v4099
  %v4101 = vrot.slane %v4094, %v4100
  %v4102 = vlaneseq
  %v4103 = vshrl.u32 %v4102, 7
  %v4104 = vsub.s32 1, %v4103
  %v4105 = vrot.slane %v4094, %v4104
  %v4106 = vlaneseq
  %v4107 = vshrl.u32 %v4106, 7
  %v4108 = vsub.s32 2, %v4107
  %v4109 = vrot.slane %v4094, %v4108
  %v4110 = vlaneseq
  %v4111 = vshrl.u32 %v4110, 7
  %v4112 = vsub.s32 3, %v4111
  %v4113 = vrot.slane %v4094, %v4112
  %v4114 = vlaneseq
  %v4115 = vshrl.u32 %v4114, 7
  %v4116 = vsub.s32 4, %v4115
  %v4117 = vrot.slane %v4094, %v4116
  %v4118 = vlaneseq
  %v4119 = vshrl.u32 %v4118, 7
  %v4120 = vsub.s32 5, %v4119
  %v4121 = vrot.slane %v4094, %v4120
  %v4122 = vlaneseq
  %v4123 = vshrl.u32 %v4122, 7
  %v4124 = vsub.s32 6, %v4123
  %v4125 = vrot.slane %v4094, %v4124
  %v4126 = vlaneseq
  %v4127 = vshrl.u32 %v4126, 7
  %v4128 = vsub.s32 7, %v4127
  %v4129 = vrot.slane %v4094, %v4128
  %v4130 = vlaneseq
  %v4131 = vshrl.u32 %v4130, 7
  %v4132 = vsub.s32 0, %v4131
  %v4133 = vrot.slane %v4095, %v4132
  %v4134 = vlaneseq
  %v4135 = vshrl.u32 %v4134, 7
  %v4136 = vsub.s32 1, %v4135
  %v4137 = vrot.slane %v4095, %v4136
  %v4148 = vsub.f32 %v3998, %v4101
  %v4149 = vsub.f32 %v3999, %v4105
  %v4150 = vsub.f32 %v4000, %v4109
  %v4151 = vsub.f32 %v4001, %v4113
  %v4152 = vsub.f32 %v4002, %v4117
  %v4153 = vsub.f32 %v4003, %v4121
  %v4154 = vsub.f32 %v4004, %v4125
  %v4155 = vsub.f32 %v4005, %v4129
  %v4156 = vsub.f32 %v4006, %v4133
  %v4157 = vsub.f32 %v4007, %v4137
  %v4158 = vmul.f32 %v4148, %v4148
  %v4159 = vmul.f32 %v4149, %v4149
  %v4160 = vmul.f32 %v4150, %v4150
  %v4161 = vmul.f32 %v4151, %v4151
  %v4162 = vmul.f32 %v4152, %v4152
  %v4163 = vmul.f32 %v4153, %v4153
  %v4164 = vmul.f32 %v4154, %v4154
  %v4165 = vmul.f32 %v4155, %v4155
  %v4166 = vmul.f32 %v4156, %v4156
  %v4167 = vmul.f32 %v4157, %v4157
  %v4178 = vcombine.low %v4158, %v4159
  %v4179 = vcombine.low %v4160, %v4161
  %v4180 = vcombine.low %v4162, %v4163
  %v4181 = vcombine.low %v4164, %v4165
  %v4183 = vunpack.c.l.s4 1966171168
  %v4184 = vunpack.c.0.s8 %v4183
  %v4185 = vlaneseq
  %v4186 = vshrl.u32 %v4185, 7
  %v4187 = vsub.s32 %v4184, %v4186
  %v4188 = vrot.slane %v4178, %v4187
  %v4190 = vunpack.c.l.s4 1966171168
  %v4191 = vunpack.c.0.s8 %v4190
  %v4192 = vlaneseq
  %v4193 = vshrl.u32 %v4192, 7
  %v4194 = vsub.s32 %v4191, %v4193
  %v4195 = vrot.slane %v4179, %v4194
  %v4197 = vunpack.c.l.s4 1966171168
  %v4198 = vunpack.c.0.s8 %v4197
  %v4199 = vlaneseq
  %v4200 = vshrl.u32 %v4199, 7
  %v4201 = vsub.s32 %v4198, %v4200
  %v4202 = vrot.slane %v4180, %v4201
  %v4204 = vunpack.c.l.s4 1966171168
  %v4205 = vunpack.c.0.s8 %v4204
  %v4206 = vlaneseq
  %v4207 = vshrl.u32 %v4206, 7
  %v4208 = vsub.s32 %v4205, %v4207
  %v4209 = vrot.slane %v4181, %v4208
  %v4210 = vcombine.low %v4188, %v4195
  %v4211 = vcombine.low %v4202, %v4209
  %v4213 = vunpack.c.l.s4 1966171168
  %v4214 = vunpack.c.0.s8 %v4213
  %v4215 = vlaneseq
  %v4216 = vshrl.u32 %v4215, 7
  %v4217 = vsub.s32 %v4214, %v4216
  %v4218 = vrot.slane %v4210, %v4217
  %v4220 = vunpack.c.l.s4 1966171168
  %v4221 = vunpack.c.0.s8 %v4220
  %v4222 = vlaneseq
  %v4223 = vshrl.u32 %v4222, 7
  %v4224 = vsub.s32 %v4221, %v4223
  %v4225 = vrot.slane %v4211, %v4224
  %v4226 = vcombine.low %v4218, %v4225
  %v4227 = vcombine.low %v4166, %v4167
  %v4229 = vunpack.c.l.s4 1966171168
  %v4230 = vunpack.c.0.s8 %v4229
  %v4231 = vlaneseq
  %v4232 = vshrl.u32 %v4231, 7
  %v4233 = vsub.s32 %v4230, %v4232
  %v4234 = vrot.slane %v4227, %v4233
  %v4236 = vunpack.c.l.s4 1966171168
  %v4237 = vunpack.c.0.s8 %v4236
  %v4238 = vlaneseq
  %v4239 = vshrl.u32 %v4238, 7
  %v4240 = vsub.s32 %v4237, %v4239
  %v4241 = vrot.slane %v4234, %v4240
  %v4244 = vsel %vm676, %v4226, 0.0
  %4245 = vadd.xlane.f32.xlu0 %v4244
  %v4246 = vpop.xlane.xlu0 %4245
  %v4247 = vsel %vm680, %v4241, 0.0
  %4248 = vadd.xlane.f32.xlu0 %v4247
  %v4249 = vpop.xlane.xlu0 %4248
  %v4250 = vmul.f32 %v4246, %v684
  %v4251 = vmul.f32 %v4249, %v684
  %v4252 = vadd.f32 %v4250, 1e-06
  %v4253 = vadd.f32 %v4251, 1e-06
  %v4254 = vrsqrt.pop %v4252
  %v4255 = vrsqrt.pop %v4253
  %v4258 = vlaneseq
  %v4259 = vshrl.u32 %v4258, 7
  %v4260 = vsub.s32 0, %v4259
  %v4261 = vrot.slane %v4254, %v4260
  %v4262 = vlaneseq
  %v4263 = vshrl.u32 %v4262, 7
  %v4264 = vsub.s32 1, %v4263
  %v4265 = vrot.slane %v4254, %v4264
  %v4266 = vlaneseq
  %v4267 = vshrl.u32 %v4266, 7
  %v4268 = vsub.s32 2, %v4267
  %v4269 = vrot.slane %v4254, %v4268
  %v4270 = vlaneseq
  %v4271 = vshrl.u32 %v4270, 7
  %v4272 = vsub.s32 3, %v4271
  %v4273 = vrot.slane %v4254, %v4272
  %v4274 = vlaneseq
  %v4275 = vshrl.u32 %v4274, 7
  %v4276 = vsub.s32 4, %v4275
  %v4277 = vrot.slane %v4254, %v4276
  %v4278 = vlaneseq
  %v4279 = vshrl.u32 %v4278, 7
  %v4280 = vsub.s32 5, %v4279
  %v4281 = vrot.slane %v4254, %v4280
  %v4282 = vlaneseq
  %v4283 = vshrl.u32 %v4282, 7
  %v4284 = vsub.s32 6, %v4283
  %v4285 = vrot.slane %v4254, %v4284
  %v4286 = vlaneseq
  %v4287 = vshrl.u32 %v4286, 7
  %v4288 = vsub.s32 7, %v4287
  %v4289 = vrot.slane %v4254, %v4288
  %v4290 = vlaneseq
  %v4291 = vshrl.u32 %v4290, 7
  %v4292 = vsub.s32 0, %v4291
  %v4293 = vrot.slane %v4255, %v4292
  %v4294 = vlaneseq
  %v4295 = vshrl.u32 %v4294, 7
  %v4296 = vsub.s32 1, %v4295
  %v4297 = vrot.slane %v4255, %v4296
  %v4308 = vmul.f32 %v4148, %v4261
  %v4309 = vmul.f32 %v4149, %v4265
  %v4310 = vmul.f32 %v4150, %v4269
  %v4311 = vmul.f32 %v4151, %v4273
  %v4312 = vmul.f32 %v4152, %v4277
  %v4313 = vmul.f32 %v4153, %v4281
  %v4314 = vmul.f32 %v4154, %v4285
  %v4315 = vmul.f32 %v4155, %v4289
  %v4316 = vmul.f32 %v4156, %v4293
  %v4317 = vmul.f32 %v4157, %v4297
  %v4319 = vlaneseq
  %v4320 = vshrl.u32 %v4319, 7
  %v4321 = vsub.s32 0, %v4320
  %v4322 = vrot.slane %v4009, %v4321
  %v4323 = vcombine.high %v4322, %v4322
  %v4325 = vunpack.c.l.s4 1966171168
  %v4326 = vunpack.c.0.s8 %v4325
  %v4327 = vlaneseq
  %v4328 = vshrl.u32 %v4327, 7
  %v4329 = vsub.s32 %v4326, %v4328
  %v4330 = vrot.slane %v4322, %v4329
  %v4332 = vunpack.c.l.s4 1966171168
  %v4333 = vunpack.c.0.s8 %v4332
  %v4334 = vlaneseq
  %v4335 = vshrl.u32 %v4334, 7
  %v4336 = vsub.s32 %v4333, %v4335
  %v4337 = vrot.slane %v4323, %v4336
  %v4338 = vcombine.high %v4330, %v4330
  %v4339 = vcombine.high %v4337, %v4337
  %v4341 = vunpack.c.l.s4 1966171168
  %v4342 = vunpack.c.0.s8 %v4341
  %v4343 = vlaneseq
  %v4344 = vshrl.u32 %v4343, 7
  %v4345 = vsub.s32 %v4342, %v4344
  %v4346 = vrot.slane %v4330, %v4345
  %v4348 = vunpack.c.l.s4 1966171168
  %v4349 = vunpack.c.0.s8 %v4348
  %v4350 = vlaneseq
  %v4351 = vshrl.u32 %v4350, 7
  %v4352 = vsub.s32 %v4349, %v4351
  %v4353 = vrot.slane %v4337, %v4352
  %v4355 = vunpack.c.l.s4 1966171168
  %v4356 = vunpack.c.0.s8 %v4355
  %v4357 = vlaneseq
  %v4358 = vshrl.u32 %v4357, 7
  %v4359 = vsub.s32 %v4356, %v4358
  %v4360 = vrot.slane %v4338, %v4359
  %v4362 = vunpack.c.l.s4 1966171168
  %v4363 = vunpack.c.0.s8 %v4362
  %v4364 = vlaneseq
  %v4365 = vshrl.u32 %v4364, 7
  %v4366 = vsub.s32 %v4363, %v4365
  %v4367 = vrot.slane %v4339, %v4366
  %v4368 = vcombine.high %v4346, %v4346
  %v4369 = vcombine.high %v4353, %v4353
  %v4370 = vcombine.high %v4360, %v4360
  %v4371 = vcombine.high %v4367, %v4367
  %v4380 = vmul.f32 %v4308, %v4346
  %v4381 = vmul.f32 %v4309, %v4360
  %v4382 = vmul.f32 %v4310, %v4368
  %v4383 = vmul.f32 %v4311, %v4370
  %v4384 = vmul.f32 %v4312, %v4353
  %v4385 = vmul.f32 %v4313, %v4367
  %v4386 = vmul.f32 %v4314, %v4369
  %v4387 = vmul.f32 %v4315, %v4371
  %v4388 = vmul.f32 %v4316, %v4346
  %v4389 = vmul.f32 %v4317, %v4360
  %v4391 = vlaneseq
  %v4392 = vshrl.u32 %v4391, 7
  %v4393 = vsub.s32 0, %v4392
  %v4394 = vrot.slane %v4011, %v4393
  %v4395 = vcombine.high %v4394, %v4394
  %v4397 = vunpack.c.l.s4 1966171168
  %v4398 = vunpack.c.0.s8 %v4397
  %v4399 = vlaneseq
  %v4400 = vshrl.u32 %v4399, 7
  %v4401 = vsub.s32 %v4398, %v4400
  %v4402 = vrot.slane %v4394, %v4401
  %v4404 = vunpack.c.l.s4 1966171168
  %v4405 = vunpack.c.0.s8 %v4404
  %v4406 = vlaneseq
  %v4407 = vshrl.u32 %v4406, 7
  %v4408 = vsub.s32 %v4405, %v4407
  %v4409 = vrot.slane %v4395, %v4408
  %v4410 = vcombine.high %v4402, %v4402
  %v4411 = vcombine.high %v4409, %v4409
  %v4413 = vunpack.c.l.s4 1966171168
  %v4414 = vunpack.c.0.s8 %v4413
  %v4415 = vlaneseq
  %v4416 = vshrl.u32 %v4415, 7
  %v4417 = vsub.s32 %v4414, %v4416
  %v4418 = vrot.slane %v4402, %v4417
  %v4420 = vunpack.c.l.s4 1966171168
  %v4421 = vunpack.c.0.s8 %v4420
  %v4422 = vlaneseq
  %v4423 = vshrl.u32 %v4422, 7
  %v4424 = vsub.s32 %v4421, %v4423
  %v4425 = vrot.slane %v4409, %v4424
  %v4427 = vunpack.c.l.s4 1966171168
  %v4428 = vunpack.c.0.s8 %v4427
  %v4429 = vlaneseq
  %v4430 = vshrl.u32 %v4429, 7
  %v4431 = vsub.s32 %v4428, %v4430
  %v4432 = vrot.slane %v4410, %v4431
  %v4434 = vunpack.c.l.s4 1966171168
  %v4435 = vunpack.c.0.s8 %v4434
  %v4436 = vlaneseq
  %v4437 = vshrl.u32 %v4436, 7
  %v4438 = vsub.s32 %v4435, %v4437
  %v4439 = vrot.slane %v4411, %v4438
  %v4440 = vcombine.high %v4418, %v4418
  %v4441 = vcombine.high %v4425, %v4425
  %v4442 = vcombine.high %v4432, %v4432
  %v4443 = vcombine.high %v4439, %v4439
  %v4452 = vadd.f32 %v4380, %v4418
  %v4453 = vadd.f32 %v4381, %v4432
  %v4454 = vadd.f32 %v4382, %v4440
  %v4455 = vadd.f32 %v4383, %v4442
  %v4456 = vadd.f32 %v4384, %v4425
  %v4457 = vadd.f32 %v4385, %v4439
  %v4458 = vadd.f32 %v4386, %v4441
  %v4459 = vadd.f32 %v4387, %v4443
  %v4460 = vadd.f32 %v4388, %v4418
  %v4461 = vadd.f32 %v4389, %v4432
  %v4472 = vcombine.low %v4452, %v4453
  %v4473 = vcombine.low %v4454, %v4455
  %v4474 = vcombine.low %v4456, %v4457
  %v4475 = vcombine.low %v4458, %v4459
  %v4477 = vunpack.c.l.s4 1966171168
  %v4478 = vunpack.c.0.s8 %v4477
  %v4479 = vlaneseq
  %v4480 = vshrl.u32 %v4479, 7
  %v4481 = vsub.s32 %v4478, %v4480
  %v4482 = vrot.slane %v4472, %v4481
  %v4484 = vunpack.c.l.s4 1966171168
  %v4485 = vunpack.c.0.s8 %v4484
  %v4486 = vlaneseq
  %v4487 = vshrl.u32 %v4486, 7
  %v4488 = vsub.s32 %v4485, %v4487
  %v4489 = vrot.slane %v4473, %v4488
  %v4491 = vunpack.c.l.s4 1966171168
  %v4492 = vunpack.c.0.s8 %v4491
  %v4493 = vlaneseq
  %v4494 = vshrl.u32 %v4493, 7
  %v4495 = vsub.s32 %v4492, %v4494
  %v4496 = vrot.slane %v4474, %v4495
  %v4498 = vunpack.c.l.s4 1966171168
  %v4499 = vunpack.c.0.s8 %v4498
  %v4500 = vlaneseq
  %v4501 = vshrl.u32 %v4500, 7
  %v4502 = vsub.s32 %v4499, %v4501
  %v4503 = vrot.slane %v4475, %v4502
  %v4504 = vcombine.low %v4482, %v4489
  %v4505 = vcombine.low %v4496, %v4503
  %v4507 = vunpack.c.l.s4 1966171168
  %v4508 = vunpack.c.0.s8 %v4507
  %v4509 = vlaneseq
  %v4510 = vshrl.u32 %v4509, 7
  %v4511 = vsub.s32 %v4508, %v4510
  %v4512 = vrot.slane %v4504, %v4511
  %v4514 = vunpack.c.l.s4 1966171168
  %v4515 = vunpack.c.0.s8 %v4514
  %v4516 = vlaneseq
  %v4517 = vshrl.u32 %v4516, 7
  %v4518 = vsub.s32 %v4515, %v4517
  %v4519 = vrot.slane %v4505, %v4518
  %v4520 = vcombine.low %v4512, %v4519
  %v4521 = vcombine.low %v4460, %v4461
  %v4523 = vunpack.c.l.s4 1966171168
  %v4524 = vunpack.c.0.s8 %v4523
  %v4525 = vlaneseq
  %v4526 = vshrl.u32 %v4525, 7
  %v4527 = vsub.s32 %v4524, %v4526
  %v4528 = vrot.slane %v4521, %v4527
  %v4530 = vunpack.c.l.s4 1966171168
  %v4531 = vunpack.c.0.s8 %v4530
  %v4532 = vlaneseq
  %v4533 = vshrl.u32 %v4532, 7
  %v4534 = vsub.s32 %v4531, %v4533
  %v4535 = vrot.slane %v4528, %v4534
  %v4538 = vpack.c.bf16 %v4535, %v4520
  %s4539 = scalar_lea.vmem %s9, 16
  %v4540 = vld [vmem:[%s4539] sm:$0xf]
  %v4541 = vld [vmem:[%s4539 + $0x4] sm:$0xf]
  %v4542 = vld [vmem:[%s4539 + $0x8] sm:$0xf]
  %v4543 = vld [vmem:[%s4539 + $0xc] sm:$0xf]
  %s4544 = scalar_lea.vmem %s10, 1
  %v4545 = vld [vmem:[%s4544] sm:$0x1]
  %v4547 = vlaneseq
  %v4548 = vshrl.u32 %v4547, 7
  %v4549 = vsub.s32 0, %v4548
  %v4550 = vrot.slane %v4545, %v4549
  %v4556 = vunpack.c.l.b16 %v4540
  %v4557 = vunpack.c.l.b16 %v4541
  %v4558 = vunpack.c.l.b16 %v4542
  %v4559 = vunpack.c.l.b16 %v4543
  %v4560 = vpack.c.b16 %v4557, %v4556
  %v4561 = vpack.c.b16 %v4559, %v4558
  %v4565 = vsel %vm676, %v4538, 0
  %4567 = vmatprep.subr.bf16.mxu0 0
  %4568 = vmatpush1.bf16.msra.mxu0 %v4560
  %4569 = vmatprep.subr.bf16.mxu0 0
  %4570 = vmatpush1.bf16.msra.mxu0 %v4561
  %4571 = vmatprep.subr.bf16.mxu0 0
  %4572 = vmatpush1.bf16.msra.mxu0 0
  %4573 = vmatprep.subr.bf16.mxu0 0
  %4574 = vmatpush1.bf16.msra.mxu0 0
  %4575 = vmatprep.subr.bf16.mxu0 0
  %4576 = vmatpush1.bf16.msra.mxu0 0
  %4577 = vmatprep.subr.bf16.mxu0 0
  %4578 = vmatpush1.bf16.msra.mxu0 0
  %4579 = vmatprep.subr.bf16.mxu0 0
  %4580 = vmatpush1.bf16.msra.mxu0 0
  %4581 = vmatprep.subr.bf16.mxu0 0
  %4582 = vmatpush1.bf16.msra.mxu0 0
  %4583 = vmatprep.subr.bf16.mxu0 0
  %4584 = vmatpush1.bf16.msra.mxu0 0
  %4585 = vmatprep.subr.bf16.mxu0 0
  %4586 = vmatpush1.bf16.msra.mxu0 0
  %4587 = vmatprep.subr.bf16.mxu0 0
  %4588 = vmatpush1.bf16.msra.mxu0 0
  %4589 = vmatprep.subr.bf16.mxu0 0
  %4590 = vmatpush1.bf16.msra.mxu0 0
  %4591 = vmatprep.subr.bf16.mxu0 0
  %4592 = vmatpush1.bf16.msra.mxu0 0
  %4593 = vmatprep.subr.bf16.mxu0 0
  %4594 = vmatpush1.bf16.msra.mxu0 0
  %4595 = vmatprep.subr.bf16.mxu0 0
  %4596 = vmatpush1.bf16.msra.mxu0 0
  %4597 = vmatprep.subr.bf16.mxu0 0
  %4598 = vmatpush1.bf16.msra.mxu0 0
  %4599 = vmatprep.mubr.bf16.mxu0 0
  %4600 = vmatmul.mubr.bf16.gmra.mrb[0].mxu0 %v4565
  %v4601 = vpop.f32.mrb[0].mxu0
  %v4602 = vadd.f32 %v4550, %v4601
  %v4603 = vpop.f32.mrb[0].mxu0
  %v4604 = vpop.f32.mrb[0].mxu0
  %v4605 = vadd.f32 %v4550, %v4604
  %v4606 = vpop.f32.mrb[0].mxu0
  %4607 = vdwg.mxu0
  %s4608 = scalar_lea.vmem %s11, 16
  %v4609 = vld [vmem:[%s4608] sm:$0xf]
  %v4610 = vld [vmem:[%s4608 + $0x4] sm:$0xf]
  %v4611 = vld [vmem:[%s4608 + $0x8] sm:$0xf]
  %v4612 = vld [vmem:[%s4608 + $0xc] sm:$0xf]
  %v4615 = vcombine.high %v4602, %v4602
  %v4617 = vunpack.c.l.s4 1966171168
  %v4618 = vunpack.c.0.s8 %v4617
  %v4619 = vlaneseq
  %v4620 = vshrl.u32 %v4619, 7
  %v4621 = vsub.s32 %v4618, %v4620
  %v4622 = vrot.slane %v4602, %v4621
  %v4624 = vunpack.c.l.s4 1966171168
  %v4625 = vunpack.c.0.s8 %v4624
  %v4626 = vlaneseq
  %v4627 = vshrl.u32 %v4626, 7
  %v4628 = vsub.s32 %v4625, %v4627
  %v4629 = vrot.slane %v4615, %v4628
  %v4630 = vcombine.high %v4622, %v4622
  %v4631 = vcombine.high %v4629, %v4629
  %v4633 = vunpack.c.l.s4 1966171168
  %v4634 = vunpack.c.0.s8 %v4633
  %v4635 = vlaneseq
  %v4636 = vshrl.u32 %v4635, 7
  %v4637 = vsub.s32 %v4634, %v4636
  %v4638 = vrot.slane %v4622, %v4637
  %v4640 = vunpack.c.l.s4 1966171168
  %v4641 = vunpack.c.0.s8 %v4640
  %v4642 = vlaneseq
  %v4643 = vshrl.u32 %v4642, 7
  %v4644 = vsub.s32 %v4641, %v4643
  %v4645 = vrot.slane %v4629, %v4644
  %v4647 = vunpack.c.l.s4 1966171168
  %v4648 = vunpack.c.0.s8 %v4647
  %v4649 = vlaneseq
  %v4650 = vshrl.u32 %v4649, 7
  %v4651 = vsub.s32 %v4648, %v4650
  %v4652 = vrot.slane %v4630, %v4651
  %v4654 = vunpack.c.l.s4 1966171168
  %v4655 = vunpack.c.0.s8 %v4654
  %v4656 = vlaneseq
  %v4657 = vshrl.u32 %v4656, 7
  %v4658 = vsub.s32 %v4655, %v4657
  %v4659 = vrot.slane %v4631, %v4658
  %v4660 = vcombine.high %v4638, %v4638
  %v4661 = vcombine.high %v4645, %v4645
  %v4662 = vcombine.high %v4652, %v4652
  %v4663 = vcombine.high %v4659, %v4659
  %v4665 = vunpack.c.l.s4 1966171168
  %v4666 = vunpack.c.0.s8 %v4665
  %v4667 = vlaneseq
  %v4668 = vshrl.u32 %v4667, 7
  %v4669 = vsub.s32 %v4666, %v4668
  %v4670 = vrot.slane %v4605, %v4669
  %v4671 = vcombine.high %v4670, %v4670
  %v4673 = vunpack.c.l.s4 1966171168
  %v4674 = vunpack.c.0.s8 %v4673
  %v4675 = vlaneseq
  %v4676 = vshrl.u32 %v4675, 7
  %v4677 = vsub.s32 %v4674, %v4676
  %v4678 = vrot.slane %v4670, %v4677
  %v4680 = vunpack.c.l.s4 1966171168
  %v4681 = vunpack.c.0.s8 %v4680
  %v4682 = vlaneseq
  %v4683 = vshrl.u32 %v4682, 7
  %v4684 = vsub.s32 %v4681, %v4683
  %v4685 = vrot.slane %v4671, %v4684
  %v4686 = vcombine.low %v4638, %v4652
  %v4687 = vcombine.low %v4660, %v4662
  %v4689 = vunpack.c.l.s4 1966171168
  %v4690 = vunpack.c.0.s8 %v4689
  %v4691 = vlaneseq
  %v4692 = vshrl.u32 %v4691, 7
  %v4693 = vsub.s32 %v4690, %v4692
  %v4694 = vrot.slane %v4686, %v4693
  %v4696 = vunpack.c.l.s4 1966171168
  %v4697 = vunpack.c.0.s8 %v4696
  %v4698 = vlaneseq
  %v4699 = vshrl.u32 %v4698, 7
  %v4700 = vsub.s32 %v4697, %v4699
  %v4701 = vrot.slane %v4687, %v4700
  %v4703 = vunpack.c.l.s4 1966171168
  %v4704 = vunpack.c.0.s8 %v4703
  %v4705 = vlaneseq
  %v4706 = vshrl.u32 %v4705, 7
  %v4707 = vsub.s32 %v4704, %v4706
  %v4708 = vrot.slane %v4645, %v4707
  %v4709 = vcombine.low %v4694, %v4701
  %v4711 = vunpack.c.l.s4 1966171168
  %v4712 = vunpack.c.0.s8 %v4711
  %v4713 = vlaneseq
  %v4714 = vshrl.u32 %v4713, 7
  %v4715 = vsub.s32 %v4712, %v4714
  %v4716 = vrot.slane %v4709, %v4715
  %v4718 = vunpack.c.l.s4 1966171168
  %v4719 = vunpack.c.0.s8 %v4718
  %v4720 = vlaneseq
  %v4721 = vshrl.u32 %v4720, 7
  %v4722 = vsub.s32 %v4719, %v4721
  %v4723 = vrot.slane %v4708, %v4722
  %v4724 = vcombine.low %v4716, %v4723
  %v4725 = vcombine.low %v4659, %v4661
  %v4726 = vcombine.low %v4663, %v4678
  %v4728 = vunpack.c.l.s4 1966171168
  %v4729 = vunpack.c.0.s8 %v4728
  %v4730 = vlaneseq
  %v4731 = vshrl.u32 %v4730, 7
  %v4732 = vsub.s32 %v4729, %v4731
  %v4733 = vrot.slane %v4725, %v4732
  %v4735 = vunpack.c.l.s4 1966171168
  %v4736 = vunpack.c.0.s8 %v4735
  %v4737 = vlaneseq
  %v4738 = vshrl.u32 %v4737, 7
  %v4739 = vsub.s32 %v4736, %v4738
  %v4740 = vrot.slane %v4726, %v4739
  %v4742 = vunpack.c.l.s4 1966171168
  %v4743 = vunpack.c.0.s8 %v4742
  %v4744 = vlaneseq
  %v4745 = vshrl.u32 %v4744, 7
  %v4746 = vsub.s32 %v4743, %v4745
  %v4747 = vrot.slane %v4685, %v4746
  %v4748 = vcombine.low %v4733, %v4740
  %v4750 = vunpack.c.l.s4 1966171168
  %v4751 = vunpack.c.0.s8 %v4750
  %v4752 = vlaneseq
  %v4753 = vshrl.u32 %v4752, 7
  %v4754 = vsub.s32 %v4751, %v4753
  %v4755 = vrot.slane %v4748, %v4754
  %v4757 = vunpack.c.l.s4 1966171168
  %v4758 = vunpack.c.0.s8 %v4757
  %v4759 = vlaneseq
  %v4760 = vshrl.u32 %v4759, 7
  %v4761 = vsub.s32 %v4758, %v4760
  %v4762 = vrot.slane %v4747, %v4761
  %v4763 = vcombine.low %v4755, %v4762
  %v4766 = vpack.c.bf16 %v4724, %v4724
  %v4767 = vpack.c.bf16 %v4763, %v4763
  %4769 = vrot.lane.b32.xlu0 %v4766, 96
  %v4770 = vpop.permute.xlu0 %4769
  %v4772 = vsel %vm1359, %v4766, 0
  %v4775 = vsel %vm1359, %v4770, 0
  %4777 = vmatprep.subr.bf16.mxu0 0
  %4778 = vmatpush1.bf16.xpose.msra.mxu0 %v4775
  %4779 = vmatprep.subr.bf16.mxu0 0
  %4780 = vmatpush1.bf16.xpose.msra.mxu0 0
  %4781 = vmatprep.subr.bf16.mxu0 0
  %4782 = vmatpush1.bf16.xpose.msra.mxu0 0
  %4783 = vmatprep.subr.bf16.mxu0 0
  %4784 = vmatpush1.bf16.xpose.msra.mxu0 0
  %4785 = vmatprep.subr.bf16.mxu0 0
  %4786 = vmatpush1.bf16.xpose.msra.mxu0 0
  %4787 = vmatprep.subr.bf16.mxu0 0
  %4788 = vmatpush1.bf16.xpose.msra.mxu0 0
  %4789 = vmatprep.subr.bf16.mxu0 0
  %4790 = vmatpush1.bf16.xpose.msra.mxu0 0
  %4791 = vmatprep.subr.bf16.mxu0 0
  %4792 = vmatpush1.bf16.xpose.msra.mxu0 0
  %4793 = vmatprep.subr.bf16.mxu0 0
  %4794 = vmatpush1.bf16.xpose.msra.mxu0 0
  %4795 = vmatprep.subr.bf16.mxu0 0
  %4796 = vmatpush1.bf16.xpose.msra.mxu0 0
  %4797 = vmatprep.subr.bf16.mxu0 0
  %4798 = vmatpush1.bf16.xpose.msra.mxu0 0
  %4799 = vmatprep.subr.bf16.mxu0 0
  %4800 = vmatpush1.bf16.xpose.msra.mxu0 0
  %4801 = vmatprep.subr.bf16.mxu0 0
  %4802 = vmatpush1.bf16.xpose.msra.mxu0 0
  %4803 = vmatprep.subr.bf16.mxu0 0
  %4804 = vmatpush1.bf16.xpose.msra.mxu0 0
  %4805 = vmatprep.subr.bf16.mxu0 0
  %4806 = vmatpush1.bf16.xpose.msra.mxu0 0
  %4807 = vmatprep.subr.bf16.mxu0 0
  %4808 = vmatpush1.bf16.xpose.msra.mxu0 0
  %4809 = vmatprep.mubr.bf16.mxu0 0
  %4810 = vmatmul.mubr.bf16.gmra.mrb[0].mxu0 %v4772
  %v4811 = vpop.f32.mrb[0].mxu0
  %v4812 = vadd.f32 0.0, %v4811
  %v4813 = vpop.f32.mrb[0].mxu0
  %v4814 = vpop.f32.mrb[0].mxu0
  %v4815 = vpop.f32.mrb[0].mxu0
  %4816 = vdwg.mxu0
  %4818 = vrot.lane.b32.xlu0 %v4767, 96
  %v4819 = vpop.permute.xlu0 %4818
  %v4821 = vsel %vm1359, %v4767, 0
  %v4824 = vsel %vm1359, %v4819, 0
  %4826 = vmatprep.subr.bf16.mxu0 0
  %4827 = vmatpush1.bf16.xpose.msra.mxu0 %v4824
  %4828 = vmatprep.subr.bf16.mxu0 0
  %4829 = vmatpush1.bf16.xpose.msra.mxu0 0
  %4830 = vmatprep.subr.bf16.mxu0 0
  %4831 = vmatpush1.bf16.xpose.msra.mxu0 0
  %4832 = vmatprep.subr.bf16.mxu0 0
  %4833 = vmatpush1.bf16.xpose.msra.mxu0 0
  %4834 = vmatprep.subr.bf16.mxu0 0
  %4835 = vmatpush1.bf16.xpose.msra.mxu0 0
  %4836 = vmatprep.subr.bf16.mxu0 0
  %4837 = vmatpush1.bf16.xpose.msra.mxu0 0
  %4838 = vmatprep.subr.bf16.mxu0 0
  %4839 = vmatpush1.bf16.xpose.msra.mxu0 0
  %4840 = vmatprep.subr.bf16.mxu0 0
  %4841 = vmatpush1.bf16.xpose.msra.mxu0 0
  %4842 = vmatprep.subr.bf16.mxu0 0
  %4843 = vmatpush1.bf16.xpose.msra.mxu0 0
  %4844 = vmatprep.subr.bf16.mxu0 0
  %4845 = vmatpush1.bf16.xpose.msra.mxu0 0
  %4846 = vmatprep.subr.bf16.mxu0 0
  %4847 = vmatpush1.bf16.xpose.msra.mxu0 0
  %4848 = vmatprep.subr.bf16.mxu0 0
  %4849 = vmatpush1.bf16.xpose.msra.mxu0 0
  %4850 = vmatprep.subr.bf16.mxu0 0
  %4851 = vmatpush1.bf16.xpose.msra.mxu0 0
  %4852 = vmatprep.subr.bf16.mxu0 0
  %4853 = vmatpush1.bf16.xpose.msra.mxu0 0
  %4854 = vmatprep.subr.bf16.mxu0 0
  %4855 = vmatpush1.bf16.xpose.msra.mxu0 0
  %4856 = vmatprep.subr.bf16.mxu0 0
  %4857 = vmatpush1.bf16.xpose.msra.mxu0 0
  %4858 = vmatprep.mubr.bf16.mxu0 0
  %4859 = vmatmul.mubr.bf16.gmra.mrb[0].mxu0 %v4821
  %v4860 = vpop.f32.mrb[0].mxu0
  %v4861 = vadd.f32 0.0, %v4860
  %v4862 = vpop.f32.mrb[0].mxu0
  %v4863 = vpop.f32.mrb[0].mxu0
  %v4864 = vpop.f32.mrb[0].mxu0
  %4865 = vdwg.mxu0
  %v4866 = vsel %vm1455, %v4812, -inf
  %4867 = vmax.xlane.f32.xlu0 %v4866
  %v4868 = vpop.xlane.xlu0 %4867
  %v4869 = vsel %vm1455, %v4861, -inf
  %4870 = vmax.xlane.f32.xlu0 %v4869
  %v4871 = vpop.xlane.xlu0 %4870
  %v4872 = vsub.f32 %v4812, %v4868
  %v4873 = vsub.f32 %v4861, %v4871
  %v4874 = vmul.f32 %v4872, 1.442695
  %v4875 = vpow.pop %v4874
  %v4876 = vmul.f32 %v4873, 1.442695
  %v4877 = vpow.pop %v4876
  %v4878 = vsel %vm1455, %v4875, 0.0
  %4879 = vadd.xlane.f32.xlu0 %v4878
  %v4880 = vpop.xlane.xlu0 %4879
  %v4881 = vsel %vm1455, %v4877, 0.0
  %4882 = vadd.xlane.f32.xlu0 %v4881
  %v4883 = vpop.xlane.xlu0 %4882
  %v4884 = vrcp.pop %v4880
  %v4885 = vrcp.pop %v4883
  %v4886 = vmul.f32 %v4875, %v4884
  %v4887 = vmul.f32 %v4877, %v4885
  %v4888 = vpack.c.bf16 %v4886, %v4886
  %v4889 = vpack.c.bf16 %v4887, %v4887
  %4890 = vrot.lane.b32.xlu0 %v4766, 64
  %v4891 = vpop.permute.xlu0 %4890
  %v4893 = vsel %vm1482, %v4888, 0
  %v4896 = vand.u32 %v4891, %v1489
  %4898 = vmatprep.subr.bf16.mxu0 0
  %4899 = vmatpush1.bf16.msra.mxu0 %v4896
  %4900 = vmatprep.subr.bf16.mxu0 0
  %4901 = vmatpush1.bf16.msra.mxu0 0
  %4902 = vmatprep.subr.bf16.mxu0 0
  %4903 = vmatpush1.bf16.msra.mxu0 0
  %4904 = vmatprep.subr.bf16.mxu0 0
  %4905 = vmatpush1.bf16.msra.mxu0 0
  %4906 = vmatprep.subr.bf16.mxu0 0
  %4907 = vmatpush1.bf16.msra.mxu0 0
  %4908 = vmatprep.subr.bf16.mxu0 0
  %4909 = vmatpush1.bf16.msra.mxu0 0
  %4910 = vmatprep.subr.bf16.mxu0 0
  %4911 = vmatpush1.bf16.msra.mxu0 0
  %4912 = vmatprep.subr.bf16.mxu0 0
  %4913 = vmatpush1.bf16.msra.mxu0 0
  %4914 = vmatprep.subr.bf16.mxu0 0
  %4915 = vmatpush1.bf16.msra.mxu0 0
  %4916 = vmatprep.subr.bf16.mxu0 0
  %4917 = vmatpush1.bf16.msra.mxu0 0
  %4918 = vmatprep.subr.bf16.mxu0 0
  %4919 = vmatpush1.bf16.msra.mxu0 0
  %4920 = vmatprep.subr.bf16.mxu0 0
  %4921 = vmatpush1.bf16.msra.mxu0 0
  %4922 = vmatprep.subr.bf16.mxu0 0
  %4923 = vmatpush1.bf16.msra.mxu0 0
  %4924 = vmatprep.subr.bf16.mxu0 0
  %4925 = vmatpush1.bf16.msra.mxu0 0
  %4926 = vmatprep.subr.bf16.mxu0 0
  %4927 = vmatpush1.bf16.msra.mxu0 0
  %4928 = vmatprep.subr.bf16.mxu0 0
  %4929 = vmatpush1.bf16.msra.mxu0 0
  %4930 = vmatprep.mubr.bf16.mxu0 0
  %4931 = vmatmul.mubr.bf16.gmra.mrb[0].mxu0 %v4893
  %v4932 = vpop.f32.mrb[0].mxu0
  %v4933 = vadd.f32 0.0, %v4932
  %v4934 = vpop.f32.mrb[0].mxu0
  %v4935 = vpop.f32.mrb[0].mxu0
  %v4936 = vpop.f32.mrb[0].mxu0
  %4937 = vdwg.mxu0
  %4938 = vrot.lane.b32.xlu0 %v4767, 64
  %v4939 = vpop.permute.xlu0 %4938
  %v4941 = vsel %vm1482, %v4889, 0
  %v4944 = vand.u32 %v4939, %v1489
  %4946 = vmatprep.subr.bf16.mxu0 0
  %4947 = vmatpush1.bf16.msra.mxu0 %v4944
  %4948 = vmatprep.subr.bf16.mxu0 0
  %4949 = vmatpush1.bf16.msra.mxu0 0
  %4950 = vmatprep.subr.bf16.mxu0 0
  %4951 = vmatpush1.bf16.msra.mxu0 0
  %4952 = vmatprep.subr.bf16.mxu0 0
  %4953 = vmatpush1.bf16.msra.mxu0 0
  %4954 = vmatprep.subr.bf16.mxu0 0
  %4955 = vmatpush1.bf16.msra.mxu0 0
  %4956 = vmatprep.subr.bf16.mxu0 0
  %4957 = vmatpush1.bf16.msra.mxu0 0
  %4958 = vmatprep.subr.bf16.mxu0 0
  %4959 = vmatpush1.bf16.msra.mxu0 0
  %4960 = vmatprep.subr.bf16.mxu0 0
  %4961 = vmatpush1.bf16.msra.mxu0 0
  %4962 = vmatprep.subr.bf16.mxu0 0
  %4963 = vmatpush1.bf16.msra.mxu0 0
  %4964 = vmatprep.subr.bf16.mxu0 0
  %4965 = vmatpush1.bf16.msra.mxu0 0
  %4966 = vmatprep.subr.bf16.mxu0 0
  %4967 = vmatpush1.bf16.msra.mxu0 0
  %4968 = vmatprep.subr.bf16.mxu0 0
  %4969 = vmatpush1.bf16.msra.mxu0 0
  %4970 = vmatprep.subr.bf16.mxu0 0
  %4971 = vmatpush1.bf16.msra.mxu0 0
  %4972 = vmatprep.subr.bf16.mxu0 0
  %4973 = vmatpush1.bf16.msra.mxu0 0
  %4974 = vmatprep.subr.bf16.mxu0 0
  %4975 = vmatpush1.bf16.msra.mxu0 0
  %4976 = vmatprep.subr.bf16.mxu0 0
  %4977 = vmatpush1.bf16.msra.mxu0 0
  %4978 = vmatprep.mubr.bf16.mxu0 0
  %4979 = vmatmul.mubr.bf16.gmra.mrb[0].mxu0 %v4941
  %v4980 = vpop.f32.mrb[0].mxu0
  %v4981 = vadd.f32 0.0, %v4980
  %v4982 = vpop.f32.mrb[0].mxu0
  %v4983 = vpop.f32.mrb[0].mxu0
  %v4984 = vpop.f32.mrb[0].mxu0
  %4985 = vdwg.mxu0
  %v4988 = vcombine.high %v4933, %v4933
  %v4990 = vunpack.c.l.s4 1966171168
  %v4991 = vunpack.c.0.s8 %v4990
  %v4992 = vlaneseq
  %v4993 = vshrl.u32 %v4992, 7
  %v4994 = vsub.s32 %v4991, %v4993
  %v4995 = vrot.slane %v4933, %v4994
  %v4997 = vunpack.c.l.s4 1966171168
  %v4998 = vunpack.c.0.s8 %v4997
  %v4999 = vlaneseq
  %v5000 = vshrl.u32 %v4999, 7
  %v5001 = vsub.s32 %v4998, %v5000
  %v5002 = vrot.slane %v4988, %v5001
  %v5003 = vcombine.high %v4995, %v4995
  %v5005 = vunpack.c.l.s4 1966171168
  %v5006 = vunpack.c.0.s8 %v5005
  %v5007 = vlaneseq
  %v5008 = vshrl.u32 %v5007, 7
  %v5009 = vsub.s32 %v5006, %v5008
  %v5010 = vrot.slane %v4995, %v5009
  %v5012 = vunpack.c.l.s4 1966171168
  %v5013 = vunpack.c.0.s8 %v5012
  %v5014 = vlaneseq
  %v5015 = vshrl.u32 %v5014, 7
  %v5016 = vsub.s32 %v5013, %v5015
  %v5017 = vrot.slane %v5002, %v5016
  %v5019 = vunpack.c.l.s4 1966171168
  %v5020 = vunpack.c.0.s8 %v5019
  %v5021 = vlaneseq
  %v5022 = vshrl.u32 %v5021, 7
  %v5023 = vsub.s32 %v5020, %v5022
  %v5024 = vrot.slane %v5003, %v5023
  %v5025 = vcombine.high %v5010, %v5010
  %v5026 = vcombine.high %v5024, %v5024
  %v5027 = vcombine.high %v4981, %v4981
  %v5029 = vunpack.c.l.s4 1966171168
  %v5030 = vunpack.c.0.s8 %v5029
  %v5031 = vlaneseq
  %v5032 = vshrl.u32 %v5031, 7
  %v5033 = vsub.s32 %v5030, %v5032
  %v5034 = vrot.slane %v4981, %v5033
  %v5036 = vunpack.c.l.s4 1966171168
  %v5037 = vunpack.c.0.s8 %v5036
  %v5038 = vlaneseq
  %v5039 = vshrl.u32 %v5038, 7
  %v5040 = vsub.s32 %v5037, %v5039
  %v5041 = vrot.slane %v5027, %v5040
  %v5042 = vcombine.high %v5034, %v5034
  %v5044 = vunpack.c.l.s4 1966171168
  %v5045 = vunpack.c.0.s8 %v5044
  %v5046 = vlaneseq
  %v5047 = vshrl.u32 %v5046, 7
  %v5048 = vsub.s32 %v5045, %v5047
  %v5049 = vrot.slane %v5034, %v5048
  %v5051 = vunpack.c.l.s4 1966171168
  %v5052 = vunpack.c.0.s8 %v5051
  %v5053 = vlaneseq
  %v5054 = vshrl.u32 %v5053, 7
  %v5055 = vsub.s32 %v5052, %v5054
  %v5056 = vrot.slane %v5041, %v5055
  %v5058 = vunpack.c.l.s4 1966171168
  %v5059 = vunpack.c.0.s8 %v5058
  %v5060 = vlaneseq
  %v5061 = vshrl.u32 %v5060, 7
  %v5062 = vsub.s32 %v5059, %v5061
  %v5063 = vrot.slane %v5042, %v5062
  %v5064 = vcombine.high %v5049, %v5049
  %v5065 = vcombine.high %v5063, %v5063
  %v5066 = vcombine.low %v5010, %v5024
  %v5067 = vcombine.low %v5025, %v5026
  %v5068 = vcombine.low %v5017, %v5049
  %v5069 = vcombine.low %v5063, %v5064
  %v5071 = vunpack.c.l.s4 1966171168
  %v5072 = vunpack.c.0.s8 %v5071
  %v5073 = vlaneseq
  %v5074 = vshrl.u32 %v5073, 7
  %v5075 = vsub.s32 %v5072, %v5074
  %v5076 = vrot.slane %v5066, %v5075
  %v5078 = vunpack.c.l.s4 1966171168
  %v5079 = vunpack.c.0.s8 %v5078
  %v5080 = vlaneseq
  %v5081 = vshrl.u32 %v5080, 7
  %v5082 = vsub.s32 %v5079, %v5081
  %v5083 = vrot.slane %v5067, %v5082
  %v5085 = vunpack.c.l.s4 1966171168
  %v5086 = vunpack.c.0.s8 %v5085
  %v5087 = vlaneseq
  %v5088 = vshrl.u32 %v5087, 7
  %v5089 = vsub.s32 %v5086, %v5088
  %v5090 = vrot.slane %v5068, %v5089
  %v5092 = vunpack.c.l.s4 1966171168
  %v5093 = vunpack.c.0.s8 %v5092
  %v5094 = vlaneseq
  %v5095 = vshrl.u32 %v5094, 7
  %v5096 = vsub.s32 %v5093, %v5095
  %v5097 = vrot.slane %v5069, %v5096
  %v5098 = vcombine.low %v5076, %v5083
  %v5099 = vcombine.low %v5090, %v5097
  %v5101 = vunpack.c.l.s4 1966171168
  %v5102 = vunpack.c.0.s8 %v5101
  %v5103 = vlaneseq
  %v5104 = vshrl.u32 %v5103, 7
  %v5105 = vsub.s32 %v5102, %v5104
  %v5106 = vrot.slane %v5098, %v5105
  %v5108 = vunpack.c.l.s4 1966171168
  %v5109 = vunpack.c.0.s8 %v5108
  %v5110 = vlaneseq
  %v5111 = vshrl.u32 %v5110, 7
  %v5112 = vsub.s32 %v5109, %v5111
  %v5113 = vrot.slane %v5099, %v5112
  %v5114 = vcombine.low %v5106, %v5113
  %v5115 = vcombine.low %v5065, %v5056
  %v5117 = vunpack.c.l.s4 1966171168
  %v5118 = vunpack.c.0.s8 %v5117
  %v5119 = vlaneseq
  %v5120 = vshrl.u32 %v5119, 7
  %v5121 = vsub.s32 %v5118, %v5120
  %v5122 = vrot.slane %v5115, %v5121
  %v5124 = vunpack.c.l.s4 1966171168
  %v5125 = vunpack.c.0.s8 %v5124
  %v5126 = vlaneseq
  %v5127 = vshrl.u32 %v5126, 7
  %v5128 = vsub.s32 %v5125, %v5127
  %v5129 = vrot.slane %v5122, %v5128
  %v5132 = vpack.c.bf16 %v5129, %v5114
  %5133 = vrot.lane.b32.xlu0 %v4766, 120
  %v5134 = vpop.permute.xlu0 %5133
  %5135 = vrot.lane.b32.xlu0 %v4766, 88
  %v5136 = vpop.permute.xlu0 %5135
  %v5138 = vsel %vm1359, %v5134, 0
  %v5141 = vsel %vm1359, %v5136, 0
  %5143 = vmatprep.subr.bf16.mxu0 0
  %5144 = vmatpush1.bf16.xpose.msra.mxu0 %v5141
  %5145 = vmatprep.subr.bf16.mxu0 0
  %5146 = vmatpush1.bf16.xpose.msra.mxu0 0
  %5147 = vmatprep.subr.bf16.mxu0 0
  %5148 = vmatpush1.bf16.xpose.msra.mxu0 0
  %5149 = vmatprep.subr.bf16.mxu0 0
  %5150 = vmatpush1.bf16.xpose.msra.mxu0 0
  %5151 = vmatprep.subr.bf16.mxu0 0
  %5152 = vmatpush1.bf16.xpose.msra.mxu0 0
  %5153 = vmatprep.subr.bf16.mxu0 0
  %5154 = vmatpush1.bf16.xpose.msra.mxu0 0
  %5155 = vmatprep.subr.bf16.mxu0 0
  %5156 = vmatpush1.bf16.xpose.msra.mxu0 0
  %5157 = vmatprep.subr.bf16.mxu0 0
  %5158 = vmatpush1.bf16.xpose.msra.mxu0 0
  %5159 = vmatprep.subr.bf16.mxu0 0
  %5160 = vmatpush1.bf16.xpose.msra.mxu0 0
  %5161 = vmatprep.subr.bf16.mxu0 0
  %5162 = vmatpush1.bf16.xpose.msra.mxu0 0
  %5163 = vmatprep.subr.bf16.mxu0 0
  %5164 = vmatpush1.bf16.xpose.msra.mxu0 0
  %5165 = vmatprep.subr.bf16.mxu0 0
  %5166 = vmatpush1.bf16.xpose.msra.mxu0 0
  %5167 = vmatprep.subr.bf16.mxu0 0
  %5168 = vmatpush1.bf16.xpose.msra.mxu0 0
  %5169 = vmatprep.subr.bf16.mxu0 0
  %5170 = vmatpush1.bf16.xpose.msra.mxu0 0
  %5171 = vmatprep.subr.bf16.mxu0 0
  %5172 = vmatpush1.bf16.xpose.msra.mxu0 0
  %5173 = vmatprep.subr.bf16.mxu0 0
  %5174 = vmatpush1.bf16.xpose.msra.mxu0 0
  %5175 = vmatprep.mubr.bf16.mxu0 0
  %5176 = vmatmul.mubr.bf16.gmra.mrb[0].mxu0 %v5138
  %v5177 = vpop.f32.mrb[0].mxu0
  %v5178 = vadd.f32 0.0, %v5177
  %v5179 = vpop.f32.mrb[0].mxu0
  %v5180 = vpop.f32.mrb[0].mxu0
  %v5181 = vpop.f32.mrb[0].mxu0
  %5182 = vdwg.mxu0
  %5183 = vrot.lane.b32.xlu0 %v4767, 120
  %v5184 = vpop.permute.xlu0 %5183
  %5185 = vrot.lane.b32.xlu0 %v4767, 88
  %v5186 = vpop.permute.xlu0 %5185
  %v5188 = vsel %vm1359, %v5184, 0
  %v5191 = vsel %vm1359, %v5186, 0
  %5193 = vmatprep.subr.bf16.mxu0 0
  %5194 = vmatpush1.bf16.xpose.msra.mxu0 %v5191
  %5195 = vmatprep.subr.bf16.mxu0 0
  %5196 = vmatpush1.bf16.xpose.msra.mxu0 0
  %5197 = vmatprep.subr.bf16.mxu0 0
  %5198 = vmatpush1.bf16.xpose.msra.mxu0 0
  %5199 = vmatprep.subr.bf16.mxu0 0
  %5200 = vmatpush1.bf16.xpose.msra.mxu0 0
  %5201 = vmatprep.subr.bf16.mxu0 0
  %5202 = vmatpush1.bf16.xpose.msra.mxu0 0
  %5203 = vmatprep.subr.bf16.mxu0 0
  %5204 = vmatpush1.bf16.xpose.msra.mxu0 0
  %5205 = vmatprep.subr.bf16.mxu0 0
  %5206 = vmatpush1.bf16.xpose.msra.mxu0 0
  %5207 = vmatprep.subr.bf16.mxu0 0
  %5208 = vmatpush1.bf16.xpose.msra.mxu0 0
  %5209 = vmatprep.subr.bf16.mxu0 0
  %5210 = vmatpush1.bf16.xpose.msra.mxu0 0
  %5211 = vmatprep.subr.bf16.mxu0 0
  %5212 = vmatpush1.bf16.xpose.msra.mxu0 0
  %5213 = vmatprep.subr.bf16.mxu0 0
  %5214 = vmatpush1.bf16.xpose.msra.mxu0 0
  %5215 = vmatprep.subr.bf16.mxu0 0
  %5216 = vmatpush1.bf16.xpose.msra.mxu0 0
  %5217 = vmatprep.subr.bf16.mxu0 0
  %5218 = vmatpush1.bf16.xpose.msra.mxu0 0
  %5219 = vmatprep.subr.bf16.mxu0 0
  %5220 = vmatpush1.bf16.xpose.msra.mxu0 0
  %5221 = vmatprep.subr.bf16.mxu0 0
  %5222 = vmatpush1.bf16.xpose.msra.mxu0 0
  %5223 = vmatprep.subr.bf16.mxu0 0
  %5224 = vmatpush1.bf16.xpose.msra.mxu0 0
  %5225 = vmatprep.mubr.bf16.mxu0 0
  %5226 = vmatmul.mubr.bf16.gmra.mrb[0].mxu0 %v5188
  %v5227 = vpop.f32.mrb[0].mxu0
  %v5228 = vadd.f32 0.0, %v5227
  %v5229 = vpop.f32.mrb[0].mxu0
  %v5230 = vpop.f32.mrb[0].mxu0
  %v5231 = vpop.f32.mrb[0].mxu0
  %5232 = vdwg.mxu0
  %v5233 = vsel %vm1455, %v5178, -inf
  %5234 = vmax.xlane.f32.xlu0 %v5233
  %v5235 = vpop.xlane.xlu0 %5234
  %v5236 = vsel %vm1455, %v5228, -inf
  %5237 = vmax.xlane.f32.xlu0 %v5236
  %v5238 = vpop.xlane.xlu0 %5237
  %v5239 = vsub.f32 %v5178, %v5235
  %v5240 = vsub.f32 %v5228, %v5238
  %v5241 = vmul.f32 %v5239, 1.442695
  %v5242 = vpow.pop %v5241
  %v5243 = vmul.f32 %v5240, 1.442695
  %v5244 = vpow.pop %v5243
  %v5245 = vsel %vm1455, %v5242, 0.0
  %5246 = vadd.xlane.f32.xlu0 %v5245
  %v5247 = vpop.xlane.xlu0 %5246
  %v5248 = vsel %vm1455, %v5244, 0.0
  %5249 = vadd.xlane.f32.xlu0 %v5248
  %v5250 = vpop.xlane.xlu0 %5249
  %v5251 = vrcp.pop %v5247
  %v5252 = vrcp.pop %v5250
  %v5253 = vmul.f32 %v5242, %v5251
  %v5254 = vmul.f32 %v5244, %v5252
  %v5255 = vpack.c.bf16 %v5253, %v5253
  %v5256 = vpack.c.bf16 %v5254, %v5254
  %5257 = vrot.lane.b32.xlu0 %v4766, 56
  %v5258 = vpop.permute.xlu0 %5257
  %v5260 = vsel %vm1482, %v5255, 0
  %v5263 = vand.u32 %v5258, %v1489
  %5265 = vmatprep.subr.bf16.mxu0 0
  %5266 = vmatpush1.bf16.msra.mxu0 %v5263
  %5267 = vmatprep.subr.bf16.mxu0 0
  %5268 = vmatpush1.bf16.msra.mxu0 0
  %5269 = vmatprep.subr.bf16.mxu0 0
  %5270 = vmatpush1.bf16.msra.mxu0 0
  %5271 = vmatprep.subr.bf16.mxu0 0
  %5272 = vmatpush1.bf16.msra.mxu0 0
  %5273 = vmatprep.subr.bf16.mxu0 0
  %5274 = vmatpush1.bf16.msra.mxu0 0
  %5275 = vmatprep.subr.bf16.mxu0 0
  %5276 = vmatpush1.bf16.msra.mxu0 0
  %5277 = vmatprep.subr.bf16.mxu0 0
  %5278 = vmatpush1.bf16.msra.mxu0 0
  %5279 = vmatprep.subr.bf16.mxu0 0
  %5280 = vmatpush1.bf16.msra.mxu0 0
  %5281 = vmatprep.subr.bf16.mxu0 0
  %5282 = vmatpush1.bf16.msra.mxu0 0
  %5283 = vmatprep.subr.bf16.mxu0 0
  %5284 = vmatpush1.bf16.msra.mxu0 0
  %5285 = vmatprep.subr.bf16.mxu0 0
  %5286 = vmatpush1.bf16.msra.mxu0 0
  %5287 = vmatprep.subr.bf16.mxu0 0
  %5288 = vmatpush1.bf16.msra.mxu0 0
  %5289 = vmatprep.subr.bf16.mxu0 0
  %5290 = vmatpush1.bf16.msra.mxu0 0
  %5291 = vmatprep.subr.bf16.mxu0 0
  %5292 = vmatpush1.bf16.msra.mxu0 0
  %5293 = vmatprep.subr.bf16.mxu0 0
  %5294 = vmatpush1.bf16.msra.mxu0 0
  %5295 = vmatprep.subr.bf16.mxu0 0
  %5296 = vmatpush1.bf16.msra.mxu0 0
  %5297 = vmatprep.mubr.bf16.mxu0 0
  %5298 = vmatmul.mubr.bf16.gmra.mrb[0].mxu0 %v5260
  %v5299 = vpop.f32.mrb[0].mxu0
  %v5300 = vadd.f32 0.0, %v5299
  %v5301 = vpop.f32.mrb[0].mxu0
  %v5302 = vpop.f32.mrb[0].mxu0
  %v5303 = vpop.f32.mrb[0].mxu0
  %5304 = vdwg.mxu0
  %5305 = vrot.lane.b32.xlu0 %v4767, 56
  %v5306 = vpop.permute.xlu0 %5305
  %v5308 = vsel %vm1482, %v5256, 0
  %v5311 = vand.u32 %v5306, %v1489
  %5313 = vmatprep.subr.bf16.mxu0 0
  %5314 = vmatpush1.bf16.msra.mxu0 %v5311
  %5315 = vmatprep.subr.bf16.mxu0 0
  %5316 = vmatpush1.bf16.msra.mxu0 0
  %5317 = vmatprep.subr.bf16.mxu0 0
  %5318 = vmatpush1.bf16.msra.mxu0 0
  %5319 = vmatprep.subr.bf16.mxu0 0
  %5320 = vmatpush1.bf16.msra.mxu0 0
  %5321 = vmatprep.subr.bf16.mxu0 0
  %5322 = vmatpush1.bf16.msra.mxu0 0
  %5323 = vmatprep.subr.bf16.mxu0 0
  %5324 = vmatpush1.bf16.msra.mxu0 0
  %5325 = vmatprep.subr.bf16.mxu0 0
  %5326 = vmatpush1.bf16.msra.mxu0 0
  %5327 = vmatprep.subr.bf16.mxu0 0
  %5328 = vmatpush1.bf16.msra.mxu0 0
  %5329 = vmatprep.subr.bf16.mxu0 0
  %5330 = vmatpush1.bf16.msra.mxu0 0
  %5331 = vmatprep.subr.bf16.mxu0 0
  %5332 = vmatpush1.bf16.msra.mxu0 0
  %5333 = vmatprep.subr.bf16.mxu0 0
  %5334 = vmatpush1.bf16.msra.mxu0 0
  %5335 = vmatprep.subr.bf16.mxu0 0
  %5336 = vmatpush1.bf16.msra.mxu0 0
  %5337 = vmatprep.subr.bf16.mxu0 0
  %5338 = vmatpush1.bf16.msra.mxu0 0
  %5339 = vmatprep.subr.bf16.mxu0 0
  %5340 = vmatpush1.bf16.msra.mxu0 0
  %5341 = vmatprep.subr.bf16.mxu0 0
  %5342 = vmatpush1.bf16.msra.mxu0 0
  %5343 = vmatprep.subr.bf16.mxu0 0
  %5344 = vmatpush1.bf16.msra.mxu0 0
  %5345 = vmatprep.mubr.bf16.mxu0 0
  %5346 = vmatmul.mubr.bf16.gmra.mrb[0].mxu0 %v5308
  %v5347 = vpop.f32.mrb[0].mxu0
  %v5348 = vadd.f32 0.0, %v5347
  %v5349 = vpop.f32.mrb[0].mxu0
  %v5350 = vpop.f32.mrb[0].mxu0
  %v5351 = vpop.f32.mrb[0].mxu0
  %5352 = vdwg.mxu0
  %v5355 = vcombine.high %v5300, %v5300
  %v5357 = vunpack.c.l.s4 1966171168
  %v5358 = vunpack.c.0.s8 %v5357
  %v5359 = vlaneseq
  %v5360 = vshrl.u32 %v5359, 7
  %v5361 = vsub.s32 %v5358, %v5360
  %v5362 = vrot.slane %v5300, %v5361
  %v5364 = vunpack.c.l.s4 1966171168
  %v5365 = vunpack.c.0.s8 %v5364
  %v5366 = vlaneseq
  %v5367 = vshrl.u32 %v5366, 7
  %v5368 = vsub.s32 %v5365, %v5367
  %v5369 = vrot.slane %v5355, %v5368
  %v5370 = vcombine.high %v5362, %v5362
  %v5372 = vunpack.c.l.s4 1966171168
  %v5373 = vunpack.c.0.s8 %v5372
  %v5374 = vlaneseq
  %v5375 = vshrl.u32 %v5374, 7
  %v5376 = vsub.s32 %v5373, %v5375
  %v5377 = vrot.slane %v5362, %v5376
  %v5379 = vunpack.c.l.s4 1966171168
  %v5380 = vunpack.c.0.s8 %v5379
  %v5381 = vlaneseq
  %v5382 = vshrl.u32 %v5381, 7
  %v5383 = vsub.s32 %v5380, %v5382
  %v5384 = vrot.slane %v5369, %v5383
  %v5386 = vunpack.c.l.s4 1966171168
  %v5387 = vunpack.c.0.s8 %v5386
  %v5388 = vlaneseq
  %v5389 = vshrl.u32 %v5388, 7
  %v5390 = vsub.s32 %v5387, %v5389
  %v5391 = vrot.slane %v5370, %v5390
  %v5392 = vcombine.high %v5377, %v5377
  %v5393 = vcombine.high %v5391, %v5391
  %v5394 = vcombine.high %v5348, %v5348
  %v5396 = vunpack.c.l.s4 1966171168
  %v5397 = vunpack.c.0.s8 %v5396
  %v5398 = vlaneseq
  %v5399 = vshrl.u32 %v5398, 7
  %v5400 = vsub.s32 %v5397, %v5399
  %v5401 = vrot.slane %v5348, %v5400
  %v5403 = vunpack.c.l.s4 1966171168
  %v5404 = vunpack.c.0.s8 %v5403
  %v5405 = vlaneseq
  %v5406 = vshrl.u32 %v5405, 7
  %v5407 = vsub.s32 %v5404, %v5406
  %v5408 = vrot.slane %v5394, %v5407
  %v5409 = vcombine.high %v5401, %v5401
  %v5411 = vunpack.c.l.s4 1966171168
  %v5412 = vunpack.c.0.s8 %v5411
  %v5413 = vlaneseq
  %v5414 = vshrl.u32 %v5413, 7
  %v5415 = vsub.s32 %v5412, %v5414
  %v5416 = vrot.slane %v5401, %v5415
  %v5418 = vunpack.c.l.s4 1966171168
  %v5419 = vunpack.c.0.s8 %v5418
  %v5420 = vlaneseq
  %v5421 = vshrl.u32 %v5420, 7
  %v5422 = vsub.s32 %v5419, %v5421
  %v5423 = vrot.slane %v5408, %v5422
  %v5425 = vunpack.c.l.s4 1966171168
  %v5426 = vunpack.c.0.s8 %v5425
  %v5427 = vlaneseq
  %v5428 = vshrl.u32 %v5427, 7
  %v5429 = vsub.s32 %v5426, %v5428
  %v5430 = vrot.slane %v5409, %v5429
  %v5431 = vcombine.high %v5416, %v5416
  %v5432 = vcombine.high %v5430, %v5430
  %v5433 = vcombine.low %v5377, %v5391
  %v5434 = vcombine.low %v5392, %v5393
  %v5435 = vcombine.low %v5384, %v5416
  %v5436 = vcombine.low %v5430, %v5431
  %v5438 = vunpack.c.l.s4 1966171168
  %v5439 = vunpack.c.0.s8 %v5438
  %v5440 = vlaneseq
  %v5441 = vshrl.u32 %v5440, 7
  %v5442 = vsub.s32 %v5439, %v5441
  %v5443 = vrot.slane %v5433, %v5442
  %v5445 = vunpack.c.l.s4 1966171168
  %v5446 = vunpack.c.0.s8 %v5445
  %v5447 = vlaneseq
  %v5448 = vshrl.u32 %v5447, 7
  %v5449 = vsub.s32 %v5446, %v5448
  %v5450 = vrot.slane %v5434, %v5449
  %v5452 = vunpack.c.l.s4 1966171168
  %v5453 = vunpack.c.0.s8 %v5452
  %v5454 = vlaneseq
  %v5455 = vshrl.u32 %v5454, 7
  %v5456 = vsub.s32 %v5453, %v5455
  %v5457 = vrot.slane %v5435, %v5456
  %v5459 = vunpack.c.l.s4 1966171168
  %v5460 = vunpack.c.0.s8 %v5459
  %v5461 = vlaneseq
  %v5462 = vshrl.u32 %v5461, 7
  %v5463 = vsub.s32 %v5460, %v5462
  %v5464 = vrot.slane %v5436, %v5463
  %v5465 = vcombine.low %v5443, %v5450
  %v5466 = vcombine.low %v5457, %v5464
  %v5468 = vunpack.c.l.s4 1966171168
  %v5469 = vunpack.c.0.s8 %v5468
  %v5470 = vlaneseq
  %v5471 = vshrl.u32 %v5470, 7
  %v5472 = vsub.s32 %v5469, %v5471
  %v5473 = vrot.slane %v5465, %v5472
  %v5475 = vunpack.c.l.s4 1966171168
  %v5476 = vunpack.c.0.s8 %v5475
  %v5477 = vlaneseq
  %v5478 = vshrl.u32 %v5477, 7
  %v5479 = vsub.s32 %v5476, %v5478
  %v5480 = vrot.slane %v5466, %v5479
  %v5481 = vcombine.low %v5473, %v5480
  %v5482 = vcombine.low %v5432, %v5423
  %v5484 = vunpack.c.l.s4 1966171168
  %v5485 = vunpack.c.0.s8 %v5484
  %v5486 = vlaneseq
  %v5487 = vshrl.u32 %v5486, 7
  %v5488 = vsub.s32 %v5485, %v5487
  %v5489 = vrot.slane %v5482, %v5488
  %v5491 = vunpack.c.l.s4 1966171168
  %v5492 = vunpack.c.0.s8 %v5491
  %v5493 = vlaneseq
  %v5494 = vshrl.u32 %v5493, 7
  %v5495 = vsub.s32 %v5492, %v5494
  %v5496 = vrot.slane %v5489, %v5495
  %v5499 = vpack.c.bf16 %v5496, %v5481
  %v5501 = vsel %vm1359, %v5499, 0
  %v5504 = vsel %vm2098, %v4610, 0
  %5506 = vmatprep.subr.bf16.mxu0 0
  %5507 = vmatpush1.bf16.msra.mxu0 %v5504
  %5508 = vmatprep.subr.bf16.mxu0 0
  %5509 = vmatpush1.bf16.msra.mxu0 0
  %5510 = vmatprep.subr.bf16.mxu0 0
  %5511 = vmatpush1.bf16.msra.mxu0 0
  %5512 = vmatprep.subr.bf16.mxu0 0
  %5513 = vmatpush1.bf16.msra.mxu0 0
  %5514 = vmatprep.subr.bf16.mxu0 0
  %5515 = vmatpush1.bf16.msra.mxu0 0
  %5516 = vmatprep.subr.bf16.mxu0 0
  %5517 = vmatpush1.bf16.msra.mxu0 0
  %5518 = vmatprep.subr.bf16.mxu0 0
  %5519 = vmatpush1.bf16.msra.mxu0 0
  %5520 = vmatprep.subr.bf16.mxu0 0
  %5521 = vmatpush1.bf16.msra.mxu0 0
  %5522 = vmatprep.subr.bf16.mxu0 0
  %5523 = vmatpush1.bf16.msra.mxu0 0
  %5524 = vmatprep.subr.bf16.mxu0 0
  %5525 = vmatpush1.bf16.msra.mxu0 0
  %5526 = vmatprep.subr.bf16.mxu0 0
  %5527 = vmatpush1.bf16.msra.mxu0 0
  %5528 = vmatprep.subr.bf16.mxu0 0
  %5529 = vmatpush1.bf16.msra.mxu0 0
  %5530 = vmatprep.subr.bf16.mxu0 0
  %5531 = vmatpush1.bf16.msra.mxu0 0
  %5532 = vmatprep.subr.bf16.mxu0 0
  %5533 = vmatpush1.bf16.msra.mxu0 0
  %5534 = vmatprep.subr.bf16.mxu0 0
  %5535 = vmatpush1.bf16.msra.mxu0 0
  %5536 = vmatprep.subr.bf16.mxu0 0
  %5537 = vmatpush1.bf16.msra.mxu0 0
  %5538 = vmatprep.mubr.bf16.mxu0 0
  %5539 = vmatmul.mubr.bf16.gmra.mrb[0].mxu0 %v5501
  %v5540 = vpop.f32.mrb[0].mxu0
  %v5541 = vadd.f32 0.0, %v5540
  %v5542 = vpop.f32.mrb[0].mxu0
  %v5543 = vpop.f32.mrb[0].mxu0
  %v5544 = vadd.f32 0.0, %v5543
  %v5545 = vpop.f32.mrb[0].mxu0
  %5546 = vdwg.mxu0
  %v5548 = vsel %vm1359, %v5132, 0
  %v5551 = vsel %vm2098, %v4609, 0
  %5553 = vmatprep.subr.bf16.mxu0 0
  %5554 = vmatpush1.bf16.msra.mxu0 %v5551
  %5555 = vmatprep.subr.bf16.mxu0 0
  %5556 = vmatpush1.bf16.msra.mxu0 0
  %5557 = vmatprep.subr.bf16.mxu0 0
  %5558 = vmatpush1.bf16.msra.mxu0 0
  %5559 = vmatprep.subr.bf16.mxu0 0
  %5560 = vmatpush1.bf16.msra.mxu0 0
  %5561 = vmatprep.subr.bf16.mxu0 0
  %5562 = vmatpush1.bf16.msra.mxu0 0
  %5563 = vmatprep.subr.bf16.mxu0 0
  %5564 = vmatpush1.bf16.msra.mxu0 0
  %5565 = vmatprep.subr.bf16.mxu0 0
  %5566 = vmatpush1.bf16.msra.mxu0 0
  %5567 = vmatprep.subr.bf16.mxu0 0
  %5568 = vmatpush1.bf16.msra.mxu0 0
  %5569 = vmatprep.subr.bf16.mxu0 0
  %5570 = vmatpush1.bf16.msra.mxu0 0
  %5571 = vmatprep.subr.bf16.mxu0 0
  %5572 = vmatpush1.bf16.msra.mxu0 0
  %5573 = vmatprep.subr.bf16.mxu0 0
  %5574 = vmatpush1.bf16.msra.mxu0 0
  %5575 = vmatprep.subr.bf16.mxu0 0
  %5576 = vmatpush1.bf16.msra.mxu0 0
  %5577 = vmatprep.subr.bf16.mxu0 0
  %5578 = vmatpush1.bf16.msra.mxu0 0
  %5579 = vmatprep.subr.bf16.mxu0 0
  %5580 = vmatpush1.bf16.msra.mxu0 0
  %5581 = vmatprep.subr.bf16.mxu0 0
  %5582 = vmatpush1.bf16.msra.mxu0 0
  %5583 = vmatprep.subr.bf16.mxu0 0
  %5584 = vmatpush1.bf16.msra.mxu0 0
  %5585 = vmatprep.mubr.bf16.mxu0 0
  %5586 = vmatmul.mubr.bf16.gmra.mrb[0].mxu0 %v5548
  %v5587 = vpop.f32.mrb[0].mxu0
  %v5588 = vadd.f32 %v5541, %v5587
  %v5589 = vpop.f32.mrb[0].mxu0
  %v5590 = vpop.f32.mrb[0].mxu0
  %v5591 = vadd.f32 %v5544, %v5590
  %v5592 = vpop.f32.mrb[0].mxu0
  %5593 = vdwg.mxu0
  %5594 = vrot.lane.b32.xlu0 %v4766, 112
  %v5595 = vpop.permute.xlu0 %5594
  %5596 = vrot.lane.b32.xlu0 %v4766, 80
  %v5597 = vpop.permute.xlu0 %5596
  %v5599 = vsel %vm1359, %v5595, 0
  %v5602 = vsel %vm1359, %v5597, 0
  %5604 = vmatprep.subr.bf16.mxu0 0
  %5605 = vmatpush1.bf16.xpose.msra.mxu0 %v5602
  %5606 = vmatprep.subr.bf16.mxu0 0
  %5607 = vmatpush1.bf16.xpose.msra.mxu0 0
  %5608 = vmatprep.subr.bf16.mxu0 0
  %5609 = vmatpush1.bf16.xpose.msra.mxu0 0
  %5610 = vmatprep.subr.bf16.mxu0 0
  %5611 = vmatpush1.bf16.xpose.msra.mxu0 0
  %5612 = vmatprep.subr.bf16.mxu0 0
  %5613 = vmatpush1.bf16.xpose.msra.mxu0 0
  %5614 = vmatprep.subr.bf16.mxu0 0
  %5615 = vmatpush1.bf16.xpose.msra.mxu0 0
  %5616 = vmatprep.subr.bf16.mxu0 0
  %5617 = vmatpush1.bf16.xpose.msra.mxu0 0
  %5618 = vmatprep.subr.bf16.mxu0 0
  %5619 = vmatpush1.bf16.xpose.msra.mxu0 0
  %5620 = vmatprep.subr.bf16.mxu0 0
  %5621 = vmatpush1.bf16.xpose.msra.mxu0 0
  %5622 = vmatprep.subr.bf16.mxu0 0
  %5623 = vmatpush1.bf16.xpose.msra.mxu0 0
  %5624 = vmatprep.subr.bf16.mxu0 0
  %5625 = vmatpush1.bf16.xpose.msra.mxu0 0
  %5626 = vmatprep.subr.bf16.mxu0 0
  %5627 = vmatpush1.bf16.xpose.msra.mxu0 0
  %5628 = vmatprep.subr.bf16.mxu0 0
  %5629 = vmatpush1.bf16.xpose.msra.mxu0 0
  %5630 = vmatprep.subr.bf16.mxu0 0
  %5631 = vmatpush1.bf16.xpose.msra.mxu0 0
  %5632 = vmatprep.subr.bf16.mxu0 0
  %5633 = vmatpush1.bf16.xpose.msra.mxu0 0
  %5634 = vmatprep.subr.bf16.mxu0 0
  %5635 = vmatpush1.bf16.xpose.msra.mxu0 0
  %5636 = vmatprep.mubr.bf16.mxu0 0
  %5637 = vmatmul.mubr.bf16.gmra.mrb[0].mxu0 %v5599
  %v5638 = vpop.f32.mrb[0].mxu0
  %v5639 = vadd.f32 0.0, %v5638
  %v5640 = vpop.f32.mrb[0].mxu0
  %v5641 = vpop.f32.mrb[0].mxu0
  %v5642 = vpop.f32.mrb[0].mxu0
  %5643 = vdwg.mxu0
  %5644 = vrot.lane.b32.xlu0 %v4767, 112
  %v5645 = vpop.permute.xlu0 %5644
  %5646 = vrot.lane.b32.xlu0 %v4767, 80
  %v5647 = vpop.permute.xlu0 %5646
  %v5649 = vsel %vm1359, %v5645, 0
  %v5652 = vsel %vm1359, %v5647, 0
  %5654 = vmatprep.subr.bf16.mxu0 0
  %5655 = vmatpush1.bf16.xpose.msra.mxu0 %v5652
  %5656 = vmatprep.subr.bf16.mxu0 0
  %5657 = vmatpush1.bf16.xpose.msra.mxu0 0
  %5658 = vmatprep.subr.bf16.mxu0 0
  %5659 = vmatpush1.bf16.xpose.msra.mxu0 0
  %5660 = vmatprep.subr.bf16.mxu0 0
  %5661 = vmatpush1.bf16.xpose.msra.mxu0 0
  %5662 = vmatprep.subr.bf16.mxu0 0
  %5663 = vmatpush1.bf16.xpose.msra.mxu0 0
  %5664 = vmatprep.subr.bf16.mxu0 0
  %5665 = vmatpush1.bf16.xpose.msra.mxu0 0
  %5666 = vmatprep.subr.bf16.mxu0 0
  %5667 = vmatpush1.bf16.xpose.msra.mxu0 0
  %5668 = vmatprep.subr.bf16.mxu0 0
  %5669 = vmatpush1.bf16.xpose.msra.mxu0 0
  %5670 = vmatprep.subr.bf16.mxu0 0
  %5671 = vmatpush1.bf16.xpose.msra.mxu0 0
  %5672 = vmatprep.subr.bf16.mxu0 0
  %5673 = vmatpush1.bf16.xpose.msra.mxu0 0
  %5674 = vmatprep.subr.bf16.mxu0 0
  %5675 = vmatpush1.bf16.xpose.msra.mxu0 0
  %5676 = vmatprep.subr.bf16.mxu0 0
  %5677 = vmatpush1.bf16.xpose.msra.mxu0 0
  %5678 = vmatprep.subr.bf16.mxu0 0
  %5679 = vmatpush1.bf16.xpose.msra.mxu0 0
  %5680 = vmatprep.subr.bf16.mxu0 0
  %5681 = vmatpush1.bf16.xpose.msra.mxu0 0
  %5682 = vmatprep.subr.bf16.mxu0 0
  %5683 = vmatpush1.bf16.xpose.msra.mxu0 0
  %5684 = vmatprep.subr.bf16.mxu0 0
  %5685 = vmatpush1.bf16.xpose.msra.mxu0 0
  %5686 = vmatprep.mubr.bf16.mxu0 0
  %5687 = vmatmul.mubr.bf16.gmra.mrb[0].mxu0 %v5649
  %v5688 = vpop.f32.mrb[0].mxu0
  %v5689 = vadd.f32 0.0, %v5688
  %v5690 = vpop.f32.mrb[0].mxu0
  %v5691 = vpop.f32.mrb[0].mxu0
  %v5692 = vpop.f32.mrb[0].mxu0
  %5693 = vdwg.mxu0
  %v5694 = vsel %vm1455, %v5639, -inf
  %5695 = vmax.xlane.f32.xlu0 %v5694
  %v5696 = vpop.xlane.xlu0 %5695
  %v5697 = vsel %vm1455, %v5689, -inf
  %5698 = vmax.xlane.f32.xlu0 %v5697
  %v5699 = vpop.xlane.xlu0 %5698
  %v5700 = vsub.f32 %v5639, %v5696
  %v5701 = vsub.f32 %v5689, %v5699
  %v5702 = vmul.f32 %v5700, 1.442695
  %v5703 = vpow.pop %v5702
  %v5704 = vmul.f32 %v5701, 1.442695
  %v5705 = vpow.pop %v5704
  %v5706 = vsel %vm1455, %v5703, 0.0
  %5707 = vadd.xlane.f32.xlu0 %v5706
  %v5708 = vpop.xlane.xlu0 %5707
  %v5709 = vsel %vm1455, %v5705, 0.0
  %5710 = vadd.xlane.f32.xlu0 %v5709
  %v5711 = vpop.xlane.xlu0 %5710
  %v5712 = vrcp.pop %v5708
  %v5713 = vrcp.pop %v5711
  %v5714 = vmul.f32 %v5703, %v5712
  %v5715 = vmul.f32 %v5705, %v5713
  %v5716 = vpack.c.bf16 %v5714, %v5714
  %v5717 = vpack.c.bf16 %v5715, %v5715
  %5718 = vrot.lane.b32.xlu0 %v4766, 48
  %v5719 = vpop.permute.xlu0 %5718
  %v5721 = vsel %vm1482, %v5716, 0
  %v5724 = vand.u32 %v5719, %v1489
  %5726 = vmatprep.subr.bf16.mxu0 0
  %5727 = vmatpush1.bf16.msra.mxu0 %v5724
  %5728 = vmatprep.subr.bf16.mxu0 0
  %5729 = vmatpush1.bf16.msra.mxu0 0
  %5730 = vmatprep.subr.bf16.mxu0 0
  %5731 = vmatpush1.bf16.msra.mxu0 0
  %5732 = vmatprep.subr.bf16.mxu0 0
  %5733 = vmatpush1.bf16.msra.mxu0 0
  %5734 = vmatprep.subr.bf16.mxu0 0
  %5735 = vmatpush1.bf16.msra.mxu0 0
  %5736 = vmatprep.subr.bf16.mxu0 0
  %5737 = vmatpush1.bf16.msra.mxu0 0
  %5738 = vmatprep.subr.bf16.mxu0 0
  %5739 = vmatpush1.bf16.msra.mxu0 0
  %5740 = vmatprep.subr.bf16.mxu0 0
  %5741 = vmatpush1.bf16.msra.mxu0 0
  %5742 = vmatprep.subr.bf16.mxu0 0
  %5743 = vmatpush1.bf16.msra.mxu0 0
  %5744 = vmatprep.subr.bf16.mxu0 0
  %5745 = vmatpush1.bf16.msra.mxu0 0
  %5746 = vmatprep.subr.bf16.mxu0 0
  %5747 = vmatpush1.bf16.msra.mxu0 0
  %5748 = vmatprep.subr.bf16.mxu0 0
  %5749 = vmatpush1.bf16.msra.mxu0 0
  %5750 = vmatprep.subr.bf16.mxu0 0
  %5751 = vmatpush1.bf16.msra.mxu0 0
  %5752 = vmatprep.subr.bf16.mxu0 0
  %5753 = vmatpush1.bf16.msra.mxu0 0
  %5754 = vmatprep.subr.bf16.mxu0 0
  %5755 = vmatpush1.bf16.msra.mxu0 0
  %5756 = vmatprep.subr.bf16.mxu0 0
  %5757 = vmatpush1.bf16.msra.mxu0 0
  %5758 = vmatprep.mubr.bf16.mxu0 0
  %5759 = vmatmul.mubr.bf16.gmra.mrb[0].mxu0 %v5721
  %v5760 = vpop.f32.mrb[0].mxu0
  %v5761 = vadd.f32 0.0, %v5760
  %v5762 = vpop.f32.mrb[0].mxu0
  %v5763 = vpop.f32.mrb[0].mxu0
  %v5764 = vpop.f32.mrb[0].mxu0
  %5765 = vdwg.mxu0
  %5766 = vrot.lane.b32.xlu0 %v4767, 48
  %v5767 = vpop.permute.xlu0 %5766
  %v5769 = vsel %vm1482, %v5717, 0
  %v5772 = vand.u32 %v5767, %v1489
  %5774 = vmatprep.subr.bf16.mxu0 0
  %5775 = vmatpush1.bf16.msra.mxu0 %v5772
  %5776 = vmatprep.subr.bf16.mxu0 0
  %5777 = vmatpush1.bf16.msra.mxu0 0
  %5778 = vmatprep.subr.bf16.mxu0 0
  %5779 = vmatpush1.bf16.msra.mxu0 0
  %5780 = vmatprep.subr.bf16.mxu0 0
  %5781 = vmatpush1.bf16.msra.mxu0 0
  %5782 = vmatprep.subr.bf16.mxu0 0
  %5783 = vmatpush1.bf16.msra.mxu0 0
  %5784 = vmatprep.subr.bf16.mxu0 0
  %5785 = vmatpush1.bf16.msra.mxu0 0
  %5786 = vmatprep.subr.bf16.mxu0 0
  %5787 = vmatpush1.bf16.msra.mxu0 0
  %5788 = vmatprep.subr.bf16.mxu0 0
  %5789 = vmatpush1.bf16.msra.mxu0 0
  %5790 = vmatprep.subr.bf16.mxu0 0
  %5791 = vmatpush1.bf16.msra.mxu0 0
  %5792 = vmatprep.subr.bf16.mxu0 0
  %5793 = vmatpush1.bf16.msra.mxu0 0
  %5794 = vmatprep.subr.bf16.mxu0 0
  %5795 = vmatpush1.bf16.msra.mxu0 0
  %5796 = vmatprep.subr.bf16.mxu0 0
  %5797 = vmatpush1.bf16.msra.mxu0 0
  %5798 = vmatprep.subr.bf16.mxu0 0
  %5799 = vmatpush1.bf16.msra.mxu0 0
  %5800 = vmatprep.subr.bf16.mxu0 0
  %5801 = vmatpush1.bf16.msra.mxu0 0
  %5802 = vmatprep.subr.bf16.mxu0 0
  %5803 = vmatpush1.bf16.msra.mxu0 0
  %5804 = vmatprep.subr.bf16.mxu0 0
  %5805 = vmatpush1.bf16.msra.mxu0 0
  %5806 = vmatprep.mubr.bf16.mxu0 0
  %5807 = vmatmul.mubr.bf16.gmra.mrb[0].mxu0 %v5769
  %v5808 = vpop.f32.mrb[0].mxu0
  %v5809 = vadd.f32 0.0, %v5808
  %v5810 = vpop.f32.mrb[0].mxu0
  %v5811 = vpop.f32.mrb[0].mxu0
  %v5812 = vpop.f32.mrb[0].mxu0
  %5813 = vdwg.mxu0
  %v5816 = vcombine.high %v5761, %v5761
  %v5818 = vunpack.c.l.s4 1966171168
  %v5819 = vunpack.c.0.s8 %v5818
  %v5820 = vlaneseq
  %v5821 = vshrl.u32 %v5820, 7
  %v5822 = vsub.s32 %v5819, %v5821
  %v5823 = vrot.slane %v5761, %v5822
  %v5825 = vunpack.c.l.s4 1966171168
  %v5826 = vunpack.c.0.s8 %v5825
  %v5827 = vlaneseq
  %v5828 = vshrl.u32 %v5827, 7
  %v5829 = vsub.s32 %v5826, %v5828
  %v5830 = vrot.slane %v5816, %v5829
  %v5831 = vcombine.high %v5823, %v5823
  %v5833 = vunpack.c.l.s4 1966171168
  %v5834 = vunpack.c.0.s8 %v5833
  %v5835 = vlaneseq
  %v5836 = vshrl.u32 %v5835, 7
  %v5837 = vsub.s32 %v5834, %v5836
  %v5838 = vrot.slane %v5823, %v5837
  %v5840 = vunpack.c.l.s4 1966171168
  %v5841 = vunpack.c.0.s8 %v5840
  %v5842 = vlaneseq
  %v5843 = vshrl.u32 %v5842, 7
  %v5844 = vsub.s32 %v5841, %v5843
  %v5845 = vrot.slane %v5830, %v5844
  %v5847 = vunpack.c.l.s4 1966171168
  %v5848 = vunpack.c.0.s8 %v5847
  %v5849 = vlaneseq
  %v5850 = vshrl.u32 %v5849, 7
  %v5851 = vsub.s32 %v5848, %v5850
  %v5852 = vrot.slane %v5831, %v5851
  %v5853 = vcombine.high %v5838, %v5838
  %v5854 = vcombine.high %v5852, %v5852
  %v5855 = vcombine.high %v5809, %v5809
  %v5857 = vunpack.c.l.s4 1966171168
  %v5858 = vunpack.c.0.s8 %v5857
  %v5859 = vlaneseq
  %v5860 = vshrl.u32 %v5859, 7
  %v5861 = vsub.s32 %v5858, %v5860
  %v5862 = vrot.slane %v5809, %v5861
  %v5864 = vunpack.c.l.s4 1966171168
  %v5865 = vunpack.c.0.s8 %v5864
  %v5866 = vlaneseq
  %v5867 = vshrl.u32 %v5866, 7
  %v5868 = vsub.s32 %v5865, %v5867
  %v5869 = vrot.slane %v5855, %v5868
  %v5870 = vcombine.high %v5862, %v5862
  %v5872 = vunpack.c.l.s4 1966171168
  %v5873 = vunpack.c.0.s8 %v5872
  %v5874 = vlaneseq
  %v5875 = vshrl.u32 %v5874, 7
  %v5876 = vsub.s32 %v5873, %v5875
  %v5877 = vrot.slane %v5862, %v5876
  %v5879 = vunpack.c.l.s4 1966171168
  %v5880 = vunpack.c.0.s8 %v5879
  %v5881 = vlaneseq
  %v5882 = vshrl.u32 %v5881, 7
  %v5883 = vsub.s32 %v5880, %v5882
  %v5884 = vrot.slane %v5869, %v5883
  %v5886 = vunpack.c.l.s4 1966171168
  %v5887 = vunpack.c.0.s8 %v5886
  %v5888 = vlaneseq
  %v5889 = vshrl.u32 %v5888, 7
  %v5890 = vsub.s32 %v5887, %v5889
  %v5891 = vrot.slane %v5870, %v5890
  %v5892 = vcombine.high %v5877, %v5877
  %v5893 = vcombine.high %v5891, %v5891
  %v5894 = vcombine.low %v5838, %v5852
  %v5895 = vcombine.low %v5853, %v5854
  %v5896 = vcombine.low %v5845, %v5877
  %v5897 = vcombine.low %v5891, %v5892
  %v5899 = vunpack.c.l.s4 1966171168
  %v5900 = vunpack.c.0.s8 %v5899
  %v5901 = vlaneseq
  %v5902 = vshrl.u32 %v5901, 7
  %v5903 = vsub.s32 %v5900, %v5902
  %v5904 = vrot.slane %v5894, %v5903
  %v5906 = vunpack.c.l.s4 1966171168
  %v5907 = vunpack.c.0.s8 %v5906
  %v5908 = vlaneseq
  %v5909 = vshrl.u32 %v5908, 7
  %v5910 = vsub.s32 %v5907, %v5909
  %v5911 = vrot.slane %v5895, %v5910
  %v5913 = vunpack.c.l.s4 1966171168
  %v5914 = vunpack.c.0.s8 %v5913
  %v5915 = vlaneseq
  %v5916 = vshrl.u32 %v5915, 7
  %v5917 = vsub.s32 %v5914, %v5916
  %v5918 = vrot.slane %v5896, %v5917
  %v5920 = vunpack.c.l.s4 1966171168
  %v5921 = vunpack.c.0.s8 %v5920
  %v5922 = vlaneseq
  %v5923 = vshrl.u32 %v5922, 7
  %v5924 = vsub.s32 %v5921, %v5923
  %v5925 = vrot.slane %v5897, %v5924
  %v5926 = vcombine.low %v5904, %v5911
  %v5927 = vcombine.low %v5918, %v5925
  %v5929 = vunpack.c.l.s4 1966171168
  %v5930 = vunpack.c.0.s8 %v5929
  %v5931 = vlaneseq
  %v5932 = vshrl.u32 %v5931, 7
  %v5933 = vsub.s32 %v5930, %v5932
  %v5934 = vrot.slane %v5926, %v5933
  %v5936 = vunpack.c.l.s4 1966171168
  %v5937 = vunpack.c.0.s8 %v5936
  %v5938 = vlaneseq
  %v5939 = vshrl.u32 %v5938, 7
  %v5940 = vsub.s32 %v5937, %v5939
  %v5941 = vrot.slane %v5927, %v5940
  %v5942 = vcombine.low %v5934, %v5941
  %v5943 = vcombine.low %v5893, %v5884
  %v5945 = vunpack.c.l.s4 1966171168
  %v5946 = vunpack.c.0.s8 %v5945
  %v5947 = vlaneseq
  %v5948 = vshrl.u32 %v5947, 7
  %v5949 = vsub.s32 %v5946, %v5948
  %v5950 = vrot.slane %v5943, %v5949
  %v5952 = vunpack.c.l.s4 1966171168
  %v5953 = vunpack.c.0.s8 %v5952
  %v5954 = vlaneseq
  %v5955 = vshrl.u32 %v5954, 7
  %v5956 = vsub.s32 %v5953, %v5955
  %v5957 = vrot.slane %v5950, %v5956
  %v5960 = vpack.c.bf16 %v5957, %v5942
  %v5962 = vsel %vm1359, %v5960, 0
  %v5965 = vsel %vm2098, %v4611, 0
  %5967 = vmatprep.subr.bf16.mxu0 0
  %5968 = vmatpush1.bf16.msra.mxu0 %v5965
  %5969 = vmatprep.subr.bf16.mxu0 0
  %5970 = vmatpush1.bf16.msra.mxu0 0
  %5971 = vmatprep.subr.bf16.mxu0 0
  %5972 = vmatpush1.bf16.msra.mxu0 0
  %5973 = vmatprep.subr.bf16.mxu0 0
  %5974 = vmatpush1.bf16.msra.mxu0 0
  %5975 = vmatprep.subr.bf16.mxu0 0
  %5976 = vmatpush1.bf16.msra.mxu0 0
  %5977 = vmatprep.subr.bf16.mxu0 0
  %5978 = vmatpush1.bf16.msra.mxu0 0
  %5979 = vmatprep.subr.bf16.mxu0 0
  %5980 = vmatpush1.bf16.msra.mxu0 0
  %5981 = vmatprep.subr.bf16.mxu0 0
  %5982 = vmatpush1.bf16.msra.mxu0 0
  %5983 = vmatprep.subr.bf16.mxu0 0
  %5984 = vmatpush1.bf16.msra.mxu0 0
  %5985 = vmatprep.subr.bf16.mxu0 0
  %5986 = vmatpush1.bf16.msra.mxu0 0
  %5987 = vmatprep.subr.bf16.mxu0 0
  %5988 = vmatpush1.bf16.msra.mxu0 0
  %5989 = vmatprep.subr.bf16.mxu0 0
  %5990 = vmatpush1.bf16.msra.mxu0 0
  %5991 = vmatprep.subr.bf16.mxu0 0
  %5992 = vmatpush1.bf16.msra.mxu0 0
  %5993 = vmatprep.subr.bf16.mxu0 0
  %5994 = vmatpush1.bf16.msra.mxu0 0
  %5995 = vmatprep.subr.bf16.mxu0 0
  %5996 = vmatpush1.bf16.msra.mxu0 0
  %5997 = vmatprep.subr.bf16.mxu0 0
  %5998 = vmatpush1.bf16.msra.mxu0 0
  %5999 = vmatprep.mubr.bf16.mxu0 0
  %6000 = vmatmul.mubr.bf16.gmra.mrb[0].mxu0 %v5962
  %v6001 = vpop.f32.mrb[0].mxu0
  %v6002 = vadd.f32 0.0, %v6001
  %v6003 = vpop.f32.mrb[0].mxu0
  %v6004 = vpop.f32.mrb[0].mxu0
  %v6005 = vadd.f32 0.0, %v6004
  %v6006 = vpop.f32.mrb[0].mxu0
  %6007 = vdwg.mxu0
  %v6008 = vadd.f32 %v5588, %v6002
  %v6009 = vadd.f32 %v5591, %v6005
  %6010 = vrot.lane.b32.xlu0 %v4766, 104
  %v6011 = vpop.permute.xlu0 %6010
  %6012 = vrot.lane.b32.xlu0 %v4766, 72
  %v6013 = vpop.permute.xlu0 %6012
  %v6015 = vsel %vm1359, %v6011, 0
  %v6018 = vsel %vm1359, %v6013, 0
  %6020 = vmatprep.subr.bf16.mxu0 0
  %6021 = vmatpush1.bf16.xpose.msra.mxu0 %v6018
  %6022 = vmatprep.subr.bf16.mxu0 0
  %6023 = vmatpush1.bf16.xpose.msra.mxu0 0
  %6024 = vmatprep.subr.bf16.mxu0 0
  %6025 = vmatpush1.bf16.xpose.msra.mxu0 0
  %6026 = vmatprep.subr.bf16.mxu0 0
  %6027 = vmatpush1.bf16.xpose.msra.mxu0 0
  %6028 = vmatprep.subr.bf16.mxu0 0
  %6029 = vmatpush1.bf16.xpose.msra.mxu0 0
  %6030 = vmatprep.subr.bf16.mxu0 0
  %6031 = vmatpush1.bf16.xpose.msra.mxu0 0
  %6032 = vmatprep.subr.bf16.mxu0 0
  %6033 = vmatpush1.bf16.xpose.msra.mxu0 0
  %6034 = vmatprep.subr.bf16.mxu0 0
  %6035 = vmatpush1.bf16.xpose.msra.mxu0 0
  %6036 = vmatprep.subr.bf16.mxu0 0
  %6037 = vmatpush1.bf16.xpose.msra.mxu0 0
  %6038 = vmatprep.subr.bf16.mxu0 0
  %6039 = vmatpush1.bf16.xpose.msra.mxu0 0
  %6040 = vmatprep.subr.bf16.mxu0 0
  %6041 = vmatpush1.bf16.xpose.msra.mxu0 0
  %6042 = vmatprep.subr.bf16.mxu0 0
  %6043 = vmatpush1.bf16.xpose.msra.mxu0 0
  %6044 = vmatprep.subr.bf16.mxu0 0
  %6045 = vmatpush1.bf16.xpose.msra.mxu0 0
  %6046 = vmatprep.subr.bf16.mxu0 0
  %6047 = vmatpush1.bf16.xpose.msra.mxu0 0
  %6048 = vmatprep.subr.bf16.mxu0 0
  %6049 = vmatpush1.bf16.xpose.msra.mxu0 0
  %6050 = vmatprep.subr.bf16.mxu0 0
  %6051 = vmatpush1.bf16.xpose.msra.mxu0 0
  %6052 = vmatprep.mubr.bf16.mxu0 0
  %6053 = vmatmul.mubr.bf16.gmra.mrb[0].mxu0 %v6015
  %v6054 = vpop.f32.mrb[0].mxu0
  %v6055 = vadd.f32 0.0, %v6054
  %v6056 = vpop.f32.mrb[0].mxu0
  %v6057 = vpop.f32.mrb[0].mxu0
  %v6058 = vpop.f32.mrb[0].mxu0
  %6059 = vdwg.mxu0
  %6060 = vrot.lane.b32.xlu0 %v4767, 104
  %v6061 = vpop.permute.xlu0 %6060
  %6062 = vrot.lane.b32.xlu0 %v4767, 72
  %v6063 = vpop.permute.xlu0 %6062
  %v6065 = vsel %vm1359, %v6061, 0
  %v6068 = vsel %vm1359, %v6063, 0
  %6070 = vmatprep.subr.bf16.mxu0 0
  %6071 = vmatpush1.bf16.xpose.msra.mxu0 %v6068
  %6072 = vmatprep.subr.bf16.mxu0 0
  %6073 = vmatpush1.bf16.xpose.msra.mxu0 0
  %6074 = vmatprep.subr.bf16.mxu0 0
  %6075 = vmatpush1.bf16.xpose.msra.mxu0 0
  %6076 = vmatprep.subr.bf16.mxu0 0
  %6077 = vmatpush1.bf16.xpose.msra.mxu0 0
  %6078 = vmatprep.subr.bf16.mxu0 0
  %6079 = vmatpush1.bf16.xpose.msra.mxu0 0
  %6080 = vmatprep.subr.bf16.mxu0 0
  %6081 = vmatpush1.bf16.xpose.msra.mxu0 0
  %6082 = vmatprep.subr.bf16.mxu0 0
  %6083 = vmatpush1.bf16.xpose.msra.mxu0 0
  %6084 = vmatprep.subr.bf16.mxu0 0
  %6085 = vmatpush1.bf16.xpose.msra.mxu0 0
  %6086 = vmatprep.subr.bf16.mxu0 0
  %6087 = vmatpush1.bf16.xpose.msra.mxu0 0
  %6088 = vmatprep.subr.bf16.mxu0 0
  %6089 = vmatpush1.bf16.xpose.msra.mxu0 0
  %6090 = vmatprep.subr.bf16.mxu0 0
  %6091 = vmatpush1.bf16.xpose.msra.mxu0 0
  %6092 = vmatprep.subr.bf16.mxu0 0
  %6093 = vmatpush1.bf16.xpose.msra.mxu0 0
  %6094 = vmatprep.subr.bf16.mxu0 0
  %6095 = vmatpush1.bf16.xpose.msra.mxu0 0
  %6096 = vmatprep.subr.bf16.mxu0 0
  %6097 = vmatpush1.bf16.xpose.msra.mxu0 0
  %6098 = vmatprep.subr.bf16.mxu0 0
  %6099 = vmatpush1.bf16.xpose.msra.mxu0 0
  %6100 = vmatprep.subr.bf16.mxu0 0
  %6101 = vmatpush1.bf16.xpose.msra.mxu0 0
  %6102 = vmatprep.mubr.bf16.mxu0 0
  %6103 = vmatmul.mubr.bf16.gmra.mrb[0].mxu0 %v6065
  %v6104 = vpop.f32.mrb[0].mxu0
  %v6105 = vadd.f32 0.0, %v6104
  %v6106 = vpop.f32.mrb[0].mxu0
  %v6107 = vpop.f32.mrb[0].mxu0
  %v6108 = vpop.f32.mrb[0].mxu0
  %6109 = vdwg.mxu0
  %v6110 = vsel %vm1455, %v6055, -inf
  %6111 = vmax.xlane.f32.xlu0 %v6110
  %v6112 = vpop.xlane.xlu0 %6111
  %v6113 = vsel %vm1455, %v6105, -inf
  %6114 = vmax.xlane.f32.xlu0 %v6113
  %v6115 = vpop.xlane.xlu0 %6114
  %v6116 = vsub.f32 %v6055, %v6112
  %v6117 = vsub.f32 %v6105, %v6115
  %v6118 = vmul.f32 %v6116, 1.442695
  %v6119 = vpow.pop %v6118
  %v6120 = vmul.f32 %v6117, 1.442695
  %v6121 = vpow.pop %v6120
  %v6122 = vsel %vm1455, %v6119, 0.0
  %6123 = vadd.xlane.f32.xlu0 %v6122
  %v6124 = vpop.xlane.xlu0 %6123
  %v6125 = vsel %vm1455, %v6121, 0.0
  %6126 = vadd.xlane.f32.xlu0 %v6125
  %v6127 = vpop.xlane.xlu0 %6126
  %v6128 = vrcp.pop %v6124
  %v6129 = vrcp.pop %v6127
  %v6130 = vmul.f32 %v6119, %v6128
  %v6131 = vmul.f32 %v6121, %v6129
  %v6132 = vpack.c.bf16 %v6130, %v6130
  %v6133 = vpack.c.bf16 %v6131, %v6131
  %6134 = vrot.lane.b32.xlu0 %v4766, 40
  %v6135 = vpop.permute.xlu0 %6134
  %v6137 = vsel %vm1482, %v6132, 0
  %v6140 = vand.u32 %v6135, %v1489
  %6142 = vmatprep.subr.bf16.mxu0 0
  %6143 = vmatpush1.bf16.msra.mxu0 %v6140
  %6144 = vmatprep.subr.bf16.mxu0 0
  %6145 = vmatpush1.bf16.msra.mxu0 0
  %6146 = vmatprep.subr.bf16.mxu0 0
  %6147 = vmatpush1.bf16.msra.mxu0 0
  %6148 = vmatprep.subr.bf16.mxu0 0
  %6149 = vmatpush1.bf16.msra.mxu0 0
  %6150 = vmatprep.subr.bf16.mxu0 0
  %6151 = vmatpush1.bf16.msra.mxu0 0
  %6152 = vmatprep.subr.bf16.mxu0 0
  %6153 = vmatpush1.bf16.msra.mxu0 0
  %6154 = vmatprep.subr.bf16.mxu0 0
  %6155 = vmatpush1.bf16.msra.mxu0 0
  %6156 = vmatprep.subr.bf16.mxu0 0
  %6157 = vmatpush1.bf16.msra.mxu0 0
  %6158 = vmatprep.subr.bf16.mxu0 0
  %6159 = vmatpush1.bf16.msra.mxu0 0
  %6160 = vmatprep.subr.bf16.mxu0 0
  %6161 = vmatpush1.bf16.msra.mxu0 0
  %6162 = vmatprep.subr.bf16.mxu0 0
  %6163 = vmatpush1.bf16.msra.mxu0 0
  %6164 = vmatprep.subr.bf16.mxu0 0
  %6165 = vmatpush1.bf16.msra.mxu0 0
  %6166 = vmatprep.subr.bf16.mxu0 0
  %6167 = vmatpush1.bf16.msra.mxu0 0
  %6168 = vmatprep.subr.bf16.mxu0 0
  %6169 = vmatpush1.bf16.msra.mxu0 0
  %6170 = vmatprep.subr.bf16.mxu0 0
  %6171 = vmatpush1.bf16.msra.mxu0 0
  %6172 = vmatprep.subr.bf16.mxu0 0
  %6173 = vmatpush1.bf16.msra.mxu0 0
  %6174 = vmatprep.mubr.bf16.mxu0 0
  %6175 = vmatmul.mubr.bf16.gmra.mrb[0].mxu0 %v6137
  %v6176 = vpop.f32.mrb[0].mxu0
  %v6177 = vadd.f32 0.0, %v6176
  %v6178 = vpop.f32.mrb[0].mxu0
  %v6179 = vpop.f32.mrb[0].mxu0
  %v6180 = vpop.f32.mrb[0].mxu0
  %6181 = vdwg.mxu0
  %6182 = vrot.lane.b32.xlu0 %v4767, 40
  %v6183 = vpop.permute.xlu0 %6182
  %v6185 = vsel %vm1482, %v6133, 0
  %v6188 = vand.u32 %v6183, %v1489
  %6190 = vmatprep.subr.bf16.mxu0 0
  %6191 = vmatpush1.bf16.msra.mxu0 %v6188
  %6192 = vmatprep.subr.bf16.mxu0 0
  %6193 = vmatpush1.bf16.msra.mxu0 0
  %6194 = vmatprep.subr.bf16.mxu0 0
  %6195 = vmatpush1.bf16.msra.mxu0 0
  %6196 = vmatprep.subr.bf16.mxu0 0
  %6197 = vmatpush1.bf16.msra.mxu0 0
  %6198 = vmatprep.subr.bf16.mxu0 0
  %6199 = vmatpush1.bf16.msra.mxu0 0
  %6200 = vmatprep.subr.bf16.mxu0 0
  %6201 = vmatpush1.bf16.msra.mxu0 0
  %6202 = vmatprep.subr.bf16.mxu0 0
  %6203 = vmatpush1.bf16.msra.mxu0 0
  %6204 = vmatprep.subr.bf16.mxu0 0
  %6205 = vmatpush1.bf16.msra.mxu0 0
  %6206 = vmatprep.subr.bf16.mxu0 0
  %6207 = vmatpush1.bf16.msra.mxu0 0
  %6208 = vmatprep.subr.bf16.mxu0 0
  %6209 = vmatpush1.bf16.msra.mxu0 0
  %6210 = vmatprep.subr.bf16.mxu0 0
  %6211 = vmatpush1.bf16.msra.mxu0 0
  %6212 = vmatprep.subr.bf16.mxu0 0
  %6213 = vmatpush1.bf16.msra.mxu0 0
  %6214 = vmatprep.subr.bf16.mxu0 0
  %6215 = vmatpush1.bf16.msra.mxu0 0
  %6216 = vmatprep.subr.bf16.mxu0 0
  %6217 = vmatpush1.bf16.msra.mxu0 0
  %6218 = vmatprep.subr.bf16.mxu0 0
  %6219 = vmatpush1.bf16.msra.mxu0 0
  %6220 = vmatprep.subr.bf16.mxu0 0
  %6221 = vmatpush1.bf16.msra.mxu0 0
  %6222 = vmatprep.mubr.bf16.mxu0 0
  %6223 = vmatmul.mubr.bf16.gmra.mrb[0].mxu0 %v6185
  %v6224 = vpop.f32.mrb[0].mxu0
  %v6225 = vadd.f32 0.0, %v6224
  %v6226 = vpop.f32.mrb[0].mxu0
  %v6227 = vpop.f32.mrb[0].mxu0
  %v6228 = vpop.f32.mrb[0].mxu0
  %6229 = vdwg.mxu0
  %v6232 = vcombine.high %v6177, %v6177
  %v6234 = vunpack.c.l.s4 1966171168
  %v6235 = vunpack.c.0.s8 %v6234
  %v6236 = vlaneseq
  %v6237 = vshrl.u32 %v6236, 7
  %v6238 = vsub.s32 %v6235, %v6237
  %v6239 = vrot.slane %v6177, %v6238
  %v6241 = vunpack.c.l.s4 1966171168
  %v6242 = vunpack.c.0.s8 %v6241
  %v6243 = vlaneseq
  %v6244 = vshrl.u32 %v6243, 7
  %v6245 = vsub.s32 %v6242, %v6244
  %v6246 = vrot.slane %v6232, %v6245
  %v6247 = vcombine.high %v6239, %v6239
  %v6249 = vunpack.c.l.s4 1966171168
  %v6250 = vunpack.c.0.s8 %v6249
  %v6251 = vlaneseq
  %v6252 = vshrl.u32 %v6251, 7
  %v6253 = vsub.s32 %v6250, %v6252
  %v6254 = vrot.slane %v6239, %v6253
  %v6256 = vunpack.c.l.s4 1966171168
  %v6257 = vunpack.c.0.s8 %v6256
  %v6258 = vlaneseq
  %v6259 = vshrl.u32 %v6258, 7
  %v6260 = vsub.s32 %v6257, %v6259
  %v6261 = vrot.slane %v6246, %v6260
  %v6263 = vunpack.c.l.s4 1966171168
  %v6264 = vunpack.c.0.s8 %v6263
  %v6265 = vlaneseq
  %v6266 = vshrl.u32 %v6265, 7
  %v6267 = vsub.s32 %v6264, %v6266
  %v6268 = vrot.slane %v6247, %v6267
  %v6269 = vcombine.high %v6254, %v6254
  %v6270 = vcombine.high %v6268, %v6268
  %v6271 = vcombine.high %v6225, %v6225
  %v6273 = vunpack.c.l.s4 1966171168
  %v6274 = vunpack.c.0.s8 %v6273
  %v6275 = vlaneseq
  %v6276 = vshrl.u32 %v6275, 7
  %v6277 = vsub.s32 %v6274, %v6276
  %v6278 = vrot.slane %v6225, %v6277
  %v6280 = vunpack.c.l.s4 1966171168
  %v6281 = vunpack.c.0.s8 %v6280
  %v6282 = vlaneseq
  %v6283 = vshrl.u32 %v6282, 7
  %v6284 = vsub.s32 %v6281, %v6283
  %v6285 = vrot.slane %v6271, %v6284
  %v6286 = vcombine.high %v6278, %v6278
  %v6288 = vunpack.c.l.s4 1966171168
  %v6289 = vunpack.c.0.s8 %v6288
  %v6290 = vlaneseq
  %v6291 = vshrl.u32 %v6290, 7
  %v6292 = vsub.s32 %v6289, %v6291
  %v6293 = vrot.slane %v6278, %v6292
  %v6295 = vunpack.c.l.s4 1966171168
  %v6296 = vunpack.c.0.s8 %v6295
  %v6297 = vlaneseq
  %v6298 = vshrl.u32 %v6297, 7
  %v6299 = vsub.s32 %v6296, %v6298
  %v6300 = vrot.slane %v6285, %v6299
  %v6302 = vunpack.c.l.s4 1966171168
  %v6303 = vunpack.c.0.s8 %v6302
  %v6304 = vlaneseq
  %v6305 = vshrl.u32 %v6304, 7
  %v6306 = vsub.s32 %v6303, %v6305
  %v6307 = vrot.slane %v6286, %v6306
  %v6308 = vcombine.high %v6293, %v6293
  %v6309 = vcombine.high %v6307, %v6307
  %v6310 = vcombine.low %v6254, %v6268
  %v6311 = vcombine.low %v6269, %v6270
  %v6312 = vcombine.low %v6261, %v6293
  %v6313 = vcombine.low %v6307, %v6308
  %v6315 = vunpack.c.l.s4 1966171168
  %v6316 = vunpack.c.0.s8 %v6315
  %v6317 = vlaneseq
  %v6318 = vshrl.u32 %v6317, 7
  %v6319 = vsub.s32 %v6316, %v6318
  %v6320 = vrot.slane %v6310, %v6319
  %v6322 = vunpack.c.l.s4 1966171168
  %v6323 = vunpack.c.0.s8 %v6322
  %v6324 = vlaneseq
  %v6325 = vshrl.u32 %v6324, 7
  %v6326 = vsub.s32 %v6323, %v6325
  %v6327 = vrot.slane %v6311, %v6326
  %v6329 = vunpack.c.l.s4 1966171168
  %v6330 = vunpack.c.0.s8 %v6329
  %v6331 = vlaneseq
  %v6332 = vshrl.u32 %v6331, 7
  %v6333 = vsub.s32 %v6330, %v6332
  %v6334 = vrot.slane %v6312, %v6333
  %v6336 = vunpack.c.l.s4 1966171168
  %v6337 = vunpack.c.0.s8 %v6336
  %v6338 = vlaneseq
  %v6339 = vshrl.u32 %v6338, 7
  %v6340 = vsub.s32 %v6337, %v6339
  %v6341 = vrot.slane %v6313, %v6340
  %v6342 = vcombine.low %v6320, %v6327
  %v6343 = vcombine.low %v6334, %v6341
  %v6345 = vunpack.c.l.s4 1966171168
  %v6346 = vunpack.c.0.s8 %v6345
  %v6347 = vlaneseq
  %v6348 = vshrl.u32 %v6347, 7
  %v6349 = vsub.s32 %v6346, %v6348
  %v6350 = vrot.slane %v6342, %v6349
  %v6352 = vunpack.c.l.s4 1966171168
  %v6353 = vunpack.c.0.s8 %v6352
  %v6354 = vlaneseq
  %v6355 = vshrl.u32 %v6354, 7
  %v6356 = vsub.s32 %v6353, %v6355
  %v6357 = vrot.slane %v6343, %v6356
  %v6358 = vcombine.low %v6350, %v6357
  %v6359 = vcombine.low %v6309, %v6300
  %v6361 = vunpack.c.l.s4 1966171168
  %v6362 = vunpack.c.0.s8 %v6361
  %v6363 = vlaneseq
  %v6364 = vshrl.u32 %v6363, 7
  %v6365 = vsub.s32 %v6362, %v6364
  %v6366 = vrot.slane %v6359, %v6365
  %v6368 = vunpack.c.l.s4 1966171168
  %v6369 = vunpack.c.0.s8 %v6368
  %v6370 = vlaneseq
  %v6371 = vshrl.u32 %v6370, 7
  %v6372 = vsub.s32 %v6369, %v6371
  %v6373 = vrot.slane %v6366, %v6372
  %v6376 = vpack.c.bf16 %v6373, %v6358
  %v6378 = vsel %vm1359, %v6376, 0
  %v6381 = vsel %vm2098, %v4612, 0
  %6383 = vmatprep.subr.bf16.mxu0 0
  %6384 = vmatpush1.bf16.msra.mxu0 %v6381
  %6385 = vmatprep.subr.bf16.mxu0 0
  %6386 = vmatpush1.bf16.msra.mxu0 0
  %6387 = vmatprep.subr.bf16.mxu0 0
  %6388 = vmatpush1.bf16.msra.mxu0 0
  %6389 = vmatprep.subr.bf16.mxu0 0
  %6390 = vmatpush1.bf16.msra.mxu0 0
  %6391 = vmatprep.subr.bf16.mxu0 0
  %6392 = vmatpush1.bf16.msra.mxu0 0
  %6393 = vmatprep.subr.bf16.mxu0 0
  %6394 = vmatpush1.bf16.msra.mxu0 0
  %6395 = vmatprep.subr.bf16.mxu0 0
  %6396 = vmatpush1.bf16.msra.mxu0 0
  %6397 = vmatprep.subr.bf16.mxu0 0
  %6398 = vmatpush1.bf16.msra.mxu0 0
  %6399 = vmatprep.subr.bf16.mxu0 0
  %6400 = vmatpush1.bf16.msra.mxu0 0
  %6401 = vmatprep.subr.bf16.mxu0 0
  %6402 = vmatpush1.bf16.msra.mxu0 0
  %6403 = vmatprep.subr.bf16.mxu0 0
  %6404 = vmatpush1.bf16.msra.mxu0 0
  %6405 = vmatprep.subr.bf16.mxu0 0
  %6406 = vmatpush1.bf16.msra.mxu0 0
  %6407 = vmatprep.subr.bf16.mxu0 0
  %6408 = vmatpush1.bf16.msra.mxu0 0
  %6409 = vmatprep.subr.bf16.mxu0 0
  %6410 = vmatpush1.bf16.msra.mxu0 0
  %6411 = vmatprep.subr.bf16.mxu0 0
  %6412 = vmatpush1.bf16.msra.mxu0 0
  %6413 = vmatprep.subr.bf16.mxu0 0
  %6414 = vmatpush1.bf16.msra.mxu0 0
  %6415 = vmatprep.mubr.bf16.mxu0 0
  %6416 = vmatmul.mubr.bf16.gmra.mrb[0].mxu0 %v6378
  %v6417 = vpop.f32.mrb[0].mxu0
  %v6418 = vadd.f32 0.0, %v6417
  %v6419 = vpop.f32.mrb[0].mxu0
  %v6420 = vpop.f32.mrb[0].mxu0
  %v6421 = vadd.f32 0.0, %v6420
  %v6422 = vpop.f32.mrb[0].mxu0
  %6423 = vdwg.mxu0
  %v6424 = vadd.f32 %v6008, %v6418
  %v6425 = vadd.f32 %v6009, %v6421
  %v6428 = vcombine.high %v6424, %v6424
  %v6430 = vunpack.c.l.s4 1966171168
  %v6431 = vunpack.c.0.s8 %v6430
  %v6432 = vlaneseq
  %v6433 = vshrl.u32 %v6432, 7
  %v6434 = vsub.s32 %v6431, %v6433
  %v6435 = vrot.slane %v6424, %v6434
  %v6437 = vunpack.c.l.s4 1966171168
  %v6438 = vunpack.c.0.s8 %v6437
  %v6439 = vlaneseq
  %v6440 = vshrl.u32 %v6439, 7
  %v6441 = vsub.s32 %v6438, %v6440
  %v6442 = vrot.slane %v6428, %v6441
  %v6443 = vcombine.high %v6435, %v6435
  %v6444 = vcombine.high %v6442, %v6442
  %v6446 = vunpack.c.l.s4 1966171168
  %v6447 = vunpack.c.0.s8 %v6446
  %v6448 = vlaneseq
  %v6449 = vshrl.u32 %v6448, 7
  %v6450 = vsub.s32 %v6447, %v6449
  %v6451 = vrot.slane %v6435, %v6450
  %v6453 = vunpack.c.l.s4 1966171168
  %v6454 = vunpack.c.0.s8 %v6453
  %v6455 = vlaneseq
  %v6456 = vshrl.u32 %v6455, 7
  %v6457 = vsub.s32 %v6454, %v6456
  %v6458 = vrot.slane %v6442, %v6457
  %v6460 = vunpack.c.l.s4 1966171168
  %v6461 = vunpack.c.0.s8 %v6460
  %v6462 = vlaneseq
  %v6463 = vshrl.u32 %v6462, 7
  %v6464 = vsub.s32 %v6461, %v6463
  %v6465 = vrot.slane %v6443, %v6464
  %v6467 = vunpack.c.l.s4 1966171168
  %v6468 = vunpack.c.0.s8 %v6467
  %v6469 = vlaneseq
  %v6470 = vshrl.u32 %v6469, 7
  %v6471 = vsub.s32 %v6468, %v6470
  %v6472 = vrot.slane %v6444, %v6471
  %v6473 = vcombine.high %v6451, %v6451
  %v6474 = vcombine.high %v6458, %v6458
  %v6475 = vcombine.high %v6465, %v6465
  %v6476 = vcombine.high %v6472, %v6472
  %v6478 = vunpack.c.l.s4 1966171168
  %v6479 = vunpack.c.0.s8 %v6478
  %v6480 = vlaneseq
  %v6481 = vshrl.u32 %v6480, 7
  %v6482 = vsub.s32 %v6479, %v6481
  %v6483 = vrot.slane %v6425, %v6482
  %v6484 = vcombine.high %v6483, %v6483
  %v6486 = vunpack.c.l.s4 1966171168
  %v6487 = vunpack.c.0.s8 %v6486
  %v6488 = vlaneseq
  %v6489 = vshrl.u32 %v6488, 7
  %v6490 = vsub.s32 %v6487, %v6489
  %v6491 = vrot.slane %v6483, %v6490
  %v6493 = vunpack.c.l.s4 1966171168
  %v6494 = vunpack.c.0.s8 %v6493
  %v6495 = vlaneseq
  %v6496 = vshrl.u32 %v6495, 7
  %v6497 = vsub.s32 %v6494, %v6496
  %v6498 = vrot.slane %v6484, %v6497
  %v6509 = vadd.f32 %v3998, %v6451
  %v6510 = vadd.f32 %v3999, %v6465
  %v6511 = vadd.f32 %v4000, %v6473
  %v6512 = vadd.f32 %v4001, %v6475
  %v6513 = vadd.f32 %v4002, %v6458
  %v6514 = vadd.f32 %v4003, %v6472
  %v6515 = vadd.f32 %v4004, %v6474
  %v6516 = vadd.f32 %v4005, %v6476
  %v6517 = vadd.f32 %v4006, %v6491
  %v6518 = vadd.f32 %v4007, %v6498
  %s6519 = scalar_lea.vmem %s12, 1
  %v6520 = vld [vmem:[%s6519] sm:$0x1]
  %v6522 = vlaneseq
  %v6523 = vshrl.u32 %v6522, 7
  %v6524 = vsub.s32 0, %v6523
  %v6525 = vrot.slane %v6520, %v6524
  %v6526 = vcombine.high %v6525, %v6525
  %v6528 = vunpack.c.l.s4 1966171168
  %v6529 = vunpack.c.0.s8 %v6528
  %v6530 = vlaneseq
  %v6531 = vshrl.u32 %v6530, 7
  %v6532 = vsub.s32 %v6529, %v6531
  %v6533 = vrot.slane %v6525, %v6532
  %v6535 = vunpack.c.l.s4 1966171168
  %v6536 = vunpack.c.0.s8 %v6535
  %v6537 = vlaneseq
  %v6538 = vshrl.u32 %v6537, 7
  %v6539 = vsub.s32 %v6536, %v6538
  %v6540 = vrot.slane %v6526, %v6539
  %v6541 = vcombine.high %v6533, %v6533
  %v6542 = vcombine.high %v6540, %v6540
  %v6544 = vunpack.c.l.s4 1966171168
  %v6545 = vunpack.c.0.s8 %v6544
  %v6546 = vlaneseq
  %v6547 = vshrl.u32 %v6546, 7
  %v6548 = vsub.s32 %v6545, %v6547
  %v6549 = vrot.slane %v6533, %v6548
  %v6551 = vunpack.c.l.s4 1966171168
  %v6552 = vunpack.c.0.s8 %v6551
  %v6553 = vlaneseq
  %v6554 = vshrl.u32 %v6553, 7
  %v6555 = vsub.s32 %v6552, %v6554
  %v6556 = vrot.slane %v6540, %v6555
  %v6558 = vunpack.c.l.s4 1966171168
  %v6559 = vunpack.c.0.s8 %v6558
  %v6560 = vlaneseq
  %v6561 = vshrl.u32 %v6560, 7
  %v6562 = vsub.s32 %v6559, %v6561
  %v6563 = vrot.slane %v6541, %v6562
  %v6565 = vunpack.c.l.s4 1966171168
  %v6566 = vunpack.c.0.s8 %v6565
  %v6567 = vlaneseq
  %v6568 = vshrl.u32 %v6567, 7
  %v6569 = vsub.s32 %v6566, %v6568
  %v6570 = vrot.slane %v6542, %v6569
  %v6571 = vcombine.high %v6549, %v6549
  %v6572 = vcombine.high %v6556, %v6556
  %v6573 = vcombine.high %v6563, %v6563
  %v6574 = vcombine.high %v6570, %v6570
  %v6583 = vadd.f32 %v6509, %v6549
  %v6584 = vadd.f32 %v6510, %v6563
  %v6585 = vadd.f32 %v6511, %v6571
  %v6586 = vadd.f32 %v6512, %v6573
  %v6587 = vadd.f32 %v6513, %v6556
  %v6588 = vadd.f32 %v6514, %v6570
  %v6589 = vadd.f32 %v6515, %v6572
  %v6590 = vadd.f32 %v6516, %v6574
  %v6591 = vadd.f32 %v6517, %v6549
  %v6592 = vadd.f32 %v6518, %v6563
  %s6593 = scalar_lea.vmem %s13, 1
  %v6594 = vld [vmem:[%s6593] sm:$0x1]
  %s6595 = scalar_lea.vmem %s14, 1
  %v6596 = vld [vmem:[%s6595] sm:$0x1]
  %v6607 = vcombine.low %v6583, %v6584
  %v6608 = vcombine.low %v6585, %v6586
  %v6609 = vcombine.low %v6587, %v6588
  %v6610 = vcombine.low %v6589, %v6590
  %v6612 = vunpack.c.l.s4 1966171168
  %v6613 = vunpack.c.0.s8 %v6612
  %v6614 = vlaneseq
  %v6615 = vshrl.u32 %v6614, 7
  %v6616 = vsub.s32 %v6613, %v6615
  %v6617 = vrot.slane %v6607, %v6616
  %v6619 = vunpack.c.l.s4 1966171168
  %v6620 = vunpack.c.0.s8 %v6619
  %v6621 = vlaneseq
  %v6622 = vshrl.u32 %v6621, 7
  %v6623 = vsub.s32 %v6620, %v6622
  %v6624 = vrot.slane %v6608, %v6623
  %v6626 = vunpack.c.l.s4 1966171168
  %v6627 = vunpack.c.0.s8 %v6626
  %v6628 = vlaneseq
  %v6629 = vshrl.u32 %v6628, 7
  %v6630 = vsub.s32 %v6627, %v6629
  %v6631 = vrot.slane %v6609, %v6630
  %v6633 = vunpack.c.l.s4 1966171168
  %v6634 = vunpack.c.0.s8 %v6633
  %v6635 = vlaneseq
  %v6636 = vshrl.u32 %v6635, 7
  %v6637 = vsub.s32 %v6634, %v6636
  %v6638 = vrot.slane %v6610, %v6637
  %v6639 = vcombine.low %v6617, %v6624
  %v6640 = vcombine.low %v6631, %v6638
  %v6642 = vunpack.c.l.s4 1966171168
  %v6643 = vunpack.c.0.s8 %v6642
  %v6644 = vlaneseq
  %v6645 = vshrl.u32 %v6644, 7
  %v6646 = vsub.s32 %v6643, %v6645
  %v6647 = vrot.slane %v6639, %v6646
  %v6649 = vunpack.c.l.s4 1966171168
  %v6650 = vunpack.c.0.s8 %v6649
  %v6651 = vlaneseq
  %v6652 = vshrl.u32 %v6651, 7
  %v6653 = vsub.s32 %v6650, %v6652
  %v6654 = vrot.slane %v6640, %v6653
  %v6655 = vcombine.low %v6647, %v6654
  %v6656 = vcombine.low %v6591, %v6592
  %v6658 = vunpack.c.l.s4 1966171168
  %v6659 = vunpack.c.0.s8 %v6658
  %v6660 = vlaneseq
  %v6661 = vshrl.u32 %v6660, 7
  %v6662 = vsub.s32 %v6659, %v6661
  %v6663 = vrot.slane %v6656, %v6662
  %v6665 = vunpack.c.l.s4 1966171168
  %v6666 = vunpack.c.0.s8 %v6665
  %v6667 = vlaneseq
  %v6668 = vshrl.u32 %v6667, 7
  %v6669 = vsub.s32 %v6666, %v6668
  %v6670 = vrot.slane %v6663, %v6669
  %v6673 = vsel %vm676, %v6655, 0.0
  %6674 = vadd.xlane.f32.xlu0 %v6673
  %v6675 = vpop.xlane.xlu0 %6674
  %v6676 = vsel %vm680, %v6670, 0.0
  %6677 = vadd.xlane.f32.xlu0 %v6676
  %v6678 = vpop.xlane.xlu0 %6677
  %v6679 = vmul.f32 %v6675, %v684
  %v6680 = vmul.f32 %v6678, %v684
  %v6683 = vlaneseq
  %v6684 = vshrl.u32 %v6683, 7
  %v6685 = vsub.s32 0, %v6684
  %v6686 = vrot.slane %v6679, %v6685
  %v6687 = vlaneseq
  %v6688 = vshrl.u32 %v6687, 7
  %v6689 = vsub.s32 1, %v6688
  %v6690 = vrot.slane %v6679, %v6689
  %v6691 = vlaneseq
  %v6692 = vshrl.u32 %v6691, 7
  %v6693 = vsub.s32 2, %v6692
  %v6694 = vrot.slane %v6679, %v6693
  %v6695 = vlaneseq
  %v6696 = vshrl.u32 %v6695, 7
  %v6697 = vsub.s32 3, %v6696
  %v6698 = vrot.slane %v6679, %v6697
  %v6699 = vlaneseq
  %v6700 = vshrl.u32 %v6699, 7
  %v6701 = vsub.s32 4, %v6700
  %v6702 = vrot.slane %v6679, %v6701
  %v6703 = vlaneseq
  %v6704 = vshrl.u32 %v6703, 7
  %v6705 = vsub.s32 5, %v6704
  %v6706 = vrot.slane %v6679, %v6705
  %v6707 = vlaneseq
  %v6708 = vshrl.u32 %v6707, 7
  %v6709 = vsub.s32 6, %v6708
  %v6710 = vrot.slane %v6679, %v6709
  %v6711 = vlaneseq
  %v6712 = vshrl.u32 %v6711, 7
  %v6713 = vsub.s32 7, %v6712
  %v6714 = vrot.slane %v6679, %v6713
  %v6715 = vlaneseq
  %v6716 = vshrl.u32 %v6715, 7
  %v6717 = vsub.s32 0, %v6716
  %v6718 = vrot.slane %v6680, %v6717
  %v6719 = vlaneseq
  %v6720 = vshrl.u32 %v6719, 7
  %v6721 = vsub.s32 1, %v6720
  %v6722 = vrot.slane %v6680, %v6721
  %v6733 = vsub.f32 %v6583, %v6686
  %v6734 = vsub.f32 %v6584, %v6690
  %v6735 = vsub.f32 %v6585, %v6694
  %v6736 = vsub.f32 %v6586, %v6698
  %v6737 = vsub.f32 %v6587, %v6702
  %v6738 = vsub.f32 %v6588, %v6706
  %v6739 = vsub.f32 %v6589, %v6710
  %v6740 = vsub.f32 %v6590, %v6714
  %v6741 = vsub.f32 %v6591, %v6718
  %v6742 = vsub.f32 %v6592, %v6722
  %v6743 = vmul.f32 %v6733, %v6733
  %v6744 = vmul.f32 %v6734, %v6734
  %v6745 = vmul.f32 %v6735, %v6735
  %v6746 = vmul.f32 %v6736, %v6736
  %v6747 = vmul.f32 %v6737, %v6737
  %v6748 = vmul.f32 %v6738, %v6738
  %v6749 = vmul.f32 %v6739, %v6739
  %v6750 = vmul.f32 %v6740, %v6740
  %v6751 = vmul.f32 %v6741, %v6741
  %v6752 = vmul.f32 %v6742, %v6742
  %v6763 = vcombine.low %v6743, %v6744
  %v6764 = vcombine.low %v6745, %v6746
  %v6765 = vcombine.low %v6747, %v6748
  %v6766 = vcombine.low %v6749, %v6750
  %v6768 = vunpack.c.l.s4 1966171168
  %v6769 = vunpack.c.0.s8 %v6768
  %v6770 = vlaneseq
  %v6771 = vshrl.u32 %v6770, 7
  %v6772 = vsub.s32 %v6769, %v6771
  %v6773 = vrot.slane %v6763, %v6772
  %v6775 = vunpack.c.l.s4 1966171168
  %v6776 = vunpack.c.0.s8 %v6775
  %v6777 = vlaneseq
  %v6778 = vshrl.u32 %v6777, 7
  %v6779 = vsub.s32 %v6776, %v6778
  %v6780 = vrot.slane %v6764, %v6779
  %v6782 = vunpack.c.l.s4 1966171168
  %v6783 = vunpack.c.0.s8 %v6782
  %v6784 = vlaneseq
  %v6785 = vshrl.u32 %v6784, 7
  %v6786 = vsub.s32 %v6783, %v6785
  %v6787 = vrot.slane %v6765, %v6786
  %v6789 = vunpack.c.l.s4 1966171168
  %v6790 = vunpack.c.0.s8 %v6789
  %v6791 = vlaneseq
  %v6792 = vshrl.u32 %v6791, 7
  %v6793 = vsub.s32 %v6790, %v6792
  %v6794 = vrot.slane %v6766, %v6793
  %v6795 = vcombine.low %v6773, %v6780
  %v6796 = vcombine.low %v6787, %v6794
  %v6798 = vunpack.c.l.s4 1966171168
  %v6799 = vunpack.c.0.s8 %v6798
  %v6800 = vlaneseq
  %v6801 = vshrl.u32 %v6800, 7
  %v6802 = vsub.s32 %v6799, %v6801
  %v6803 = vrot.slane %v6795, %v6802
  %v6805 = vunpack.c.l.s4 1966171168
  %v6806 = vunpack.c.0.s8 %v6805
  %v6807 = vlaneseq
  %v6808 = vshrl.u32 %v6807, 7
  %v6809 = vsub.s32 %v6806, %v6808
  %v6810 = vrot.slane %v6796, %v6809
  %v6811 = vcombine.low %v6803, %v6810
  %v6812 = vcombine.low %v6751, %v6752
  %v6814 = vunpack.c.l.s4 1966171168
  %v6815 = vunpack.c.0.s8 %v6814
  %v6816 = vlaneseq
  %v6817 = vshrl.u32 %v6816, 7
  %v6818 = vsub.s32 %v6815, %v6817
  %v6819 = vrot.slane %v6812, %v6818
  %v6821 = vunpack.c.l.s4 1966171168
  %v6822 = vunpack.c.0.s8 %v6821
  %v6823 = vlaneseq
  %v6824 = vshrl.u32 %v6823, 7
  %v6825 = vsub.s32 %v6822, %v6824
  %v6826 = vrot.slane %v6819, %v6825
  %v6829 = vsel %vm676, %v6811, 0.0
  %6830 = vadd.xlane.f32.xlu0 %v6829
  %v6831 = vpop.xlane.xlu0 %6830
  %v6832 = vsel %vm680, %v6826, 0.0
  %6833 = vadd.xlane.f32.xlu0 %v6832
  %v6834 = vpop.xlane.xlu0 %6833
  %v6835 = vmul.f32 %v6831, %v684
  %v6836 = vmul.f32 %v6834, %v684
  %v6837 = vadd.f32 %v6835, 1e-06
  %v6838 = vadd.f32 %v6836, 1e-06
  %v6839 = vrsqrt.pop %v6837
  %v6840 = vrsqrt.pop %v6838
  %v6843 = vlaneseq
  %v6844 = vshrl.u32 %v6843, 7
  %v6845 = vsub.s32 0, %v6844
  %v6846 = vrot.slane %v6839, %v6845
  %v6847 = vlaneseq
  %v6848 = vshrl.u32 %v6847, 7
  %v6849 = vsub.s32 1, %v6848
  %v6850 = vrot.slane %v6839, %v6849
  %v6851 = vlaneseq
  %v6852 = vshrl.u32 %v6851, 7
  %v6853 = vsub.s32 2, %v6852
  %v6854 = vrot.slane %v6839, %v6853
  %v6855 = vlaneseq
  %v6856 = vshrl.u32 %v6855, 7
  %v6857 = vsub.s32 3, %v6856
  %v6858 = vrot.slane %v6839, %v6857
  %v6859 = vlaneseq
  %v6860 = vshrl.u32 %v6859, 7
  %v6861 = vsub.s32 4, %v6860
  %v6862 = vrot.slane %v6839, %v6861
  %v6863 = vlaneseq
  %v6864 = vshrl.u32 %v6863, 7
  %v6865 = vsub.s32 5, %v6864
  %v6866 = vrot.slane %v6839, %v6865
  %v6867 = vlaneseq
  %v6868 = vshrl.u32 %v6867, 7
  %v6869 = vsub.s32 6, %v6868
  %v6870 = vrot.slane %v6839, %v6869
  %v6871 = vlaneseq
  %v6872 = vshrl.u32 %v6871, 7
  %v6873 = vsub.s32 7, %v6872
  %v6874 = vrot.slane %v6839, %v6873
  %v6875 = vlaneseq
  %v6876 = vshrl.u32 %v6875, 7
  %v6877 = vsub.s32 0, %v6876
  %v6878 = vrot.slane %v6840, %v6877
  %v6879 = vlaneseq
  %v6880 = vshrl.u32 %v6879, 7
  %v6881 = vsub.s32 1, %v6880
  %v6882 = vrot.slane %v6840, %v6881
  %v6893 = vmul.f32 %v6733, %v6846
  %v6894 = vmul.f32 %v6734, %v6850
  %v6895 = vmul.f32 %v6735, %v6854
  %v6896 = vmul.f32 %v6736, %v6858
  %v6897 = vmul.f32 %v6737, %v6862
  %v6898 = vmul.f32 %v6738, %v6866
  %v6899 = vmul.f32 %v6739, %v6870
  %v6900 = vmul.f32 %v6740, %v6874
  %v6901 = vmul.f32 %v6741, %v6878
  %v6902 = vmul.f32 %v6742, %v6882
  %v6904 = vlaneseq
  %v6905 = vshrl.u32 %v6904, 7
  %v6906 = vsub.s32 0, %v6905
  %v6907 = vrot.slane %v6594, %v6906
  %v6908 = vcombine.high %v6907, %v6907
  %v6910 = vunpack.c.l.s4 1966171168
  %v6911 = vunpack.c.0.s8 %v6910
  %v6912 = vlaneseq
  %v6913 = vshrl.u32 %v6912, 7
  %v6914 = vsub.s32 %v6911, %v6913
  %v6915 = vrot.slane %v6907, %v6914
  %v6917 = vunpack.c.l.s4 1966171168
  %v6918 = vunpack.c.0.s8 %v6917
  %v6919 = vlaneseq
  %v6920 = vshrl.u32 %v6919, 7
  %v6921 = vsub.s32 %v6918, %v6920
  %v6922 = vrot.slane %v6908, %v6921
  %v6923 = vcombine.high %v6915, %v6915
  %v6924 = vcombine.high %v6922, %v6922
  %v6926 = vunpack.c.l.s4 1966171168
  %v6927 = vunpack.c.0.s8 %v6926
  %v6928 = vlaneseq
  %v6929 = vshrl.u32 %v6928, 7
  %v6930 = vsub.s32 %v6927, %v6929
  %v6931 = vrot.slane %v6915, %v6930
  %v6933 = vunpack.c.l.s4 1966171168
  %v6934 = vunpack.c.0.s8 %v6933
  %v6935 = vlaneseq
  %v6936 = vshrl.u32 %v6935, 7
  %v6937 = vsub.s32 %v6934, %v6936
  %v6938 = vrot.slane %v6922, %v6937
  %v6940 = vunpack.c.l.s4 1966171168
  %v6941 = vunpack.c.0.s8 %v6940
  %v6942 = vlaneseq
  %v6943 = vshrl.u32 %v6942, 7
  %v6944 = vsub.s32 %v6941, %v6943
  %v6945 = vrot.slane %v6923, %v6944
  %v6947 = vunpack.c.l.s4 1966171168
  %v6948 = vunpack.c.0.s8 %v6947
  %v6949 = vlaneseq
  %v6950 = vshrl.u32 %v6949, 7
  %v6951 = vsub.s32 %v6948, %v6950
  %v6952 = vrot.slane %v6924, %v6951
  %v6953 = vcombine.high %v6931, %v6931
  %v6954 = vcombine.high %v6938, %v6938
  %v6955 = vcombine.high %v6945, %v6945
  %v6956 = vcombine.high %v6952, %v6952
  %v6965 = vmul.f32 %v6893, %v6931
  %v6966 = vmul.f32 %v6894, %v6945
  %v6967 = vmul.f32 %v6895, %v6953
  %v6968 = vmul.f32 %v6896, %v6955
  %v6969 = vmul.f32 %v6897, %v6938
  %v6970 = vmul.f32 %v6898, %v6952
  %v6971 = vmul.f32 %v6899, %v6954
  %v6972 = vmul.f32 %v6900, %v6956
  %v6973 = vmul.f32 %v6901, %v6931
  %v6974 = vmul.f32 %v6902, %v6945
  %v6976 = vlaneseq
  %v6977 = vshrl.u32 %v6976, 7
  %v6978 = vsub.s32 0, %v6977
  %v6979 = vrot.slane %v6596, %v6978
  %v6980 = vcombine.high %v6979, %v6979
  %v6982 = vunpack.c.l.s4 1966171168
  %v6983 = vunpack.c.0.s8 %v6982
  %v6984 = vlaneseq
  %v6985 = vshrl.u32 %v6984, 7
  %v6986 = vsub.s32 %v6983, %v6985
  %v6987 = vrot.slane %v6979, %v6986
  %v6989 = vunpack.c.l.s4 1966171168
  %v6990 = vunpack.c.0.s8 %v6989
  %v6991 = vlaneseq
  %v6992 = vshrl.u32 %v6991, 7
  %v6993 = vsub.s32 %v6990, %v6992
  %v6994 = vrot.slane %v6980, %v6993
  %v6995 = vcombine.high %v6987, %v6987
  %v6996 = vcombine.high %v6994, %v6994
  %v6998 = vunpack.c.l.s4 1966171168
  %v6999 = vunpack.c.0.s8 %v6998
  %v7000 = vlaneseq
  %v7001 = vshrl.u32 %v7000, 7
  %v7002 = vsub.s32 %v6999, %v7001
  %v7003 = vrot.slane %v6987, %v7002
  %v7005 = vunpack.c.l.s4 1966171168
  %v7006 = vunpack.c.0.s8 %v7005
  %v7007 = vlaneseq
  %v7008 = vshrl.u32 %v7007, 7
  %v7009 = vsub.s32 %v7006, %v7008
  %v7010 = vrot.slane %v6994, %v7009
  %v7012 = vunpack.c.l.s4 1966171168
  %v7013 = vunpack.c.0.s8 %v7012
  %v7014 = vlaneseq
  %v7015 = vshrl.u32 %v7014, 7
  %v7016 = vsub.s32 %v7013, %v7015
  %v7017 = vrot.slane %v6995, %v7016
  %v7019 = vunpack.c.l.s4 1966171168
  %v7020 = vunpack.c.0.s8 %v7019
  %v7021 = vlaneseq
  %v7022 = vshrl.u32 %v7021, 7
  %v7023 = vsub.s32 %v7020, %v7022
  %v7024 = vrot.slane %v6996, %v7023
  %v7025 = vcombine.high %v7003, %v7003
  %v7026 = vcombine.high %v7010, %v7010
  %v7027 = vcombine.high %v7017, %v7017
  %v7028 = vcombine.high %v7024, %v7024
  %v7037 = vadd.f32 %v6965, %v7003
  %v7038 = vadd.f32 %v6966, %v7017
  %v7039 = vadd.f32 %v6967, %v7025
  %v7040 = vadd.f32 %v6968, %v7027
  %v7041 = vadd.f32 %v6969, %v7010
  %v7042 = vadd.f32 %v6970, %v7024
  %v7043 = vadd.f32 %v6971, %v7026
  %v7044 = vadd.f32 %v6972, %v7028
  %v7045 = vadd.f32 %v6973, %v7003
  %v7046 = vadd.f32 %v6974, %v7017
  %v7057 = vcombine.low %v7037, %v7038
  %v7058 = vcombine.low %v7039, %v7040
  %v7059 = vcombine.low %v7041, %v7042
  %v7060 = vcombine.low %v7043, %v7044
  %v7062 = vunpack.c.l.s4 1966171168
  %v7063 = vunpack.c.0.s8 %v7062
  %v7064 = vlaneseq
  %v7065 = vshrl.u32 %v7064, 7
  %v7066 = vsub.s32 %v7063, %v7065
  %v7067 = vrot.slane %v7057, %v7066
  %v7069 = vunpack.c.l.s4 1966171168
  %v7070 = vunpack.c.0.s8 %v7069
  %v7071 = vlaneseq
  %v7072 = vshrl.u32 %v7071, 7
  %v7073 = vsub.s32 %v7070, %v7072
  %v7074 = vrot.slane %v7058, %v7073
  %v7076 = vunpack.c.l.s4 1966171168
  %v7077 = vunpack.c.0.s8 %v7076
  %v7078 = vlaneseq
  %v7079 = vshrl.u32 %v7078, 7
  %v7080 = vsub.s32 %v7077, %v7079
  %v7081 = vrot.slane %v7059, %v7080
  %v7083 = vunpack.c.l.s4 1966171168
  %v7084 = vunpack.c.0.s8 %v7083
  %v7085 = vlaneseq
  %v7086 = vshrl.u32 %v7085, 7
  %v7087 = vsub.s32 %v7084, %v7086
  %v7088 = vrot.slane %v7060, %v7087
  %v7089 = vcombine.low %v7067, %v7074
  %v7090 = vcombine.low %v7081, %v7088
  %v7092 = vunpack.c.l.s4 1966171168
  %v7093 = vunpack.c.0.s8 %v7092
  %v7094 = vlaneseq
  %v7095 = vshrl.u32 %v7094, 7
  %v7096 = vsub.s32 %v7093, %v7095
  %v7097 = vrot.slane %v7089, %v7096
  %v7099 = vunpack.c.l.s4 1966171168
  %v7100 = vunpack.c.0.s8 %v7099
  %v7101 = vlaneseq
  %v7102 = vshrl.u32 %v7101, 7
  %v7103 = vsub.s32 %v7100, %v7102
  %v7104 = vrot.slane %v7090, %v7103
  %v7105 = vcombine.low %v7097, %v7104
  %v7106 = vcombine.low %v7045, %v7046
  %v7108 = vunpack.c.l.s4 1966171168
  %v7109 = vunpack.c.0.s8 %v7108
  %v7110 = vlaneseq
  %v7111 = vshrl.u32 %v7110, 7
  %v7112 = vsub.s32 %v7109, %v7111
  %v7113 = vrot.slane %v7106, %v7112
  %v7115 = vunpack.c.l.s4 1966171168
  %v7116 = vunpack.c.0.s8 %v7115
  %v7117 = vlaneseq
  %v7118 = vshrl.u32 %v7117, 7
  %v7119 = vsub.s32 %v7116, %v7118
  %v7120 = vrot.slane %v7113, %v7119
  %v7123 = vpack.c.bf16 %v7120, %v7105
  %s7124 = scalar_lea.vmem %s15, 16
  %v7125 = vld [vmem:[%s7124] sm:$0xf]
  %v7126 = vld [vmem:[%s7124 + $0x4] sm:$0xf]
  %v7127 = vld [vmem:[%s7124 + $0x8] sm:$0xf]
  %v7128 = vld [vmem:[%s7124 + $0xc] sm:$0xf]
  %s7129 = scalar_lea.vmem %s16, 1
  %v7130 = vld [vmem:[%s7129] sm:$0x1]
  %v7132 = vlaneseq
  %v7133 = vshrl.u32 %v7132, 7
  %v7134 = vsub.s32 0, %v7133
  %v7135 = vrot.slane %v7130, %v7134
  %v7141 = vunpack.c.l.b16 %v7125
  %v7142 = vunpack.c.l.b16 %v7126
  %v7143 = vunpack.c.l.b16 %v7127
  %v7144 = vunpack.c.l.b16 %v7128
  %v7145 = vpack.c.b16 %v7142, %v7141
  %v7146 = vpack.c.b16 %v7144, %v7143
  %v7150 = vsel %vm676, %v7123, 0
  %7152 = vmatprep.subr.bf16.mxu0 0
  %7153 = vmatpush1.bf16.msra.mxu0 %v7145
  %7154 = vmatprep.subr.bf16.mxu0 0
  %7155 = vmatpush1.bf16.msra.mxu0 %v7146
  %7156 = vmatprep.subr.bf16.mxu0 0
  %7157 = vmatpush1.bf16.msra.mxu0 0
  %7158 = vmatprep.subr.bf16.mxu0 0
  %7159 = vmatpush1.bf16.msra.mxu0 0
  %7160 = vmatprep.subr.bf16.mxu0 0
  %7161 = vmatpush1.bf16.msra.mxu0 0
  %7162 = vmatprep.subr.bf16.mxu0 0
  %7163 = vmatpush1.bf16.msra.mxu0 0
  %7164 = vmatprep.subr.bf16.mxu0 0
  %7165 = vmatpush1.bf16.msra.mxu0 0
  %7166 = vmatprep.subr.bf16.mxu0 0
  %7167 = vmatpush1.bf16.msra.mxu0 0
  %7168 = vmatprep.subr.bf16.mxu0 0
  %7169 = vmatpush1.bf16.msra.mxu0 0
  %7170 = vmatprep.subr.bf16.mxu0 0
  %7171 = vmatpush1.bf16.msra.mxu0 0
  %7172 = vmatprep.subr.bf16.mxu0 0
  %7173 = vmatpush1.bf16.msra.mxu0 0
  %7174 = vmatprep.subr.bf16.mxu0 0
  %7175 = vmatpush1.bf16.msra.mxu0 0
  %7176 = vmatprep.subr.bf16.mxu0 0
  %7177 = vmatpush1.bf16.msra.mxu0 0
  %7178 = vmatprep.subr.bf16.mxu0 0
  %7179 = vmatpush1.bf16.msra.mxu0 0
  %7180 = vmatprep.subr.bf16.mxu0 0
  %7181 = vmatpush1.bf16.msra.mxu0 0
  %7182 = vmatprep.subr.bf16.mxu0 0
  %7183 = vmatpush1.bf16.msra.mxu0 0
  %7184 = vmatprep.mubr.bf16.mxu0 0
  %7185 = vmatmul.mubr.bf16.gmra.mrb[0].mxu0 %v7150
  %v7186 = vpop.f32.mrb[0].mxu0
  %v7187 = vadd.f32 %v7135, %v7186
  %v7188 = vpop.f32.mrb[0].mxu0
  %v7189 = vpop.f32.mrb[0].mxu0
  %v7190 = vadd.f32 %v7135, %v7189
  %v7191 = vpop.f32.mrb[0].mxu0
  %7192 = vdwg.mxu0
  %v7193 = vmul.f32 %v7187, 0.5
  %v7194 = vmul.f32 %v7190, 0.5
  %v7195 = vmul.f32 %v7187, 0.044715
  %v7196 = vmul.f32 %v7190, 0.044715
  %v7197 = vmul.f32 %v7195, %v7187
  %v7198 = vmul.f32 %v7196, %v7190
  %v7199 = vmul.f32 %v7197, %v7187
  %v7200 = vmul.f32 %v7198, %v7190
  %v7201 = vadd.f32 %v7187, %v7199
  %v7202 = vadd.f32 %v7190, %v7200
  %v7203 = vmul.f32 %v7201, 0.7978846
  %v7204 = vmul.f32 %v7202, 0.7978846
  %v7205 = vtanh.pop %v7203
  %v7206 = vtanh.pop %v7204
  %v7207 = vadd.f32 %v7205, 1.0
  %v7208 = vadd.f32 %v7206, 1.0
  %v7209 = vmul.f32 %v7193, %v7207
  %v7210 = vmul.f32 %v7194, %v7208
  %v7211 = vpack.c.bf16 %v7210, %v7209
  %s7212 = scalar_lea.vmem %s17, 64
  %v7213 = vld [vmem:[%s7212] sm:$0xf]
  %v7214 = vld [vmem:[%s7212 + $0x4] sm:$0xf]
  %v7215 = vld [vmem:[%s7212 + $0x8] sm:$0xf]
  %v7216 = vld [vmem:[%s7212 + $0xc] sm:$0xf]
  %v7217 = vld [vmem:[%s7212 + $0x10] sm:$0xf]
  %v7218 = vld [vmem:[%s7212 + $0x14] sm:$0xf]
  %v7219 = vld [vmem:[%s7212 + $0x18] sm:$0xf]
  %v7220 = vld [vmem:[%s7212 + $0x1c] sm:$0xf]
  %v7221 = vld [vmem:[%s7212 + $0x20] sm:$0xf]
  %v7222 = vld [vmem:[%s7212 + $0x24] sm:$0xf]
  %v7223 = vld [vmem:[%s7212 + $0x28] sm:$0xf]
  %v7224 = vld [vmem:[%s7212 + $0x2c] sm:$0xf]
  %v7225 = vld [vmem:[%s7212 + $0x30] sm:$0xf]
  %v7226 = vld [vmem:[%s7212 + $0x34] sm:$0xf]
  %v7227 = vld [vmem:[%s7212 + $0x38] sm:$0xf]
  %v7228 = vld [vmem:[%s7212 + $0x3c] sm:$0xf]
  %s7229 = scalar_lea.vmem %s18, 1
  %v7230 = vld [vmem:[%s7229] sm:$0x1]
  %v7232 = vlaneseq
  %v7233 = vshrl.u32 %v7232, 7
  %v7234 = vsub.s32 0, %v7233
  %v7235 = vrot.slane %v7230, %v7234
  %v7253 = vunpack.c.l.b16 %v7213
  %v7254 = vunpack.c.l.b16 %v7214
  %v7255 = vunpack.c.l.b16 %v7215
  %v7256 = vunpack.c.l.b16 %v7216
  %v7257 = vunpack.c.l.b16 %v7217
  %v7258 = vunpack.c.l.b16 %v7218
  %v7259 = vunpack.c.l.b16 %v7219
  %v7260 = vunpack.c.l.b16 %v7220
  %v7261 = vunpack.c.l.b16 %v7221
  %v7262 = vunpack.c.l.b16 %v7222
  %v7263 = vunpack.c.l.b16 %v7223
  %v7264 = vunpack.c.l.b16 %v7224
  %v7265 = vunpack.c.l.b16 %v7225
  %v7266 = vunpack.c.l.b16 %v7226
  %v7267 = vunpack.c.l.b16 %v7227
  %v7268 = vunpack.c.l.b16 %v7228
  %v7269 = vpack.c.b16 %v7254, %v7253
  %v7270 = vpack.c.b16 %v7256, %v7255
  %v7271 = vpack.c.b16 %v7258, %v7257
  %v7272 = vpack.c.b16 %v7260, %v7259
  %v7273 = vpack.c.b16 %v7262, %v7261
  %v7274 = vpack.c.b16 %v7264, %v7263
  %v7275 = vpack.c.b16 %v7266, %v7265
  %v7276 = vpack.c.b16 %v7268, %v7267
  %7285 = vmatprep.subr.bf16.mxu0 0
  %7286 = vmatpush1.bf16.msra.mxu0 %v7269
  %7287 = vmatprep.subr.bf16.mxu0 0
  %7288 = vmatpush1.bf16.msra.mxu0 %v7270
  %7289 = vmatprep.subr.bf16.mxu0 0
  %7290 = vmatpush1.bf16.msra.mxu0 %v7271
  %7291 = vmatprep.subr.bf16.mxu0 0
  %7292 = vmatpush1.bf16.msra.mxu0 %v7272
  %7293 = vmatprep.subr.bf16.mxu0 0
  %7294 = vmatpush1.bf16.msra.mxu0 %v7273
  %7295 = vmatprep.subr.bf16.mxu0 0
  %7296 = vmatpush1.bf16.msra.mxu0 %v7274
  %7297 = vmatprep.subr.bf16.mxu0 0
  %7298 = vmatpush1.bf16.msra.mxu0 %v7275
  %7299 = vmatprep.subr.bf16.mxu0 0
  %7300 = vmatpush1.bf16.msra.mxu0 %v7276
  %7301 = vmatprep.subr.bf16.mxu0 0
  %7302 = vmatpush1.bf16.msra.mxu0 0
  %7303 = vmatprep.subr.bf16.mxu0 0
  %7304 = vmatpush1.bf16.msra.mxu0 0
  %7305 = vmatprep.subr.bf16.mxu0 0
  %7306 = vmatpush1.bf16.msra.mxu0 0
  %7307 = vmatprep.subr.bf16.mxu0 0
  %7308 = vmatpush1.bf16.msra.mxu0 0
  %7309 = vmatprep.subr.bf16.mxu0 0
  %7310 = vmatpush1.bf16.msra.mxu0 0
  %7311 = vmatprep.subr.bf16.mxu0 0
  %7312 = vmatpush1.bf16.msra.mxu0 0
  %7313 = vmatprep.subr.bf16.mxu0 0
  %7314 = vmatpush1.bf16.msra.mxu0 0
  %7315 = vmatprep.subr.bf16.mxu0 0
  %7316 = vmatpush1.bf16.msra.mxu0 0
  %7317 = vmatprep.mubr.bf16.mxu0 0
  %7318 = vmatmul.mubr.bf16.gmra.mrb[0].mxu0 %v7211
  %v7319 = vpop.f32.mrb[0].mxu0
  %v7320 = vadd.f32 %v7235, %v7319
  %v7321 = vpop.f32.mrb[0].mxu0
  %v7322 = vpop.f32.mrb[0].mxu0
  %v7323 = vadd.f32 %v7235, %v7322
  %v7324 = vpop.f32.mrb[0].mxu0
  %7325 = vdwg.mxu0
  %v7328 = vcombine.high %v7320, %v7320
  %v7330 = vunpack.c.l.s4 1966171168
  %v7331 = vunpack.c.0.s8 %v7330
  %v7332 = vlaneseq
  %v7333 = vshrl.u32 %v7332, 7
  %v7334 = vsub.s32 %v7331, %v7333
  %v7335 = vrot.slane %v7320, %v7334
  %v7337 = vunpack.c.l.s4 1966171168
  %v7338 = vunpack.c.0.s8 %v7337
  %v7339 = vlaneseq
  %v7340 = vshrl.u32 %v7339, 7
  %v7341 = vsub.s32 %v7338, %v7340
  %v7342 = vrot.slane %v7328, %v7341
  %v7343 = vcombine.high %v7335, %v7335
  %v7344 = vcombine.high %v7342, %v7342
  %v7346 = vunpack.c.l.s4 1966171168
  %v7347 = vunpack.c.0.s8 %v7346
  %v7348 = vlaneseq
  %v7349 = vshrl.u32 %v7348, 7
  %v7350 = vsub.s32 %v7347, %v7349
  %v7351 = vrot.slane %v7335, %v7350
  %v7353 = vunpack.c.l.s4 1966171168
  %v7354 = vunpack.c.0.s8 %v7353
  %v7355 = vlaneseq
  %v7356 = vshrl.u32 %v7355, 7
  %v7357 = vsub.s32 %v7354, %v7356
  %v7358 = vrot.slane %v7342, %v7357
  %v7360 = vunpack.c.l.s4 1966171168
  %v7361 = vunpack.c.0.s8 %v7360
  %v7362 = vlaneseq
  %v7363 = vshrl.u32 %v7362, 7
  %v7364 = vsub.s32 %v7361, %v7363
  %v7365 = vrot.slane %v7343, %v7364
  %v7367 = vunpack.c.l.s4 1966171168
  %v7368 = vunpack.c.0.s8 %v7367
  %v7369 = vlaneseq
  %v7370 = vshrl.u32 %v7369, 7
  %v7371 = vsub.s32 %v7368, %v7370
  %v7372 = vrot.slane %v7344, %v7371
  %v7373 = vcombine.high %v7351, %v7351
  %v7374 = vcombine.high %v7358, %v7358
  %v7375 = vcombine.high %v7365, %v7365
  %v7376 = vcombine.high %v7372, %v7372
  %v7378 = vunpack.c.l.s4 1966171168
  %v7379 = vunpack.c.0.s8 %v7378
  %v7380 = vlaneseq
  %v7381 = vshrl.u32 %v7380, 7
  %v7382 = vsub.s32 %v7379, %v7381
  %v7383 = vrot.slane %v7323, %v7382
  %v7384 = vcombine.high %v7383, %v7383
  %v7386 = vunpack.c.l.s4 1966171168
  %v7387 = vunpack.c.0.s8 %v7386
  %v7388 = vlaneseq
  %v7389 = vshrl.u32 %v7388, 7
  %v7390 = vsub.s32 %v7387, %v7389
  %v7391 = vrot.slane %v7383, %v7390
  %v7393 = vunpack.c.l.s4 1966171168
  %v7394 = vunpack.c.0.s8 %v7393
  %v7395 = vlaneseq
  %v7396 = vshrl.u32 %v7395, 7
  %v7397 = vsub.s32 %v7394, %v7396
  %v7398 = vrot.slane %v7384, %v7397
  %v7409 = vadd.f32 %v6583, %v7351
  %v7410 = vadd.f32 %v6584, %v7365
  %v7411 = vadd.f32 %v6585, %v7373
  %v7412 = vadd.f32 %v6586, %v7375
  %v7413 = vadd.f32 %v6587, %v7358
  %v7414 = vadd.f32 %v6588, %v7372
  %v7415 = vadd.f32 %v6589, %v7374
  %v7416 = vadd.f32 %v6590, %v7376
  %v7417 = vadd.f32 %v6591, %v7391
  %v7418 = vadd.f32 %v6592, %v7398
  %v7419 = vld [vmem:[%s5] sm:$0x1]
  %v7420 = vld [vmem:[%s6] sm:$0x1]
  %v7431 = vcombine.low %v7409, %v7410
  %v7432 = vcombine.low %v7411, %v7412
  %v7433 = vcombine.low %v7413, %v7414
  %v7434 = vcombine.low %v7415, %v7416
  %v7436 = vunpack.c.l.s4 1966171168
  %v7437 = vunpack.c.0.s8 %v7436
  %v7438 = vlaneseq
  %v7439 = vshrl.u32 %v7438, 7
  %v7440 = vsub.s32 %v7437, %v7439
  %v7441 = vrot.slane %v7431, %v7440
  %v7443 = vunpack.c.l.s4 1966171168
  %v7444 = vunpack.c.0.s8 %v7443
  %v7445 = vlaneseq
  %v7446 = vshrl.u32 %v7445, 7
  %v7447 = vsub.s32 %v7444, %v7446
  %v7448 = vrot.slane %v7432, %v7447
  %v7450 = vunpack.c.l.s4 1966171168
  %v7451 = vunpack.c.0.s8 %v7450
  %v7452 = vlaneseq
  %v7453 = vshrl.u32 %v7452, 7
  %v7454 = vsub.s32 %v7451, %v7453
  %v7455 = vrot.slane %v7433, %v7454
  %v7457 = vunpack.c.l.s4 1966171168
  %v7458 = vunpack.c.0.s8 %v7457
  %v7459 = vlaneseq
  %v7460 = vshrl.u32 %v7459, 7
  %v7461 = vsub.s32 %v7458, %v7460
  %v7462 = vrot.slane %v7434, %v7461
  %v7463 = vcombine.low %v7441, %v7448
  %v7464 = vcombine.low %v7455, %v7462
  %v7466 = vunpack.c.l.s4 1966171168
  %v7467 = vunpack.c.0.s8 %v7466
  %v7468 = vlaneseq
  %v7469 = vshrl.u32 %v7468, 7
  %v7470 = vsub.s32 %v7467, %v7469
  %v7471 = vrot.slane %v7463, %v7470
  %v7473 = vunpack.c.l.s4 1966171168
  %v7474 = vunpack.c.0.s8 %v7473
  %v7475 = vlaneseq
  %v7476 = vshrl.u32 %v7475, 7
  %v7477 = vsub.s32 %v7474, %v7476
  %v7478 = vrot.slane %v7464, %v7477
  %v7479 = vcombine.low %v7471, %v7478
  %v7480 = vcombine.low %v7417, %v7418
  %v7482 = vunpack.c.l.s4 1966171168
  %v7483 = vunpack.c.0.s8 %v7482
  %v7484 = vlaneseq
  %v7485 = vshrl.u32 %v7484, 7
  %v7486 = vsub.s32 %v7483, %v7485
  %v7487 = vrot.slane %v7480, %v7486
  %v7489 = vunpack.c.l.s4 1966171168
  %v7490 = vunpack.c.0.s8 %v7489
  %v7491 = vlaneseq
  %v7492 = vshrl.u32 %v7491, 7
  %v7493 = vsub.s32 %v7490, %v7492
  %v7494 = vrot.slane %v7487, %v7493
  %v7497 = vsel %vm676, %v7479, 0.0
  %7498 = vadd.xlane.f32.xlu0 %v7497
  %v7499 = vpop.xlane.xlu0 %7498
  %v7500 = vsel %vm680, %v7494, 0.0
  %7501 = vadd.xlane.f32.xlu0 %v7500
  %v7502 = vpop.xlane.xlu0 %7501
  %v7503 = vmul.f32 %v7499, %v684
  %v7504 = vmul.f32 %v7502, %v684
  %v7507 = vlaneseq
  %v7508 = vshrl.u32 %v7507, 7
  %v7509 = vsub.s32 0, %v7508
  %v7510 = vrot.slane %v7503, %v7509
  %v7511 = vlaneseq
  %v7512 = vshrl.u32 %v7511, 7
  %v7513 = vsub.s32 1, %v7512
  %v7514 = vrot.slane %v7503, %v7513
  %v7515 = vlaneseq
  %v7516 = vshrl.u32 %v7515, 7
  %v7517 = vsub.s32 2, %v7516
  %v7518 = vrot.slane %v7503, %v7517
  %v7519 = vlaneseq
  %v7520 = vshrl.u32 %v7519, 7
  %v7521 = vsub.s32 3, %v7520
  %v7522 = vrot.slane %v7503, %v7521
  %v7523 = vlaneseq
  %v7524 = vshrl.u32 %v7523, 7
  %v7525 = vsub.s32 4, %v7524
  %v7526 = vrot.slane %v7503, %v7525
  %v7527 = vlaneseq
  %v7528 = vshrl.u32 %v7527, 7
  %v7529 = vsub.s32 5, %v7528
  %v7530 = vrot.slane %v7503, %v7529
  %v7531 = vlaneseq
  %v7532 = vshrl.u32 %v7531, 7
  %v7533 = vsub.s32 6, %v7532
  %v7534 = vrot.slane %v7503, %v7533
  %v7535 = vlaneseq
  %v7536 = vshrl.u32 %v7535, 7
  %v7537 = vsub.s32 7, %v7536
  %v7538 = vrot.slane %v7503, %v7537
  %v7539 = vlaneseq
  %v7540 = vshrl.u32 %v7539, 7
  %v7541 = vsub.s32 0, %v7540
  %v7542 = vrot.slane %v7504, %v7541
  %v7543 = vlaneseq
  %v7544 = vshrl.u32 %v7543, 7
  %v7545 = vsub.s32 1, %v7544
  %v7546 = vrot.slane %v7504, %v7545
  %v7557 = vsub.f32 %v7409, %v7510
  %v7558 = vsub.f32 %v7410, %v7514
  %v7559 = vsub.f32 %v7411, %v7518
  %v7560 = vsub.f32 %v7412, %v7522
  %v7561 = vsub.f32 %v7413, %v7526
  %v7562 = vsub.f32 %v7414, %v7530
  %v7563 = vsub.f32 %v7415, %v7534
  %v7564 = vsub.f32 %v7416, %v7538
  %v7565 = vsub.f32 %v7417, %v7542
  %v7566 = vsub.f32 %v7418, %v7546
  %v7567 = vmul.f32 %v7557, %v7557
  %v7568 = vmul.f32 %v7558, %v7558
  %v7569 = vmul.f32 %v7559, %v7559
  %v7570 = vmul.f32 %v7560, %v7560
  %v7571 = vmul.f32 %v7561, %v7561
  %v7572 = vmul.f32 %v7562, %v7562
  %v7573 = vmul.f32 %v7563, %v7563
  %v7574 = vmul.f32 %v7564, %v7564
  %v7575 = vmul.f32 %v7565, %v7565
  %v7576 = vmul.f32 %v7566, %v7566
  %v7587 = vcombine.low %v7567, %v7568
  %v7588 = vcombine.low %v7569, %v7570
  %v7589 = vcombine.low %v7571, %v7572
  %v7590 = vcombine.low %v7573, %v7574
  %v7592 = vunpack.c.l.s4 1966171168
  %v7593 = vunpack.c.0.s8 %v7592
  %v7594 = vlaneseq
  %v7595 = vshrl.u32 %v7594, 7
  %v7596 = vsub.s32 %v7593, %v7595
  %v7597 = vrot.slane %v7587, %v7596
  %v7599 = vunpack.c.l.s4 1966171168
  %v7600 = vunpack.c.0.s8 %v7599
  %v7601 = vlaneseq
  %v7602 = vshrl.u32 %v7601, 7
  %v7603 = vsub.s32 %v7600, %v7602
  %v7604 = vrot.slane %v7588, %v7603
  %v7606 = vunpack.c.l.s4 1966171168
  %v7607 = vunpack.c.0.s8 %v7606
  %v7608 = vlaneseq
  %v7609 = vshrl.u32 %v7608, 7
  %v7610 = vsub.s32 %v7607, %v7609
  %v7611 = vrot.slane %v7589, %v7610
  %v7613 = vunpack.c.l.s4 1966171168
  %v7614 = vunpack.c.0.s8 %v7613
  %v7615 = vlaneseq
  %v7616 = vshrl.u32 %v7615, 7
  %v7617 = vsub.s32 %v7614, %v7616
  %v7618 = vrot.slane %v7590, %v7617
  %v7619 = vcombine.low %v7597, %v7604
  %v7620 = vcombine.low %v7611, %v7618
  %v7622 = vunpack.c.l.s4 1966171168
  %v7623 = vunpack.c.0.s8 %v7622
  %v7624 = vlaneseq
  %v7625 = vshrl.u32 %v7624, 7
  %v7626 = vsub.s32 %v7623, %v7625
  %v7627 = vrot.slane %v7619, %v7626
  %v7629 = vunpack.c.l.s4 1966171168
  %v7630 = vunpack.c.0.s8 %v7629
  %v7631 = vlaneseq
  %v7632 = vshrl.u32 %v7631, 7
  %v7633 = vsub.s32 %v7630, %v7632
  %v7634 = vrot.slane %v7620, %v7633
  %v7635 = vcombine.low %v7627, %v7634
  %v7636 = vcombine.low %v7575, %v7576
  %v7638 = vunpack.c.l.s4 1966171168
  %v7639 = vunpack.c.0.s8 %v7638
  %v7640 = vlaneseq
  %v7641 = vshrl.u32 %v7640, 7
  %v7642 = vsub.s32 %v7639, %v7641
  %v7643 = vrot.slane %v7636, %v7642
  %v7645 = vunpack.c.l.s4 1966171168
  %v7646 = vunpack.c.0.s8 %v7645
  %v7647 = vlaneseq
  %v7648 = vshrl.u32 %v7647, 7
  %v7649 = vsub.s32 %v7646, %v7648
  %v7650 = vrot.slane %v7643, %v7649
  %v7653 = vsel %vm676, %v7635, 0.0
  %7654 = vadd.xlane.f32.xlu0 %v7653
  %v7655 = vpop.xlane.xlu0 %7654
  %v7656 = vsel %vm680, %v7650, 0.0
  %7657 = vadd.xlane.f32.xlu0 %v7656
  %v7658 = vpop.xlane.xlu0 %7657
  %v7659 = vmul.f32 %v7655, %v684
  %v7660 = vmul.f32 %v7658, %v684
  %v7661 = vadd.f32 %v7659, 1e-06
  %v7662 = vadd.f32 %v7660, 1e-06
  %v7663 = vrsqrt.pop %v7661
  %v7664 = vrsqrt.pop %v7662
  %v7667 = vlaneseq
  %v7668 = vshrl.u32 %v7667, 7
  %v7669 = vsub.s32 0, %v7668
  %v7670 = vrot.slane %v7663, %v7669
  %v7671 = vlaneseq
  %v7672 = vshrl.u32 %v7671, 7
  %v7673 = vsub.s32 1, %v7672
  %v7674 = vrot.slane %v7663, %v7673
  %v7675 = vlaneseq
  %v7676 = vshrl.u32 %v7675, 7
  %v7677 = vsub.s32 2, %v7676
  %v7678 = vrot.slane %v7663, %v7677
  %v7679 = vlaneseq
  %v7680 = vshrl.u32 %v7679, 7
  %v7681 = vsub.s32 3, %v7680
  %v7682 = vrot.slane %v7663, %v7681
  %v7683 = vlaneseq
  %v7684 = vshrl.u32 %v7683, 7
  %v7685 = vsub.s32 4, %v7684
  %v7686 = vrot.slane %v7663, %v7685
  %v7687 = vlaneseq
  %v7688 = vshrl.u32 %v7687, 7
  %v7689 = vsub.s32 5, %v7688
  %v7690 = vrot.slane %v7663, %v7689
  %v7691 = vlaneseq
  %v7692 = vshrl.u32 %v7691, 7
  %v7693 = vsub.s32 6, %v7692
  %v7694 = vrot.slane %v7663, %v7693
  %v7695 = vlaneseq
  %v7696 = vshrl.u32 %v7695, 7
  %v7697 = vsub.s32 7, %v7696
  %v7698 = vrot.slane %v7663, %v7697
  %v7699 = vlaneseq
  %v7700 = vshrl.u32 %v7699, 7
  %v7701 = vsub.s32 0, %v7700
  %v7702 = vrot.slane %v7664, %v7701
  %v7703 = vlaneseq
  %v7704 = vshrl.u32 %v7703, 7
  %v7705 = vsub.s32 1, %v7704
  %v7706 = vrot.slane %v7664, %v7705
  %v7717 = vmul.f32 %v7557, %v7670
  %v7718 = vmul.f32 %v7558, %v7674
  %v7719 = vmul.f32 %v7559, %v7678
  %v7720 = vmul.f32 %v7560, %v7682
  %v7721 = vmul.f32 %v7561, %v7686
  %v7722 = vmul.f32 %v7562, %v7690
  %v7723 = vmul.f32 %v7563, %v7694
  %v7724 = vmul.f32 %v7564, %v7698
  %v7725 = vmul.f32 %v7565, %v7702
  %v7726 = vmul.f32 %v7566, %v7706
  %v7728 = vlaneseq
  %v7729 = vshrl.u32 %v7728, 7
  %v7730 = vsub.s32 0, %v7729
  %v7731 = vrot.slane %v7419, %v7730
  %v7732 = vcombine.high %v7731, %v7731
  %v7734 = vunpack.c.l.s4 1966171168
  %v7735 = vunpack.c.0.s8 %v7734
  %v7736 = vlaneseq
  %v7737 = vshrl.u32 %v7736, 7
  %v7738 = vsub.s32 %v7735, %v7737
  %v7739 = vrot.slane %v7731, %v7738
  %v7741 = vunpack.c.l.s4 1966171168
  %v7742 = vunpack.c.0.s8 %v7741
  %v7743 = vlaneseq
  %v7744 = vshrl.u32 %v7743, 7
  %v7745 = vsub.s32 %v7742, %v7744
  %v7746 = vrot.slane %v7732, %v7745
  %v7747 = vcombine.high %v7739, %v7739
  %v7748 = vcombine.high %v7746, %v7746
  %v7750 = vunpack.c.l.s4 1966171168
  %v7751 = vunpack.c.0.s8 %v7750
  %v7752 = vlaneseq
  %v7753 = vshrl.u32 %v7752, 7
  %v7754 = vsub.s32 %v7751, %v7753
  %v7755 = vrot.slane %v7739, %v7754
  %v7757 = vunpack.c.l.s4 1966171168
  %v7758 = vunpack.c.0.s8 %v7757
  %v7759 = vlaneseq
  %v7760 = vshrl.u32 %v7759, 7
  %v7761 = vsub.s32 %v7758, %v7760
  %v7762 = vrot.slane %v7746, %v7761
  %v7764 = vunpack.c.l.s4 1966171168
  %v7765 = vunpack.c.0.s8 %v7764
  %v7766 = vlaneseq
  %v7767 = vshrl.u32 %v7766, 7
  %v7768 = vsub.s32 %v7765, %v7767
  %v7769 = vrot.slane %v7747, %v7768
  %v7771 = vunpack.c.l.s4 1966171168
  %v7772 = vunpack.c.0.s8 %v7771
  %v7773 = vlaneseq
  %v7774 = vshrl.u32 %v7773, 7
  %v7775 = vsub.s32 %v7772, %v7774
  %v7776 = vrot.slane %v7748, %v7775
  %v7777 = vcombine.high %v7755, %v7755
  %v7778 = vcombine.high %v7762, %v7762
  %v7779 = vcombine.high %v7769, %v7769
  %v7780 = vcombine.high %v7776, %v7776
  %v7789 = vmul.f32 %v7717, %v7755
  %v7790 = vmul.f32 %v7718, %v7769
  %v7791 = vmul.f32 %v7719, %v7777
  %v7792 = vmul.f32 %v7720, %v7779
  %v7793 = vmul.f32 %v7721, %v7762
  %v7794 = vmul.f32 %v7722, %v7776
  %v7795 = vmul.f32 %v7723, %v7778
  %v7796 = vmul.f32 %v7724, %v7780
  %v7797 = vmul.f32 %v7725, %v7755
  %v7798 = vmul.f32 %v7726, %v7769
  %v7800 = vlaneseq
  %v7801 = vshrl.u32 %v7800, 7
  %v7802 = vsub.s32 0, %v7801
  %v7803 = vrot.slane %v7420, %v7802
  %v7804 = vcombine.high %v7803, %v7803
  %v7806 = vunpack.c.l.s4 1966171168
  %v7807 = vunpack.c.0.s8 %v7806
  %v7808 = vlaneseq
  %v7809 = vshrl.u32 %v7808, 7
  %v7810 = vsub.s32 %v7807, %v7809
  %v7811 = vrot.slane %v7803, %v7810
  %v7813 = vunpack.c.l.s4 1966171168
  %v7814 = vunpack.c.0.s8 %v7813
  %v7815 = vlaneseq
  %v7816 = vshrl.u32 %v7815, 7
  %v7817 = vsub.s32 %v7814, %v7816
  %v7818 = vrot.slane %v7804, %v7817
  %v7819 = vcombine.high %v7811, %v7811
  %v7820 = vcombine.high %v7818, %v7818
  %v7822 = vunpack.c.l.s4 1966171168
  %v7823 = vunpack.c.0.s8 %v7822
  %v7824 = vlaneseq
  %v7825 = vshrl.u32 %v7824, 7
  %v7826 = vsub.s32 %v7823, %v7825
  %v7827 = vrot.slane %v7811, %v7826
  %v7829 = vunpack.c.l.s4 1966171168
  %v7830 = vunpack.c.0.s8 %v7829
  %v7831 = vlaneseq
  %v7832 = vshrl.u32 %v7831, 7
  %v7833 = vsub.s32 %v7830, %v7832
  %v7834 = vrot.slane %v7818, %v7833
  %v7836 = vunpack.c.l.s4 1966171168
  %v7837 = vunpack.c.0.s8 %v7836
  %v7838 = vlaneseq
  %v7839 = vshrl.u32 %v7838, 7
  %v7840 = vsub.s32 %v7837, %v7839
  %v7841 = vrot.slane %v7819, %v7840
  %v7843 = vunpack.c.l.s4 1966171168
  %v7844 = vunpack.c.0.s8 %v7843
  %v7845 = vlaneseq
  %v7846 = vshrl.u32 %v7845, 7
  %v7847 = vsub.s32 %v7844, %v7846
  %v7848 = vrot.slane %v7820, %v7847
  %v7849 = vcombine.high %v7827, %v7827
  %v7850 = vcombine.high %v7834, %v7834
  %v7851 = vcombine.high %v7841, %v7841
  %v7852 = vcombine.high %v7848, %v7848
  %v7861 = vadd.f32 %v7789, %v7827
  %v7862 = vadd.f32 %v7790, %v7841
  %v7863 = vadd.f32 %v7791, %v7849
  %v7864 = vadd.f32 %v7792, %v7851
  %v7865 = vadd.f32 %v7793, %v7834
  %v7866 = vadd.f32 %v7794, %v7848
  %v7867 = vadd.f32 %v7795, %v7850
  %v7868 = vadd.f32 %v7796, %v7852
  %v7869 = vadd.f32 %v7797, %v7827
  %v7870 = vadd.f32 %v7798, %v7841
  %v7881 = vcombine.low %v7861, %v7862
  %v7882 = vcombine.low %v7863, %v7864
  %v7884 = vunpack.c.l.s4 1966171168
  %v7885 = vunpack.c.0.s8 %v7884
  %v7886 = vlaneseq
  %v7887 = vshrl.u32 %v7886, 7
  %v7888 = vsub.s32 %v7885, %v7887
  %v7889 = vrot.slane %v7881, %v7888
  %v7891 = vunpack.c.l.s4 1966171168
  %v7892 = vunpack.c.0.s8 %v7891
  %v7893 = vlaneseq
  %v7894 = vshrl.u32 %v7893, 7
  %v7895 = vsub.s32 %v7892, %v7894
  %v7896 = vrot.slane %v7882, %v7895
  %v7898 = vunpack.c.l.s4 1966171168
  %v7899 = vunpack.c.0.s8 %v7898
  %v7900 = vlaneseq
  %v7901 = vshrl.u32 %v7900, 7
  %v7902 = vsub.s32 %v7899, %v7901
  %v7903 = vrot.slane %v7865, %v7902
  %v7904 = vcombine.low %v7889, %v7896
  %v7906 = vunpack.c.l.s4 1966171168
  %v7907 = vunpack.c.0.s8 %v7906
  %v7908 = vlaneseq
  %v7909 = vshrl.u32 %v7908, 7
  %v7910 = vsub.s32 %v7907, %v7909
  %v7911 = vrot.slane %v7904, %v7910
  %v7913 = vunpack.c.l.s4 1966171168
  %v7914 = vunpack.c.0.s8 %v7913
  %v7915 = vlaneseq
  %v7916 = vshrl.u32 %v7915, 7
  %v7917 = vsub.s32 %v7914, %v7916
  %v7918 = vrot.slane %v7903, %v7917
  %v7919 = vcombine.low %v7911, %v7918
  %v7920 = vcombine.low %v7866, %v7867
  %v7921 = vcombine.low %v7868, %v7869
  %v7923 = vunpack.c.l.s4 1966171168
  %v7924 = vunpack.c.0.s8 %v7923
  %v7925 = vlaneseq
  %v7926 = vshrl.u32 %v7925, 7
  %v7927 = vsub.s32 %v7924, %v7926
  %v7928 = vrot.slane %v7920, %v7927
  %v7930 = vunpack.c.l.s4 1966171168
  %v7931 = vunpack.c.0.s8 %v7930
  %v7932 = vlaneseq
  %v7933 = vshrl.u32 %v7932, 7
  %v7934 = vsub.s32 %v7931, %v7933
  %v7935 = vrot.slane %v7921, %v7934
  %v7937 = vunpack.c.l.s4 1966171168
  %v7938 = vunpack.c.0.s8 %v7937
  %v7939 = vlaneseq
  %v7940 = vshrl.u32 %v7939, 7
  %v7941 = vsub.s32 %v7938, %v7940
  %v7942 = vrot.slane %v7870, %v7941
  %v7943 = vcombine.low %v7928, %v7935
  %v7945 = vunpack.c.l.s4 1966171168
  %v7946 = vunpack.c.0.s8 %v7945
  %v7947 = vlaneseq
  %v7948 = vshrl.u32 %v7947, 7
  %v7949 = vsub.s32 %v7946, %v7948
  %v7950 = vrot.slane %v7943, %v7949
  %v7952 = vunpack.c.l.s4 1966171168
  %v7953 = vunpack.c.0.s8 %v7952
  %v7954 = vlaneseq
  %v7955 = vshrl.u32 %v7954, 7
  %v7956 = vsub.s32 %v7953, %v7955
  %v7957 = vrot.slane %v7942, %v7956
  %v7958 = vcombine.low %v7950, %v7957
  %vm7961 = vcmask 258048
  %7962 = vst.msk [vmem:[%s19] sm:$0x1f] %vm7961, %v7919
  %7963 = vst.msk [vmem:[%s19 + $0x8] sm:$0x1f] %vm7961, %v7958
  // Predicated region
  $region78: #{tpu_custom_call.1} parent=0 // pred_check
    _
  $region79: #{tpu_custom_call.1} parent=0 // pred_check_branch
    %7965 = sbr.rel (0) target = $region81
  $region80: #{tpu_custom_call.1} parent=0 // pred_region
    _
  $region81: #{tpu_custom_call.1} parent=0 // pred_fallthru
    _
  // Predicated region
  $region82: #{tpu_custom_call.1} parent=0 // pred_check
    _
  $region83: #{tpu_custom_call.1} parent=0 // pred_check_branch
    %7967 = sbr.rel (0) target = $region85
  $region84: #{tpu_custom_call.1} parent=0 // pred_region
    _
  $region85: #{tpu_custom_call.1} parent=0 // pred_fallthru
    _

</llo_original>
